<compile_context>
chip_gen: v6e
topology: v6e:2x2x1
jax: 0.10.0
libtpu: 0.0.40
codegen_flags: <defaults>
</compile_context>

<pallas_src>
import math
from functools import partial

import jax
import jax.numpy as jnp
from jax.experimental import pallas as pl
from jax.experimental.pallas import tpu as pltpu

_LN_EPS = 1e-5


def _layernorm(y):
    mu = jnp.mean(y, axis=-1, keepdims=True)
    var = jnp.mean((y - mu) ** 2, axis=-1, keepdims=True)
    return (y - mu) * jax.lax.rsqrt(var + _LN_EPS)


def _attention_block(x_q, x_kv, masked, wq, wk, wv, wo,
                     B, Lq, Lk, H, d_k, d_v, scale):
    """Multi-head attention + residual + LayerNorm, fully VMEM-resident.

    x_q:   [B*Lq, D]  (also the residual)
    x_kv:  [B*Lk, D]
    masked: bool, broadcastable to [B, Lq, Lk] (True = masked)
    wq/wk: [H, D, d_k], wv: [H, D, d_v], wo: [H, d_v, D]  (head-major weights)
    returns (LayerNorm(out + x_q) [B*Lq, D], attn probs [B, H, Lq, Lk])
    """
    d_model = x_q.shape[-1]
    out = jnp.zeros((B * Lq, d_model), jnp.float32)
    probs = []
    for h in range(H):                      # static unroll; no lane slices
        qh = jnp.dot(x_q, wq[h], preferred_element_type=jnp.float32).reshape(B, Lq, d_k)
        kh = jnp.dot(x_kv, wk[h], preferred_element_type=jnp.float32).reshape(B, Lk, d_k)
        vh = jnp.dot(x_kv, wv[h], preferred_element_type=jnp.float32).reshape(B, Lk, d_v)
        s = jnp.einsum('bqd,bkd->bqk', qh, kh,
                       preferred_element_type=jnp.float32) * scale
        s = jnp.where(masked, -1e9, s)
        mx = jnp.max(s, axis=-1, keepdims=True)
        e = jnp.exp(s - mx)
        p = e * pl.reciprocal(jnp.sum(e, axis=-1, keepdims=True), approx=True)
        probs.append(p)
        ctx = jnp.einsum('bqk,bkd->bqd', p, vh,
                         preferred_element_type=jnp.float32).reshape(B * Lq, d_v)
        out = out + jnp.dot(ctx, wo[h], preferred_element_type=jnp.float32)
    attn = jnp.stack(probs, axis=1)         # [B, H, Lq, Lk] — one store upstream
    return _layernorm(out + x_q), attn


# ----------------------------- Pallas kernels -----------------------------

def _encoder_stack_kernel(x_ref, epad_ref, wq_ref, wk_ref, wv_ref, wo_ref,
                          w1_ref, w2_ref, out_ref, attn_ref,
                          *, B, L, H, d_k, d_v, scale):
    """One encoder layer per grid step; activation carried in the resident out block."""
    l = pl.program_id(0)

    @pl.when(l == 0)
    def _():
        out_ref[...] = x_ref[...]

    x = out_ref[...]                                        # [B*L, D]
    masked = epad_ref[...][:, None, :] > 0.5                # [B, 1, L] pad-key mask

    y, attn = _attention_block(x, x, masked,
                               wq_ref[0], wk_ref[0], wv_ref[0], wo_ref[0],
                               B, L, L, H, d_k, d_v, scale)
    attn_ref[0] = attn

    h = jnp.maximum(jnp.dot(y, w1_ref[0], preferred_element_type=jnp.float32), 0.0)
    z = _layernorm(jnp.dot(h, w2_ref[0], preferred_element_type=jnp.float32) + y)
    out_ref[...] = z


def _decoder_stack_kernel(y_ref, enc_ref, dpad_ref, epad_ref,
                          swq_ref, swk_ref, swv_ref, swo_ref,
                          cwq_ref, cwk_ref, cwv_ref, cwo_ref,
                          w1_ref, w2_ref, proj_ref,
                          logits_ref, sattn_ref, cattn_ref, x_scr,
                          *, B, Lt, Ls, H, d_k, d_v, scale):
    """One decoder layer per grid step; final-layer output is projected to logits."""
    l = pl.program_id(0)

    @pl.when(l == 0)
    def _():
        x_scr[...] = y_ref[...]

    x = x_scr[...]                                          # [B*Lt, D]
    enc = enc_ref[...]                                      # [B*Ls, D]

    # masks built in-kernel: pad + causal for self-attn, pad(enc keys) for cross
    row = jax.lax.broadcasted_iota(jnp.int32, (Lt, Lt), 0)
    col = jax.lax.broadcasted_iota(jnp.int32, (Lt, Lt), 1)
    self_masked = (dpad_ref[...][:, None, :] > 0.5) | (col > row)[None]   # [B, Lt, Lt]
    cross_masked = epad_ref[...][:, None, :] > 0.5                        # [B, 1, Ls]

    y1, sattn = _attention_block(x, x, self_masked,
                                 swq_ref[0], swk_ref[0], swv_ref[0], swo_ref[0],
                                 B, Lt, Lt, H, d_k, d_v, scale)
    sattn_ref[0] = sattn

    y2, cattn = _attention_block(y1, enc, cross_masked,
                                 cwq_ref[0], cwk_ref[0], cwv_ref[0], cwo_ref[0],
                                 B, Lt, Ls, H, d_k, d_v, scale)
    cattn_ref[0] = cattn

    h = jnp.maximum(jnp.dot(y2, w1_ref[0], preferred_element_type=jnp.float32), 0.0)
    z = _layernorm(jnp.dot(h, w2_ref[0], preferred_element_type=jnp.float32) + y2)
    x_scr[...] = z

    @pl.when(l == pl.num_programs(0) - 1)
    def _():
        logits_ref[...] = jnp.dot(z, proj_ref[...], preferred_element_type=jnp.float32)


# ------------------------------- wrappers -------------------------------

def _layer_spec(w):
    """BlockSpec selecting one layer's weights per grid step."""
    nz = w.ndim - 1
    return pl.BlockSpec((1,) + w.shape[1:], lambda l, _n=nz: (l,) + (0,) * _n)


def run_encoder_stack(x_emb, enc_pad, ew, n_heads, d_k, d_v):
    nl = ew["wq"].shape[0]
    B, L, D = x_emb.shape
    kern = partial(_encoder_stack_kernel, B=B, L=L, H=n_heads, d_k=d_k, d_v=d_v,
                   scale=1.0 / math.sqrt(d_k))
    full2 = lambda l: (0, 0)
    out, attn = pl.pallas_call(
        kern,
        out_shape=(jax.ShapeDtypeStruct((B * L, D), jnp.float32),
                   jax.ShapeDtypeStruct((nl, B, n_heads, L, L), jnp.float32)),
        grid=(nl,),
        in_specs=[
            pl.BlockSpec((B * L, D), full2),
            pl.BlockSpec((B, L), full2),
            _layer_spec(ew["wq"]), _layer_spec(ew["wk"]), _layer_spec(ew["wv"]),
            _layer_spec(ew["wo"]), _layer_spec(ew["w1"]), _layer_spec(ew["w2"]),
        ],
        out_specs=(
            pl.BlockSpec((B * L, D), full2),
            pl.BlockSpec((1, B, n_heads, L, L), lambda l: (l, 0, 0, 0, 0)),
        ),
        compiler_params=pltpu.CompilerParams(dimension_semantics=("arbitrary",)),
    )(x_emb.reshape(B * L, D), enc_pad,
      ew["wq"], ew["wk"], ew["wv"], ew["wo"], ew["w1"], ew["w2"])
    return out, attn


def run_decoder_stack(dec_emb, enc_out2d, dec_pad, enc_pad, dw, proj, n_heads, d_k, d_v):
    nl = dw["swq"].shape[0]
    B, Lt, D = dec_emb.shape
    Ls = enc_out2d.shape[0] // B
    V = proj.shape[1]
    kern = partial(_decoder_stack_kernel, B=B, Lt=Lt, Ls=Ls, H=n_heads,
                   d_k=d_k, d_v=d_v, scale=1.0 / math.sqrt(d_k))
    full2 = lambda l: (0, 0)
    logits, sattn, cattn = pl.pallas_call(
        kern,
        out_shape=(jax.ShapeDtypeStruct((B * Lt, V), jnp.float32),
                   jax.ShapeDtypeStruct((nl, B, n_heads, Lt, Lt), jnp.float32),
                   jax.ShapeDtypeStruct((nl, B, n_heads, Lt, Ls), jnp.float32)),
        grid=(nl,),
        in_specs=[
            pl.BlockSpec((B * Lt, D), full2),
            pl.BlockSpec((B * Ls, D), full2),
            pl.BlockSpec((B, Lt), full2),
            pl.BlockSpec((B, Ls), full2),
            _layer_spec(dw["swq"]), _layer_spec(dw["swk"]),
            _layer_spec(dw["swv"]), _layer_spec(dw["swo"]),
            _layer_spec(dw["cwq"]), _layer_spec(dw["cwk"]),
            _layer_spec(dw["cwv"]), _layer_spec(dw["cwo"]),
            _layer_spec(dw["w1"]), _layer_spec(dw["w2"]),
            pl.BlockSpec((D, V), full2),
        ],
        out_specs=(
            pl.BlockSpec((B * Lt, V), full2),
            pl.BlockSpec((1, B, n_heads, Lt, Lt), lambda l: (l, 0, 0, 0, 0)),
            pl.BlockSpec((1, B, n_heads, Lt, Ls), lambda l: (l, 0, 0, 0, 0)),
        ),
        scratch_shapes=[pltpu.VMEM((B * Lt, D), jnp.float32)],
        compiler_params=pltpu.CompilerParams(dimension_semantics=("arbitrary",)),
    )(dec_emb.reshape(B * Lt, D), enc_out2d, dec_pad, enc_pad,
      dw["swq"], dw["swk"], dw["swv"], dw["swo"],
      dw["cwq"], dw["cwk"], dw["cwv"], dw["cwo"],
      dw["w1"], dw["w2"], proj)
    return logits, sattn, cattn


# --------------------------- model glue (plain JAX) ---------------------------

def pos_encoding(max_len, d_model):
    pos = jnp.arange(max_len, dtype=jnp.float32)[:, None]
    i = jnp.arange(d_model)[None, :]
    angle = pos / jnp.power(10000.0, (2 * (i // 2)).astype(jnp.float32) / d_model)
    return jnp.where(i % 2 == 0, jnp.sin(angle), jnp.cos(angle)).astype(jnp.float32)


def init_params(key, cfg):
    d_model, nl, d_ff = cfg["d_model"], cfg["n_layers"], cfg["d_ff"]
    d_k, d_v, H = cfg["d_k"], cfg["d_v"], cfg["n_heads"]
    keys = iter(jax.random.split(key, 32))

    def nrm(shape, scale=0.02):
        return (scale * jax.random.normal(next(keys), shape)).astype(jnp.float32)

    return {
        "src_emb": nrm((cfg["src_vocab"], d_model), 1.0),
        "tgt_emb": nrm((cfg["tgt_vocab"], d_model), 1.0),
        "proj": nrm((d_model, cfg["tgt_vocab"])),
        # head-major, layer-stacked weights: [n_layers, H, ...]
        "enc": {
            "wq": nrm((nl, H, d_model, d_k)), "wk": nrm((nl, H, d_model, d_k)),
            "wv": nrm((nl, H, d_model, d_v)), "wo": nrm((nl, H, d_v, d_model)),
            "w1": nrm((nl, d_model, d_ff)), "w2": nrm((nl, d_ff, d_model)),
        },
        "dec": {
            "swq": nrm((nl, H, d_model, d_k)), "swk": nrm((nl, H, d_model, d_k)),
            "swv": nrm((nl, H, d_model, d_v)), "swo": nrm((nl, H, d_v, d_model)),
            "cwq": nrm((nl, H, d_model, d_k)), "cwk": nrm((nl, H, d_model, d_k)),
            "cwv": nrm((nl, H, d_model, d_v)), "cwo": nrm((nl, H, d_v, d_model)),
            "w1": nrm((nl, d_model, d_ff)), "w2": nrm((nl, d_ff, d_model)),
        },
    }


def transformer_forward(params, enc_inputs, dec_inputs, cfg):
    d_model, H = cfg["d_model"], cfg["n_heads"]
    d_k, d_v, n_layers = cfg["d_k"], cfg["d_v"], cfg["n_layers"]
    B, src_len = enc_inputs.shape
    tgt_len = dec_inputs.shape[1]

    enc_pad = (enc_inputs == 0).astype(jnp.float32)         # [B, Ls], 1.0 = PAD key
    dec_pad = (dec_inputs == 0).astype(jnp.float32)         # [B, Lt]

    # ---------------- Encoder (1 launch) ----------------
    enc_emb = jnp.take(params["src_emb"], enc_inputs, axis=0) + pos_encoding(src_len, d_model)[None]
    enc_out2d, enc_attn = run_encoder_stack(enc_emb, enc_pad, params["enc"], H, d_k, d_v)

    # ---------------- Decoder + projection (1 launch) ----------------
    dec_emb = jnp.take(params["tgt_emb"], dec_inputs, axis=0) + pos_encoding(tgt_len, d_model)[None]
    logits, dec_sattn, dec_cattn = run_decoder_stack(
        dec_emb, enc_out2d, dec_pad, enc_pad, params["dec"], params["proj"], H, d_k, d_v)

    enc_self_attns = [enc_attn[i] for i in range(n_layers)]
    dec_self_attns = [dec_sattn[i] for i in range(n_layers)]
    dec_enc_attns = [dec_cattn[i] for i in range(n_layers)]
    return logits, enc_self_attns, dec_self_attns, dec_enc_attns


# ----------------------------------- main -----------------------------------

if __name__ == "__main__":
    cfg = dict(src_vocab=16, tgt_vocab=16, d_model=32, n_layers=2,
               d_ff=64, d_k=8, d_v=8, n_heads=4)
    B, src_len, tgt_len = 2, 8, 8

    root = jax.random.PRNGKey(0)
    k_param, k_enc, k_dec = jax.random.split(root, 3)

    params = init_params(k_param, cfg)

    # token ids in [1, vocab); last position set to PAD (0) to exercise the pad mask
    enc_inputs = jax.random.randint(k_enc, (B, src_len), 1, cfg["src_vocab"], dtype=jnp.int32)
    dec_inputs = jax.random.randint(k_dec, (B, tgt_len), 1, cfg["tgt_vocab"], dtype=jnp.int32)
    enc_inputs = enc_inputs.at[:, -1].set(0)
    dec_inputs = dec_inputs.at[:, -1].set(0)

    fwd = jax.jit(partial(transformer_forward, cfg=cfg))
    logits, enc_attns, dec_self_attns, dec_enc_attns = fwd(params, enc_inputs, dec_inputs)

    jax.block_until_ready((logits, enc_attns, dec_self_attns, dec_enc_attns))

    assert logits.shape == (B * tgt_len, cfg["tgt_vocab"])
    assert len(enc_attns) == cfg["n_layers"]
    assert all(a.shape == (B, cfg["n_heads"], src_len, src_len) for a in enc_attns)
    assert all(a.shape == (B, cfg["n_heads"], tgt_len, tgt_len) for a in dec_self_attns)
    assert all(a.shape == (B, cfg["n_heads"], tgt_len, src_len) for a in dec_enc_attns)
    assert bool(jnp.all(jnp.isfinite(logits)))
    assert all(bool(jnp.all(jnp.isfinite(a))) for a in enc_attns + dec_self_attns + dec_enc_attns)
    print("KERNEL_OK")
</pallas_src>

<mosaic_0001>
module attributes {stable_mosaic.version = 11 : i64} {
  func.func @_encoder_stack_kernel(%arg0: i32, %arg1: memref<16x32xf32, #tpu.memory_space<vmem>>, %arg2: memref<2x8xf32, #tpu.memory_space<vmem>>, %arg3: memref<1x4x32x8xf32, #tpu.memory_space<vmem>>, %arg4: memref<1x4x32x8xf32, #tpu.memory_space<vmem>>, %arg5: memref<1x4x32x8xf32, #tpu.memory_space<vmem>>, %arg6: memref<1x4x8x32xf32, #tpu.memory_space<vmem>>, %arg7: memref<1x32x64xf32, #tpu.memory_space<vmem>>, %arg8: memref<1x64x32xf32, #tpu.memory_space<vmem>>, %arg9: memref<16x32xf32, #tpu.memory_space<vmem>>, %arg10: memref<1x2x4x8x8xf32, #tpu.memory_space<vmem>>) attributes {dimension_semantics = [#tpu.dimension_semantics<arbitrary>], iteration_bounds = array<i64: 2>, scalar_prefetch = 0 : i64, scratch_operands = 0 : i64, tpu.core_type = #tpu.core_type<tc>, window_params = [{pipeline_mode = #tpu.pipeline_mode<synchronous>, transform_indices = @transform_0, window_bounds = array<i64: 16, 32>}, {pipeline_mode = #tpu.pipeline_mode<synchronous>, transform_indices = @transform_1, window_bounds = array<i64: 2, 8>}, {transform_indices = @transform_2, window_bounds = array<i64: 1, 4, 32, 8>}, {transform_indices = @transform_3, window_bounds = array<i64: 1, 4, 32, 8>}, {transform_indices = @transform_4, window_bounds = array<i64: 1, 4, 32, 8>}, {transform_indices = @transform_5, window_bounds = array<i64: 1, 4, 8, 32>}, {transform_indices = @transform_6, window_bounds = array<i64: 1, 32, 64>}, {transform_indices = @transform_7, window_bounds = array<i64: 1, 64, 32>}, {pipeline_mode = #tpu.pipeline_mode<synchronous>, transform_indices = @transform_8, window_bounds = array<i64: 16, 32>}, {transform_indices = @transform_9, window_bounds = array<i64: 1, 2, 4, 8, 8>}]} {
    %c0_i32 = arith.constant 0 : i32
    %0 = arith.cmpi eq, %arg0, %c0_i32 : i32
    %1 = arith.extui %0 : i1 to i32
    %c0_i32_0 = arith.constant 0 : i32
    %2 = arith.cmpi ne, %1, %c0_i32_0 : i32
    scf.if %2 {
      %c0_87 = arith.constant 0 : index
      %c0_88 = arith.constant 0 : index
      %212 = vector.load %arg1[%c0_87, %c0_88] : memref<16x32xf32, #tpu.memory_space<vmem>>, vector<16x32xf32>
      %c0_89 = arith.constant 0 : index
      %c0_90 = arith.constant 0 : index
      %213 = vector.load %arg9[%c0_89, %c0_90] : memref<16x32xf32, #tpu.memory_space<vmem>>, vector<16x32xf32>
      tpu.vector_store %arg9[%c0_89, %c0_90], %212 {strides = array<i32>} : memref<16x32xf32, #tpu.memory_space<vmem>>, vector<16x32xf32>,
    } else {
    }
    %c0 = arith.constant 0 : index
    %c0_1 = arith.constant 0 : index
    %3 = vector.load %arg9[%c0, %c0_1] : memref<16x32xf32, #tpu.memory_space<vmem>>, vector<16x32xf32>
    %c0_2 = arith.constant 0 : index
    %c0_3 = arith.constant 0 : index
    %4 = vector.load %arg2[%c0_2, %c0_3] : memref<2x8xf32, #tpu.memory_space<vmem>>, vector<2x8xf32>
    %5 = vector.shape_cast %4 : vector<2x8xf32> to vector<2x1x8xf32>
    %cst = arith.constant 5.000000e-01 : f32
    %6 = vector.broadcast %cst : f32 to vector<2x1x8xf32>
    %7 = arith.cmpf ogt, %5, %6 : vector<2x1x8xf32>
    %c0_4 = arith.constant 0 : index
    %c0_5 = arith.constant 0 : index
    %c0_6 = arith.constant 0 : index
    %c0_7 = arith.constant 0 : index
    %8 = vector.load %arg3[%c0_4, %c0_5, %c0_6, %c0_7] : memref<1x4x32x8xf32, #tpu.memory_space<vmem>>, vector<1x4x32x8xf32>
    %9 = vector.shape_cast %8 : vector<1x4x32x8xf32> to vector<4x32x8xf32>
    %c0_8 = arith.constant 0 : index
    %c0_9 = arith.constant 0 : index
    %c0_10 = arith.constant 0 : index
    %c0_11 = arith.constant 0 : index
    %10 = vector.load %arg4[%c0_8, %c0_9, %c0_10, %c0_11] : memref<1x4x32x8xf32, #tpu.memory_space<vmem>>, vector<1x4x32x8xf32>
    %11 = vector.shape_cast %10 : vector<1x4x32x8xf32> to vector<4x32x8xf32>
    %c0_12 = arith.constant 0 : index
    %c0_13 = arith.constant 0 : index
    %c0_14 = arith.constant 0 : index
    %c0_15 = arith.constant 0 : index
    %12 = vector.load %arg5[%c0_12, %c0_13, %c0_14, %c0_15] : memref<1x4x32x8xf32, #tpu.memory_space<vmem>>, vector<1x4x32x8xf32>
    %13 = vector.shape_cast %12 : vector<1x4x32x8xf32> to vector<4x32x8xf32>
    %c0_16 = arith.constant 0 : index
    %c0_17 = arith.constant 0 : index
    %c0_18 = arith.constant 0 : index
    %c0_19 = arith.constant 0 : index
    %14 = vector.load %arg6[%c0_16, %c0_17, %c0_18, %c0_19] : memref<1x4x8x32xf32, #tpu.memory_space<vmem>>, vector<1x4x8x32xf32>
    %15 = vector.shape_cast %14 : vector<1x4x8x32xf32> to vector<4x8x32xf32>
    %cst_20 = arith.constant 0.000000e+00 : f32
    %16 = vector.broadcast %cst_20 : f32 to vector<16x32xf32>
    %17 = vector.extract_strided_slice %9 {offsets = [0, 0, 0], sizes = [1, 32, 8], strides = [1, 1, 1]} : vector<4x32x8xf32> to vector<1x32x8xf32>
    %18 = vector.shape_cast %17 : vector<1x32x8xf32> to vector<32x8xf32>
    %cst_21 = arith.constant dense<0.000000e+00> : vector<16x8xf32>
    %19 = tpu.matmul %3, %18, %cst_21 {dimension_numbers = #tpu.dot_dimension_numbers<[1], [0], [0], [1], [0, 0, 1, 1], [], []>} : vector<16x32xf32>, vector<32x8xf32>, vector<16x8xf32> -> vector<16x8xf32>
    %20 = vector.shape_cast %19 : vector<16x8xf32> to vector<2x8x8xf32>
    %21 = vector.extract_strided_slice %11 {offsets = [0, 0, 0], sizes = [1, 32, 8], strides = [1, 1, 1]} : vector<4x32x8xf32> to vector<1x32x8xf32>
    %22 = vector.shape_cast %21 : vector<1x32x8xf32> to vector<32x8xf32>
    %cst_22 = arith.constant dense<0.000000e+00> : vector<16x8xf32>
    %23 = tpu.matmul %3, %22, %cst_22 {dimension_numbers = #tpu.dot_dimension_numbers<[1], [0], [0], [1], [0, 0, 1, 1], [], []>} : vector<16x32xf32>, vector<32x8xf32>, vector<16x8xf32> -> vector<16x8xf32>
    %24 = vector.shape_cast %23 : vector<16x8xf32> to vector<2x8x8xf32>
    %25 = vector.extract_strided_slice %13 {offsets = [0, 0, 0], sizes = [1, 32, 8], strides = [1, 1, 1]} : vector<4x32x8xf32> to vector<1x32x8xf32>
    %26 = vector.shape_cast %25 : vector<1x32x8xf32> to vector<32x8xf32>
    %cst_23 = arith.constant dense<0.000000e+00> : vector<16x8xf32>
    %27 = tpu.matmul %3, %26, %cst_23 {dimension_numbers = #tpu.dot_dimension_numbers<[1], [0], [0], [1], [0, 0, 1, 1], [], []>} : vector<16x32xf32>, vector<32x8xf32>, vector<16x8xf32> -> vector<16x8xf32>
    %28 = vector.shape_cast %27 : vector<16x8xf32> to vector<2x8x8xf32>
    "tpu.trace_start"() <{level = 10 : i32, message = "bqd,bkd->bqk"}> : () -> ()
    %cst_24 = arith.constant dense<0.000000e+00> : vector<2x8x8xf32>
    %29 = tpu.matmul %20, %24, %cst_24 {dimension_numbers = #tpu.dot_dimension_numbers<[2], [2], [1], [1], [0, 0, 0, 1, 1, 1], [0], [0]>} : vector<2x8x8xf32>, vector<2x8x8xf32>, vector<2x8x8xf32> -> vector<2x8x8xf32>
    "tpu.trace_stop"() : () -> ()
    %cst_25 = arith.constant 0.353553385 : f32
    %30 = vector.broadcast %cst_25 : f32 to vector<2x8x8xf32>
    %31 = arith.mulf %29, %30 : vector<2x8x8xf32>
    %cst_26 = arith.constant -1.000000e+09 : f32
    %32 = vector.shape_cast %7 : vector<2x1x8xi1> to vector<2x1x8xi1>
    %33 = vector.broadcast %32 : vector<2x1x8xi1> to vector<2x8x8xi1>
    %34 = vector.broadcast %cst_26 : f32 to vector<2x8x8xf32>
    %35 = arith.select %33, %34, %31 : vector<2x8x8xi1>, vector<2x8x8xf32>
    %cst_27 = arith.constant dense<0xFF800000> : vector<2x8xf32>
    %36 = vector.multi_reduction <maximumf>, %35, %cst_27 [2] : vector<2x8x8xf32> to vector<2x8xf32>
    %37 = vector.shape_cast %36 : vector<2x8xf32> to vector<2x8x1xf32>
    %38 = vector.broadcast %37 : vector<2x8x1xf32> to vector<2x8x8xf32>
    %39 = arith.subf %35, %38 : vector<2x8x8xf32>
    %40 = math.exp %39 : vector<2x8x8xf32>
    %cst_28 = arith.constant dense<0.000000e+00> : vector<2x8xf32>
    %41 = vector.multi_reduction <add>, %40, %cst_28 [2] : vector<2x8x8xf32> to vector<2x8xf32>
    %42 = vector.shape_cast %41 : vector<2x8xf32> to vector<2x8x1xf32>
    %43 = tpu.reciprocal %42 {approx = true} : vector<2x8x1xf32> -> vector<2x8x1xf32>
    %44 = vector.broadcast %43 : vector<2x8x1xf32> to vector<2x8x8xf32>
    %45 = arith.mulf %40, %44 : vector<2x8x8xf32>
    "tpu.trace_start"() <{level = 10 : i32, message = "bqk,bkd->bqd"}> : () -> ()
    %cst_29 = arith.constant dense<0.000000e+00> : vector<2x8x8xf32>
    %46 = tpu.matmul %45, %28, %cst_29 {dimension_numbers = #tpu.dot_dimension_numbers<[2], [1], [1], [2], [0, 0, 0, 1, 1, 2], [0], [0]>} : vector<2x8x8xf32>, vector<2x8x8xf32>, vector<2x8x8xf32> -> vector<2x8x8xf32>
    "tpu.trace_stop"() : () -> ()
    %47 = vector.shape_cast %46 : vector<2x8x8xf32> to vector<16x8xf32>
    %48 = vector.extract_strided_slice %15 {offsets = [0, 0, 0], sizes = [1, 8, 32], strides = [1, 1, 1]} : vector<4x8x32xf32> to vector<1x8x32xf32>
    %49 = vector.shape_cast %48 : vector<1x8x32xf32> to vector<8x32xf32>
    %cst_30 = arith.constant dense<0.000000e+00> : vector<16x32xf32>
    %50 = tpu.matmul %47, %49, %cst_30 {dimension_numbers = #tpu.dot_dimension_numbers<[1], [0], [0], [1], [0, 0, 1, 1], [], []>} : vector<16x8xf32>, vector<8x32xf32>, vector<16x32xf32> -> vector<16x32xf32>
    %51 = arith.addf %16, %50 : vector<16x32xf32>
    %52 = vector.extract_strided_slice %9 {offsets = [1, 0, 0], sizes = [1, 32, 8], strides = [1, 1, 1]} : vector<4x32x8xf32> to vector<1x32x8xf32>
    %53 = vector.shape_cast %52 : vector<1x32x8xf32> to vector<32x8xf32>
    %cst_31 = arith.constant dense<0.000000e+00> : vector<16x8xf32>
    %54 = tpu.matmul %3, %53, %cst_31 {dimension_numbers = #tpu.dot_dimension_numbers<[1], [0], [0], [1], [0, 0, 1, 1], [], []>} : vector<16x32xf32>, vector<32x8xf32>, vector<16x8xf32> -> vector<16x8xf32>
    %55 = vector.shape_cast %54 : vector<16x8xf32> to vector<2x8x8xf32>
    %56 = vector.extract_strided_slice %11 {offsets = [1, 0, 0], sizes = [1, 32, 8], strides = [1, 1, 1]} : vector<4x32x8xf32> to vector<1x32x8xf32>
    %57 = vector.shape_cast %56 : vector<1x32x8xf32> to vector<32x8xf32>
    %cst_32 = arith.constant dense<0.000000e+00> : vector<16x8xf32>
    %58 = tpu.matmul %3, %57, %cst_32 {dimension_numbers = #tpu.dot_dimension_numbers<[1], [0], [0], [1], [0, 0, 1, 1], [], []>} : vector<16x32xf32>, vector<32x8xf32>, vector<16x8xf32> -> vector<16x8xf32>
    %59 = vector.shape_cast %58 : vector<16x8xf32> to vector<2x8x8xf32>
    %60 = vector.extract_strided_slice %13 {offsets = [1, 0, 0], sizes = [1, 32, 8], strides = [1, 1, 1]} : vector<4x32x8xf32> to vector<1x32x8xf32>
    %61 = vector.shape_cast %60 : vector<1x32x8xf32> to vector<32x8xf32>
    %cst_33 = arith.constant dense<0.000000e+00> : vector<16x8xf32>
    %62 = tpu.matmul %3, %61, %cst_33 {dimension_numbers = #tpu.dot_dimension_numbers<[1], [0], [0], [1], [0, 0, 1, 1], [], []>} : vector<16x32xf32>, vector<32x8xf32>, vector<16x8xf32> -> vector<16x8xf32>
    %63 = vector.shape_cast %62 : vector<16x8xf32> to vector<2x8x8xf32>
    "tpu.trace_start"() <{level = 10 : i32, message = "bqd,bkd->bqk"}> : () -> ()
    %cst_34 = arith.constant dense<0.000000e+00> : vector<2x8x8xf32>
    %64 = tpu.matmul %55, %59, %cst_34 {dimension_numbers = #tpu.dot_dimension_numbers<[2], [2], [1], [1], [0, 0, 0, 1, 1, 1], [0], [0]>} : vector<2x8x8xf32>, vector<2x8x8xf32>, vector<2x8x8xf32> -> vector<2x8x8xf32>
    "tpu.trace_stop"() : () -> ()
    %cst_35 = arith.constant 0.353553385 : f32
    %65 = vector.broadcast %cst_35 : f32 to vector<2x8x8xf32>
    %66 = arith.mulf %64, %65 : vector<2x8x8xf32>
    %cst_36 = arith.constant -1.000000e+09 : f32
    %67 = vector.shape_cast %7 : vector<2x1x8xi1> to vector<2x1x8xi1>
    %68 = vector.broadcast %67 : vector<2x1x8xi1> to vector<2x8x8xi1>
    %69 = vector.broadcast %cst_36 : f32 to vector<2x8x8xf32>
    %70 = arith.select %68, %69, %66 : vector<2x8x8xi1>, vector<2x8x8xf32>
    %cst_37 = arith.constant dense<0xFF800000> : vector<2x8xf32>
    %71 = vector.multi_reduction <maximumf>, %70, %cst_37 [2] : vector<2x8x8xf32> to vector<2x8xf32>
    %72 = vector.shape_cast %71 : vector<2x8xf32> to vector<2x8x1xf32>
    %73 = vector.broadcast %72 : vector<2x8x1xf32> to vector<2x8x8xf32>
    %74 = arith.subf %70, %73 : vector<2x8x8xf32>
    %75 = math.exp %74 : vector<2x8x8xf32>
    %cst_38 = arith.constant dense<0.000000e+00> : vector<2x8xf32>
    %76 = vector.multi_reduction <add>, %75, %cst_38 [2] : vector<2x8x8xf32> to vector<2x8xf32>
    %77 = vector.shape_cast %76 : vector<2x8xf32> to vector<2x8x1xf32>
    %78 = tpu.reciprocal %77 {approx = true} : vector<2x8x1xf32> -> vector<2x8x1xf32>
    %79 = vector.broadcast %78 : vector<2x8x1xf32> to vector<2x8x8xf32>
    %80 = arith.mulf %75, %79 : vector<2x8x8xf32>
    "tpu.trace_start"() <{level = 10 : i32, message = "bqk,bkd->bqd"}> : () -> ()
    %cst_39 = arith.constant dense<0.000000e+00> : vector<2x8x8xf32>
    %81 = tpu.matmul %80, %63, %cst_39 {dimension_numbers = #tpu.dot_dimension_numbers<[2], [1], [1], [2], [0, 0, 0, 1, 1, 2], [0], [0]>} : vector<2x8x8xf32>, vector<2x8x8xf32>, vector<2x8x8xf32> -> vector<2x8x8xf32>
    "tpu.trace_stop"() : () -> ()
    %82 = vector.shape_cast %81 : vector<2x8x8xf32> to vector<16x8xf32>
    %83 = vector.extract_strided_slice %15 {offsets = [1, 0, 0], sizes = [1, 8, 32], strides = [1, 1, 1]} : vector<4x8x32xf32> to vector<1x8x32xf32>
    %84 = vector.shape_cast %83 : vector<1x8x32xf32> to vector<8x32xf32>
    %cst_40 = arith.constant dense<0.000000e+00> : vector<16x32xf32>
    %85 = tpu.matmul %82, %84, %cst_40 {dimension_numbers = #tpu.dot_dimension_numbers<[1], [0], [0], [1], [0, 0, 1, 1], [], []>} : vector<16x8xf32>, vector<8x32xf32>, vector<16x32xf32> -> vector<16x32xf32>
    %86 = arith.addf %51, %85 : vector<16x32xf32>
    %87 = vector.extract_strided_slice %9 {offsets = [2, 0, 0], sizes = [1, 32, 8], strides = [1, 1, 1]} : vector<4x32x8xf32> to vector<1x32x8xf32>
    %88 = vector.shape_cast %87 : vector<1x32x8xf32> to vector<32x8xf32>
    %cst_41 = arith.constant dense<0.000000e+00> : vector<16x8xf32>
    %89 = tpu.matmul %3, %88, %cst_41 {dimension_numbers = #tpu.dot_dimension_numbers<[1], [0], [0], [1], [0, 0, 1, 1], [], []>} : vector<16x32xf32>, vector<32x8xf32>, vector<16x8xf32> -> vector<16x8xf32>
    %90 = vector.shape_cast %89 : vector<16x8xf32> to vector<2x8x8xf32>
    %91 = vector.extract_strided_slice %11 {offsets = [2, 0, 0], sizes = [1, 32, 8], strides = [1, 1, 1]} : vector<4x32x8xf32> to vector<1x32x8xf32>
    %92 = vector.shape_cast %91 : vector<1x32x8xf32> to vector<32x8xf32>
    %cst_42 = arith.constant dense<0.000000e+00> : vector<16x8xf32>
    %93 = tpu.matmul %3, %92, %cst_42 {dimension_numbers = #tpu.dot_dimension_numbers<[1], [0], [0], [1], [0, 0, 1, 1], [], []>} : vector<16x32xf32>, vector<32x8xf32>, vector<16x8xf32> -> vector<16x8xf32>
    %94 = vector.shape_cast %93 : vector<16x8xf32> to vector<2x8x8xf32>
    %95 = vector.extract_strided_slice %13 {offsets = [2, 0, 0], sizes = [1, 32, 8], strides = [1, 1, 1]} : vector<4x32x8xf32> to vector<1x32x8xf32>
    %96 = vector.shape_cast %95 : vector<1x32x8xf32> to vector<32x8xf32>
    %cst_43 = arith.constant dense<0.000000e+00> : vector<16x8xf32>
    %97 = tpu.matmul %3, %96, %cst_43 {dimension_numbers = #tpu.dot_dimension_numbers<[1], [0], [0], [1], [0, 0, 1, 1], [], []>} : vector<16x32xf32>, vector<32x8xf32>, vector<16x8xf32> -> vector<16x8xf32>
    %98 = vector.shape_cast %97 : vector<16x8xf32> to vector<2x8x8xf32>
    "tpu.trace_start"() <{level = 10 : i32, message = "bqd,bkd->bqk"}> : () -> ()
    %cst_44 = arith.constant dense<0.000000e+00> : vector<2x8x8xf32>
    %99 = tpu.matmul %90, %94, %cst_44 {dimension_numbers = #tpu.dot_dimension_numbers<[2], [2], [1], [1], [0, 0, 0, 1, 1, 1], [0], [0]>} : vector<2x8x8xf32>, vector<2x8x8xf32>, vector<2x8x8xf32> -> vector<2x8x8xf32>
    "tpu.trace_stop"() : () -> ()
    %cst_45 = arith.constant 0.353553385 : f32
    %100 = vector.broadcast %cst_45 : f32 to vector<2x8x8xf32>
    %101 = arith.mulf %99, %100 : vector<2x8x8xf32>
    %cst_46 = arith.constant -1.000000e+09 : f32
    %102 = vector.shape_cast %7 : vector<2x1x8xi1> to vector<2x1x8xi1>
    %103 = vector.broadcast %102 : vector<2x1x8xi1> to vector<2x8x8xi1>
    %104 = vector.broadcast %cst_46 : f32 to vector<2x8x8xf32>
    %105 = arith.select %103, %104, %101 : vector<2x8x8xi1>, vector<2x8x8xf32>
    %cst_47 = arith.constant dense<0xFF800000> : vector<2x8xf32>
    %106 = vector.multi_reduction <maximumf>, %105, %cst_47 [2] : vector<2x8x8xf32> to vector<2x8xf32>
    %107 = vector.shape_cast %106 : vector<2x8xf32> to vector<2x8x1xf32>
    %108 = vector.broadcast %107 : vector<2x8x1xf32> to vector<2x8x8xf32>
    %109 = arith.subf %105, %108 : vector<2x8x8xf32>
    %110 = math.exp %109 : vector<2x8x8xf32>
    %cst_48 = arith.constant dense<0.000000e+00> : vector<2x8xf32>
    %111 = vector.multi_reduction <add>, %110, %cst_48 [2] : vector<2x8x8xf32> to vector<2x8xf32>
    %112 = vector.shape_cast %111 : vector<2x8xf32> to vector<2x8x1xf32>
    %113 = tpu.reciprocal %112 {approx = true} : vector<2x8x1xf32> -> vector<2x8x1xf32>
    %114 = vector.broadcast %113 : vector<2x8x1xf32> to vector<2x8x8xf32>
    %115 = arith.mulf %110, %114 : vector<2x8x8xf32>
    "tpu.trace_start"() <{level = 10 : i32, message = "bqk,bkd->bqd"}> : () -> ()
    %cst_49 = arith.constant dense<0.000000e+00> : vector<2x8x8xf32>
    %116 = tpu.matmul %115, %98, %cst_49 {dimension_numbers = #tpu.dot_dimension_numbers<[2], [1], [1], [2], [0, 0, 0, 1, 1, 2], [0], [0]>} : vector<2x8x8xf32>, vector<2x8x8xf32>, vector<2x8x8xf32> -> vector<2x8x8xf32>
    "tpu.trace_stop"() : () -> ()
    %117 = vector.shape_cast %116 : vector<2x8x8xf32> to vector<16x8xf32>
    %118 = vector.extract_strided_slice %15 {offsets = [2, 0, 0], sizes = [1, 8, 32], strides = [1, 1, 1]} : vector<4x8x32xf32> to vector<1x8x32xf32>
    %119 = vector.shape_cast %118 : vector<1x8x32xf32> to vector<8x32xf32>
    %cst_50 = arith.constant dense<0.000000e+00> : vector<16x32xf32>
    %120 = tpu.matmul %117, %119, %cst_50 {dimension_numbers = #tpu.dot_dimension_numbers<[1], [0], [0], [1], [0, 0, 1, 1], [], []>} : vector<16x8xf32>, vector<8x32xf32>, vector<16x32xf32> -> vector<16x32xf32>
    %121 = arith.addf %86, %120 : vector<16x32xf32>
    %122 = vector.extract_strided_slice %9 {offsets = [3, 0, 0], sizes = [1, 32, 8], strides = [1, 1, 1]} : vector<4x32x8xf32> to vector<1x32x8xf32>
    %123 = vector.shape_cast %122 : vector<1x32x8xf32> to vector<32x8xf32>
    %cst_51 = arith.constant dense<0.000000e+00> : vector<16x8xf32>
    %124 = tpu.matmul %3, %123, %cst_51 {dimension_numbers = #tpu.dot_dimension_numbers<[1], [0], [0], [1], [0, 0, 1, 1], [], []>} : vector<16x32xf32>, vector<32x8xf32>, vector<16x8xf32> -> vector<16x8xf32>
    %125 = vector.shape_cast %124 : vector<16x8xf32> to vector<2x8x8xf32>
    %126 = vector.extract_strided_slice %11 {offsets = [3, 0, 0], sizes = [1, 32, 8], strides = [1, 1, 1]} : vector<4x32x8xf32> to vector<1x32x8xf32>
    %127 = vector.shape_cast %126 : vector<1x32x8xf32> to vector<32x8xf32>
    %cst_52 = arith.constant dense<0.000000e+00> : vector<16x8xf32>
    %128 = tpu.matmul %3, %127, %cst_52 {dimension_numbers = #tpu.dot_dimension_numbers<[1], [0], [0], [1], [0, 0, 1, 1], [], []>} : vector<16x32xf32>, vector<32x8xf32>, vector<16x8xf32> -> vector<16x8xf32>
    %129 = vector.shape_cast %128 : vector<16x8xf32> to vector<2x8x8xf32>
    %130 = vector.extract_strided_slice %13 {offsets = [3, 0, 0], sizes = [1, 32, 8], strides = [1, 1, 1]} : vector<4x32x8xf32> to vector<1x32x8xf32>
    %131 = vector.shape_cast %130 : vector<1x32x8xf32> to vector<32x8xf32>
    %cst_53 = arith.constant dense<0.000000e+00> : vector<16x8xf32>
    %132 = tpu.matmul %3, %131, %cst_53 {dimension_numbers = #tpu.dot_dimension_numbers<[1], [0], [0], [1], [0, 0, 1, 1], [], []>} : vector<16x32xf32>, vector<32x8xf32>, vector<16x8xf32> -> vector<16x8xf32>
    %133 = vector.shape_cast %132 : vector<16x8xf32> to vector<2x8x8xf32>
    "tpu.trace_start"() <{level = 10 : i32, message = "bqd,bkd->bqk"}> : () -> ()
    %cst_54 = arith.constant dense<0.000000e+00> : vector<2x8x8xf32>
    %134 = tpu.matmul %125, %129, %cst_54 {dimension_numbers = #tpu.dot_dimension_numbers<[2], [2], [1], [1], [0, 0, 0, 1, 1, 1], [0], [0]>} : vector<2x8x8xf32>, vector<2x8x8xf32>, vector<2x8x8xf32> -> vector<2x8x8xf32>
    "tpu.trace_stop"() : () -> ()
    %cst_55 = arith.constant 0.353553385 : f32
    %135 = vector.broadcast %cst_55 : f32 to vector<2x8x8xf32>
    %136 = arith.mulf %134, %135 : vector<2x8x8xf32>
    %cst_56 = arith.constant -1.000000e+09 : f32
    %137 = vector.shape_cast %7 : vector<2x1x8xi1> to vector<2x1x8xi1>
    %138 = vector.broadcast %137 : vector<2x1x8xi1> to vector<2x8x8xi1>
    %139 = vector.broadcast %cst_56 : f32 to vector<2x8x8xf32>
    %140 = arith.select %138, %139, %136 : vector<2x8x8xi1>, vector<2x8x8xf32>
    %cst_57 = arith.constant dense<0xFF800000> : vector<2x8xf32>
    %141 = vector.multi_reduction <maximumf>, %140, %cst_57 [2] : vector<2x8x8xf32> to vector<2x8xf32>
    %142 = vector.shape_cast %141 : vector<2x8xf32> to vector<2x8x1xf32>
    %143 = vector.broadcast %142 : vector<2x8x1xf32> to vector<2x8x8xf32>
    %144 = arith.subf %140, %143 : vector<2x8x8xf32>
    %145 = math.exp %144 : vector<2x8x8xf32>
    %cst_58 = arith.constant dense<0.000000e+00> : vector<2x8xf32>
    %146 = vector.multi_reduction <add>, %145, %cst_58 [2] : vector<2x8x8xf32> to vector<2x8xf32>
    %147 = vector.shape_cast %146 : vector<2x8xf32> to vector<2x8x1xf32>
    %148 = tpu.reciprocal %147 {approx = true} : vector<2x8x1xf32> -> vector<2x8x1xf32>
    %149 = vector.broadcast %148 : vector<2x8x1xf32> to vector<2x8x8xf32>
    %150 = arith.mulf %145, %149 : vector<2x8x8xf32>
    "tpu.trace_start"() <{level = 10 : i32, message = "bqk,bkd->bqd"}> : () -> ()
    %cst_59 = arith.constant dense<0.000000e+00> : vector<2x8x8xf32>
    %151 = tpu.matmul %150, %133, %cst_59 {dimension_numbers = #tpu.dot_dimension_numbers<[2], [1], [1], [2], [0, 0, 0, 1, 1, 2], [0], [0]>} : vector<2x8x8xf32>, vector<2x8x8xf32>, vector<2x8x8xf32> -> vector<2x8x8xf32>
    "tpu.trace_stop"() : () -> ()
    %152 = vector.shape_cast %151 : vector<2x8x8xf32> to vector<16x8xf32>
    %153 = vector.extract_strided_slice %15 {offsets = [3, 0, 0], sizes = [1, 8, 32], strides = [1, 1, 1]} : vector<4x8x32xf32> to vector<1x8x32xf32>
    %154 = vector.shape_cast %153 : vector<1x8x32xf32> to vector<8x32xf32>
    %cst_60 = arith.constant dense<0.000000e+00> : vector<16x32xf32>
    %155 = tpu.matmul %152, %154, %cst_60 {dimension_numbers = #tpu.dot_dimension_numbers<[1], [0], [0], [1], [0, 0, 1, 1], [], []>} : vector<16x8xf32>, vector<8x32xf32>, vector<16x32xf32> -> vector<16x32xf32>
    %156 = arith.addf %121, %155 : vector<16x32xf32>
    %157 = vector.shape_cast %45 : vector<2x8x8xf32> to vector<2x1x8x8xf32>
    %158 = vector.shape_cast %80 : vector<2x8x8xf32> to vector<2x1x8x8xf32>
    %159 = vector.shape_cast %115 : vector<2x8x8xf32> to vector<2x1x8x8xf32>
    %160 = vector.shape_cast %150 : vector<2x8x8xf32> to vector<2x1x8x8xf32>
    %161 = tpu.concatenate %157, %158, %159, %160 in 1 : vector<2x1x8x8xf32>, vector<2x1x8x8xf32>, vector<2x1x8x8xf32>, vector<2x1x8x8xf32> -> vector<2x4x8x8xf32>
    %162 = arith.addf %156, %3 : vector<16x32xf32>
    %cst_61 = arith.constant dense<0.000000e+00> : vector<16xf32>
    %163 = vector.multi_reduction <add>, %162, %cst_61 [1] : vector<16x32xf32> to vector<16xf32>
    %164 = vector.shape_cast %163 : vector<16xf32> to vector<16x1xf32>
    %cst_62 = arith.constant 3.200000e+01 : f32
    %165 = vector.broadcast %cst_62 : f32 to vector<16x1xf32>
    %166 = arith.divf %164, %165 : vector<16x1xf32>
    %167 = vector.broadcast %166 : vector<16x1xf32> to vector<16x32xf32>
    %168 = arith.subf %162, %167 : vector<16x32xf32>
    %169 = arith.mulf %168, %168 : vector<16x32xf32>
    %cst_63 = arith.constant dense<0.000000e+00> : vector<16xf32>
    %170 = vector.multi_reduction <add>, %169, %cst_63 [1] : vector<16x32xf32> to vector<16xf32>
    %171 = vector.shape_cast %170 : vector<16xf32> to vector<16x1xf32>
    %cst_64 = arith.constant 3.200000e+01 : f32
    %172 = vector.broadcast %cst_64 : f32 to vector<16x1xf32>
    %173 = arith.divf %171, %172 : vector<16x1xf32>
    %174 = vector.broadcast %166 : vector<16x1xf32> to vector<16x32xf32>
    %175 = arith.subf %162, %174 : vector<16x32xf32>
    %cst_65 = arith.constant 9.99999974E-6 : f32
    %176 = vector.broadcast %cst_65 : f32 to vector<16x1xf32>
    %177 = arith.addf %173, %176 : vector<16x1xf32>
    %178 = math.rsqrt %177 : vector<16x1xf32>
    %179 = vector.broadcast %178 : vector<16x1xf32> to vector<16x32xf32>
    %180 = arith.mulf %175, %179 : vector<16x32xf32>
    %c0_66 = arith.constant 0 : index
    %c0_67 = arith.constant 0 : index
    %c0_68 = arith.constant 0 : index
    %c0_69 = arith.constant 0 : index
    %c0_70 = arith.constant 0 : index
    %181 = vector.load %arg10[%c0_66, %c0_67, %c0_68, %c0_69, %c0_70] : memref<1x2x4x8x8xf32, #tpu.memory_space<vmem>>, vector<1x2x4x8x8xf32>
    %182 = vector.shape_cast %181 : vector<1x2x4x8x8xf32> to vector<2x4x8x8xf32>
    %183 = vector.shape_cast %161 : vector<2x4x8x8xf32> to vector<1x2x4x8x8xf32>
    tpu.vector_store %arg10[%c0_66, %c0_67, %c0_68, %c0_69, %c0_70], %183 {strides = array<i32>} : memref<1x2x4x8x8xf32, #tpu.memory_space<vmem>>, vector<1x2x4x8x8xf32>,
    %c0_71 = arith.constant 0 : index
    %c0_72 = arith.constant 0 : index
    %c0_73 = arith.constant 0 : index
    %184 = vector.load %arg7[%c0_71, %c0_72, %c0_73] : memref<1x32x64xf32, #tpu.memory_space<vmem>>, vector<1x32x64xf32>
    %185 = vector.shape_cast %184 : vector<1x32x64xf32> to vector<32x64xf32>
    %cst_74 = arith.constant dense<0.000000e+00> : vector<16x64xf32>
    %186 = tpu.matmul %180, %185, %cst_74 {dimension_numbers = #tpu.dot_dimension_numbers<[1], [0], [0], [1], [0, 0, 1, 1], [], []>} : vector<16x32xf32>, vector<32x64xf32>, vector<16x64xf32> -> vector<16x64xf32>
    %cst_75 = arith.constant 0.000000e+00 : f32
    %187 = vector.broadcast %cst_75 : f32 to vector<16x64xf32>
    %188 = arith.maximumf %186, %187 : vector<16x64xf32>
    %c0_76 = arith.constant 0 : index
    %c0_77 = arith.constant 0 : index
    %c0_78 = arith.constant 0 : index
    %189 = vector.load %arg8[%c0_76, %c0_77, %c0_78] : memref<1x64x32xf32, #tpu.memory_space<vmem>>, vector<1x64x32xf32>
    %190 = vector.shape_cast %189 : vector<1x64x32xf32> to vector<64x32xf32>
    %cst_79 = arith.constant dense<0.000000e+00> : vector<16x32xf32>
    %191 = tpu.matmul %188, %190, %cst_79 {dimension_numbers = #tpu.dot_dimension_numbers<[1], [0], [0], [1], [0, 0, 1, 1], [], []>} : vector<16x64xf32>, vector<64x32xf32>, vector<16x32xf32> -> vector<16x32xf32>
    %192 = arith.addf %191, %180 : vector<16x32xf32>
    %cst_80 = arith.constant dense<0.000000e+00> : vector<16xf32>
    %193 = vector.multi_reduction <add>, %192, %cst_80 [1] : vector<16x32xf32> to vector<16xf32>
    %194 = vector.shape_cast %193 : vector<16xf32> to vector<16x1xf32>
    %cst_81 = arith.constant 3.200000e+01 : f32
    %195 = vector.broadcast %cst_81 : f32 to vector<16x1xf32>
    %196 = arith.divf %194, %195 : vector<16x1xf32>
    %197 = vector.broadcast %196 : vector<16x1xf32> to vector<16x32xf32>
    %198 = arith.subf %192, %197 : vector<16x32xf32>
    %199 = arith.mulf %198, %198 : vector<16x32xf32>
    %cst_82 = arith.constant dense<0.000000e+00> : vector<16xf32>
    %200 = vector.multi_reduction <add>, %199, %cst_82 [1] : vector<16x32xf32> to vector<16xf32>
    %201 = vector.shape_cast %200 : vector<16xf32> to vector<16x1xf32>
    %cst_83 = arith.constant 3.200000e+01 : f32
    %202 = vector.broadcast %cst_83 : f32 to vector<16x1xf32>
    %203 = arith.divf %201, %202 : vector<16x1xf32>
    %204 = vector.broadcast %196 : vector<16x1xf32> to vector<16x32xf32>
    %205 = arith.subf %192, %204 : vector<16x32xf32>
    %cst_84 = arith.constant 9.99999974E-6 : f32
    %206 = vector.broadcast %cst_84 : f32 to vector<16x1xf32>
    %207 = arith.addf %203, %206 : vector<16x1xf32>
    %208 = math.rsqrt %207 : vector<16x1xf32>
    %209 = vector.broadcast %208 : vector<16x1xf32> to vector<16x32xf32>
    %210 = arith.mulf %205, %209 : vector<16x32xf32>
    %c0_85 = arith.constant 0 : index
    %c0_86 = arith.constant 0 : index
    %211 = vector.load %arg9[%c0_85, %c0_86] : memref<16x32xf32, #tpu.memory_space<vmem>>, vector<16x32xf32>
    tpu.vector_store %arg9[%c0_85, %c0_86], %210 {strides = array<i32>} : memref<16x32xf32, #tpu.memory_space<vmem>>, vector<16x32xf32>,
    return
  }
  func.func @transform_0(%arg0: i32) -> (i32, i32) {
    %c0_i32 = arith.constant 0 : i32
    %c0_i32_0 = arith.constant 0 : i32
    %c0_i32_1 = arith.constant 0 : i32
    return %c0_i32, %c0_i32_0 : i32, i32
  }
  func.func @transform_1(%arg0: i32) -> (i32, i32) {
    %c0_i32 = arith.constant 0 : i32
    %c0_i32_0 = arith.constant 0 : i32
    %c0_i32_1 = arith.constant 0 : i32
    return %c0_i32, %c0_i32_0 : i32, i32
  }
  func.func @transform_2(%arg0: i32) -> (i32, i32, i32, i32) {
    %c0_i32 = arith.constant 0 : i32
    %c0_i32_0 = arith.constant 0 : i32
    %c0_i32_1 = arith.constant 0 : i32
    %c0_i32_2 = arith.constant 0 : i32
    return %arg0, %c0_i32, %c0_i32_0, %c0_i32_1 : i32, i32, i32, i32
  }
  func.func @transform_3(%arg0: i32) -> (i32, i32, i32, i32) {
    %c0_i32 = arith.constant 0 : i32
    %c0_i32_0 = arith.constant 0 : i32
    %c0_i32_1 = arith.constant 0 : i32
    %c0_i32_2 = arith.constant 0 : i32
    return %arg0, %c0_i32, %c0_i32_0, %c0_i32_1 : i32, i32, i32, i32
  }
  func.func @transform_4(%arg0: i32) -> (i32, i32, i32, i32) {
    %c0_i32 = arith.constant 0 : i32
    %c0_i32_0 = arith.constant 0 : i32
    %c0_i32_1 = arith.constant 0 : i32
    %c0_i32_2 = arith.constant 0 : i32
    return %arg0, %c0_i32, %c0_i32_0, %c0_i32_1 : i32, i32, i32, i32
  }
  func.func @transform_5(%arg0: i32) -> (i32, i32, i32, i32) {
    %c0_i32 = arith.constant 0 : i32
    %c0_i32_0 = arith.constant 0 : i32
    %c0_i32_1 = arith.constant 0 : i32
    %c0_i32_2 = arith.constant 0 : i32
    return %arg0, %c0_i32, %c0_i32_0, %c0_i32_1 : i32, i32, i32, i32
  }
  func.func @transform_6(%arg0: i32) -> (i32, i32, i32) {
    %c0_i32 = arith.constant 0 : i32
    %c0_i32_0 = arith.constant 0 : i32
    %c0_i32_1 = arith.constant 0 : i32
    return %arg0, %c0_i32, %c0_i32_0 : i32, i32, i32
  }
  func.func @transform_7(%arg0: i32) -> (i32, i32, i32) {
    %c0_i32 = arith.constant 0 : i32
    %c0_i32_0 = arith.constant 0 : i32
    %c0_i32_1 = arith.constant 0 : i32
    return %arg0, %c0_i32, %c0_i32_0 : i32, i32, i32
  }
  func.func @transform_8(%arg0: i32) -> (i32, i32) {
    %c0_i32 = arith.constant 0 : i32
    %c0_i32_0 = arith.constant 0 : i32
    %c0_i32_1 = arith.constant 0 : i32
    return %c0_i32, %c0_i32_0 : i32, i32
  }
  func.func @transform_9(%arg0: i32) -> (i32, i32, i32, i32, i32) {
    %c0_i32 = arith.constant 0 : i32
    %c0_i32_0 = arith.constant 0 : i32
    %c0_i32_1 = arith.constant 0 : i32
    %c0_i32_2 = arith.constant 0 : i32
    %c0_i32_3 = arith.constant 0 : i32
    return %arg0, %c0_i32, %c0_i32_0, %c0_i32_1, %c0_i32_2 : i32, i32, i32, i32, i32
  }
}

module attributes {stable_mosaic.version = 11 : i64} {
  func.func @_decoder_stack_kernel(%arg0: i32, %arg1: memref<16x32xf32, #tpu.memory_space<vmem>>, %arg2: memref<16x32xf32, #tpu.memory_space<vmem>>, %arg3: memref<2x8xf32, #tpu.memory_space<vmem>>, %arg4: memref<2x8xf32, #tpu.memory_space<vmem>>, %arg5: memref<1x4x32x8xf32, #tpu.memory_space<vmem>>, %arg6: memref<1x4x32x8xf32, #tpu.memory_space<vmem>>, %arg7: memref<1x4x32x8xf32, #tpu.memory_space<vmem>>, %arg8: memref<1x4x8x32xf32, #tpu.memory_space<vmem>>, %arg9: memref<1x4x32x8xf32, #tpu.memory_space<vmem>>, %arg10: memref<1x4x32x8xf32, #tpu.memory_space<vmem>>, %arg11: memref<1x4x32x8xf32, #tpu.memory_space<vmem>>, %arg12: memref<1x4x8x32xf32, #tpu.memory_space<vmem>>, %arg13: memref<1x32x64xf32, #tpu.memory_space<vmem>>, %arg14: memref<1x64x32xf32, #tpu.memory_space<vmem>>, %arg15: memref<32x16xf32, #tpu.memory_space<vmem>>, %arg16: memref<16x16xf32, #tpu.memory_space<vmem>>, %arg17: memref<1x2x4x8x8xf32, #tpu.memory_space<vmem>>, %arg18: memref<1x2x4x8x8xf32, #tpu.memory_space<vmem>>, %arg19: memref<16x32xf32, #tpu.memory_space<vmem>>) attributes {dimension_semantics = [#tpu.dimension_semantics<arbitrary>], iteration_bounds = array<i64: 2>, scalar_prefetch = 0 : i64, scratch_operands = 1 : i64, tpu.core_type = #tpu.core_type<tc>, window_params = [{pipeline_mode = #tpu.pipeline_mode<synchronous>, transform_indices = @transform_0, window_bounds = array<i64: 16, 32>}, {pipeline_mode = #tpu.pipeline_mode<synchronous>, transform_indices = @transform_1, window_bounds = array<i64: 16, 32>}, {pipeline_mode = #tpu.pipeline_mode<synchronous>, transform_indices = @transform_2, window_bounds = array<i64: 2, 8>}, {pipeline_mode = #tpu.pipeline_mode<synchronous>, transform_indices = @transform_3, window_bounds = array<i64: 2, 8>}, {transform_indices = @transform_4, window_bounds = array<i64: 1, 4, 32, 8>}, {transform_indices = @transform_5, window_bounds = array<i64: 1, 4, 32, 8>}, {transform_indices = @transform_6, window_bounds = array<i64: 1, 4, 32, 8>}, {transform_indices = @transform_7, window_bounds = array<i64: 1, 4, 8, 32>}, {transform_indices = @transform_8, window_bounds = array<i64: 1, 4, 32, 8>}, {transform_indices = @transform_9, window_bounds = array<i64: 1, 4, 32, 8>}, {transform_indices = @transform_10, window_bounds = array<i64: 1, 4, 32, 8>}, {transform_indices = @transform_11, window_bounds = array<i64: 1, 4, 8, 32>}, {transform_indices = @transform_12, window_bounds = array<i64: 1, 32, 64>}, {transform_indices = @transform_13, window_bounds = array<i64: 1, 64, 32>}, {pipeline_mode = #tpu.pipeline_mode<synchronous>, transform_indices = @transform_14, window_bounds = array<i64: 32, 16>}, {pipeline_mode = #tpu.pipeline_mode<synchronous>, transform_indices = @transform_15, window_bounds = array<i64: 16, 16>}, {transform_indices = @transform_16, window_bounds = array<i64: 1, 2, 4, 8, 8>}, {transform_indices = @transform_17, window_bounds = array<i64: 1, 2, 4, 8, 8>}]} {
    %c0_i32 = arith.constant 0 : i32
    %0 = arith.cmpi eq, %arg0, %c0_i32 : i32
    %1 = arith.extui %0 : i1 to i32
    %c0_i32_0 = arith.constant 0 : i32
    %2 = arith.cmpi ne, %1, %c0_i32_0 : i32
    scf.if %2 {
      %c0_160 = arith.constant 0 : index
      %c0_161 = arith.constant 0 : index
      %395 = vector.load %arg1[%c0_160, %c0_161] : memref<16x32xf32, #tpu.memory_space<vmem>>, vector<16x32xf32>
      %c0_162 = arith.constant 0 : index
      %c0_163 = arith.constant 0 : index
      %396 = vector.load %arg19[%c0_162, %c0_163] : memref<16x32xf32, #tpu.memory_space<vmem>>, vector<16x32xf32>
      tpu.vector_store %arg19[%c0_162, %c0_163], %395 {strides = array<i32>} : memref<16x32xf32, #tpu.memory_space<vmem>>, vector<16x32xf32>,
    } else {
    }
    %c0 = arith.constant 0 : index
    %c0_1 = arith.constant 0 : index
    %3 = vector.load %arg19[%c0, %c0_1] : memref<16x32xf32, #tpu.memory_space<vmem>>, vector<16x32xf32>
    %c0_2 = arith.constant 0 : index
    %c0_3 = arith.constant 0 : index
    %4 = vector.load %arg2[%c0_2, %c0_3] : memref<16x32xf32, #tpu.memory_space<vmem>>, vector<16x32xf32>
    %5 = tpu.iota {dimensions = array<i32: 0>} : vector<8x8xi32>
    %6 = tpu.iota {dimensions = array<i32: 1>} : vector<8x8xi32>
    %c0_4 = arith.constant 0 : index
    %c0_5 = arith.constant 0 : index
    %7 = vector.load %arg3[%c0_4, %c0_5] : memref<2x8xf32, #tpu.memory_space<vmem>>, vector<2x8xf32>
    %8 = vector.shape_cast %7 : vector<2x8xf32> to vector<2x1x8xf32>
    %cst = arith.constant 5.000000e-01 : f32
    %9 = vector.broadcast %cst : f32 to vector<2x1x8xf32>
    %10 = arith.cmpf ogt, %8, %9 : vector<2x1x8xf32>
    %11 = arith.cmpi sgt, %6, %5 : vector<8x8xi32>
    %12 = vector.shape_cast %11 : vector<8x8xi1> to vector<1x8x8xi1>
    %13 = vector.broadcast %10 : vector<2x1x8xi1> to vector<2x8x8xi1>
    %14 = vector.broadcast %12 : vector<1x8x8xi1> to vector<2x8x8xi1>
    %15 = arith.ori %13, %14 : vector<2x8x8xi1>
    %c0_6 = arith.constant 0 : index
    %c0_7 = arith.constant 0 : index
    %16 = vector.load %arg4[%c0_6, %c0_7] : memref<2x8xf32, #tpu.memory_space<vmem>>, vector<2x8xf32>
    %17 = vector.shape_cast %16 : vector<2x8xf32> to vector<2x1x8xf32>
    %cst_8 = arith.constant 5.000000e-01 : f32
    %18 = vector.broadcast %cst_8 : f32 to vector<2x1x8xf32>
    %19 = arith.cmpf ogt, %17, %18 : vector<2x1x8xf32>
    %c0_9 = arith.constant 0 : index
    %c0_10 = arith.constant 0 : index
    %c0_11 = arith.constant 0 : index
    %c0_12 = arith.constant 0 : index
    %20 = vector.load %arg5[%c0_9, %c0_10, %c0_11, %c0_12] : memref<1x4x32x8xf32, #tpu.memory_space<vmem>>, vector<1x4x32x8xf32>
    %21 = vector.shape_cast %20 : vector<1x4x32x8xf32> to vector<4x32x8xf32>
    %c0_13 = arith.constant 0 : index
    %c0_14 = arith.constant 0 : index
    %c0_15 = arith.constant 0 : index
    %c0_16 = arith.constant 0 : index
    %22 = vector.load %arg6[%c0_13, %c0_14, %c0_15, %c0_16] : memref<1x4x32x8xf32, #tpu.memory_space<vmem>>, vector<1x4x32x8xf32>
    %23 = vector.shape_cast %22 : vector<1x4x32x8xf32> to vector<4x32x8xf32>
    %c0_17 = arith.constant 0 : index
    %c0_18 = arith.constant 0 : index
    %c0_19 = arith.constant 0 : index
    %c0_20 = arith.constant 0 : index
    %24 = vector.load %arg7[%c0_17, %c0_18, %c0_19, %c0_20] : memref<1x4x32x8xf32, #tpu.memory_space<vmem>>, vector<1x4x32x8xf32>
    %25 = vector.shape_cast %24 : vector<1x4x32x8xf32> to vector<4x32x8xf32>
    %c0_21 = arith.constant 0 : index
    %c0_22 = arith.constant 0 : index
    %c0_23 = arith.constant 0 : index
    %c0_24 = arith.constant 0 : index
    %26 = vector.load %arg8[%c0_21, %c0_22, %c0_23, %c0_24] : memref<1x4x8x32xf32, #tpu.memory_space<vmem>>, vector<1x4x8x32xf32>
    %27 = vector.shape_cast %26 : vector<1x4x8x32xf32> to vector<4x8x32xf32>
    %cst_25 = arith.constant 0.000000e+00 : f32
    %28 = vector.broadcast %cst_25 : f32 to vector<16x32xf32>
    %29 = vector.extract_strided_slice %21 {offsets = [0, 0, 0], sizes = [1, 32, 8], strides = [1, 1, 1]} : vector<4x32x8xf32> to vector<1x32x8xf32>
    %30 = vector.shape_cast %29 : vector<1x32x8xf32> to vector<32x8xf32>
    %cst_26 = arith.constant dense<0.000000e+00> : vector<16x8xf32>
    %31 = tpu.matmul %3, %30, %cst_26 {dimension_numbers = #tpu.dot_dimension_numbers<[1], [0], [0], [1], [0, 0, 1, 1], [], []>} : vector<16x32xf32>, vector<32x8xf32>, vector<16x8xf32> -> vector<16x8xf32>
    %32 = vector.shape_cast %31 : vector<16x8xf32> to vector<2x8x8xf32>
    %33 = vector.extract_strided_slice %23 {offsets = [0, 0, 0], sizes = [1, 32, 8], strides = [1, 1, 1]} : vector<4x32x8xf32> to vector<1x32x8xf32>
    %34 = vector.shape_cast %33 : vector<1x32x8xf32> to vector<32x8xf32>
    %cst_27 = arith.constant dense<0.000000e+00> : vector<16x8xf32>
    %35 = tpu.matmul %3, %34, %cst_27 {dimension_numbers = #tpu.dot_dimension_numbers<[1], [0], [0], [1], [0, 0, 1, 1], [], []>} : vector<16x32xf32>, vector<32x8xf32>, vector<16x8xf32> -> vector<16x8xf32>
    %36 = vector.shape_cast %35 : vector<16x8xf32> to vector<2x8x8xf32>
    %37 = vector.extract_strided_slice %25 {offsets = [0, 0, 0], sizes = [1, 32, 8], strides = [1, 1, 1]} : vector<4x32x8xf32> to vector<1x32x8xf32>
    %38 = vector.shape_cast %37 : vector<1x32x8xf32> to vector<32x8xf32>
    %cst_28 = arith.constant dense<0.000000e+00> : vector<16x8xf32>
    %39 = tpu.matmul %3, %38, %cst_28 {dimension_numbers = #tpu.dot_dimension_numbers<[1], [0], [0], [1], [0, 0, 1, 1], [], []>} : vector<16x32xf32>, vector<32x8xf32>, vector<16x8xf32> -> vector<16x8xf32>
    %40 = vector.shape_cast %39 : vector<16x8xf32> to vector<2x8x8xf32>
    "tpu.trace_start"() <{level = 10 : i32, message = "bqd,bkd->bqk"}> : () -> ()
    %cst_29 = arith.constant dense<0.000000e+00> : vector<2x8x8xf32>
    %41 = tpu.matmul %32, %36, %cst_29 {dimension_numbers = #tpu.dot_dimension_numbers<[2], [2], [1], [1], [0, 0, 0, 1, 1, 1], [0], [0]>} : vector<2x8x8xf32>, vector<2x8x8xf32>, vector<2x8x8xf32> -> vector<2x8x8xf32>
    "tpu.trace_stop"() : () -> ()
    %cst_30 = arith.constant 0.353553385 : f32
    %42 = vector.broadcast %cst_30 : f32 to vector<2x8x8xf32>
    %43 = arith.mulf %41, %42 : vector<2x8x8xf32>
    %cst_31 = arith.constant -1.000000e+09 : f32
    %44 = vector.broadcast %cst_31 : f32 to vector<2x8x8xf32>
    %45 = arith.select %15, %44, %43 : vector<2x8x8xi1>, vector<2x8x8xf32>
    %cst_32 = arith.constant dense<0xFF800000> : vector<2x8xf32>
    %46 = vector.multi_reduction <maximumf>, %45, %cst_32 [2] : vector<2x8x8xf32> to vector<2x8xf32>
    %47 = vector.shape_cast %46 : vector<2x8xf32> to vector<2x8x1xf32>
    %48 = vector.broadcast %47 : vector<2x8x1xf32> to vector<2x8x8xf32>
    %49 = arith.subf %45, %48 : vector<2x8x8xf32>
    %50 = math.exp %49 : vector<2x8x8xf32>
    %cst_33 = arith.constant dense<0.000000e+00> : vector<2x8xf32>
    %51 = vector.multi_reduction <add>, %50, %cst_33 [2] : vector<2x8x8xf32> to vector<2x8xf32>
    %52 = vector.shape_cast %51 : vector<2x8xf32> to vector<2x8x1xf32>
    %53 = tpu.reciprocal %52 {approx = true} : vector<2x8x1xf32> -> vector<2x8x1xf32>
    %54 = vector.broadcast %53 : vector<2x8x1xf32> to vector<2x8x8xf32>
    %55 = arith.mulf %50, %54 : vector<2x8x8xf32>
    "tpu.trace_start"() <{level = 10 : i32, message = "bqk,bkd->bqd"}> : () -> ()
    %cst_34 = arith.constant dense<0.000000e+00> : vector<2x8x8xf32>
    %56 = tpu.matmul %55, %40, %cst_34 {dimension_numbers = #tpu.dot_dimension_numbers<[2], [1], [1], [2], [0, 0, 0, 1, 1, 2], [0], [0]>} : vector<2x8x8xf32>, vector<2x8x8xf32>, vector<2x8x8xf32> -> vector<2x8x8xf32>
    "tpu.trace_stop"() : () -> ()
    %57 = vector.shape_cast %56 : vector<2x8x8xf32> to vector<16x8xf32>
    %58 = vector.extract_strided_slice %27 {offsets = [0, 0, 0], sizes = [1, 8, 32], strides = [1, 1, 1]} : vector<4x8x32xf32> to vector<1x8x32xf32>
    %59 = vector.shape_cast %58 : vector<1x8x32xf32> to vector<8x32xf32>
    %cst_35 = arith.constant dense<0.000000e+00> : vector<16x32xf32>
    %60 = tpu.matmul %57, %59, %cst_35 {dimension_numbers = #tpu.dot_dimension_numbers<[1], [0], [0], [1], [0, 0, 1, 1], [], []>} : vector<16x8xf32>, vector<8x32xf32>, vector<16x32xf32> -> vector<16x32xf32>
    %61 = arith.addf %28, %60 : vector<16x32xf32>
    %62 = vector.extract_strided_slice %21 {offsets = [1, 0, 0], sizes = [1, 32, 8], strides = [1, 1, 1]} : vector<4x32x8xf32> to vector<1x32x8xf32>
    %63 = vector.shape_cast %62 : vector<1x32x8xf32> to vector<32x8xf32>
    %cst_36 = arith.constant dense<0.000000e+00> : vector<16x8xf32>
    %64 = tpu.matmul %3, %63, %cst_36 {dimension_numbers = #tpu.dot_dimension_numbers<[1], [0], [0], [1], [0, 0, 1, 1], [], []>} : vector<16x32xf32>, vector<32x8xf32>, vector<16x8xf32> -> vector<16x8xf32>
    %65 = vector.shape_cast %64 : vector<16x8xf32> to vector<2x8x8xf32>
    %66 = vector.extract_strided_slice %23 {offsets = [1, 0, 0], sizes = [1, 32, 8], strides = [1, 1, 1]} : vector<4x32x8xf32> to vector<1x32x8xf32>
    %67 = vector.shape_cast %66 : vector<1x32x8xf32> to vector<32x8xf32>
    %cst_37 = arith.constant dense<0.000000e+00> : vector<16x8xf32>
    %68 = tpu.matmul %3, %67, %cst_37 {dimension_numbers = #tpu.dot_dimension_numbers<[1], [0], [0], [1], [0, 0, 1, 1], [], []>} : vector<16x32xf32>, vector<32x8xf32>, vector<16x8xf32> -> vector<16x8xf32>
    %69 = vector.shape_cast %68 : vector<16x8xf32> to vector<2x8x8xf32>
    %70 = vector.extract_strided_slice %25 {offsets = [1, 0, 0], sizes = [1, 32, 8], strides = [1, 1, 1]} : vector<4x32x8xf32> to vector<1x32x8xf32>
    %71 = vector.shape_cast %70 : vector<1x32x8xf32> to vector<32x8xf32>
    %cst_38 = arith.constant dense<0.000000e+00> : vector<16x8xf32>
    %72 = tpu.matmul %3, %71, %cst_38 {dimension_numbers = #tpu.dot_dimension_numbers<[1], [0], [0], [1], [0, 0, 1, 1], [], []>} : vector<16x32xf32>, vector<32x8xf32>, vector<16x8xf32> -> vector<16x8xf32>
    %73 = vector.shape_cast %72 : vector<16x8xf32> to vector<2x8x8xf32>
    "tpu.trace_start"() <{level = 10 : i32, message = "bqd,bkd->bqk"}> : () -> ()
    %cst_39 = arith.constant dense<0.000000e+00> : vector<2x8x8xf32>
    %74 = tpu.matmul %65, %69, %cst_39 {dimension_numbers = #tpu.dot_dimension_numbers<[2], [2], [1], [1], [0, 0, 0, 1, 1, 1], [0], [0]>} : vector<2x8x8xf32>, vector<2x8x8xf32>, vector<2x8x8xf32> -> vector<2x8x8xf32>
    "tpu.trace_stop"() : () -> ()
    %cst_40 = arith.constant 0.353553385 : f32
    %75 = vector.broadcast %cst_40 : f32 to vector<2x8x8xf32>
    %76 = arith.mulf %74, %75 : vector<2x8x8xf32>
    %cst_41 = arith.constant -1.000000e+09 : f32
    %77 = vector.broadcast %cst_41 : f32 to vector<2x8x8xf32>
    %78 = arith.select %15, %77, %76 : vector<2x8x8xi1>, vector<2x8x8xf32>
    %cst_42 = arith.constant dense<0xFF800000> : vector<2x8xf32>
    %79 = vector.multi_reduction <maximumf>, %78, %cst_42 [2] : vector<2x8x8xf32> to vector<2x8xf32>
    %80 = vector.shape_cast %79 : vector<2x8xf32> to vector<2x8x1xf32>
    %81 = vector.broadcast %80 : vector<2x8x1xf32> to vector<2x8x8xf32>
    %82 = arith.subf %78, %81 : vector<2x8x8xf32>
    %83 = math.exp %82 : vector<2x8x8xf32>
    %cst_43 = arith.constant dense<0.000000e+00> : vector<2x8xf32>
    %84 = vector.multi_reduction <add>, %83, %cst_43 [2] : vector<2x8x8xf32> to vector<2x8xf32>
    %85 = vector.shape_cast %84 : vector<2x8xf32> to vector<2x8x1xf32>
    %86 = tpu.reciprocal %85 {approx = true} : vector<2x8x1xf32> -> vector<2x8x1xf32>
    %87 = vector.broadcast %86 : vector<2x8x1xf32> to vector<2x8x8xf32>
    %88 = arith.mulf %83, %87 : vector<2x8x8xf32>
    "tpu.trace_start"() <{level = 10 : i32, message = "bqk,bkd->bqd"}> : () -> ()
    %cst_44 = arith.constant dense<0.000000e+00> : vector<2x8x8xf32>
    %89 = tpu.matmul %88, %73, %cst_44 {dimension_numbers = #tpu.dot_dimension_numbers<[2], [1], [1], [2], [0, 0, 0, 1, 1, 2], [0], [0]>} : vector<2x8x8xf32>, vector<2x8x8xf32>, vector<2x8x8xf32> -> vector<2x8x8xf32>
    "tpu.trace_stop"() : () -> ()
    %90 = vector.shape_cast %89 : vector<2x8x8xf32> to vector<16x8xf32>
    %91 = vector.extract_strided_slice %27 {offsets = [1, 0, 0], sizes = [1, 8, 32], strides = [1, 1, 1]} : vector<4x8x32xf32> to vector<1x8x32xf32>
    %92 = vector.shape_cast %91 : vector<1x8x32xf32> to vector<8x32xf32>
    %cst_45 = arith.constant dense<0.000000e+00> : vector<16x32xf32>
    %93 = tpu.matmul %90, %92, %cst_45 {dimension_numbers = #tpu.dot_dimension_numbers<[1], [0], [0], [1], [0, 0, 1, 1], [], []>} : vector<16x8xf32>, vector<8x32xf32>, vector<16x32xf32> -> vector<16x32xf32>
    %94 = arith.addf %61, %93 : vector<16x32xf32>
    %95 = vector.extract_strided_slice %21 {offsets = [2, 0, 0], sizes = [1, 32, 8], strides = [1, 1, 1]} : vector<4x32x8xf32> to vector<1x32x8xf32>
    %96 = vector.shape_cast %95 : vector<1x32x8xf32> to vector<32x8xf32>
    %cst_46 = arith.constant dense<0.000000e+00> : vector<16x8xf32>
    %97 = tpu.matmul %3, %96, %cst_46 {dimension_numbers = #tpu.dot_dimension_numbers<[1], [0], [0], [1], [0, 0, 1, 1], [], []>} : vector<16x32xf32>, vector<32x8xf32>, vector<16x8xf32> -> vector<16x8xf32>
    %98 = vector.shape_cast %97 : vector<16x8xf32> to vector<2x8x8xf32>
    %99 = vector.extract_strided_slice %23 {offsets = [2, 0, 0], sizes = [1, 32, 8], strides = [1, 1, 1]} : vector<4x32x8xf32> to vector<1x32x8xf32>
    %100 = vector.shape_cast %99 : vector<1x32x8xf32> to vector<32x8xf32>
    %cst_47 = arith.constant dense<0.000000e+00> : vector<16x8xf32>
    %101 = tpu.matmul %3, %100, %cst_47 {dimension_numbers = #tpu.dot_dimension_numbers<[1], [0], [0], [1], [0, 0, 1, 1], [], []>} : vector<16x32xf32>, vector<32x8xf32>, vector<16x8xf32> -> vector<16x8xf32>
    %102 = vector.shape_cast %101 : vector<16x8xf32> to vector<2x8x8xf32>
    %103 = vector.extract_strided_slice %25 {offsets = [2, 0, 0], sizes = [1, 32, 8], strides = [1, 1, 1]} : vector<4x32x8xf32> to vector<1x32x8xf32>
    %104 = vector.shape_cast %103 : vector<1x32x8xf32> to vector<32x8xf32>
    %cst_48 = arith.constant dense<0.000000e+00> : vector<16x8xf32>
    %105 = tpu.matmul %3, %104, %cst_48 {dimension_numbers = #tpu.dot_dimension_numbers<[1], [0], [0], [1], [0, 0, 1, 1], [], []>} : vector<16x32xf32>, vector<32x8xf32>, vector<16x8xf32> -> vector<16x8xf32>
    %106 = vector.shape_cast %105 : vector<16x8xf32> to vector<2x8x8xf32>
    "tpu.trace_start"() <{level = 10 : i32, message = "bqd,bkd->bqk"}> : () -> ()
    %cst_49 = arith.constant dense<0.000000e+00> : vector<2x8x8xf32>
    %107 = tpu.matmul %98, %102, %cst_49 {dimension_numbers = #tpu.dot_dimension_numbers<[2], [2], [1], [1], [0, 0, 0, 1, 1, 1], [0], [0]>} : vector<2x8x8xf32>, vector<2x8x8xf32>, vector<2x8x8xf32> -> vector<2x8x8xf32>
    "tpu.trace_stop"() : () -> ()
    %cst_50 = arith.constant 0.353553385 : f32
    %108 = vector.broadcast %cst_50 : f32 to vector<2x8x8xf32>
    %109 = arith.mulf %107, %108 : vector<2x8x8xf32>
    %cst_51 = arith.constant -1.000000e+09 : f32
    %110 = vector.broadcast %cst_51 : f32 to vector<2x8x8xf32>
    %111 = arith.select %15, %110, %109 : vector<2x8x8xi1>, vector<2x8x8xf32>
    %cst_52 = arith.constant dense<0xFF800000> : vector<2x8xf32>
    %112 = vector.multi_reduction <maximumf>, %111, %cst_52 [2] : vector<2x8x8xf32> to vector<2x8xf32>
    %113 = vector.shape_cast %112 : vector<2x8xf32> to vector<2x8x1xf32>
    %114 = vector.broadcast %113 : vector<2x8x1xf32> to vector<2x8x8xf32>
    %115 = arith.subf %111, %114 : vector<2x8x8xf32>
    %116 = math.exp %115 : vector<2x8x8xf32>
    %cst_53 = arith.constant dense<0.000000e+00> : vector<2x8xf32>
    %117 = vector.multi_reduction <add>, %116, %cst_53 [2] : vector<2x8x8xf32> to vector<2x8xf32>
    %118 = vector.shape_cast %117 : vector<2x8xf32> to vector<2x8x1xf32>
    %119 = tpu.reciprocal %118 {approx = true} : vector<2x8x1xf32> -> vector<2x8x1xf32>
    %120 = vector.broadcast %119 : vector<2x8x1xf32> to vector<2x8x8xf32>
    %121 = arith.mulf %116, %120 : vector<2x8x8xf32>
    "tpu.trace_start"() <{level = 10 : i32, message = "bqk,bkd->bqd"}> : () -> ()
    %cst_54 = arith.constant dense<0.000000e+00> : vector<2x8x8xf32>
    %122 = tpu.matmul %121, %106, %cst_54 {dimension_numbers = #tpu.dot_dimension_numbers<[2], [1], [1], [2], [0, 0, 0, 1, 1, 2], [0], [0]>} : vector<2x8x8xf32>, vector<2x8x8xf32>, vector<2x8x8xf32> -> vector<2x8x8xf32>
    "tpu.trace_stop"() : () -> ()
    %123 = vector.shape_cast %122 : vector<2x8x8xf32> to vector<16x8xf32>
    %124 = vector.extract_strided_slice %27 {offsets = [2, 0, 0], sizes = [1, 8, 32], strides = [1, 1, 1]} : vector<4x8x32xf32> to vector<1x8x32xf32>
    %125 = vector.shape_cast %124 : vector<1x8x32xf32> to vector<8x32xf32>
    %cst_55 = arith.constant dense<0.000000e+00> : vector<16x32xf32>
    %126 = tpu.matmul %123, %125, %cst_55 {dimension_numbers = #tpu.dot_dimension_numbers<[1], [0], [0], [1], [0, 0, 1, 1], [], []>} : vector<16x8xf32>, vector<8x32xf32>, vector<16x32xf32> -> vector<16x32xf32>
    %127 = arith.addf %94, %126 : vector<16x32xf32>
    %128 = vector.extract_strided_slice %21 {offsets = [3, 0, 0], sizes = [1, 32, 8], strides = [1, 1, 1]} : vector<4x32x8xf32> to vector<1x32x8xf32>
    %129 = vector.shape_cast %128 : vector<1x32x8xf32> to vector<32x8xf32>
    %cst_56 = arith.constant dense<0.000000e+00> : vector<16x8xf32>
    %130 = tpu.matmul %3, %129, %cst_56 {dimension_numbers = #tpu.dot_dimension_numbers<[1], [0], [0], [1], [0, 0, 1, 1], [], []>} : vector<16x32xf32>, vector<32x8xf32>, vector<16x8xf32> -> vector<16x8xf32>
    %131 = vector.shape_cast %130 : vector<16x8xf32> to vector<2x8x8xf32>
    %132 = vector.extract_strided_slice %23 {offsets = [3, 0, 0], sizes = [1, 32, 8], strides = [1, 1, 1]} : vector<4x32x8xf32> to vector<1x32x8xf32>
    %133 = vector.shape_cast %132 : vector<1x32x8xf32> to vector<32x8xf32>
    %cst_57 = arith.constant dense<0.000000e+00> : vector<16x8xf32>
    %134 = tpu.matmul %3, %133, %cst_57 {dimension_numbers = #tpu.dot_dimension_numbers<[1], [0], [0], [1], [0, 0, 1, 1], [], []>} : vector<16x32xf32>, vector<32x8xf32>, vector<16x8xf32> -> vector<16x8xf32>
    %135 = vector.shape_cast %134 : vector<16x8xf32> to vector<2x8x8xf32>
    %136 = vector.extract_strided_slice %25 {offsets = [3, 0, 0], sizes = [1, 32, 8], strides = [1, 1, 1]} : vector<4x32x8xf32> to vector<1x32x8xf32>
    %137 = vector.shape_cast %136 : vector<1x32x8xf32> to vector<32x8xf32>
    %cst_58 = arith.constant dense<0.000000e+00> : vector<16x8xf32>
    %138 = tpu.matmul %3, %137, %cst_58 {dimension_numbers = #tpu.dot_dimension_numbers<[1], [0], [0], [1], [0, 0, 1, 1], [], []>} : vector<16x32xf32>, vector<32x8xf32>, vector<16x8xf32> -> vector<16x8xf32>
    %139 = vector.shape_cast %138 : vector<16x8xf32> to vector<2x8x8xf32>
    "tpu.trace_start"() <{level = 10 : i32, message = "bqd,bkd->bqk"}> : () -> ()
    %cst_59 = arith.constant dense<0.000000e+00> : vector<2x8x8xf32>
    %140 = tpu.matmul %131, %135, %cst_59 {dimension_numbers = #tpu.dot_dimension_numbers<[2], [2], [1], [1], [0, 0, 0, 1, 1, 1], [0], [0]>} : vector<2x8x8xf32>, vector<2x8x8xf32>, vector<2x8x8xf32> -> vector<2x8x8xf32>
    "tpu.trace_stop"() : () -> ()
    %cst_60 = arith.constant 0.353553385 : f32
    %141 = vector.broadcast %cst_60 : f32 to vector<2x8x8xf32>
    %142 = arith.mulf %140, %141 : vector<2x8x8xf32>
    %cst_61 = arith.constant -1.000000e+09 : f32
    %143 = vector.broadcast %cst_61 : f32 to vector<2x8x8xf32>
    %144 = arith.select %15, %143, %142 : vector<2x8x8xi1>, vector<2x8x8xf32>
    %cst_62 = arith.constant dense<0xFF800000> : vector<2x8xf32>
    %145 = vector.multi_reduction <maximumf>, %144, %cst_62 [2] : vector<2x8x8xf32> to vector<2x8xf32>
    %146 = vector.shape_cast %145 : vector<2x8xf32> to vector<2x8x1xf32>
    %147 = vector.broadcast %146 : vector<2x8x1xf32> to vector<2x8x8xf32>
    %148 = arith.subf %144, %147 : vector<2x8x8xf32>
    %149 = math.exp %148 : vector<2x8x8xf32>
    %cst_63 = arith.constant dense<0.000000e+00> : vector<2x8xf32>
    %150 = vector.multi_reduction <add>, %149, %cst_63 [2] : vector<2x8x8xf32> to vector<2x8xf32>
    %151 = vector.shape_cast %150 : vector<2x8xf32> to vector<2x8x1xf32>
    %152 = tpu.reciprocal %151 {approx = true} : vector<2x8x1xf32> -> vector<2x8x1xf32>
    %153 = vector.broadcast %152 : vector<2x8x1xf32> to vector<2x8x8xf32>
    %154 = arith.mulf %149, %153 : vector<2x8x8xf32>
    "tpu.trace_start"() <{level = 10 : i32, message = "bqk,bkd->bqd"}> : () -> ()
    %cst_64 = arith.constant dense<0.000000e+00> : vector<2x8x8xf32>
    %155 = tpu.matmul %154, %139, %cst_64 {dimension_numbers = #tpu.dot_dimension_numbers<[2], [1], [1], [2], [0, 0, 0, 1, 1, 2], [0], [0]>} : vector<2x8x8xf32>, vector<2x8x8xf32>, vector<2x8x8xf32> -> vector<2x8x8xf32>
    "tpu.trace_stop"() : () -> ()
    %156 = vector.shape_cast %155 : vector<2x8x8xf32> to vector<16x8xf32>
    %157 = vector.extract_strided_slice %27 {offsets = [3, 0, 0], sizes = [1, 8, 32], strides = [1, 1, 1]} : vector<4x8x32xf32> to vector<1x8x32xf32>
    %158 = vector.shape_cast %157 : vector<1x8x32xf32> to vector<8x32xf32>
    %cst_65 = arith.constant dense<0.000000e+00> : vector<16x32xf32>
    %159 = tpu.matmul %156, %158, %cst_65 {dimension_numbers = #tpu.dot_dimension_numbers<[1], [0], [0], [1], [0, 0, 1, 1], [], []>} : vector<16x8xf32>, vector<8x32xf32>, vector<16x32xf32> -> vector<16x32xf32>
    %160 = arith.addf %127, %159 : vector<16x32xf32>
    %161 = vector.shape_cast %55 : vector<2x8x8xf32> to vector<2x1x8x8xf32>
    %162 = vector.shape_cast %88 : vector<2x8x8xf32> to vector<2x1x8x8xf32>
    %163 = vector.shape_cast %121 : vector<2x8x8xf32> to vector<2x1x8x8xf32>
    %164 = vector.shape_cast %154 : vector<2x8x8xf32> to vector<2x1x8x8xf32>
    %165 = tpu.concatenate %161, %162, %163, %164 in 1 : vector<2x1x8x8xf32>, vector<2x1x8x8xf32>, vector<2x1x8x8xf32>, vector<2x1x8x8xf32> -> vector<2x4x8x8xf32>
    %166 = arith.addf %160, %3 : vector<16x32xf32>
    %cst_66 = arith.constant dense<0.000000e+00> : vector<16xf32>
    %167 = vector.multi_reduction <add>, %166, %cst_66 [1] : vector<16x32xf32> to vector<16xf32>
    %168 = vector.shape_cast %167 : vector<16xf32> to vector<16x1xf32>
    %cst_67 = arith.constant 3.200000e+01 : f32
    %169 = vector.broadcast %cst_67 : f32 to vector<16x1xf32>
    %170 = arith.divf %168, %169 : vector<16x1xf32>
    %171 = vector.broadcast %170 : vector<16x1xf32> to vector<16x32xf32>
    %172 = arith.subf %166, %171 : vector<16x32xf32>
    %173 = arith.mulf %172, %172 : vector<16x32xf32>
    %cst_68 = arith.constant dense<0.000000e+00> : vector<16xf32>
    %174 = vector.multi_reduction <add>, %173, %cst_68 [1] : vector<16x32xf32> to vector<16xf32>
    %175 = vector.shape_cast %174 : vector<16xf32> to vector<16x1xf32>
    %cst_69 = arith.constant 3.200000e+01 : f32
    %176 = vector.broadcast %cst_69 : f32 to vector<16x1xf32>
    %177 = arith.divf %175, %176 : vector<16x1xf32>
    %178 = vector.broadcast %170 : vector<16x1xf32> to vector<16x32xf32>
    %179 = arith.subf %166, %178 : vector<16x32xf32>
    %cst_70 = arith.constant 9.99999974E-6 : f32
    %180 = vector.broadcast %cst_70 : f32 to vector<16x1xf32>
    %181 = arith.addf %177, %180 : vector<16x1xf32>
    %182 = math.rsqrt %181 : vector<16x1xf32>
    %183 = vector.broadcast %182 : vector<16x1xf32> to vector<16x32xf32>
    %184 = arith.mulf %179, %183 : vector<16x32xf32>
    %c0_71 = arith.constant 0 : index
    %c0_72 = arith.constant 0 : index
    %c0_73 = arith.constant 0 : index
    %c0_74 = arith.constant 0 : index
    %c0_75 = arith.constant 0 : index
    %185 = vector.load %arg17[%c0_71, %c0_72, %c0_73, %c0_74, %c0_75] : memref<1x2x4x8x8xf32, #tpu.memory_space<vmem>>, vector<1x2x4x8x8xf32>
    %186 = vector.shape_cast %185 : vector<1x2x4x8x8xf32> to vector<2x4x8x8xf32>
    %187 = vector.shape_cast %165 : vector<2x4x8x8xf32> to vector<1x2x4x8x8xf32>
    tpu.vector_store %arg17[%c0_71, %c0_72, %c0_73, %c0_74, %c0_75], %187 {strides = array<i32>} : memref<1x2x4x8x8xf32, #tpu.memory_space<vmem>>, vector<1x2x4x8x8xf32>,
    %c0_76 = arith.constant 0 : index
    %c0_77 = arith.constant 0 : index
    %c0_78 = arith.constant 0 : index
    %c0_79 = arith.constant 0 : index
    %188 = vector.load %arg9[%c0_76, %c0_77, %c0_78, %c0_79] : memref<1x4x32x8xf32, #tpu.memory_space<vmem>>, vector<1x4x32x8xf32>
    %189 = vector.shape_cast %188 : vector<1x4x32x8xf32> to vector<4x32x8xf32>
    %c0_80 = arith.constant 0 : index
    %c0_81 = arith.constant 0 : index
    %c0_82 = arith.constant 0 : index
    %c0_83 = arith.constant 0 : index
    %190 = vector.load %arg10[%c0_80, %c0_81, %c0_82, %c0_83] : memref<1x4x32x8xf32, #tpu.memory_space<vmem>>, vector<1x4x32x8xf32>
    %191 = vector.shape_cast %190 : vector<1x4x32x8xf32> to vector<4x32x8xf32>
    %c0_84 = arith.constant 0 : index
    %c0_85 = arith.constant 0 : index
    %c0_86 = arith.constant 0 : index
    %c0_87 = arith.constant 0 : index
    %192 = vector.load %arg11[%c0_84, %c0_85, %c0_86, %c0_87] : memref<1x4x32x8xf32, #tpu.memory_space<vmem>>, vector<1x4x32x8xf32>
    %193 = vector.shape_cast %192 : vector<1x4x32x8xf32> to vector<4x32x8xf32>
    %c0_88 = arith.constant 0 : index
    %c0_89 = arith.constant 0 : index
    %c0_90 = arith.constant 0 : index
    %c0_91 = arith.constant 0 : index
    %194 = vector.load %arg12[%c0_88, %c0_89, %c0_90, %c0_91] : memref<1x4x8x32xf32, #tpu.memory_space<vmem>>, vector<1x4x8x32xf32>
    %195 = vector.shape_cast %194 : vector<1x4x8x32xf32> to vector<4x8x32xf32>
    %cst_92 = arith.constant 0.000000e+00 : f32
    %196 = vector.broadcast %cst_92 : f32 to vector<16x32xf32>
    %197 = vector.extract_strided_slice %189 {offsets = [0, 0, 0], sizes = [1, 32, 8], strides = [1, 1, 1]} : vector<4x32x8xf32> to vector<1x32x8xf32>
    %198 = vector.shape_cast %197 : vector<1x32x8xf32> to vector<32x8xf32>
    %cst_93 = arith.constant dense<0.000000e+00> : vector<16x8xf32>
    %199 = tpu.matmul %184, %198, %cst_93 {dimension_numbers = #tpu.dot_dimension_numbers<[1], [0], [0], [1], [0, 0, 1, 1], [], []>} : vector<16x32xf32>, vector<32x8xf32>, vector<16x8xf32> -> vector<16x8xf32>
    %200 = vector.shape_cast %199 : vector<16x8xf32> to vector<2x8x8xf32>
    %201 = vector.extract_strided_slice %191 {offsets = [0, 0, 0], sizes = [1, 32, 8], strides = [1, 1, 1]} : vector<4x32x8xf32> to vector<1x32x8xf32>
    %202 = vector.shape_cast %201 : vector<1x32x8xf32> to vector<32x8xf32>
    %cst_94 = arith.constant dense<0.000000e+00> : vector<16x8xf32>
    %203 = tpu.matmul %4, %202, %cst_94 {dimension_numbers = #tpu.dot_dimension_numbers<[1], [0], [0], [1], [0, 0, 1, 1], [], []>} : vector<16x32xf32>, vector<32x8xf32>, vector<16x8xf32> -> vector<16x8xf32>
    %204 = vector.shape_cast %203 : vector<16x8xf32> to vector<2x8x8xf32>
    %205 = vector.extract_strided_slice %193 {offsets = [0, 0, 0], sizes = [1, 32, 8], strides = [1, 1, 1]} : vector<4x32x8xf32> to vector<1x32x8xf32>
    %206 = vector.shape_cast %205 : vector<1x32x8xf32> to vector<32x8xf32>
    %cst_95 = arith.constant dense<0.000000e+00> : vector<16x8xf32>
    %207 = tpu.matmul %4, %206, %cst_95 {dimension_numbers = #tpu.dot_dimension_numbers<[1], [0], [0], [1], [0, 0, 1, 1], [], []>} : vector<16x32xf32>, vector<32x8xf32>, vector<16x8xf32> -> vector<16x8xf32>
    %208 = vector.shape_cast %207 : vector<16x8xf32> to vector<2x8x8xf32>
    "tpu.trace_start"() <{level = 10 : i32, message = "bqd,bkd->bqk"}> : () -> ()
    %cst_96 = arith.constant dense<0.000000e+00> : vector<2x8x8xf32>
    %209 = tpu.matmul %200, %204, %cst_96 {dimension_numbers = #tpu.dot_dimension_numbers<[2], [2], [1], [1], [0, 0, 0, 1, 1, 1], [0], [0]>} : vector<2x8x8xf32>, vector<2x8x8xf32>, vector<2x8x8xf32> -> vector<2x8x8xf32>
    "tpu.trace_stop"() : () -> ()
    %cst_97 = arith.constant 0.353553385 : f32
    %210 = vector.broadcast %cst_97 : f32 to vector<2x8x8xf32>
    %211 = arith.mulf %209, %210 : vector<2x8x8xf32>
    %cst_98 = arith.constant -1.000000e+09 : f32
    %212 = vector.shape_cast %19 : vector<2x1x8xi1> to vector<2x1x8xi1>
    %213 = vector.broadcast %212 : vector<2x1x8xi1> to vector<2x8x8xi1>
    %214 = vector.broadcast %cst_98 : f32 to vector<2x8x8xf32>
    %215 = arith.select %213, %214, %211 : vector<2x8x8xi1>, vector<2x8x8xf32>
    %cst_99 = arith.constant dense<0xFF800000> : vector<2x8xf32>
    %216 = vector.multi_reduction <maximumf>, %215, %cst_99 [2] : vector<2x8x8xf32> to vector<2x8xf32>
    %217 = vector.shape_cast %216 : vector<2x8xf32> to vector<2x8x1xf32>
    %218 = vector.broadcast %217 : vector<2x8x1xf32> to vector<2x8x8xf32>
    %219 = arith.subf %215, %218 : vector<2x8x8xf32>
    %220 = math.exp %219 : vector<2x8x8xf32>
    %cst_100 = arith.constant dense<0.000000e+00> : vector<2x8xf32>
    %221 = vector.multi_reduction <add>, %220, %cst_100 [2] : vector<2x8x8xf32> to vector<2x8xf32>
    %222 = vector.shape_cast %221 : vector<2x8xf32> to vector<2x8x1xf32>
    %223 = tpu.reciprocal %222 {approx = true} : vector<2x8x1xf32> -> vector<2x8x1xf32>
    %224 = vector.broadcast %223 : vector<2x8x1xf32> to vector<2x8x8xf32>
    %225 = arith.mulf %220, %224 : vector<2x8x8xf32>
    "tpu.trace_start"() <{level = 10 : i32, message = "bqk,bkd->bqd"}> : () -> ()
    %cst_101 = arith.constant dense<0.000000e+00> : vector<2x8x8xf32>
    %226 = tpu.matmul %225, %208, %cst_101 {dimension_numbers = #tpu.dot_dimension_numbers<[2], [1], [1], [2], [0, 0, 0, 1, 1, 2], [0], [0]>} : vector<2x8x8xf32>, vector<2x8x8xf32>, vector<2x8x8xf32> -> vector<2x8x8xf32>
    "tpu.trace_stop"() : () -> ()
    %227 = vector.shape_cast %226 : vector<2x8x8xf32> to vector<16x8xf32>
    %228 = vector.extract_strided_slice %195 {offsets = [0, 0, 0], sizes = [1, 8, 32], strides = [1, 1, 1]} : vector<4x8x32xf32> to vector<1x8x32xf32>
    %229 = vector.shape_cast %228 : vector<1x8x32xf32> to vector<8x32xf32>
    %cst_102 = arith.constant dense<0.000000e+00> : vector<16x32xf32>
    %230 = tpu.matmul %227, %229, %cst_102 {dimension_numbers = #tpu.dot_dimension_numbers<[1], [0], [0], [1], [0, 0, 1, 1], [], []>} : vector<16x8xf32>, vector<8x32xf32>, vector<16x32xf32> -> vector<16x32xf32>
    %231 = arith.addf %196, %230 : vector<16x32xf32>
    %232 = vector.extract_strided_slice %189 {offsets = [1, 0, 0], sizes = [1, 32, 8], strides = [1, 1, 1]} : vector<4x32x8xf32> to vector<1x32x8xf32>
    %233 = vector.shape_cast %232 : vector<1x32x8xf32> to vector<32x8xf32>
    %cst_103 = arith.constant dense<0.000000e+00> : vector<16x8xf32>
    %234 = tpu.matmul %184, %233, %cst_103 {dimension_numbers = #tpu.dot_dimension_numbers<[1], [0], [0], [1], [0, 0, 1, 1], [], []>} : vector<16x32xf32>, vector<32x8xf32>, vector<16x8xf32> -> vector<16x8xf32>
    %235 = vector.shape_cast %234 : vector<16x8xf32> to vector<2x8x8xf32>
    %236 = vector.extract_strided_slice %191 {offsets = [1, 0, 0], sizes = [1, 32, 8], strides = [1, 1, 1]} : vector<4x32x8xf32> to vector<1x32x8xf32>
    %237 = vector.shape_cast %236 : vector<1x32x8xf32> to vector<32x8xf32>
    %cst_104 = arith.constant dense<0.000000e+00> : vector<16x8xf32>
    %238 = tpu.matmul %4, %237, %cst_104 {dimension_numbers = #tpu.dot_dimension_numbers<[1], [0], [0], [1], [0, 0, 1, 1], [], []>} : vector<16x32xf32>, vector<32x8xf32>, vector<16x8xf32> -> vector<16x8xf32>
    %239 = vector.shape_cast %238 : vector<16x8xf32> to vector<2x8x8xf32>
    %240 = vector.extract_strided_slice %193 {offsets = [1, 0, 0], sizes = [1, 32, 8], strides = [1, 1, 1]} : vector<4x32x8xf32> to vector<1x32x8xf32>
    %241 = vector.shape_cast %240 : vector<1x32x8xf32> to vector<32x8xf32>
    %cst_105 = arith.constant dense<0.000000e+00> : vector<16x8xf32>
    %242 = tpu.matmul %4, %241, %cst_105 {dimension_numbers = #tpu.dot_dimension_numbers<[1], [0], [0], [1], [0, 0, 1, 1], [], []>} : vector<16x32xf32>, vector<32x8xf32>, vector<16x8xf32> -> vector<16x8xf32>
    %243 = vector.shape_cast %242 : vector<16x8xf32> to vector<2x8x8xf32>
    "tpu.trace_start"() <{level = 10 : i32, message = "bqd,bkd->bqk"}> : () -> ()
    %cst_106 = arith.constant dense<0.000000e+00> : vector<2x8x8xf32>
    %244 = tpu.matmul %235, %239, %cst_106 {dimension_numbers = #tpu.dot_dimension_numbers<[2], [2], [1], [1], [0, 0, 0, 1, 1, 1], [0], [0]>} : vector<2x8x8xf32>, vector<2x8x8xf32>, vector<2x8x8xf32> -> vector<2x8x8xf32>
    "tpu.trace_stop"() : () -> ()
    %cst_107 = arith.constant 0.353553385 : f32
    %245 = vector.broadcast %cst_107 : f32 to vector<2x8x8xf32>
    %246 = arith.mulf %244, %245 : vector<2x8x8xf32>
    %cst_108 = arith.constant -1.000000e+09 : f32
    %247 = vector.shape_cast %19 : vector<2x1x8xi1> to vector<2x1x8xi1>
    %248 = vector.broadcast %247 : vector<2x1x8xi1> to vector<2x8x8xi1>
    %249 = vector.broadcast %cst_108 : f32 to vector<2x8x8xf32>
    %250 = arith.select %248, %249, %246 : vector<2x8x8xi1>, vector<2x8x8xf32>
    %cst_109 = arith.constant dense<0xFF800000> : vector<2x8xf32>
    %251 = vector.multi_reduction <maximumf>, %250, %cst_109 [2] : vector<2x8x8xf32> to vector<2x8xf32>
    %252 = vector.shape_cast %251 : vector<2x8xf32> to vector<2x8x1xf32>
    %253 = vector.broadcast %252 : vector<2x8x1xf32> to vector<2x8x8xf32>
    %254 = arith.subf %250, %253 : vector<2x8x8xf32>
    %255 = math.exp %254 : vector<2x8x8xf32>
    %cst_110 = arith.constant dense<0.000000e+00> : vector<2x8xf32>
    %256 = vector.multi_reduction <add>, %255, %cst_110 [2] : vector<2x8x8xf32> to vector<2x8xf32>
    %257 = vector.shape_cast %256 : vector<2x8xf32> to vector<2x8x1xf32>
    %258 = tpu.reciprocal %257 {approx = true} : vector<2x8x1xf32> -> vector<2x8x1xf32>
    %259 = vector.broadcast %258 : vector<2x8x1xf32> to vector<2x8x8xf32>
    %260 = arith.mulf %255, %259 : vector<2x8x8xf32>
    "tpu.trace_start"() <{level = 10 : i32, message = "bqk,bkd->bqd"}> : () -> ()
    %cst_111 = arith.constant dense<0.000000e+00> : vector<2x8x8xf32>
    %261 = tpu.matmul %260, %243, %cst_111 {dimension_numbers = #tpu.dot_dimension_numbers<[2], [1], [1], [2], [0, 0, 0, 1, 1, 2], [0], [0]>} : vector<2x8x8xf32>, vector<2x8x8xf32>, vector<2x8x8xf32> -> vector<2x8x8xf32>
    "tpu.trace_stop"() : () -> ()
    %262 = vector.shape_cast %261 : vector<2x8x8xf32> to vector<16x8xf32>
    %263 = vector.extract_strided_slice %195 {offsets = [1, 0, 0], sizes = [1, 8, 32], strides = [1, 1, 1]} : vector<4x8x32xf32> to vector<1x8x32xf32>
    %264 = vector.shape_cast %263 : vector<1x8x32xf32> to vector<8x32xf32>
    %cst_112 = arith.constant dense<0.000000e+00> : vector<16x32xf32>
    %265 = tpu.matmul %262, %264, %cst_112 {dimension_numbers = #tpu.dot_dimension_numbers<[1], [0], [0], [1], [0, 0, 1, 1], [], []>} : vector<16x8xf32>, vector<8x32xf32>, vector<16x32xf32> -> vector<16x32xf32>
    %266 = arith.addf %231, %265 : vector<16x32xf32>
    %267 = vector.extract_strided_slice %189 {offsets = [2, 0, 0], sizes = [1, 32, 8], strides = [1, 1, 1]} : vector<4x32x8xf32> to vector<1x32x8xf32>
    %268 = vector.shape_cast %267 : vector<1x32x8xf32> to vector<32x8xf32>
    %cst_113 = arith.constant dense<0.000000e+00> : vector<16x8xf32>
    %269 = tpu.matmul %184, %268, %cst_113 {dimension_numbers = #tpu.dot_dimension_numbers<[1], [0], [0], [1], [0, 0, 1, 1], [], []>} : vector<16x32xf32>, vector<32x8xf32>, vector<16x8xf32> -> vector<16x8xf32>
    %270 = vector.shape_cast %269 : vector<16x8xf32> to vector<2x8x8xf32>
    %271 = vector.extract_strided_slice %191 {offsets = [2, 0, 0], sizes = [1, 32, 8], strides = [1, 1, 1]} : vector<4x32x8xf32> to vector<1x32x8xf32>
    %272 = vector.shape_cast %271 : vector<1x32x8xf32> to vector<32x8xf32>
    %cst_114 = arith.constant dense<0.000000e+00> : vector<16x8xf32>
    %273 = tpu.matmul %4, %272, %cst_114 {dimension_numbers = #tpu.dot_dimension_numbers<[1], [0], [0], [1], [0, 0, 1, 1], [], []>} : vector<16x32xf32>, vector<32x8xf32>, vector<16x8xf32> -> vector<16x8xf32>
    %274 = vector.shape_cast %273 : vector<16x8xf32> to vector<2x8x8xf32>
    %275 = vector.extract_strided_slice %193 {offsets = [2, 0, 0], sizes = [1, 32, 8], strides = [1, 1, 1]} : vector<4x32x8xf32> to vector<1x32x8xf32>
    %276 = vector.shape_cast %275 : vector<1x32x8xf32> to vector<32x8xf32>
    %cst_115 = arith.constant dense<0.000000e+00> : vector<16x8xf32>
    %277 = tpu.matmul %4, %276, %cst_115 {dimension_numbers = #tpu.dot_dimension_numbers<[1], [0], [0], [1], [0, 0, 1, 1], [], []>} : vector<16x32xf32>, vector<32x8xf32>, vector<16x8xf32> -> vector<16x8xf32>
    %278 = vector.shape_cast %277 : vector<16x8xf32> to vector<2x8x8xf32>
    "tpu.trace_start"() <{level = 10 : i32, message = "bqd,bkd->bqk"}> : () -> ()
    %cst_116 = arith.constant dense<0.000000e+00> : vector<2x8x8xf32>
    %279 = tpu.matmul %270, %274, %cst_116 {dimension_numbers = #tpu.dot_dimension_numbers<[2], [2], [1], [1], [0, 0, 0, 1, 1, 1], [0], [0]>} : vector<2x8x8xf32>, vector<2x8x8xf32>, vector<2x8x8xf32> -> vector<2x8x8xf32>
    "tpu.trace_stop"() : () -> ()
    %cst_117 = arith.constant 0.353553385 : f32
    %280 = vector.broadcast %cst_117 : f32 to vector<2x8x8xf32>
    %281 = arith.mulf %279, %280 : vector<2x8x8xf32>
    %cst_118 = arith.constant -1.000000e+09 : f32
    %282 = vector.shape_cast %19 : vector<2x1x8xi1> to vector<2x1x8xi1>
    %283 = vector.broadcast %282 : vector<2x1x8xi1> to vector<2x8x8xi1>
    %284 = vector.broadcast %cst_118 : f32 to vector<2x8x8xf32>
    %285 = arith.select %283, %284, %281 : vector<2x8x8xi1>, vector<2x8x8xf32>
    %cst_119 = arith.constant dense<0xFF800000> : vector<2x8xf32>
    %286 = vector.multi_reduction <maximumf>, %285, %cst_119 [2] : vector<2x8x8xf32> to vector<2x8xf32>
    %287 = vector.shape_cast %286 : vector<2x8xf32> to vector<2x8x1xf32>
    %288 = vector.broadcast %287 : vector<2x8x1xf32> to vector<2x8x8xf32>
    %289 = arith.subf %285, %288 : vector<2x8x8xf32>
    %290 = math.exp %289 : vector<2x8x8xf32>
    %cst_120 = arith.constant dense<0.000000e+00> : vector<2x8xf32>
    %291 = vector.multi_reduction <add>, %290, %cst_120 [2] : vector<2x8x8xf32> to vector<2x8xf32>
    %292 = vector.shape_cast %291 : vector<2x8xf32> to vector<2x8x1xf32>
    %293 = tpu.reciprocal %292 {approx = true} : vector<2x8x1xf32> -> vector<2x8x1xf32>
    %294 = vector.broadcast %293 : vector<2x8x1xf32> to vector<2x8x8xf32>
    %295 = arith.mulf %290, %294 : vector<2x8x8xf32>
    "tpu.trace_start"() <{level = 10 : i32, message = "bqk,bkd->bqd"}> : () -> ()
    %cst_121 = arith.constant dense<0.000000e+00> : vector<2x8x8xf32>
    %296 = tpu.matmul %295, %278, %cst_121 {dimension_numbers = #tpu.dot_dimension_numbers<[2], [1], [1], [2], [0, 0, 0, 1, 1, 2], [0], [0]>} : vector<2x8x8xf32>, vector<2x8x8xf32>, vector<2x8x8xf32> -> vector<2x8x8xf32>
    "tpu.trace_stop"() : () -> ()
    %297 = vector.shape_cast %296 : vector<2x8x8xf32> to vector<16x8xf32>
    %298 = vector.extract_strided_slice %195 {offsets = [2, 0, 0], sizes = [1, 8, 32], strides = [1, 1, 1]} : vector<4x8x32xf32> to vector<1x8x32xf32>
    %299 = vector.shape_cast %298 : vector<1x8x32xf32> to vector<8x32xf32>
    %cst_122 = arith.constant dense<0.000000e+00> : vector<16x32xf32>
    %300 = tpu.matmul %297, %299, %cst_122 {dimension_numbers = #tpu.dot_dimension_numbers<[1], [0], [0], [1], [0, 0, 1, 1], [], []>} : vector<16x8xf32>, vector<8x32xf32>, vector<16x32xf32> -> vector<16x32xf32>
    %301 = arith.addf %266, %300 : vector<16x32xf32>
    %302 = vector.extract_strided_slice %189 {offsets = [3, 0, 0], sizes = [1, 32, 8], strides = [1, 1, 1]} : vector<4x32x8xf32> to vector<1x32x8xf32>
    %303 = vector.shape_cast %302 : vector<1x32x8xf32> to vector<32x8xf32>
    %cst_123 = arith.constant dense<0.000000e+00> : vector<16x8xf32>
    %304 = tpu.matmul %184, %303, %cst_123 {dimension_numbers = #tpu.dot_dimension_numbers<[1], [0], [0], [1], [0, 0, 1, 1], [], []>} : vector<16x32xf32>, vector<32x8xf32>, vector<16x8xf32> -> vector<16x8xf32>
    %305 = vector.shape_cast %304 : vector<16x8xf32> to vector<2x8x8xf32>
    %306 = vector.extract_strided_slice %191 {offsets = [3, 0, 0], sizes = [1, 32, 8], strides = [1, 1, 1]} : vector<4x32x8xf32> to vector<1x32x8xf32>
    %307 = vector.shape_cast %306 : vector<1x32x8xf32> to vector<32x8xf32>
    %cst_124 = arith.constant dense<0.000000e+00> : vector<16x8xf32>
    %308 = tpu.matmul %4, %307, %cst_124 {dimension_numbers = #tpu.dot_dimension_numbers<[1], [0], [0], [1], [0, 0, 1, 1], [], []>} : vector<16x32xf32>, vector<32x8xf32>, vector<16x8xf32> -> vector<16x8xf32>
    %309 = vector.shape_cast %308 : vector<16x8xf32> to vector<2x8x8xf32>
    %310 = vector.extract_strided_slice %193 {offsets = [3, 0, 0], sizes = [1, 32, 8], strides = [1, 1, 1]} : vector<4x32x8xf32> to vector<1x32x8xf32>
    %311 = vector.shape_cast %310 : vector<1x32x8xf32> to vector<32x8xf32>
    %cst_125 = arith.constant dense<0.000000e+00> : vector<16x8xf32>
    %312 = tpu.matmul %4, %311, %cst_125 {dimension_numbers = #tpu.dot_dimension_numbers<[1], [0], [0], [1], [0, 0, 1, 1], [], []>} : vector<16x32xf32>, vector<32x8xf32>, vector<16x8xf32> -> vector<16x8xf32>
    %313 = vector.shape_cast %312 : vector<16x8xf32> to vector<2x8x8xf32>
    "tpu.trace_start"() <{level = 10 : i32, message = "bqd,bkd->bqk"}> : () -> ()
    %cst_126 = arith.constant dense<0.000000e+00> : vector<2x8x8xf32>
    %314 = tpu.matmul %305, %309, %cst_126 {dimension_numbers = #tpu.dot_dimension_numbers<[2], [2], [1], [1], [0, 0, 0, 1, 1, 1], [0], [0]>} : vector<2x8x8xf32>, vector<2x8x8xf32>, vector<2x8x8xf32> -> vector<2x8x8xf32>
    "tpu.trace_stop"() : () -> ()
    %cst_127 = arith.constant 0.353553385 : f32
    %315 = vector.broadcast %cst_127 : f32 to vector<2x8x8xf32>
    %316 = arith.mulf %314, %315 : vector<2x8x8xf32>
    %cst_128 = arith.constant -1.000000e+09 : f32
    %317 = vector.shape_cast %19 : vector<2x1x8xi1> to vector<2x1x8xi1>
    %318 = vector.broadcast %317 : vector<2x1x8xi1> to vector<2x8x8xi1>
    %319 = vector.broadcast %cst_128 : f32 to vector<2x8x8xf32>
    %320 = arith.select %318, %319, %316 : vector<2x8x8xi1>, vector<2x8x8xf32>
    %cst_129 = arith.constant dense<0xFF800000> : vector<2x8xf32>
    %321 = vector.multi_reduction <maximumf>, %320, %cst_129 [2] : vector<2x8x8xf32> to vector<2x8xf32>
    %322 = vector.shape_cast %321 : vector<2x8xf32> to vector<2x8x1xf32>
    %323 = vector.broadcast %322 : vector<2x8x1xf32> to vector<2x8x8xf32>
    %324 = arith.subf %320, %323 : vector<2x8x8xf32>
    %325 = math.exp %324 : vector<2x8x8xf32>
    %cst_130 = arith.constant dense<0.000000e+00> : vector<2x8xf32>
    %326 = vector.multi_reduction <add>, %325, %cst_130 [2] : vector<2x8x8xf32> to vector<2x8xf32>
    %327 = vector.shape_cast %326 : vector<2x8xf32> to vector<2x8x1xf32>
    %328 = tpu.reciprocal %327 {approx = true} : vector<2x8x1xf32> -> vector<2x8x1xf32>
    %329 = vector.broadcast %328 : vector<2x8x1xf32> to vector<2x8x8xf32>
    %330 = arith.mulf %325, %329 : vector<2x8x8xf32>
    "tpu.trace_start"() <{level = 10 : i32, message = "bqk,bkd->bqd"}> : () -> ()
    %cst_131 = arith.constant dense<0.000000e+00> : vector<2x8x8xf32>
    %331 = tpu.matmul %330, %313, %cst_131 {dimension_numbers = #tpu.dot_dimension_numbers<[2], [1], [1], [2], [0, 0, 0, 1, 1, 2], [0], [0]>} : vector<2x8x8xf32>, vector<2x8x8xf32>, vector<2x8x8xf32> -> vector<2x8x8xf32>
    "tpu.trace_stop"() : () -> ()
    %332 = vector.shape_cast %331 : vector<2x8x8xf32> to vector<16x8xf32>
    %333 = vector.extract_strided_slice %195 {offsets = [3, 0, 0], sizes = [1, 8, 32], strides = [1, 1, 1]} : vector<4x8x32xf32> to vector<1x8x32xf32>
    %334 = vector.shape_cast %333 : vector<1x8x32xf32> to vector<8x32xf32>
    %cst_132 = arith.constant dense<0.000000e+00> : vector<16x32xf32>
    %335 = tpu.matmul %332, %334, %cst_132 {dimension_numbers = #tpu.dot_dimension_numbers<[1], [0], [0], [1], [0, 0, 1, 1], [], []>} : vector<16x8xf32>, vector<8x32xf32>, vector<16x32xf32> -> vector<16x32xf32>
    %336 = arith.addf %301, %335 : vector<16x32xf32>
    %337 = vector.shape_cast %225 : vector<2x8x8xf32> to vector<2x1x8x8xf32>
    %338 = vector.shape_cast %260 : vector<2x8x8xf32> to vector<2x1x8x8xf32>
    %339 = vector.shape_cast %295 : vector<2x8x8xf32> to vector<2x1x8x8xf32>
    %340 = vector.shape_cast %330 : vector<2x8x8xf32> to vector<2x1x8x8xf32>
    %341 = tpu.concatenate %337, %338, %339, %340 in 1 : vector<2x1x8x8xf32>, vector<2x1x8x8xf32>, vector<2x1x8x8xf32>, vector<2x1x8x8xf32> -> vector<2x4x8x8xf32>
    %342 = arith.addf %336, %184 : vector<16x32xf32>
    %cst_133 = arith.constant dense<0.000000e+00> : vector<16xf32>
    %343 = vector.multi_reduction <add>, %342, %cst_133 [1] : vector<16x32xf32> to vector<16xf32>
    %344 = vector.shape_cast %343 : vector<16xf32> to vector<16x1xf32>
    %cst_134 = arith.constant 3.200000e+01 : f32
    %345 = vector.broadcast %cst_134 : f32 to vector<16x1xf32>
    %346 = arith.divf %344, %345 : vector<16x1xf32>
    %347 = vector.broadcast %346 : vector<16x1xf32> to vector<16x32xf32>
    %348 = arith.subf %342, %347 : vector<16x32xf32>
    %349 = arith.mulf %348, %348 : vector<16x32xf32>
    %cst_135 = arith.constant dense<0.000000e+00> : vector<16xf32>
    %350 = vector.multi_reduction <add>, %349, %cst_135 [1] : vector<16x32xf32> to vector<16xf32>
    %351 = vector.shape_cast %350 : vector<16xf32> to vector<16x1xf32>
    %cst_136 = arith.constant 3.200000e+01 : f32
    %352 = vector.broadcast %cst_136 : f32 to vector<16x1xf32>
    %353 = arith.divf %351, %352 : vector<16x1xf32>
    %354 = vector.broadcast %346 : vector<16x1xf32> to vector<16x32xf32>
    %355 = arith.subf %342, %354 : vector<16x32xf32>
    %cst_137 = arith.constant 9.99999974E-6 : f32
    %356 = vector.broadcast %cst_137 : f32 to vector<16x1xf32>
    %357 = arith.addf %353, %356 : vector<16x1xf32>
    %358 = math.rsqrt %357 : vector<16x1xf32>
    %359 = vector.broadcast %358 : vector<16x1xf32> to vector<16x32xf32>
    %360 = arith.mulf %355, %359 : vector<16x32xf32>
    %c0_138 = arith.constant 0 : index
    %c0_139 = arith.constant 0 : index
    %c0_140 = arith.constant 0 : index
    %c0_141 = arith.constant 0 : index
    %c0_142 = arith.constant 0 : index
    %361 = vector.load %arg18[%c0_138, %c0_139, %c0_140, %c0_141, %c0_142] : memref<1x2x4x8x8xf32, #tpu.memory_space<vmem>>, vector<1x2x4x8x8xf32>
    %362 = vector.shape_cast %361 : vector<1x2x4x8x8xf32> to vector<2x4x8x8xf32>
    %363 = vector.shape_cast %341 : vector<2x4x8x8xf32> to vector<1x2x4x8x8xf32>
    tpu.vector_store %arg18[%c0_138, %c0_139, %c0_140, %c0_141, %c0_142], %363 {strides = array<i32>} : memref<1x2x4x8x8xf32, #tpu.memory_space<vmem>>, vector<1x2x4x8x8xf32>,
    %c0_143 = arith.constant 0 : index
    %c0_144 = arith.constant 0 : index
    %c0_145 = arith.constant 0 : index
    %364 = vector.load %arg13[%c0_143, %c0_144, %c0_145] : memref<1x32x64xf32, #tpu.memory_space<vmem>>, vector<1x32x64xf32>
    %365 = vector.shape_cast %364 : vector<1x32x64xf32> to vector<32x64xf32>
    %cst_146 = arith.constant dense<0.000000e+00> : vector<16x64xf32>
    %366 = tpu.matmul %360, %365, %cst_146 {dimension_numbers = #tpu.dot_dimension_numbers<[1], [0], [0], [1], [0, 0, 1, 1], [], []>} : vector<16x32xf32>, vector<32x64xf32>, vector<16x64xf32> -> vector<16x64xf32>
    %cst_147 = arith.constant 0.000000e+00 : f32
    %367 = vector.broadcast %cst_147 : f32 to vector<16x64xf32>
    %368 = arith.maximumf %366, %367 : vector<16x64xf32>
    %c0_148 = arith.constant 0 : index
    %c0_149 = arith.constant 0 : index
    %c0_150 = arith.constant 0 : index
    %369 = vector.load %arg14[%c0_148, %c0_149, %c0_150] : memref<1x64x32xf32, #tpu.memory_space<vmem>>, vector<1x64x32xf32>
    %370 = vector.shape_cast %369 : vector<1x64x32xf32> to vector<64x32xf32>
    %cst_151 = arith.constant dense<0.000000e+00> : vector<16x32xf32>
    %371 = tpu.matmul %368, %370, %cst_151 {dimension_numbers = #tpu.dot_dimension_numbers<[1], [0], [0], [1], [0, 0, 1, 1], [], []>} : vector<16x64xf32>, vector<64x32xf32>, vector<16x32xf32> -> vector<16x32xf32>
    %372 = arith.addf %371, %360 : vector<16x32xf32>
    %cst_152 = arith.constant dense<0.000000e+00> : vector<16xf32>
    %373 = vector.multi_reduction <add>, %372, %cst_152 [1] : vector<16x32xf32> to vector<16xf32>
    %374 = vector.shape_cast %373 : vector<16xf32> to vector<16x1xf32>
    %cst_153 = arith.constant 3.200000e+01 : f32
    %375 = vector.broadcast %cst_153 : f32 to vector<16x1xf32>
    %376 = arith.divf %374, %375 : vector<16x1xf32>
    %377 = vector.broadcast %376 : vector<16x1xf32> to vector<16x32xf32>
    %378 = arith.subf %372, %377 : vector<16x32xf32>
    %379 = arith.mulf %378, %378 : vector<16x32xf32>
    %cst_154 = arith.constant dense<0.000000e+00> : vector<16xf32>
    %380 = vector.multi_reduction <add>, %379, %cst_154 [1] : vector<16x32xf32> to vector<16xf32>
    %381 = vector.shape_cast %380 : vector<16xf32> to vector<16x1xf32>
    %cst_155 = arith.constant 3.200000e+01 : f32
    %382 = vector.broadcast %cst_155 : f32 to vector<16x1xf32>
    %383 = arith.divf %381, %382 : vector<16x1xf32>
    %384 = vector.broadcast %376 : vector<16x1xf32> to vector<16x32xf32>
    %385 = arith.subf %372, %384 : vector<16x32xf32>
    %cst_156 = arith.constant 9.99999974E-6 : f32
    %386 = vector.broadcast %cst_156 : f32 to vector<16x1xf32>
    %387 = arith.addf %383, %386 : vector<16x1xf32>
    %388 = math.rsqrt %387 : vector<16x1xf32>
    %389 = vector.broadcast %388 : vector<16x1xf32> to vector<16x32xf32>
    %390 = arith.mulf %385, %389 : vector<16x32xf32>
    %c0_157 = arith.constant 0 : index
    %c0_158 = arith.constant 0 : index
    %391 = vector.load %arg19[%c0_157, %c0_158] : memref<16x32xf32, #tpu.memory_space<vmem>>, vector<16x32xf32>
    tpu.vector_store %arg19[%c0_157, %c0_158], %390 {strides = array<i32>} : memref<16x32xf32, #tpu.memory_space<vmem>>, vector<16x32xf32>,
    %c1_i32 = arith.constant 1 : i32
    %392 = arith.cmpi eq, %arg0, %c1_i32 : i32
    %393 = arith.extui %392 : i1 to i32
    %c0_i32_159 = arith.constant 0 : i32
    %394 = arith.cmpi ne, %393, %c0_i32_159 : i32
    scf.if %394 {
      %c0_160 = arith.constant 0 : index
      %c0_161 = arith.constant 0 : index
      %395 = vector.load %arg15[%c0_160, %c0_161] : memref<32x16xf32, #tpu.memory_space<vmem>>, vector<32x16xf32>
      %cst_162 = arith.constant dense<0.000000e+00> : vector<16x16xf32>
      %396 = tpu.matmul %390, %395, %cst_162 {dimension_numbers = #tpu.dot_dimension_numbers<[1], [0], [0], [1], [0, 0, 1, 1], [], []>} : vector<16x32xf32>, vector<32x16xf32>, vector<16x16xf32> -> vector<16x16xf32>
      %c0_163 = arith.constant 0 : index
      %c0_164 = arith.constant 0 : index
      %397 = vector.load %arg16[%c0_163, %c0_164] : memref<16x16xf32, #tpu.memory_space<vmem>>, vector<16x16xf32>
      tpu.vector_store %arg16[%c0_163, %c0_164], %396 {strides = array<i32>} : memref<16x16xf32, #tpu.memory_space<vmem>>, vector<16x16xf32>,
    } else {
    }
    return
  }
  func.func @transform_0(%arg0: i32) -> (i32, i32) {
    %c0_i32 = arith.constant 0 : i32
    %c0_i32_0 = arith.constant 0 : i32
    %c0_i32_1 = arith.constant 0 : i32
    return %c0_i32, %c0_i32_0 : i32, i32
  }
  func.func @transform_1(%arg0: i32) -> (i32, i32) {
    %c0_i32 = arith.constant 0 : i32
    %c0_i32_0 = arith.constant 0 : i32
    %c0_i32_1 = arith.constant 0 : i32
    return %c0_i32, %c0_i32_0 : i32, i32
  }
  func.func @transform_2(%arg0: i32) -> (i32, i32) {
    %c0_i32 = arith.constant 0 : i32
    %c0_i32_0 = arith.constant 0 : i32
    %c0_i32_1 = arith.constant 0 : i32
    return %c0_i32, %c0_i32_0 : i32, i32
  }
  func.func @transform_3(%arg0: i32) -> (i32, i32) {
    %c0_i32 = arith.constant 0 : i32
    %c0_i32_0 = arith.constant 0 : i32
    %c0_i32_1 = arith.constant 0 : i32
    return %c0_i32, %c0_i32_0 : i32, i32
  }
  func.func @transform_4(%arg0: i32) -> (i32, i32, i32, i32) {
    %c0_i32 = arith.constant 0 : i32
    %c0_i32_0 = arith.constant 0 : i32
    %c0_i32_1 = arith.constant 0 : i32
    %c0_i32_2 = arith.constant 0 : i32
    return %arg0, %c0_i32, %c0_i32_0, %c0_i32_1 : i32, i32, i32, i32
  }
  func.func @transform_5(%arg0: i32) -> (i32, i32, i32, i32) {
    %c0_i32 = arith.constant 0 : i32
    %c0_i32_0 = arith.constant 0 : i32
    %c0_i32_1 = arith.constant 0 : i32
    %c0_i32_2 = arith.constant 0 : i32
    return %arg0, %c0_i32, %c0_i32_0, %c0_i32_1 : i32, i32, i32, i32
  }
  func.func @transform_6(%arg0: i32) -> (i32, i32, i32, i32) {
    %c0_i32 = arith.constant 0 : i32
    %c0_i32_0 = arith.constant 0 : i32
    %c0_i32_1 = arith.constant 0 : i32
    %c0_i32_2 = arith.constant 0 : i32
    return %arg0, %c0_i32, %c0_i32_0, %c0_i32_1 : i32, i32, i32, i32
  }
  func.func @transform_7(%arg0: i32) -> (i32, i32, i32, i32) {
    %c0_i32 = arith.constant 0 : i32
    %c0_i32_0 = arith.constant 0 : i32
    %c0_i32_1 = arith.constant 0 : i32
    %c0_i32_2 = arith.constant 0 : i32
    return %arg0, %c0_i32, %c0_i32_0, %c0_i32_1 : i32, i32, i32, i32
  }
  func.func @transform_8(%arg0: i32) -> (i32, i32, i32, i32) {
    %c0_i32 = arith.constant 0 : i32
    %c0_i32_0 = arith.constant 0 : i32
    %c0_i32_1 = arith.constant 0 : i32
    %c0_i32_2 = arith.constant 0 : i32
    return %arg0, %c0_i32, %c0_i32_0, %c0_i32_1 : i32, i32, i32, i32
  }
  func.func @transform_9(%arg0: i32) -> (i32, i32, i32, i32) {
    %c0_i32 = arith.constant 0 : i32
    %c0_i32_0 = arith.constant 0 : i32
    %c0_i32_1 = arith.constant 0 : i32
    %c0_i32_2 = arith.constant 0 : i32
    return %arg0, %c0_i32, %c0_i32_0, %c0_i32_1 : i32, i32, i32, i32
  }
  func.func @transform_10(%arg0: i32) -> (i32, i32, i32, i32) {
    %c0_i32 = arith.constant 0 : i32
    %c0_i32_0 = arith.constant 0 : i32
    %c0_i32_1 = arith.constant 0 : i32
    %c0_i32_2 = arith.constant 0 : i32
    return %arg0, %c0_i32, %c0_i32_0, %c0_i32_1 : i32, i32, i32, i32
  }
  func.func @transform_11(%arg0: i32) -> (i32, i32, i32, i32) {
    %c0_i32 = arith.constant 0 : i32
    %c0_i32_0 = arith.constant 0 : i32
    %c0_i32_1 = arith.constant 0 : i32
    %c0_i32_2 = arith.constant 0 : i32
    return %arg0, %c0_i32, %c0_i32_0, %c0_i32_1 : i32, i32, i32, i32
  }
  func.func @transform_12(%arg0: i32) -> (i32, i32, i32) {
    %c0_i32 = arith.constant 0 : i32
    %c0_i32_0 = arith.constant 0 : i32
    %c0_i32_1 = arith.constant 0 : i32
    return %arg0, %c0_i32, %c0_i32_0 : i32, i32, i32
  }
  func.func @transform_13(%arg0: i32) -> (i32, i32, i32) {
    %c0_i32 = arith.constant 0 : i32
    %c0_i32_0 = arith.constant 0 : i32
    %c0_i32_1 = arith.constant 0 : i32
    return %arg0, %c0_i32, %c0_i32_0 : i32, i32, i32
  }
  func.func @transform_14(%arg0: i32) -> (i32, i32) {
    %c0_i32 = arith.constant 0 : i32
    %c0_i32_0 = arith.constant 0 : i32
    %c0_i32_1 = arith.constant 0 : i32
    return %c0_i32, %c0_i32_0 : i32, i32
  }
  func.func @transform_15(%arg0: i32) -> (i32, i32) {
    %c0_i32 = arith.constant 0 : i32
    %c0_i32_0 = arith.constant 0 : i32
    %c0_i32_1 = arith.constant 0 : i32
    return %c0_i32, %c0_i32_0 : i32, i32
  }
  func.func @transform_16(%arg0: i32) -> (i32, i32, i32, i32, i32) {
    %c0_i32 = arith.constant 0 : i32
    %c0_i32_0 = arith.constant 0 : i32
    %c0_i32_1 = arith.constant 0 : i32
    %c0_i32_2 = arith.constant 0 : i32
    %c0_i32_3 = arith.constant 0 : i32
    return %arg0, %c0_i32, %c0_i32_0, %c0_i32_1, %c0_i32_2 : i32, i32, i32, i32, i32
  }
  func.func @transform_17(%arg0: i32) -> (i32, i32, i32, i32, i32) {
    %c0_i32 = arith.constant 0 : i32
    %c0_i32_0 = arith.constant 0 : i32
    %c0_i32_1 = arith.constant 0 : i32
    %c0_i32_2 = arith.constant 0 : i32
    %c0_i32_3 = arith.constant 0 : i32
    return %arg0, %c0_i32, %c0_i32_0, %c0_i32_1, %c0_i32_2 : i32, i32, i32, i32, i32
  }
}

</mosaic_0001>

<llo_original>
// kernel: transformer_forward.2
$region0: #{transformer_forward.2}
  #allocation0 [shape = 'u32[]', space=smem, size = 0x4, offset = 0x4, fixed_abs, tag = 'smem constant byte address 0x4 - core index']
  #allocation1 [shape = 'u32[144,128]{1,0:T(1,128)}', space=vmem, size = 0x12000, scoped, tag = 'internal scratch']
  %s0 = inlined_call_operand.vmem [shape: f32[16,32], index: 0, kind: input, shape index: {}]
  %s1 = inlined_call_operand.vmem [shape: f32[2,8], index: 1, kind: input, shape index: {}]
  %s2 = inlined_call_operand.vmem [shape: f32[2,4,32,8], index: 2, kind: input, shape index: {}]
  %s3 = inlined_call_operand.vmem [shape: f32[2,4,32,8], index: 3, kind: input, shape index: {}]
  %s4 = inlined_call_operand.vmem [shape: f32[2,4,32,8], index: 4, kind: input, shape index: {}]
  %s5 = inlined_call_operand.vmem [shape: f32[2,4,8,32], index: 5, kind: input, shape index: {}]
  %s6 = inlined_call_operand.vmem [shape: f32[2,32,64], index: 6, kind: input, shape index: {}]
  %s7 = inlined_call_operand.vmem [shape: f32[2,64,32], index: 7, kind: input, shape index: {}]
  %s8 = inlined_call_operand.vmem [shape: f32[16,32], index: 8, kind: output, shape index: {0}]
  %s9 = inlined_call_operand.vmem [shape: f32[2,2,4,8,8], index: 9, kind: output, shape index: {1}]
  %10 = xla_tuple %s8, %s9
  %s11 = sld [smem:[#allocation0]]
  $region77: #{transformer_forward.2} parent=0
    _
  %s13 = ssub.s32 1, %s11
  %s14 = scalar_select 0, %s13, %s11
  loop: start=0, step=1, limit=4
  $region2: #{transformer_forward.2} parent=0 // loop_pre_header
    _
  $region3: #{transformer_forward.2} parent=0 // loop_header
    %s16 = sphi 0, %s20
    %p17 = scmp.ge.s32.totalorder %s16, 4
    %s24 = sphi 0, %s24
    %s26 = sphi 0, %s24
    %s27 = sphi 0, %s26
    %s41 = sphi 0, %s27
    %s45 = sphi 0, %s45
    %s47 = sphi 0, %s45
    %s48 = sphi 0, %s47
    %s62 = sphi 0, %s48
    %s68 = sphi 0, %s70
    %s71 = sphi 0, %s68
    %s72 = sphi 0, %s71
    %s88 = sphi 0, %s72
    %s94 = sphi 0, %s96
    %s97 = sphi 0, %s94
    %s98 = sphi 0, %s97
    %s114 = sphi 0, %s98
    %s120 = sphi 0, %s122
    %s123 = sphi 0, %s120
    %s124 = sphi 0, %s123
    %s140 = sphi 0, %s124
    %s146 = sphi 0, %s148
    %s149 = sphi 0, %s146
    %s150 = sphi 0, %s149
    %s166 = sphi 0, %s150
    %s172 = sphi 0, %s174
    %s175 = sphi 0, %s172
    %s176 = sphi 0, %s175
    %s192 = sphi 0, %s176
    %s198 = sphi 0, %s200
    %s201 = sphi 0, %s198
    %s202 = sphi 0, %s201
    %s218 = sphi 0, %s202
    %s222 = sphi 0, %s222
    %s224 = sphi 0, %s222
    %s225 = sphi 0, %s224
    %s239 = sphi 0, %s225
    %s245 = sphi 0, %s247
    %s248 = sphi 0, %s245
    %s249 = sphi 0, %s248
    %s265 = sphi 0, %s249
  $region4: #{transformer_forward.2} parent=0 // loop_header_branch
    %19 = sbr.rel (%p17) target = $region8
  $region5: #{transformer_forward.2} parent=0 // loop_body
    %s21 = ssub.s32 %s16, 1
    %s22 = ssub.s32 %s16, 2
    %s23 = sadd.s32 %s16, 1
    %s25 = sadd.s32 %s24, 1
    %p28 = scmp.eq.s32.totalorder %s16, 1
    %p29 = scmp.ne.s32.totalorder %s24, %s26
    %p30 = scmp.eq.s32.totalorder %s16, 0
    %p31 = por %p29, %p30
    %p32 = scmp.ne.s32.totalorder %s24, %s26
    %p33 = scmp.eq.s32.totalorder %s21, 1
    %p34 = por %p32, %p33
    %p35 = scmp.ne.s32.totalorder %s26, %s27
    %p36 = scmp.eq.s32.totalorder %s21, 0
    %p37 = por %p35, %p36
    %p38 = scmp.ne.s32.totalorder %s26, %s27
    %p39 = scmp.eq.s32.totalorder %s22, 1
    %p40 = por %p38, %p39
    %p42 = scmp.ne.s32.totalorder %s27, %s41
    %p43 = scmp.eq.s32.totalorder %s22, 0
    %p44 = por %p42, %p43
    %s46 = sadd.s32 %s45, 1
    %p49 = scmp.eq.s32.totalorder %s16, 1
    %p50 = scmp.ne.s32.totalorder %s45, %s47
    %p51 = scmp.eq.s32.totalorder %s16, 0
    %p52 = por %p50, %p51
    %p53 = scmp.ne.s32.totalorder %s45, %s47
    %p54 = scmp.eq.s32.totalorder %s21, 1
    %p55 = por %p53, %p54
    %p56 = scmp.ne.s32.totalorder %s47, %s48
    %p57 = scmp.eq.s32.totalorder %s21, 0
    %p58 = por %p56, %p57
    %p59 = scmp.ne.s32.totalorder %s47, %s48
    %p60 = scmp.eq.s32.totalorder %s22, 1
    %p61 = por %p59, %p60
    %p63 = scmp.ne.s32.totalorder %s48, %s62
    %p64 = scmp.eq.s32.totalorder %s22, 0
    %p65 = por %p63, %p64
    %s66 = ssub.s32 %s16, %s23
    %p67 = scmp.eq.s32.totalorder %s66, 0
    %s69 = sadd.s32 %s68, 1
    %s70 = scalar_select %p67, %s68, %s69
    %p73 = pneg %p67
    %p74 = scmp.eq.s32.totalorder %s16, 1
    %p75 = por %p73, %p74
    %p76 = scmp.ne.s32.totalorder %s68, %s71
    %p77 = scmp.eq.s32.totalorder %s16, 0
    %p78 = por %p76, %p77
    %p79 = scmp.ne.s32.totalorder %s68, %s71
    %p80 = scmp.eq.s32.totalorder %s21, 1
    %p81 = por %p79, %p80
    %p82 = scmp.ne.s32.totalorder %s71, %s72
    %p83 = scmp.eq.s32.totalorder %s21, 0
    %p84 = por %p82, %p83
    %p85 = scmp.ne.s32.totalorder %s71, %s72
    %p86 = scmp.eq.s32.totalorder %s22, 1
    %p87 = por %p85, %p86
    %p89 = scmp.ne.s32.totalorder %s72, %s88
    %p90 = scmp.eq.s32.totalorder %s22, 0
    %p91 = por %p89, %p90
    %s92 = ssub.s32 %s16, %s23
    %p93 = scmp.eq.s32.totalorder %s92, 0
    %s95 = sadd.s32 %s94, 1
    %s96 = scalar_select %p93, %s94, %s95
    %p99 = pneg %p93
    %p100 = scmp.eq.s32.totalorder %s16, 1
    %p101 = por %p99, %p100
    %p102 = scmp.ne.s32.totalorder %s94, %s97
    %p103 = scmp.eq.s32.totalorder %s16, 0
    %p104 = por %p102, %p103
    %p105 = scmp.ne.s32.totalorder %s94, %s97
    %p106 = scmp.eq.s32.totalorder %s21, 1
    %p107 = por %p105, %p106
    %p108 = scmp.ne.s32.totalorder %s97, %s98
    %p109 = scmp.eq.s32.totalorder %s21, 0
    %p110 = por %p108, %p109
    %p111 = scmp.ne.s32.totalorder %s97, %s98
    %p112 = scmp.eq.s32.totalorder %s22, 1
    %p113 = por %p111, %p112
    %p115 = scmp.ne.s32.totalorder %s98, %s114
    %p116 = scmp.eq.s32.totalorder %s22, 0
    %p117 = por %p115, %p116
    %s118 = ssub.s32 %s16, %s23
    %p119 = scmp.eq.s32.totalorder %s118, 0
    %s121 = sadd.s32 %s120, 1
    %s122 = scalar_select %p119, %s120, %s121
    %p125 = pneg %p119
    %p126 = scmp.eq.s32.totalorder %s16, 1
    %p127 = por %p125, %p126
    %p128 = scmp.ne.s32.totalorder %s120, %s123
    %p129 = scmp.eq.s32.totalorder %s16, 0
    %p130 = por %p128, %p129
    %p131 = scmp.ne.s32.totalorder %s120, %s123
    %p132 = scmp.eq.s32.totalorder %s21, 1
    %p133 = por %p131, %p132
    %p134 = scmp.ne.s32.totalorder %s123, %s124
    %p135 = scmp.eq.s32.totalorder %s21, 0
    %p136 = por %p134, %p135
    %p137 = scmp.ne.s32.totalorder %s123, %s124
    %p138 = scmp.eq.s32.totalorder %s22, 1
    %p139 = por %p137, %p138
    %p141 = scmp.ne.s32.totalorder %s124, %s140
    %p142 = scmp.eq.s32.totalorder %s22, 0
    %p143 = por %p141, %p142
    %s144 = ssub.s32 %s16, %s23
    %p145 = scmp.eq.s32.totalorder %s144, 0
    %s147 = sadd.s32 %s146, 1
    %s148 = scalar_select %p145, %s146, %s147
    %p151 = pneg %p145
    %p152 = scmp.eq.s32.totalorder %s16, 1
    %p153 = por %p151, %p152
    %p154 = scmp.ne.s32.totalorder %s146, %s149
    %p155 = scmp.eq.s32.totalorder %s16, 0
    %p156 = por %p154, %p155
    %p157 = scmp.ne.s32.totalorder %s146, %s149
    %p158 = scmp.eq.s32.totalorder %s21, 1
    %p159 = por %p157, %p158
    %p160 = scmp.ne.s32.totalorder %s149, %s150
    %p161 = scmp.eq.s32.totalorder %s21, 0
    %p162 = por %p160, %p161
    %p163 = scmp.ne.s32.totalorder %s149, %s150
    %p164 = scmp.eq.s32.totalorder %s22, 1
    %p165 = por %p163, %p164
    %p167 = scmp.ne.s32.totalorder %s150, %s166
    %p168 = scmp.eq.s32.totalorder %s22, 0
    %p169 = por %p167, %p168
    %s170 = ssub.s32 %s16, %s23
    %p171 = scmp.eq.s32.totalorder %s170, 0
    %s173 = sadd.s32 %s172, 1
    %s174 = scalar_select %p171, %s172, %s173
    %p177 = pneg %p171
    %p178 = scmp.eq.s32.totalorder %s16, 1
    %p179 = por %p177, %p178
    %p180 = scmp.ne.s32.totalorder %s172, %s175
    %p181 = scmp.eq.s32.totalorder %s16, 0
    %p182 = por %p180, %p181
    %p183 = scmp.ne.s32.totalorder %s172, %s175
    %p184 = scmp.eq.s32.totalorder %s21, 1
    %p185 = por %p183, %p184
    %p186 = scmp.ne.s32.totalorder %s175, %s176
    %p187 = scmp.eq.s32.totalorder %s21, 0
    %p188 = por %p186, %p187
    %p189 = scmp.ne.s32.totalorder %s175, %s176
    %p190 = scmp.eq.s32.totalorder %s22, 1
    %p191 = por %p189, %p190
    %p193 = scmp.ne.s32.totalorder %s176, %s192
    %p194 = scmp.eq.s32.totalorder %s22, 0
    %p195 = por %p193, %p194
    %s196 = ssub.s32 %s16, %s23
    %p197 = scmp.eq.s32.totalorder %s196, 0
    %s199 = sadd.s32 %s198, 1
    %s200 = scalar_select %p197, %s198, %s199
    %p203 = pneg %p197
    %p204 = scmp.eq.s32.totalorder %s16, 1
    %p205 = por %p203, %p204
    %p206 = scmp.ne.s32.totalorder %s198, %s201
    %p207 = scmp.eq.s32.totalorder %s16, 0
    %p208 = por %p206, %p207
    %p209 = scmp.ne.s32.totalorder %s198, %s201
    %p210 = scmp.eq.s32.totalorder %s21, 1
    %p211 = por %p209, %p210
    %p212 = scmp.ne.s32.totalorder %s201, %s202
    %p213 = scmp.eq.s32.totalorder %s21, 0
    %p214 = por %p212, %p213
    %p215 = scmp.ne.s32.totalorder %s201, %s202
    %p216 = scmp.eq.s32.totalorder %s22, 1
    %p217 = por %p215, %p216
    %p219 = scmp.ne.s32.totalorder %s202, %s218
    %p220 = scmp.eq.s32.totalorder %s22, 0
    %p221 = por %p219, %p220
    %s223 = sadd.s32 %s222, 1
    %p226 = scmp.eq.s32.totalorder %s16, 1
    %p227 = scmp.ne.s32.totalorder %s222, %s224
    %p228 = scmp.eq.s32.totalorder %s16, 0
    %p229 = por %p227, %p228
    %p230 = scmp.ne.s32.totalorder %s222, %s224
    %p231 = scmp.eq.s32.totalorder %s21, 1
    %p232 = por %p230, %p231
    %p233 = scmp.ne.s32.totalorder %s224, %s225
    %p234 = scmp.eq.s32.totalorder %s21, 0
    %p235 = por %p233, %p234
    %p236 = scmp.ne.s32.totalorder %s224, %s225
    %p237 = scmp.eq.s32.totalorder %s22, 1
    %p238 = por %p236, %p237
    %p240 = scmp.ne.s32.totalorder %s225, %s239
    %p241 = scmp.eq.s32.totalorder %s22, 0
    %p242 = por %p240, %p241
    %s243 = ssub.s32 %s16, %s23
    %p244 = scmp.eq.s32.totalorder %s243, 0
    %s246 = sadd.s32 %s245, 1
    %s247 = scalar_select %p244, %s245, %s246
    %p250 = pneg %p244
    %p251 = scmp.eq.s32.totalorder %s16, 1
    %p252 = por %p250, %p251
    %p253 = scmp.ne.s32.totalorder %s245, %s248
    %p254 = scmp.eq.s32.totalorder %s16, 0
    %p255 = por %p253, %p254
    %p256 = scmp.ne.s32.totalorder %s245, %s248
    %p257 = scmp.eq.s32.totalorder %s21, 1
    %p258 = por %p256, %p257
    %p259 = scmp.ne.s32.totalorder %s248, %s249
    %p260 = scmp.eq.s32.totalorder %s21, 0
    %p261 = por %p259, %p260
    %p262 = scmp.ne.s32.totalorder %s248, %s249
    %p263 = scmp.eq.s32.totalorder %s22, 1
    %p264 = por %p262, %p263
    %p266 = scmp.ne.s32.totalorder %s249, %s265
    %p267 = scmp.eq.s32.totalorder %s22, 0
    %p268 = por %p266, %p267
    %p269 = scmp.le.s32.totalorder 1, %s16
    %p270 = scmp.lt.s32.totalorder %s16, 3
    %p271 = pnand %p269, %p270
    %p272 = pneg %p271
    // Predicated region
    $region9: #{transformer_forward.2} parent=5 // pred_check
      _
    $region10: #{transformer_forward.2} parent=5 // pred_check_branch
      %274 = sbr.rel (%p271) target = $region12
    $region11: #{transformer_forward.2} parent=5 // pred_region
      %s275 = ssub.s32 %s16, 1
      // Predicated region
      $region13: #{transformer_forward.2} parent=11 // pred_check
        %p276 = pneg %p37
      $region14: #{transformer_forward.2} parent=11 // pred_check_branch
        %278 = sbr.rel (%p276) target = $region16
      $region15: #{transformer_forward.2} parent=11 // pred_region
        _
      $region16: #{transformer_forward.2} parent=11 // pred_fallthru
        _
      // Predicated region
      $region17: #{transformer_forward.2} parent=11 // pred_check
        %p279 = pneg %p58
      $region18: #{transformer_forward.2} parent=11 // pred_check_branch
        %281 = sbr.rel (%p279) target = $region20
      $region19: #{transformer_forward.2} parent=11 // pred_region
        _
      $region20: #{transformer_forward.2} parent=11 // pred_fallthru
        _
    $region12: #{transformer_forward.2} parent=5 // pred_fallthru
      _
    %p282 = scmp.lt.s32.totalorder %s16, 2
    // Predicated region
    $region21: #{transformer_forward.2} parent=5 // pred_check
      %p283 = pneg %p282
    $region22: #{transformer_forward.2} parent=5 // pred_check_branch
      %285 = sbr.rel (%p283) target = $region24
    $region23: #{transformer_forward.2} parent=5 // pred_region
      // Predicated region
      $region25: #{transformer_forward.2} parent=23 // pred_check
        %p286 = pneg %p78
      $region26: #{transformer_forward.2} parent=23 // pred_check_branch
        %288 = sbr.rel (%p286) target = $region28
      $region27: #{transformer_forward.2} parent=23 // pred_region
        %p289 = scmp.lt.s32.totalorder %s16, 1
        %s290 = scalar_select %p289, %s16, 1
        %s291 = smul.addr %s290, 16
        %s292 = smul.addr %s291, 8
        %s293 = scalar_lea.vmem %s2, %s292
      $region28: #{transformer_forward.2} parent=23 // pred_fallthru
        _
      // Predicated region
      $region29: #{transformer_forward.2} parent=23 // pred_check
        %p294 = pneg %p104
      $region30: #{transformer_forward.2} parent=23 // pred_check_branch
        %296 = sbr.rel (%p294) target = $region32
      $region31: #{transformer_forward.2} parent=23 // pred_region
        %p297 = scmp.lt.s32.totalorder %s16, 1
        %s298 = scalar_select %p297, %s16, 1
        %s299 = smul.addr %s298, 16
        %s300 = smul.addr %s299, 8
        %s301 = scalar_lea.vmem %s3, %s300
      $region32: #{transformer_forward.2} parent=23 // pred_fallthru
        _
      // Predicated region
      $region33: #{transformer_forward.2} parent=23 // pred_check
        %p302 = pneg %p130
      $region34: #{transformer_forward.2} parent=23 // pred_check_branch
        %304 = sbr.rel (%p302) target = $region36
      $region35: #{transformer_forward.2} parent=23 // pred_region
        %p305 = scmp.lt.s32.totalorder %s16, 1
        %s306 = scalar_select %p305, %s16, 1
        %s307 = smul.addr %s306, 16
        %s308 = smul.addr %s307, 8
        %s309 = scalar_lea.vmem %s4, %s308
      $region36: #{transformer_forward.2} parent=23 // pred_fallthru
        _
      // Predicated region
      $region37: #{transformer_forward.2} parent=23 // pred_check
        %p310 = pneg %p156
      $region38: #{transformer_forward.2} parent=23 // pred_check_branch
        %312 = sbr.rel (%p310) target = $region40
      $region39: #{transformer_forward.2} parent=23 // pred_region
        %p313 = scmp.lt.s32.totalorder %s16, 1
        %s314 = scalar_select %p313, %s16, 1
        %s315 = smul.addr %s314, 4
        %s316 = smul.addr %s315, 8
        %s317 = scalar_lea.vmem %s5, %s316
      $region40: #{transformer_forward.2} parent=23 // pred_fallthru
        _
      // Predicated region
      $region41: #{transformer_forward.2} parent=23 // pred_check
        %p318 = pneg %p182
      $region42: #{transformer_forward.2} parent=23 // pred_check_branch
        %320 = sbr.rel (%p318) target = $region44
      $region43: #{transformer_forward.2} parent=23 // pred_region
        %p321 = scmp.lt.s32.totalorder %s16, 1
        %s322 = scalar_select %p321, %s16, 1
        %s323 = smul.addr %s322, 4
        %s324 = smul.addr %s323, 8
        %s325 = scalar_lea.vmem %s6, %s324
      $region44: #{transformer_forward.2} parent=23 // pred_fallthru
        _
      // Predicated region
      $region45: #{transformer_forward.2} parent=23 // pred_check
        %p326 = pneg %p208
      $region46: #{transformer_forward.2} parent=23 // pred_check_branch
        %328 = sbr.rel (%p326) target = $region48
      $region47: #{transformer_forward.2} parent=23 // pred_region
        %p329 = scmp.lt.s32.totalorder %s16, 1
        %s330 = scalar_select %p329, %s16, 1
        %s331 = smul.addr %s330, 8
        %s332 = smul.addr %s331, 8
        %s333 = scalar_lea.vmem %s7, %s332
      $region48: #{transformer_forward.2} parent=23 // pred_fallthru
        _
    $region24: #{transformer_forward.2} parent=5 // pred_fallthru
      _
    %p334 = scmp.le.s32.totalorder 1, %s16
    %p335 = scmp.lt.s32.totalorder %s16, 3
    %p336 = pnand %p334, %p335
    %p337 = pneg %p336
    // Predicated region
    $region49: #{transformer_forward.2} parent=5 // pred_check
      _
    $region50: #{transformer_forward.2} parent=5 // pred_check_branch
      %339 = sbr.rel (%p336) target = $region52
    $region51: #{transformer_forward.2} parent=5 // pred_region
      %s340 = ssub.s32 %s16, 1
      %p341 = pneg %p37
      %p342 = pneg %p34
      %p343 = pneg %p58
      %p344 = pneg %p55
      %p345 = scmp.lt.s32.totalorder %s21, 1
      %s346 = scalar_select %p345, %s21, 1
      %s347 = smul.addr %s346, 16
      %s348 = smul.addr %s347, 8
      %s349 = scalar_lea.vmem %s2, %s348
      %p350 = pneg %p84
      %p351 = pneg %p81
      %p352 = scmp.lt.s32.totalorder %s21, 1
      %s353 = scalar_select %p352, %s21, 1
      %s354 = smul.addr %s353, 16
      %s355 = smul.addr %s354, 8
      %s356 = scalar_lea.vmem %s3, %s355
      %p357 = pneg %p110
      %p358 = pneg %p107
      %p359 = scmp.lt.s32.totalorder %s21, 1
      %s360 = scalar_select %p359, %s21, 1
      %s361 = smul.addr %s360, 16
      %s362 = smul.addr %s361, 8
      %s363 = scalar_lea.vmem %s4, %s362
      %p364 = pneg %p136
      %p365 = pneg %p133
      %p366 = scmp.lt.s32.totalorder %s21, 1
      %s367 = scalar_select %p366, %s21, 1
      %s368 = smul.addr %s367, 4
      %s369 = smul.addr %s368, 8
      %s370 = scalar_lea.vmem %s5, %s369
      %p371 = pneg %p162
      %p372 = pneg %p159
      %p373 = scmp.lt.s32.totalorder %s21, 1
      %s374 = scalar_select %p373, %s21, 1
      %s375 = smul.addr %s374, 4
      %s376 = smul.addr %s375, 8
      %s377 = scalar_lea.vmem %s6, %s376
      %p378 = pneg %p188
      %p379 = pneg %p185
      %p380 = scmp.lt.s32.totalorder %s21, 1
      %s381 = scalar_select %p380, %s21, 1
      %s382 = smul.addr %s381, 8
      %s383 = smul.addr %s382, 8
      %s384 = scalar_lea.vmem %s7, %s383
      %p385 = pneg %p214
      %p386 = pneg %p211
      %p387 = pneg %p235
      %p388 = pneg %p232
      %p389 = pneg %p261
      %p390 = pneg %p258
      %p391 = scmp.lt.s32.totalorder %s21, 1
      %s392 = scalar_select %p391, %s21, 1
      %s393 = smul.addr %s392, 8
      %s394 = smul.addr %s393, 8
      %s395 = scalar_lea.vmem %s9, %s394
      %p396 = scmp.lt.s32.totalorder %s21, 1
      %s397 = scalar_select %p396, %s21, 1
      %s398 = smul.addr %s397, 16
      %s399 = smul.addr %s398, 8
      %s400 = scalar_lea.vmem %s2, %s399
      %p401 = scmp.lt.s32.totalorder %s21, 1
      %s402 = scalar_select %p401, %s21, 1
      %s403 = smul.addr %s402, 16
      %s404 = smul.addr %s403, 8
      %s405 = scalar_lea.vmem %s3, %s404
      %p406 = scmp.lt.s32.totalorder %s21, 1
      %s407 = scalar_select %p406, %s21, 1
      %s408 = smul.addr %s407, 16
      %s409 = smul.addr %s408, 8
      %s410 = scalar_lea.vmem %s4, %s409
      %p411 = scmp.lt.s32.totalorder %s21, 1
      %s412 = scalar_select %p411, %s21, 1
      %s413 = smul.addr %s412, 4
      %s414 = smul.addr %s413, 8
      %s415 = scalar_lea.vmem %s5, %s414
      %p416 = scmp.lt.s32.totalorder %s21, 1
      %s417 = scalar_select %p416, %s21, 1
      %s418 = smul.addr %s417, 4
      %s419 = smul.addr %s418, 8
      %s420 = scalar_lea.vmem %s6, %s419
      %p421 = scmp.lt.s32.totalorder %s21, 1
      %s422 = scalar_select %p421, %s21, 1
      %s423 = smul.addr %s422, 8
      %s424 = smul.addr %s423, 8
      %s425 = scalar_lea.vmem %s7, %s424
      %p426 = scmp.lt.s32.totalorder %s21, 1
      %s427 = scalar_select %p426, %s21, 1
      %s428 = smul.addr %s427, 8
      %s429 = smul.addr %s428, 8
      %s430 = scalar_lea.vmem %s9, %s429
      %p431 = scmp.eq.s32.totalorder %s21, 0
      // Predicated region
      $region53: #{transformer_forward.2} parent=51 // pred_check
        %p432 = pneg %p431
      $region54: #{transformer_forward.2} parent=51 // pred_check_branch
        %434 = sbr.rel (%p432) target = $region56
      $region55: #{transformer_forward.2} parent=51 // pred_region
        %v435 = vld [vmem:[%s0] sm:$0xff]
        %v436 = vld [vmem:[%s0 + $0x8] sm:$0xff]
        %vm437 = vcmask 261120
        %438 = vst.msk [vmem:[%s8] sm:$0xff] %vm437, %v435
        %439 = vst.msk [vmem:[%s8 + $0x8] sm:$0xff] %vm437, %v436
      $region56: #{transformer_forward.2} parent=51 // pred_fallthru
        _
      %v440 = vld [vmem:[%s8] sm:$0xff]
      %v441 = vld [vmem:[%s8 + $0x8] sm:$0xff]
      %v442 = vld [vmem:[%s1] sm:$0x3]
      %v445 = vunpack.c.l.s4 1966171168
      %v446 = vunpack.c.0.s8 %v445
      %v447 = vlaneseq
      %v448 = vshrl.u32 %v447, 7
      %v449 = vsub.s32 %v446, %v448
      %v450 = vrot.slane %v442, %v449
      %v451 = vcombine.high %v450, %v450
      %v453 = vunpack.c.l.s4 1966171168
      %v454 = vunpack.c.0.s8 %v453
      %v455 = vlaneseq
      %v456 = vshrl.u32 %v455, 7
      %v457 = vsub.s32 %v454, %v456
      %v458 = vrot.slane %v450, %v457
      %v460 = vunpack.c.l.s4 1966171168
      %v461 = vunpack.c.0.s8 %v460
      %v462 = vlaneseq
      %v463 = vshrl.u32 %v462, 7
      %v464 = vsub.s32 %v461, %v463
      %v465 = vrot.slane %v451, %v464
      %vm468 = vcmp.gt.f32.partialorder %v458, 0.5
      %vm469 = vcmp.gt.f32.partialorder %v465, 0.5
      %v470 = vld [vmem:[%s400] sm:$0xff]
      %v471 = vld [vmem:[%s400 + $0x8] sm:$0xff]
      %v472 = vld [vmem:[%s400 + $0x10] sm:$0xff]
      %v473 = vld [vmem:[%s400 + $0x18] sm:$0xff]
      %v474 = vld [vmem:[%s400 + $0x20] sm:$0xff]
      %v475 = vld [vmem:[%s400 + $0x28] sm:$0xff]
      %v476 = vld [vmem:[%s400 + $0x30] sm:$0xff]
      %v477 = vld [vmem:[%s400 + $0x38] sm:$0xff]
      %v478 = vld [vmem:[%s400 + $0x40] sm:$0xff]
      %v479 = vld [vmem:[%s400 + $0x48] sm:$0xff]
      %v480 = vld [vmem:[%s400 + $0x50] sm:$0xff]
      %v481 = vld [vmem:[%s400 + $0x58] sm:$0xff]
      %v482 = vld [vmem:[%s400 + $0x60] sm:$0xff]
      %v483 = vld [vmem:[%s400 + $0x68] sm:$0xff]
      %v484 = vld [vmem:[%s400 + $0x70] sm:$0xff]
      %v485 = vld [vmem:[%s400 + $0x78] sm:$0xff]
      %v486 = vld [vmem:[%s405] sm:$0xff]
      %v487 = vld [vmem:[%s405 + $0x8] sm:$0xff]
      %v488 = vld [vmem:[%s405 + $0x10] sm:$0xff]
      %v489 = vld [vmem:[%s405 + $0x18] sm:$0xff]
      %v490 = vld [vmem:[%s405 + $0x20] sm:$0xff]
      %v491 = vld [vmem:[%s405 + $0x28] sm:$0xff]
      %v492 = vld [vmem:[%s405 + $0x30] sm:$0xff]
      %v493 = vld [vmem:[%s405 + $0x38] sm:$0xff]
      %v494 = vld [vmem:[%s405 + $0x40] sm:$0xff]
      %v495 = vld [vmem:[%s405 + $0x48] sm:$0xff]
      %v496 = vld [vmem:[%s405 + $0x50] sm:$0xff]
      %v497 = vld [vmem:[%s405 + $0x58] sm:$0xff]
      %v498 = vld [vmem:[%s405 + $0x60] sm:$0xff]
      %v499 = vld [vmem:[%s405 + $0x68] sm:$0xff]
      %v500 = vld [vmem:[%s405 + $0x70] sm:$0xff]
      %v501 = vld [vmem:[%s405 + $0x78] sm:$0xff]
      %v502 = vld [vmem:[%s410] sm:$0xff]
      %v503 = vld [vmem:[%s410 + $0x8] sm:$0xff]
      %v504 = vld [vmem:[%s410 + $0x10] sm:$0xff]
      %v505 = vld [vmem:[%s410 + $0x18] sm:$0xff]
      %v506 = vld [vmem:[%s410 + $0x20] sm:$0xff]
      %v507 = vld [vmem:[%s410 + $0x28] sm:$0xff]
      %v508 = vld [vmem:[%s410 + $0x30] sm:$0xff]
      %v509 = vld [vmem:[%s410 + $0x38] sm:$0xff]
      %v510 = vld [vmem:[%s410 + $0x40] sm:$0xff]
      %v511 = vld [vmem:[%s410 + $0x48] sm:$0xff]
      %v512 = vld [vmem:[%s410 + $0x50] sm:$0xff]
      %v513 = vld [vmem:[%s410 + $0x58] sm:$0xff]
      %v514 = vld [vmem:[%s410 + $0x60] sm:$0xff]
      %v515 = vld [vmem:[%s410 + $0x68] sm:$0xff]
      %v516 = vld [vmem:[%s410 + $0x70] sm:$0xff]
      %v517 = vld [vmem:[%s410 + $0x78] sm:$0xff]
      %v518 = vld [vmem:[%s415] sm:$0xff]
      %v519 = vld [vmem:[%s415 + $0x8] sm:$0xff]
      %v520 = vld [vmem:[%s415 + $0x10] sm:$0xff]
      %v521 = vld [vmem:[%s415 + $0x18] sm:$0xff]
      %vm522 = vcmask 261120
      %v524 = vsel %vm522, %v440, 0
      %v527 = vsel %vm522, %v441, 0
      %529 = vmatprep.subr.mxu0 0.0
      %530 = vmatpush1.msra.mxu0 0.0
      %531 = vmatprep.subr.mxu0 0.0
      %532 = vmatpush1.msra.mxu0 0.0
      %533 = vmatprep.subr.mxu0 0.0
      %534 = vmatpush1.msra.mxu0 0.0
      %535 = vmatprep.subr.mxu0 0.0
      %536 = vmatpush1.msra.mxu0 0.0
      %537 = vmatprep.subr.mxu0 0.0
      %538 = vmatpush1.msra.mxu0 0.0
      %539 = vmatprep.subr.mxu0 0.0
      %540 = vmatpush1.msra.mxu0 0.0
      %541 = vmatprep.subr.mxu0 0.0
      %542 = vmatpush1.msra.mxu0 0.0
      %543 = vmatprep.subr.mxu0 0.0
      %544 = vmatpush1.msra.mxu0 0.0
      %545 = vmatprep.subr.mxu0 0.0
      %546 = vmatpush1.msra.mxu0 0.0
      %547 = vmatprep.subr.mxu0 0.0
      %548 = vmatpush1.msra.mxu0 0.0
      %549 = vmatprep.subr.mxu0 0.0
      %550 = vmatpush1.msra.mxu0 0.0
      %551 = vmatprep.subr.mxu0 0.0
      %552 = vmatpush1.msra.mxu0 0.0
      %553 = vmatprep.subr.mxu0 0.0
      %554 = vmatpush1.msra.mxu0 %v473
      %555 = vmatprep.subr.mxu0 0.0
      %556 = vmatpush1.msra.mxu0 %v472
      %557 = vmatprep.subr.mxu0 0.0
      %558 = vmatpush1.msra.mxu0 %v471
      %559 = vmatprep.subr.mxu0 0.0
      %560 = vmatpush1.msra.mxu0 %v470
      %561 = vmatprep.subr.mxu0 0.0
      %562 = vmatpush2.msra.mxu0 0.0
      %563 = vmatprep.subr.mxu0 0.0
      %564 = vmatpush2.msra.mxu0 0.0
      %565 = vmatprep.subr.mxu0 0.0
      %566 = vmatpush2.msra.mxu0 0.0
      %567 = vmatprep.subr.mxu0 0.0
      %568 = vmatpush2.msra.mxu0 0.0
      %569 = vmatprep.subr.mxu0 0.0
      %570 = vmatpush2.msra.mxu0 0.0
      %571 = vmatprep.subr.mxu0 0.0
      %572 = vmatpush2.msra.mxu0 0.0
      %573 = vmatprep.subr.mxu0 0.0
      %574 = vmatpush2.msra.mxu0 0.0
      %575 = vmatprep.subr.mxu0 0.0
      %576 = vmatpush2.msra.mxu0 0.0
      %577 = vmatprep.subr.mxu0 0.0
      %578 = vmatpush2.msra.mxu0 0.0
      %579 = vmatprep.subr.mxu0 0.0
      %580 = vmatpush2.msra.mxu0 0.0
      %581 = vmatprep.subr.mxu0 0.0
      %582 = vmatpush2.msra.mxu0 0.0
      %583 = vmatprep.subr.mxu0 0.0
      %584 = vmatpush2.msra.mxu0 0.0
      %585 = vmatprep.subr.mxu0 0.0
      %586 = vmatpush2.msra.mxu0 0.0
      %587 = vmatprep.subr.mxu0 0.0
      %588 = vmatpush2.msra.mxu0 0.0
      %589 = vmatprep.subr.mxu0 0.0
      %590 = vmatpush2.msra.mxu0 0.0
      %591 = vmatprep.subr.mxu0 0.0
      %592 = vmatpush2.msra.mxu0 0.0
      %593 = vmatprep.mubr.f32.mxu0 0.0
      %594 = vmatmul.mubr.f32.gmra.mxu0 %v524
      %v595 = vpop.f32.mrf.mxu0
      %v596 = vadd.f32 0.0, %v595
      %v597 = vpop.f32.mrf.mxu0
      %598 = vmatprep.mubr.f32.mxu0 0.0
      %599 = vmatmul.mubr.f32.gmra.mxu0 %v527
      %v600 = vpop.f32.mrf.mxu0
      %v601 = vadd.f32 0.0, %v600
      %v602 = vpop.f32.mrf.mxu0
      %603 = vdwg.mxu0
      %604 = vmatprep.subr.mxu0 0.0
      %605 = vmatpush1.msra.mxu0 0.0
      %606 = vmatprep.subr.mxu0 0.0
      %607 = vmatpush1.msra.mxu0 0.0
      %608 = vmatprep.subr.mxu0 0.0
      %609 = vmatpush1.msra.mxu0 0.0
      %610 = vmatprep.subr.mxu0 0.0
      %611 = vmatpush1.msra.mxu0 0.0
      %612 = vmatprep.subr.mxu0 0.0
      %613 = vmatpush1.msra.mxu0 0.0
      %614 = vmatprep.subr.mxu0 0.0
      %615 = vmatpush1.msra.mxu0 0.0
      %616 = vmatprep.subr.mxu0 0.0
      %617 = vmatpush1.msra.mxu0 0.0
      %618 = vmatprep.subr.mxu0 0.0
      %619 = vmatpush1.msra.mxu0 0.0
      %620 = vmatprep.subr.mxu0 0.0
      %621 = vmatpush1.msra.mxu0 0.0
      %622 = vmatprep.subr.mxu0 0.0
      %623 = vmatpush1.msra.mxu0 0.0
      %624 = vmatprep.subr.mxu0 0.0
      %625 = vmatpush1.msra.mxu0 0.0
      %626 = vmatprep.subr.mxu0 0.0
      %627 = vmatpush1.msra.mxu0 0.0
      %628 = vmatprep.subr.mxu0 0.0
      %629 = vmatpush1.msra.mxu0 %v489
      %630 = vmatprep.subr.mxu0 0.0
      %631 = vmatpush1.msra.mxu0 %v488
      %632 = vmatprep.subr.mxu0 0.0
      %633 = vmatpush1.msra.mxu0 %v487
      %634 = vmatprep.subr.mxu0 0.0
      %635 = vmatpush1.msra.mxu0 %v486
      %636 = vmatprep.subr.mxu0 0.0
      %637 = vmatpush2.msra.mxu0 0.0
      %638 = vmatprep.subr.mxu0 0.0
      %639 = vmatpush2.msra.mxu0 0.0
      %640 = vmatprep.subr.mxu0 0.0
      %641 = vmatpush2.msra.mxu0 0.0
      %642 = vmatprep.subr.mxu0 0.0
      %643 = vmatpush2.msra.mxu0 0.0
      %644 = vmatprep.subr.mxu0 0.0
      %645 = vmatpush2.msra.mxu0 0.0
      %646 = vmatprep.subr.mxu0 0.0
      %647 = vmatpush2.msra.mxu0 0.0
      %648 = vmatprep.subr.mxu0 0.0
      %649 = vmatpush2.msra.mxu0 0.0
      %650 = vmatprep.subr.mxu0 0.0
      %651 = vmatpush2.msra.mxu0 0.0
      %652 = vmatprep.subr.mxu0 0.0
      %653 = vmatpush2.msra.mxu0 0.0
      %654 = vmatprep.subr.mxu0 0.0
      %655 = vmatpush2.msra.mxu0 0.0
      %656 = vmatprep.subr.mxu0 0.0
      %657 = vmatpush2.msra.mxu0 0.0
      %658 = vmatprep.subr.mxu0 0.0
      %659 = vmatpush2.msra.mxu0 0.0
      %660 = vmatprep.subr.mxu0 0.0
      %661 = vmatpush2.msra.mxu0 0.0
      %662 = vmatprep.subr.mxu0 0.0
      %663 = vmatpush2.msra.mxu0 0.0
      %664 = vmatprep.subr.mxu0 0.0
      %665 = vmatpush2.msra.mxu0 0.0
      %666 = vmatprep.subr.mxu0 0.0
      %667 = vmatpush2.msra.mxu0 0.0
      %668 = vmatprep.mubr.f32.mxu0 0.0
      %669 = vmatmul.mubr.f32.gmra.mxu0 %v524
      %v670 = vpop.f32.mrf.mxu0
      %v671 = vadd.f32 0.0, %v670
      %v672 = vpop.f32.mrf.mxu0
      %673 = vmatprep.mubr.f32.mxu0 0.0
      %674 = vmatmul.mubr.f32.gmra.mxu0 %v527
      %v675 = vpop.f32.mrf.mxu0
      %v676 = vadd.f32 0.0, %v675
      %v677 = vpop.f32.mrf.mxu0
      %678 = vdwg.mxu0
      %679 = vmatprep.subr.mxu0 0.0
      %680 = vmatpush1.msra.mxu0 0.0
      %681 = vmatprep.subr.mxu0 0.0
      %682 = vmatpush1.msra.mxu0 0.0
      %683 = vmatprep.subr.mxu0 0.0
      %684 = vmatpush1.msra.mxu0 0.0
      %685 = vmatprep.subr.mxu0 0.0
      %686 = vmatpush1.msra.mxu0 0.0
      %687 = vmatprep.subr.mxu0 0.0
      %688 = vmatpush1.msra.mxu0 0.0
      %689 = vmatprep.subr.mxu0 0.0
      %690 = vmatpush1.msra.mxu0 0.0
      %691 = vmatprep.subr.mxu0 0.0
      %692 = vmatpush1.msra.mxu0 0.0
      %693 = vmatprep.subr.mxu0 0.0
      %694 = vmatpush1.msra.mxu0 0.0
      %695 = vmatprep.subr.mxu0 0.0
      %696 = vmatpush1.msra.mxu0 0.0
      %697 = vmatprep.subr.mxu0 0.0
      %698 = vmatpush1.msra.mxu0 0.0
      %699 = vmatprep.subr.mxu0 0.0
      %700 = vmatpush1.msra.mxu0 0.0
      %701 = vmatprep.subr.mxu0 0.0
      %702 = vmatpush1.msra.mxu0 0.0
      %703 = vmatprep.subr.mxu0 0.0
      %704 = vmatpush1.msra.mxu0 %v505
      %705 = vmatprep.subr.mxu0 0.0
      %706 = vmatpush1.msra.mxu0 %v504
      %707 = vmatprep.subr.mxu0 0.0
      %708 = vmatpush1.msra.mxu0 %v503
      %709 = vmatprep.subr.mxu0 0.0
      %710 = vmatpush1.msra.mxu0 %v502
      %711 = vmatprep.subr.mxu0 0.0
      %712 = vmatpush2.msra.mxu0 0.0
      %713 = vmatprep.subr.mxu0 0.0
      %714 = vmatpush2.msra.mxu0 0.0
      %715 = vmatprep.subr.mxu0 0.0
      %716 = vmatpush2.msra.mxu0 0.0
      %717 = vmatprep.subr.mxu0 0.0
      %718 = vmatpush2.msra.mxu0 0.0
      %719 = vmatprep.subr.mxu0 0.0
      %720 = vmatpush2.msra.mxu0 0.0
      %721 = vmatprep.subr.mxu0 0.0
      %722 = vmatpush2.msra.mxu0 0.0
      %723 = vmatprep.subr.mxu0 0.0
      %724 = vmatpush2.msra.mxu0 0.0
      %725 = vmatprep.subr.mxu0 0.0
      %726 = vmatpush2.msra.mxu0 0.0
      %727 = vmatprep.subr.mxu0 0.0
      %728 = vmatpush2.msra.mxu0 0.0
      %729 = vmatprep.subr.mxu0 0.0
      %730 = vmatpush2.msra.mxu0 0.0
      %731 = vmatprep.subr.mxu0 0.0
      %732 = vmatpush2.msra.mxu0 0.0
      %733 = vmatprep.subr.mxu0 0.0
      %734 = vmatpush2.msra.mxu0 0.0
      %735 = vmatprep.subr.mxu0 0.0
      %736 = vmatpush2.msra.mxu0 0.0
      %737 = vmatprep.subr.mxu0 0.0
      %738 = vmatpush2.msra.mxu0 0.0
      %739 = vmatprep.subr.mxu0 0.0
      %740 = vmatpush2.msra.mxu0 0.0
      %741 = vmatprep.subr.mxu0 0.0
      %742 = vmatpush2.msra.mxu0 0.0
      %743 = vmatprep.mubr.f32.mxu0 0.0
      %744 = vmatmul.mubr.f32.gmra.mxu0 %v524
      %v745 = vpop.f32.mrf.mxu0
      %v746 = vadd.f32 0.0, %v745
      %v747 = vpop.f32.mrf.mxu0
      %748 = vmatprep.mubr.f32.mxu0 0.0
      %749 = vmatmul.mubr.f32.gmra.mxu0 %v527
      %v750 = vpop.f32.mrf.mxu0
      %v751 = vadd.f32 0.0, %v750
      %v752 = vpop.f32.mrf.mxu0
      %753 = vdwg.mxu0
      %vm754 = vcmask 64512
      %v756 = vsel %vm754, %v596, 0
      %v759 = vsel %vm754, %v671, 0
      %761 = vmatprep.subr.mxu0 0.0
      %762 = vmatpush1.xpose.msra.mxu0 0.0
      %763 = vmatprep.subr.mxu0 0.0
      %764 = vmatpush1.xpose.msra.mxu0 0.0
      %765 = vmatprep.subr.mxu0 0.0
      %766 = vmatpush1.xpose.msra.mxu0 0.0
      %767 = vmatprep.subr.mxu0 0.0
      %768 = vmatpush1.xpose.msra.mxu0 0.0
      %769 = vmatprep.subr.mxu0 0.0
      %770 = vmatpush1.xpose.msra.mxu0 0.0
      %771 = vmatprep.subr.mxu0 0.0
      %772 = vmatpush1.xpose.msra.mxu0 0.0
      %773 = vmatprep.subr.mxu0 0.0
      %774 = vmatpush1.xpose.msra.mxu0 0.0
      %775 = vmatprep.subr.mxu0 0.0
      %776 = vmatpush1.xpose.msra.mxu0 0.0
      %777 = vmatprep.subr.mxu0 0.0
      %778 = vmatpush1.xpose.msra.mxu0 0.0
      %779 = vmatprep.subr.mxu0 0.0
      %780 = vmatpush1.xpose.msra.mxu0 0.0
      %781 = vmatprep.subr.mxu0 0.0
      %782 = vmatpush1.xpose.msra.mxu0 0.0
      %783 = vmatprep.subr.mxu0 0.0
      %784 = vmatpush1.xpose.msra.mxu0 0.0
      %785 = vmatprep.subr.mxu0 0.0
      %786 = vmatpush1.xpose.msra.mxu0 0.0
      %787 = vmatprep.subr.mxu0 0.0
      %788 = vmatpush1.xpose.msra.mxu0 0.0
      %789 = vmatprep.subr.mxu0 0.0
      %790 = vmatpush1.xpose.msra.mxu0 0.0
      %791 = vmatprep.subr.mxu0 0.0
      %792 = vmatpush1.xpose.msra.mxu0 %v759
      %793 = vmatprep.subr.mxu0 0.0
      %794 = vmatpush2.xpose.msra.mxu0 0.0
      %795 = vmatprep.subr.mxu0 0.0
      %796 = vmatpush2.xpose.msra.mxu0 0.0
      %797 = vmatprep.subr.mxu0 0.0
      %798 = vmatpush2.xpose.msra.mxu0 0.0
      %799 = vmatprep.subr.mxu0 0.0
      %800 = vmatpush2.xpose.msra.mxu0 0.0
      %801 = vmatprep.subr.mxu0 0.0
      %802 = vmatpush2.xpose.msra.mxu0 0.0
      %803 = vmatprep.subr.mxu0 0.0
      %804 = vmatpush2.xpose.msra.mxu0 0.0
      %805 = vmatprep.subr.mxu0 0.0
      %806 = vmatpush2.xpose.msra.mxu0 0.0
      %807 = vmatprep.subr.mxu0 0.0
      %808 = vmatpush2.xpose.msra.mxu0 0.0
      %809 = vmatprep.subr.mxu0 0.0
      %810 = vmatpush2.xpose.msra.mxu0 0.0
      %811 = vmatprep.subr.mxu0 0.0
      %812 = vmatpush2.xpose.msra.mxu0 0.0
      %813 = vmatprep.subr.mxu0 0.0
      %814 = vmatpush2.xpose.msra.mxu0 0.0
      %815 = vmatprep.subr.mxu0 0.0
      %816 = vmatpush2.xpose.msra.mxu0 0.0
      %817 = vmatprep.subr.mxu0 0.0
      %818 = vmatpush2.xpose.msra.mxu0 0.0
      %819 = vmatprep.subr.mxu0 0.0
      %820 = vmatpush2.xpose.msra.mxu0 0.0
      %821 = vmatprep.subr.mxu0 0.0
      %822 = vmatpush2.xpose.msra.mxu0 0.0
      %823 = vmatprep.subr.mxu0 0.0
      %824 = vmatpush2.xpose.msra.mxu0 0.0
      %825 = vmatprep.mubr.f32.mxu0 0.0
      %826 = vmatmul.mubr.f32.gmra.mxu0 %v756
      %v827 = vpop.f32.mrf.mxu0
      %v828 = vadd.f32 0.0, %v827
      %v829 = vpop.f32.mrf.mxu0
      %830 = vdwg.mxu0
      %v832 = vsel %vm754, %v601, 0
      %v835 = vsel %vm754, %v676, 0
      %837 = vmatprep.subr.mxu0 0.0
      %838 = vmatpush1.xpose.msra.mxu0 0.0
      %839 = vmatprep.subr.mxu0 0.0
      %840 = vmatpush1.xpose.msra.mxu0 0.0
      %841 = vmatprep.subr.mxu0 0.0
      %842 = vmatpush1.xpose.msra.mxu0 0.0
      %843 = vmatprep.subr.mxu0 0.0
      %844 = vmatpush1.xpose.msra.mxu0 0.0
      %845 = vmatprep.subr.mxu0 0.0
      %846 = vmatpush1.xpose.msra.mxu0 0.0
      %847 = vmatprep.subr.mxu0 0.0
      %848 = vmatpush1.xpose.msra.mxu0 0.0
      %849 = vmatprep.subr.mxu0 0.0
      %850 = vmatpush1.xpose.msra.mxu0 0.0
      %851 = vmatprep.subr.mxu0 0.0
      %852 = vmatpush1.xpose.msra.mxu0 0.0
      %853 = vmatprep.subr.mxu0 0.0
      %854 = vmatpush1.xpose.msra.mxu0 0.0
      %855 = vmatprep.subr.mxu0 0.0
      %856 = vmatpush1.xpose.msra.mxu0 0.0
      %857 = vmatprep.subr.mxu0 0.0
      %858 = vmatpush1.xpose.msra.mxu0 0.0
      %859 = vmatprep.subr.mxu0 0.0
      %860 = vmatpush1.xpose.msra.mxu0 0.0
      %861 = vmatprep.subr.mxu0 0.0
      %862 = vmatpush1.xpose.msra.mxu0 0.0
      %863 = vmatprep.subr.mxu0 0.0
      %864 = vmatpush1.xpose.msra.mxu0 0.0
      %865 = vmatprep.subr.mxu0 0.0
      %866 = vmatpush1.xpose.msra.mxu0 0.0
      %867 = vmatprep.subr.mxu0 0.0
      %868 = vmatpush1.xpose.msra.mxu0 %v835
      %869 = vmatprep.subr.mxu0 0.0
      %870 = vmatpush2.xpose.msra.mxu0 0.0
      %871 = vmatprep.subr.mxu0 0.0
      %872 = vmatpush2.xpose.msra.mxu0 0.0
      %873 = vmatprep.subr.mxu0 0.0
      %874 = vmatpush2.xpose.msra.mxu0 0.0
      %875 = vmatprep.subr.mxu0 0.0
      %876 = vmatpush2.xpose.msra.mxu0 0.0
      %877 = vmatprep.subr.mxu0 0.0
      %878 = vmatpush2.xpose.msra.mxu0 0.0
      %879 = vmatprep.subr.mxu0 0.0
      %880 = vmatpush2.xpose.msra.mxu0 0.0
      %881 = vmatprep.subr.mxu0 0.0
      %882 = vmatpush2.xpose.msra.mxu0 0.0
      %883 = vmatprep.subr.mxu0 0.0
      %884 = vmatpush2.xpose.msra.mxu0 0.0
      %885 = vmatprep.subr.mxu0 0.0
      %886 = vmatpush2.xpose.msra.mxu0 0.0
      %887 = vmatprep.subr.mxu0 0.0
      %888 = vmatpush2.xpose.msra.mxu0 0.0
      %889 = vmatprep.subr.mxu0 0.0
      %890 = vmatpush2.xpose.msra.mxu0 0.0
      %891 = vmatprep.subr.mxu0 0.0
      %892 = vmatpush2.xpose.msra.mxu0 0.0
      %893 = vmatprep.subr.mxu0 0.0
      %894 = vmatpush2.xpose.msra.mxu0 0.0
      %895 = vmatprep.subr.mxu0 0.0
      %896 = vmatpush2.xpose.msra.mxu0 0.0
      %897 = vmatprep.subr.mxu0 0.0
      %898 = vmatpush2.xpose.msra.mxu0 0.0
      %899 = vmatprep.subr.mxu0 0.0
      %900 = vmatpush2.xpose.msra.mxu0 0.0
      %901 = vmatprep.mubr.f32.mxu0 0.0
      %902 = vmatmul.mubr.f32.gmra.mxu0 %v832
      %v903 = vpop.f32.mrf.mxu0
      %v904 = vadd.f32 0.0, %v903
      %v905 = vpop.f32.mrf.mxu0
      %906 = vdwg.mxu0
      %v907 = vmul.f32 %v828, 0.35355338
      %v908 = vmul.f32 %v904, 0.35355338
      %v909 = vsel %vm468, 1, 0
      %v910 = vsel %vm469, 1, 0
      %v911 = vlaneseq
      %v912 = vshrl.u32 %v911, 7
      %v913 = vsub.s32 0, %v912
      %v914 = vrot.slane %v909, %v913
      %v915 = vlaneseq
      %v916 = vshrl.u32 %v915, 7
      %v917 = vsub.s32 0, %v916
      %v918 = vrot.slane %v910, %v917
      %vm919 = vcmp.eq.s32.totalorder %v914, 1
      %vm920 = vcmp.eq.s32.totalorder %v918, 1
      %v921 = vsel %vm919, -1e+09, %v907
      %v922 = vsel %vm920, -1e+09, %v908
      %v923 = vsel %vm754, %v921, -inf
      %924 = vmax.xlane.f32.xlu0 %v923
      %v925 = vpop.xlane.xlu0 %924
      %v926 = vsel %vm754, %v922, -inf
      %927 = vmax.xlane.f32.xlu0 %v926
      %v928 = vpop.xlane.xlu0 %927
      %v929 = vsub.f32 %v921, %v925
      %v930 = vsub.f32 %v922, %v928
      %v931 = vmul.f32 %v929, 1.442695
      %v932 = vpow.pop %v931
      %v933 = vmul.f32 %v930, 1.442695
      %v934 = vpow.pop %v933
      %v935 = vsel %vm754, %v932, 0.0
      %936 = vadd.xlane.f32.xlu0 %v935
      %v937 = vpop.xlane.xlu0 %936
      %v938 = vsel %vm754, %v934, 0.0
      %939 = vadd.xlane.f32.xlu0 %v938
      %v940 = vpop.xlane.xlu0 %939
      %v941 = vrcp.pop %v937
      %v942 = vrcp.pop %v940
      %v943 = vmul.f32 %v932, %v941
      %v944 = vmul.f32 %v934, %v942
      %v946 = vsel %vm754, %v943, 0
      %948 = vmatprep.subr.mxu0 0.0
      %949 = vmatpush1.msra.mxu0 0.0
      %950 = vmatprep.subr.mxu0 0.0
      %951 = vmatpush1.msra.mxu0 0.0
      %952 = vmatprep.subr.mxu0 0.0
      %953 = vmatpush1.msra.mxu0 0.0
      %954 = vmatprep.subr.mxu0 0.0
      %955 = vmatpush1.msra.mxu0 0.0
      %956 = vmatprep.subr.mxu0 0.0
      %957 = vmatpush1.msra.mxu0 0.0
      %958 = vmatprep.subr.mxu0 0.0
      %959 = vmatpush1.msra.mxu0 0.0
      %960 = vmatprep.subr.mxu0 0.0
      %961 = vmatpush1.msra.mxu0 0.0
      %962 = vmatprep.subr.mxu0 0.0
      %963 = vmatpush1.msra.mxu0 0.0
      %964 = vmatprep.subr.mxu0 0.0
      %965 = vmatpush1.msra.mxu0 0.0
      %966 = vmatprep.subr.mxu0 0.0
      %967 = vmatpush1.msra.mxu0 0.0
      %968 = vmatprep.subr.mxu0 0.0
      %969 = vmatpush1.msra.mxu0 0.0
      %970 = vmatprep.subr.mxu0 0.0
      %971 = vmatpush1.msra.mxu0 0.0
      %972 = vmatprep.subr.mxu0 0.0
      %973 = vmatpush1.msra.mxu0 0.0
      %974 = vmatprep.subr.mxu0 0.0
      %975 = vmatpush1.msra.mxu0 0.0
      %976 = vmatprep.subr.mxu0 0.0
      %977 = vmatpush1.msra.mxu0 0.0
      %978 = vmatprep.subr.mxu0 0.0
      %979 = vmatpush1.msra.mxu0 %v746
      %980 = vmatprep.subr.mxu0 0.0
      %981 = vmatpush2.msra.mxu0 0.0
      %982 = vmatprep.subr.mxu0 0.0
      %983 = vmatpush2.msra.mxu0 0.0
      %984 = vmatprep.subr.mxu0 0.0
      %985 = vmatpush2.msra.mxu0 0.0
      %986 = vmatprep.subr.mxu0 0.0
      %987 = vmatpush2.msra.mxu0 0.0
      %988 = vmatprep.subr.mxu0 0.0
      %989 = vmatpush2.msra.mxu0 0.0
      %990 = vmatprep.subr.mxu0 0.0
      %991 = vmatpush2.msra.mxu0 0.0
      %992 = vmatprep.subr.mxu0 0.0
      %993 = vmatpush2.msra.mxu0 0.0
      %994 = vmatprep.subr.mxu0 0.0
      %995 = vmatpush2.msra.mxu0 0.0
      %996 = vmatprep.subr.mxu0 0.0
      %997 = vmatpush2.msra.mxu0 0.0
      %998 = vmatprep.subr.mxu0 0.0
      %999 = vmatpush2.msra.mxu0 0.0
      %1000 = vmatprep.subr.mxu0 0.0
      %1001 = vmatpush2.msra.mxu0 0.0
      %1002 = vmatprep.subr.mxu0 0.0
      %1003 = vmatpush2.msra.mxu0 0.0
      %1004 = vmatprep.subr.mxu0 0.0
      %1005 = vmatpush2.msra.mxu0 0.0
      %1006 = vmatprep.subr.mxu0 0.0
      %1007 = vmatpush2.msra.mxu0 0.0
      %1008 = vmatprep.subr.mxu0 0.0
      %1009 = vmatpush2.msra.mxu0 0.0
      %1010 = vmatprep.subr.mxu0 0.0
      %1011 = vmatpush2.msra.mxu0 0.0
      %1012 = vmatprep.mubr.f32.mxu0 0.0
      %1013 = vmatmul.mubr.f32.gmra.mxu0 %v946
      %v1014 = vpop.f32.mrf.mxu0
      %v1015 = vadd.f32 0.0, %v1014
      %v1016 = vpop.f32.mrf.mxu0
      %1017 = vdwg.mxu0
      %v1019 = vsel %vm754, %v944, 0
      %1021 = vmatprep.subr.mxu0 0.0
      %1022 = vmatpush1.msra.mxu0 0.0
      %1023 = vmatprep.subr.mxu0 0.0
      %1024 = vmatpush1.msra.mxu0 0.0
      %1025 = vmatprep.subr.mxu0 0.0
      %1026 = vmatpush1.msra.mxu0 0.0
      %1027 = vmatprep.subr.mxu0 0.0
      %1028 = vmatpush1.msra.mxu0 0.0
      %1029 = vmatprep.subr.mxu0 0.0
      %1030 = vmatpush1.msra.mxu0 0.0
      %1031 = vmatprep.subr.mxu0 0.0
      %1032 = vmatpush1.msra.mxu0 0.0
      %1033 = vmatprep.subr.mxu0 0.0
      %1034 = vmatpush1.msra.mxu0 0.0
      %1035 = vmatprep.subr.mxu0 0.0
      %1036 = vmatpush1.msra.mxu0 0.0
      %1037 = vmatprep.subr.mxu0 0.0
      %1038 = vmatpush1.msra.mxu0 0.0
      %1039 = vmatprep.subr.mxu0 0.0
      %1040 = vmatpush1.msra.mxu0 0.0
      %1041 = vmatprep.subr.mxu0 0.0
      %1042 = vmatpush1.msra.mxu0 0.0
      %1043 = vmatprep.subr.mxu0 0.0
      %1044 = vmatpush1.msra.mxu0 0.0
      %1045 = vmatprep.subr.mxu0 0.0
      %1046 = vmatpush1.msra.mxu0 0.0
      %1047 = vmatprep.subr.mxu0 0.0
      %1048 = vmatpush1.msra.mxu0 0.0
      %1049 = vmatprep.subr.mxu0 0.0
      %1050 = vmatpush1.msra.mxu0 0.0
      %1051 = vmatprep.subr.mxu0 0.0
      %1052 = vmatpush1.msra.mxu0 %v751
      %1053 = vmatprep.subr.mxu0 0.0
      %1054 = vmatpush2.msra.mxu0 0.0
      %1055 = vmatprep.subr.mxu0 0.0
      %1056 = vmatpush2.msra.mxu0 0.0
      %1057 = vmatprep.subr.mxu0 0.0
      %1058 = vmatpush2.msra.mxu0 0.0
      %1059 = vmatprep.subr.mxu0 0.0
      %1060 = vmatpush2.msra.mxu0 0.0
      %1061 = vmatprep.subr.mxu0 0.0
      %1062 = vmatpush2.msra.mxu0 0.0
      %1063 = vmatprep.subr.mxu0 0.0
      %1064 = vmatpush2.msra.mxu0 0.0
      %1065 = vmatprep.subr.mxu0 0.0
      %1066 = vmatpush2.msra.mxu0 0.0
      %1067 = vmatprep.subr.mxu0 0.0
      %1068 = vmatpush2.msra.mxu0 0.0
      %1069 = vmatprep.subr.mxu0 0.0
      %1070 = vmatpush2.msra.mxu0 0.0
      %1071 = vmatprep.subr.mxu0 0.0
      %1072 = vmatpush2.msra.mxu0 0.0
      %1073 = vmatprep.subr.mxu0 0.0
      %1074 = vmatpush2.msra.mxu0 0.0
      %1075 = vmatprep.subr.mxu0 0.0
      %1076 = vmatpush2.msra.mxu0 0.0
      %1077 = vmatprep.subr.mxu0 0.0
      %1078 = vmatpush2.msra.mxu0 0.0
      %1079 = vmatprep.subr.mxu0 0.0
      %1080 = vmatpush2.msra.mxu0 0.0
      %1081 = vmatprep.subr.mxu0 0.0
      %1082 = vmatpush2.msra.mxu0 0.0
      %1083 = vmatprep.subr.mxu0 0.0
      %1084 = vmatpush2.msra.mxu0 0.0
      %1085 = vmatprep.mubr.f32.mxu0 0.0
      %1086 = vmatmul.mubr.f32.gmra.mxu0 %v1019
      %v1087 = vpop.f32.mrf.mxu0
      %v1088 = vadd.f32 0.0, %v1087
      %v1089 = vpop.f32.mrf.mxu0
      %1090 = vdwg.mxu0
      %1091 = vmatprep.subr.mxu0 0.0
      %1092 = vmatpush1.msra.mxu0 0.0
      %1093 = vmatprep.subr.mxu0 0.0
      %1094 = vmatpush1.msra.mxu0 0.0
      %1095 = vmatprep.subr.mxu0 0.0
      %1096 = vmatpush1.msra.mxu0 0.0
      %1097 = vmatprep.subr.mxu0 0.0
      %1098 = vmatpush1.msra.mxu0 0.0
      %1099 = vmatprep.subr.mxu0 0.0
      %1100 = vmatpush1.msra.mxu0 0.0
      %1101 = vmatprep.subr.mxu0 0.0
      %1102 = vmatpush1.msra.mxu0 0.0
      %1103 = vmatprep.subr.mxu0 0.0
      %1104 = vmatpush1.msra.mxu0 0.0
      %1105 = vmatprep.subr.mxu0 0.0
      %1106 = vmatpush1.msra.mxu0 0.0
      %1107 = vmatprep.subr.mxu0 0.0
      %1108 = vmatpush1.msra.mxu0 0.0
      %1109 = vmatprep.subr.mxu0 0.0
      %1110 = vmatpush1.msra.mxu0 0.0
      %1111 = vmatprep.subr.mxu0 0.0
      %1112 = vmatpush1.msra.mxu0 0.0
      %1113 = vmatprep.subr.mxu0 0.0
      %1114 = vmatpush1.msra.mxu0 0.0
      %1115 = vmatprep.subr.mxu0 0.0
      %1116 = vmatpush1.msra.mxu0 %v477
      %1117 = vmatprep.subr.mxu0 0.0
      %1118 = vmatpush1.msra.mxu0 %v476
      %1119 = vmatprep.subr.mxu0 0.0
      %1120 = vmatpush1.msra.mxu0 %v475
      %1121 = vmatprep.subr.mxu0 0.0
      %1122 = vmatpush1.msra.mxu0 %v474
      %1123 = vmatprep.subr.mxu0 0.0
      %1124 = vmatpush2.msra.mxu0 0.0
      %1125 = vmatprep.subr.mxu0 0.0
      %1126 = vmatpush2.msra.mxu0 0.0
      %1127 = vmatprep.subr.mxu0 0.0
      %1128 = vmatpush2.msra.mxu0 0.0
      %1129 = vmatprep.subr.mxu0 0.0
      %1130 = vmatpush2.msra.mxu0 0.0
      %1131 = vmatprep.subr.mxu0 0.0
      %1132 = vmatpush2.msra.mxu0 0.0
      %1133 = vmatprep.subr.mxu0 0.0
      %1134 = vmatpush2.msra.mxu0 0.0
      %1135 = vmatprep.subr.mxu0 0.0
      %1136 = vmatpush2.msra.mxu0 0.0
      %1137 = vmatprep.subr.mxu0 0.0
      %1138 = vmatpush2.msra.mxu0 0.0
      %1139 = vmatprep.subr.mxu0 0.0
      %1140 = vmatpush2.msra.mxu0 0.0
      %1141 = vmatprep.subr.mxu0 0.0
      %1142 = vmatpush2.msra.mxu0 0.0
      %1143 = vmatprep.subr.mxu0 0.0
      %1144 = vmatpush2.msra.mxu0 0.0
      %1145 = vmatprep.subr.mxu0 0.0
      %1146 = vmatpush2.msra.mxu0 0.0
      %1147 = vmatprep.subr.mxu0 0.0
      %1148 = vmatpush2.msra.mxu0 0.0
      %1149 = vmatprep.subr.mxu0 0.0
      %1150 = vmatpush2.msra.mxu0 0.0
      %1151 = vmatprep.subr.mxu0 0.0
      %1152 = vmatpush2.msra.mxu0 0.0
      %1153 = vmatprep.subr.mxu0 0.0
      %1154 = vmatpush2.msra.mxu0 0.0
      %1155 = vmatprep.mubr.f32.mxu0 0.0
      %1156 = vmatmul.mubr.f32.gmra.mxu0 %v524
      %v1157 = vpop.f32.mrf.mxu0
      %v1158 = vadd.f32 0.0, %v1157
      %v1159 = vpop.f32.mrf.mxu0
      %1160 = vmatprep.mubr.f32.mxu0 0.0
      %1161 = vmatmul.mubr.f32.gmra.mxu0 %v527
      %v1162 = vpop.f32.mrf.mxu0
      %v1163 = vadd.f32 0.0, %v1162
      %v1164 = vpop.f32.mrf.mxu0
      %1165 = vdwg.mxu0
      %1166 = vmatprep.subr.mxu0 0.0
      %1167 = vmatpush1.msra.mxu0 0.0
      %1168 = vmatprep.subr.mxu0 0.0
      %1169 = vmatpush1.msra.mxu0 0.0
      %1170 = vmatprep.subr.mxu0 0.0
      %1171 = vmatpush1.msra.mxu0 0.0
      %1172 = vmatprep.subr.mxu0 0.0
      %1173 = vmatpush1.msra.mxu0 0.0
      %1174 = vmatprep.subr.mxu0 0.0
      %1175 = vmatpush1.msra.mxu0 0.0
      %1176 = vmatprep.subr.mxu0 0.0
      %1177 = vmatpush1.msra.mxu0 0.0
      %1178 = vmatprep.subr.mxu0 0.0
      %1179 = vmatpush1.msra.mxu0 0.0
      %1180 = vmatprep.subr.mxu0 0.0
      %1181 = vmatpush1.msra.mxu0 0.0
      %1182 = vmatprep.subr.mxu0 0.0
      %1183 = vmatpush1.msra.mxu0 0.0
      %1184 = vmatprep.subr.mxu0 0.0
      %1185 = vmatpush1.msra.mxu0 0.0
      %1186 = vmatprep.subr.mxu0 0.0
      %1187 = vmatpush1.msra.mxu0 0.0
      %1188 = vmatprep.subr.mxu0 0.0
      %1189 = vmatpush1.msra.mxu0 0.0
      %1190 = vmatprep.subr.mxu0 0.0
      %1191 = vmatpush1.msra.mxu0 %v493
      %1192 = vmatprep.subr.mxu0 0.0
      %1193 = vmatpush1.msra.mxu0 %v492
      %1194 = vmatprep.subr.mxu0 0.0
      %1195 = vmatpush1.msra.mxu0 %v491
      %1196 = vmatprep.subr.mxu0 0.0
      %1197 = vmatpush1.msra.mxu0 %v490
      %1198 = vmatprep.subr.mxu0 0.0
      %1199 = vmatpush2.msra.mxu0 0.0
      %1200 = vmatprep.subr.mxu0 0.0
      %1201 = vmatpush2.msra.mxu0 0.0
      %1202 = vmatprep.subr.mxu0 0.0
      %1203 = vmatpush2.msra.mxu0 0.0
      %1204 = vmatprep.subr.mxu0 0.0
      %1205 = vmatpush2.msra.mxu0 0.0
      %1206 = vmatprep.subr.mxu0 0.0
      %1207 = vmatpush2.msra.mxu0 0.0
      %1208 = vmatprep.subr.mxu0 0.0
      %1209 = vmatpush2.msra.mxu0 0.0
      %1210 = vmatprep.subr.mxu0 0.0
      %1211 = vmatpush2.msra.mxu0 0.0
      %1212 = vmatprep.subr.mxu0 0.0
      %1213 = vmatpush2.msra.mxu0 0.0
      %1214 = vmatprep.subr.mxu0 0.0
      %1215 = vmatpush2.msra.mxu0 0.0
      %1216 = vmatprep.subr.mxu0 0.0
      %1217 = vmatpush2.msra.mxu0 0.0
      %1218 = vmatprep.subr.mxu0 0.0
      %1219 = vmatpush2.msra.mxu0 0.0
      %1220 = vmatprep.subr.mxu0 0.0
      %1221 = vmatpush2.msra.mxu0 0.0
      %1222 = vmatprep.subr.mxu0 0.0
      %1223 = vmatpush2.msra.mxu0 0.0
      %1224 = vmatprep.subr.mxu0 0.0
      %1225 = vmatpush2.msra.mxu0 0.0
      %1226 = vmatprep.subr.mxu0 0.0
      %1227 = vmatpush2.msra.mxu0 0.0
      %1228 = vmatprep.subr.mxu0 0.0
      %1229 = vmatpush2.msra.mxu0 0.0
      %1230 = vmatprep.mubr.f32.mxu0 0.0
      %1231 = vmatmul.mubr.f32.gmra.mxu0 %v524
      %v1232 = vpop.f32.mrf.mxu0
      %v1233 = vadd.f32 0.0, %v1232
      %v1234 = vpop.f32.mrf.mxu0
      %1235 = vmatprep.mubr.f32.mxu0 0.0
      %1236 = vmatmul.mubr.f32.gmra.mxu0 %v527
      %v1237 = vpop.f32.mrf.mxu0
      %v1238 = vadd.f32 0.0, %v1237
      %v1239 = vpop.f32.mrf.mxu0
      %1240 = vdwg.mxu0
      %1241 = vmatprep.subr.mxu0 0.0
      %1242 = vmatpush1.msra.mxu0 0.0
      %1243 = vmatprep.subr.mxu0 0.0
      %1244 = vmatpush1.msra.mxu0 0.0
      %1245 = vmatprep.subr.mxu0 0.0
      %1246 = vmatpush1.msra.mxu0 0.0
      %1247 = vmatprep.subr.mxu0 0.0
      %1248 = vmatpush1.msra.mxu0 0.0
      %1249 = vmatprep.subr.mxu0 0.0
      %1250 = vmatpush1.msra.mxu0 0.0
      %1251 = vmatprep.subr.mxu0 0.0
      %1252 = vmatpush1.msra.mxu0 0.0
      %1253 = vmatprep.subr.mxu0 0.0
      %1254 = vmatpush1.msra.mxu0 0.0
      %1255 = vmatprep.subr.mxu0 0.0
      %1256 = vmatpush1.msra.mxu0 0.0
      %1257 = vmatprep.subr.mxu0 0.0
      %1258 = vmatpush1.msra.mxu0 0.0
      %1259 = vmatprep.subr.mxu0 0.0
      %1260 = vmatpush1.msra.mxu0 0.0
      %1261 = vmatprep.subr.mxu0 0.0
      %1262 = vmatpush1.msra.mxu0 0.0
      %1263 = vmatprep.subr.mxu0 0.0
      %1264 = vmatpush1.msra.mxu0 0.0
      %1265 = vmatprep.subr.mxu0 0.0
      %1266 = vmatpush1.msra.mxu0 %v509
      %1267 = vmatprep.subr.mxu0 0.0
      %1268 = vmatpush1.msra.mxu0 %v508
      %1269 = vmatprep.subr.mxu0 0.0
      %1270 = vmatpush1.msra.mxu0 %v507
      %1271 = vmatprep.subr.mxu0 0.0
      %1272 = vmatpush1.msra.mxu0 %v506
      %1273 = vmatprep.subr.mxu0 0.0
      %1274 = vmatpush2.msra.mxu0 0.0
      %1275 = vmatprep.subr.mxu0 0.0
      %1276 = vmatpush2.msra.mxu0 0.0
      %1277 = vmatprep.subr.mxu0 0.0
      %1278 = vmatpush2.msra.mxu0 0.0
      %1279 = vmatprep.subr.mxu0 0.0
      %1280 = vmatpush2.msra.mxu0 0.0
      %1281 = vmatprep.subr.mxu0 0.0
      %1282 = vmatpush2.msra.mxu0 0.0
      %1283 = vmatprep.subr.mxu0 0.0
      %1284 = vmatpush2.msra.mxu0 0.0
      %1285 = vmatprep.subr.mxu0 0.0
      %1286 = vmatpush2.msra.mxu0 0.0
      %1287 = vmatprep.subr.mxu0 0.0
      %1288 = vmatpush2.msra.mxu0 0.0
      %1289 = vmatprep.subr.mxu0 0.0
      %1290 = vmatpush2.msra.mxu0 0.0
      %1291 = vmatprep.subr.mxu0 0.0
      %1292 = vmatpush2.msra.mxu0 0.0
      %1293 = vmatprep.subr.mxu0 0.0
      %1294 = vmatpush2.msra.mxu0 0.0
      %1295 = vmatprep.subr.mxu0 0.0
      %1296 = vmatpush2.msra.mxu0 0.0
      %1297 = vmatprep.subr.mxu0 0.0
      %1298 = vmatpush2.msra.mxu0 0.0
      %1299 = vmatprep.subr.mxu0 0.0
      %1300 = vmatpush2.msra.mxu0 0.0
      %1301 = vmatprep.subr.mxu0 0.0
      %1302 = vmatpush2.msra.mxu0 0.0
      %1303 = vmatprep.subr.mxu0 0.0
      %1304 = vmatpush2.msra.mxu0 0.0
      %1305 = vmatprep.mubr.f32.mxu0 0.0
      %1306 = vmatmul.mubr.f32.gmra.mxu0 %v524
      %v1307 = vpop.f32.mrf.mxu0
      %v1308 = vadd.f32 0.0, %v1307
      %v1309 = vpop.f32.mrf.mxu0
      %1310 = vmatprep.mubr.f32.mxu0 0.0
      %1311 = vmatmul.mubr.f32.gmra.mxu0 %v527
      %v1312 = vpop.f32.mrf.mxu0
      %v1313 = vadd.f32 0.0, %v1312
      %v1314 = vpop.f32.mrf.mxu0
      %1315 = vdwg.mxu0
      %v1317 = vsel %vm754, %v1158, 0
      %v1320 = vsel %vm754, %v1233, 0
      %1322 = vmatprep.subr.mxu0 0.0
      %1323 = vmatpush1.xpose.msra.mxu0 0.0
      %1324 = vmatprep.subr.mxu0 0.0
      %1325 = vmatpush1.xpose.msra.mxu0 0.0
      %1326 = vmatprep.subr.mxu0 0.0
      %1327 = vmatpush1.xpose.msra.mxu0 0.0
      %1328 = vmatprep.subr.mxu0 0.0
      %1329 = vmatpush1.xpose.msra.mxu0 0.0
      %1330 = vmatprep.subr.mxu0 0.0
      %1331 = vmatpush1.xpose.msra.mxu0 0.0
      %1332 = vmatprep.subr.mxu0 0.0
      %1333 = vmatpush1.xpose.msra.mxu0 0.0
      %1334 = vmatprep.subr.mxu0 0.0
      %1335 = vmatpush1.xpose.msra.mxu0 0.0
      %1336 = vmatprep.subr.mxu0 0.0
      %1337 = vmatpush1.xpose.msra.mxu0 0.0
      %1338 = vmatprep.subr.mxu0 0.0
      %1339 = vmatpush1.xpose.msra.mxu0 0.0
      %1340 = vmatprep.subr.mxu0 0.0
      %1341 = vmatpush1.xpose.msra.mxu0 0.0
      %1342 = vmatprep.subr.mxu0 0.0
      %1343 = vmatpush1.xpose.msra.mxu0 0.0
      %1344 = vmatprep.subr.mxu0 0.0
      %1345 = vmatpush1.xpose.msra.mxu0 0.0
      %1346 = vmatprep.subr.mxu0 0.0
      %1347 = vmatpush1.xpose.msra.mxu0 0.0
      %1348 = vmatprep.subr.mxu0 0.0
      %1349 = vmatpush1.xpose.msra.mxu0 0.0
      %1350 = vmatprep.subr.mxu0 0.0
      %1351 = vmatpush1.xpose.msra.mxu0 0.0
      %1352 = vmatprep.subr.mxu0 0.0
      %1353 = vmatpush1.xpose.msra.mxu0 %v1320
      %1354 = vmatprep.subr.mxu0 0.0
      %1355 = vmatpush2.xpose.msra.mxu0 0.0
      %1356 = vmatprep.subr.mxu0 0.0
      %1357 = vmatpush2.xpose.msra.mxu0 0.0
      %1358 = vmatprep.subr.mxu0 0.0
      %1359 = vmatpush2.xpose.msra.mxu0 0.0
      %1360 = vmatprep.subr.mxu0 0.0
      %1361 = vmatpush2.xpose.msra.mxu0 0.0
      %1362 = vmatprep.subr.mxu0 0.0
      %1363 = vmatpush2.xpose.msra.mxu0 0.0
      %1364 = vmatprep.subr.mxu0 0.0
      %1365 = vmatpush2.xpose.msra.mxu0 0.0
      %1366 = vmatprep.subr.mxu0 0.0
      %1367 = vmatpush2.xpose.msra.mxu0 0.0
      %1368 = vmatprep.subr.mxu0 0.0
      %1369 = vmatpush2.xpose.msra.mxu0 0.0
      %1370 = vmatprep.subr.mxu0 0.0
      %1371 = vmatpush2.xpose.msra.mxu0 0.0
      %1372 = vmatprep.subr.mxu0 0.0
      %1373 = vmatpush2.xpose.msra.mxu0 0.0
      %1374 = vmatprep.subr.mxu0 0.0
      %1375 = vmatpush2.xpose.msra.mxu0 0.0
      %1376 = vmatprep.subr.mxu0 0.0
      %1377 = vmatpush2.xpose.msra.mxu0 0.0
      %1378 = vmatprep.subr.mxu0 0.0
      %1379 = vmatpush2.xpose.msra.mxu0 0.0
      %1380 = vmatprep.subr.mxu0 0.0
      %1381 = vmatpush2.xpose.msra.mxu0 0.0
      %1382 = vmatprep.subr.mxu0 0.0
      %1383 = vmatpush2.xpose.msra.mxu0 0.0
      %1384 = vmatprep.subr.mxu0 0.0
      %1385 = vmatpush2.xpose.msra.mxu0 0.0
      %1386 = vmatprep.mubr.f32.mxu0 0.0
      %1387 = vmatmul.mubr.f32.gmra.mxu0 %v1317
      %v1388 = vpop.f32.mrf.mxu0
      %v1389 = vadd.f32 0.0, %v1388
      %v1390 = vpop.f32.mrf.mxu0
      %1391 = vdwg.mxu0
      %v1393 = vsel %vm754, %v1163, 0
      %v1396 = vsel %vm754, %v1238, 0
      %1398 = vmatprep.subr.mxu0 0.0
      %1399 = vmatpush1.xpose.msra.mxu0 0.0
      %1400 = vmatprep.subr.mxu0 0.0
      %1401 = vmatpush1.xpose.msra.mxu0 0.0
      %1402 = vmatprep.subr.mxu0 0.0
      %1403 = vmatpush1.xpose.msra.mxu0 0.0
      %1404 = vmatprep.subr.mxu0 0.0
      %1405 = vmatpush1.xpose.msra.mxu0 0.0
      %1406 = vmatprep.subr.mxu0 0.0
      %1407 = vmatpush1.xpose.msra.mxu0 0.0
      %1408 = vmatprep.subr.mxu0 0.0
      %1409 = vmatpush1.xpose.msra.mxu0 0.0
      %1410 = vmatprep.subr.mxu0 0.0
      %1411 = vmatpush1.xpose.msra.mxu0 0.0
      %1412 = vmatprep.subr.mxu0 0.0
      %1413 = vmatpush1.xpose.msra.mxu0 0.0
      %1414 = vmatprep.subr.mxu0 0.0
      %1415 = vmatpush1.xpose.msra.mxu0 0.0
      %1416 = vmatprep.subr.mxu0 0.0
      %1417 = vmatpush1.xpose.msra.mxu0 0.0
      %1418 = vmatprep.subr.mxu0 0.0
      %1419 = vmatpush1.xpose.msra.mxu0 0.0
      %1420 = vmatprep.subr.mxu0 0.0
      %1421 = vmatpush1.xpose.msra.mxu0 0.0
      %1422 = vmatprep.subr.mxu0 0.0
      %1423 = vmatpush1.xpose.msra.mxu0 0.0
      %1424 = vmatprep.subr.mxu0 0.0
      %1425 = vmatpush1.xpose.msra.mxu0 0.0
      %1426 = vmatprep.subr.mxu0 0.0
      %1427 = vmatpush1.xpose.msra.mxu0 0.0
      %1428 = vmatprep.subr.mxu0 0.0
      %1429 = vmatpush1.xpose.msra.mxu0 %v1396
      %1430 = vmatprep.subr.mxu0 0.0
      %1431 = vmatpush2.xpose.msra.mxu0 0.0
      %1432 = vmatprep.subr.mxu0 0.0
      %1433 = vmatpush2.xpose.msra.mxu0 0.0
      %1434 = vmatprep.subr.mxu0 0.0
      %1435 = vmatpush2.xpose.msra.mxu0 0.0
      %1436 = vmatprep.subr.mxu0 0.0
      %1437 = vmatpush2.xpose.msra.mxu0 0.0
      %1438 = vmatprep.subr.mxu0 0.0
      %1439 = vmatpush2.xpose.msra.mxu0 0.0
      %1440 = vmatprep.subr.mxu0 0.0
      %1441 = vmatpush2.xpose.msra.mxu0 0.0
      %1442 = vmatprep.subr.mxu0 0.0
      %1443 = vmatpush2.xpose.msra.mxu0 0.0
      %1444 = vmatprep.subr.mxu0 0.0
      %1445 = vmatpush2.xpose.msra.mxu0 0.0
      %1446 = vmatprep.subr.mxu0 0.0
      %1447 = vmatpush2.xpose.msra.mxu0 0.0
      %1448 = vmatprep.subr.mxu0 0.0
      %1449 = vmatpush2.xpose.msra.mxu0 0.0
      %1450 = vmatprep.subr.mxu0 0.0
      %1451 = vmatpush2.xpose.msra.mxu0 0.0
      %1452 = vmatprep.subr.mxu0 0.0
      %1453 = vmatpush2.xpose.msra.mxu0 0.0
      %1454 = vmatprep.subr.mxu0 0.0
      %1455 = vmatpush2.xpose.msra.mxu0 0.0
      %1456 = vmatprep.subr.mxu0 0.0
      %1457 = vmatpush2.xpose.msra.mxu0 0.0
      %1458 = vmatprep.subr.mxu0 0.0
      %1459 = vmatpush2.xpose.msra.mxu0 0.0
      %1460 = vmatprep.subr.mxu0 0.0
      %1461 = vmatpush2.xpose.msra.mxu0 0.0
      %1462 = vmatprep.mubr.f32.mxu0 0.0
      %1463 = vmatmul.mubr.f32.gmra.mxu0 %v1393
      %v1464 = vpop.f32.mrf.mxu0
      %v1465 = vadd.f32 0.0, %v1464
      %v1466 = vpop.f32.mrf.mxu0
      %1467 = vdwg.mxu0
      %v1468 = vmul.f32 %v1389, 0.35355338
      %v1469 = vmul.f32 %v1465, 0.35355338
      %v1470 = vsel %vm919, -1e+09, %v1468
      %v1471 = vsel %vm920, -1e+09, %v1469
      %v1472 = vsel %vm754, %v1470, -inf
      %1473 = vmax.xlane.f32.xlu0 %v1472
      %v1474 = vpop.xlane.xlu0 %1473
      %v1475 = vsel %vm754, %v1471, -inf
      %1476 = vmax.xlane.f32.xlu0 %v1475
      %v1477 = vpop.xlane.xlu0 %1476
      %v1478 = vsub.f32 %v1470, %v1474
      %v1479 = vsub.f32 %v1471, %v1477
      %v1480 = vmul.f32 %v1478, 1.442695
      %v1481 = vpow.pop %v1480
      %v1482 = vmul.f32 %v1479, 1.442695
      %v1483 = vpow.pop %v1482
      %v1484 = vsel %vm754, %v1481, 0.0
      %1485 = vadd.xlane.f32.xlu0 %v1484
      %v1486 = vpop.xlane.xlu0 %1485
      %v1487 = vsel %vm754, %v1483, 0.0
      %1488 = vadd.xlane.f32.xlu0 %v1487
      %v1489 = vpop.xlane.xlu0 %1488
      %v1490 = vrcp.pop %v1486
      %v1491 = vrcp.pop %v1489
      %v1492 = vmul.f32 %v1481, %v1490
      %v1493 = vmul.f32 %v1483, %v1491
      %v1495 = vsel %vm754, %v1492, 0
      %1497 = vmatprep.subr.mxu0 0.0
      %1498 = vmatpush1.msra.mxu0 0.0
      %1499 = vmatprep.subr.mxu0 0.0
      %1500 = vmatpush1.msra.mxu0 0.0
      %1501 = vmatprep.subr.mxu0 0.0
      %1502 = vmatpush1.msra.mxu0 0.0
      %1503 = vmatprep.subr.mxu0 0.0
      %1504 = vmatpush1.msra.mxu0 0.0
      %1505 = vmatprep.subr.mxu0 0.0
      %1506 = vmatpush1.msra.mxu0 0.0
      %1507 = vmatprep.subr.mxu0 0.0
      %1508 = vmatpush1.msra.mxu0 0.0
      %1509 = vmatprep.subr.mxu0 0.0
      %1510 = vmatpush1.msra.mxu0 0.0
      %1511 = vmatprep.subr.mxu0 0.0
      %1512 = vmatpush1.msra.mxu0 0.0
      %1513 = vmatprep.subr.mxu0 0.0
      %1514 = vmatpush1.msra.mxu0 0.0
      %1515 = vmatprep.subr.mxu0 0.0
      %1516 = vmatpush1.msra.mxu0 0.0
      %1517 = vmatprep.subr.mxu0 0.0
      %1518 = vmatpush1.msra.mxu0 0.0
      %1519 = vmatprep.subr.mxu0 0.0
      %1520 = vmatpush1.msra.mxu0 0.0
      %1521 = vmatprep.subr.mxu0 0.0
      %1522 = vmatpush1.msra.mxu0 0.0
      %1523 = vmatprep.subr.mxu0 0.0
      %1524 = vmatpush1.msra.mxu0 0.0
      %1525 = vmatprep.subr.mxu0 0.0
      %1526 = vmatpush1.msra.mxu0 0.0
      %1527 = vmatprep.subr.mxu0 0.0
      %1528 = vmatpush1.msra.mxu0 %v1308
      %1529 = vmatprep.subr.mxu0 0.0
      %1530 = vmatpush2.msra.mxu0 0.0
      %1531 = vmatprep.subr.mxu0 0.0
      %1532 = vmatpush2.msra.mxu0 0.0
      %1533 = vmatprep.subr.mxu0 0.0
      %1534 = vmatpush2.msra.mxu0 0.0
      %1535 = vmatprep.subr.mxu0 0.0
      %1536 = vmatpush2.msra.mxu0 0.0
      %1537 = vmatprep.subr.mxu0 0.0
      %1538 = vmatpush2.msra.mxu0 0.0
      %1539 = vmatprep.subr.mxu0 0.0
      %1540 = vmatpush2.msra.mxu0 0.0
      %1541 = vmatprep.subr.mxu0 0.0
      %1542 = vmatpush2.msra.mxu0 0.0
      %1543 = vmatprep.subr.mxu0 0.0
      %1544 = vmatpush2.msra.mxu0 0.0
      %1545 = vmatprep.subr.mxu0 0.0
      %1546 = vmatpush2.msra.mxu0 0.0
      %1547 = vmatprep.subr.mxu0 0.0
      %1548 = vmatpush2.msra.mxu0 0.0
      %1549 = vmatprep.subr.mxu0 0.0
      %1550 = vmatpush2.msra.mxu0 0.0
      %1551 = vmatprep.subr.mxu0 0.0
      %1552 = vmatpush2.msra.mxu0 0.0
      %1553 = vmatprep.subr.mxu0 0.0
      %1554 = vmatpush2.msra.mxu0 0.0
      %1555 = vmatprep.subr.mxu0 0.0
      %1556 = vmatpush2.msra.mxu0 0.0
      %1557 = vmatprep.subr.mxu0 0.0
      %1558 = vmatpush2.msra.mxu0 0.0
      %1559 = vmatprep.subr.mxu0 0.0
      %1560 = vmatpush2.msra.mxu0 0.0
      %1561 = vmatprep.mubr.f32.mxu0 0.0
      %1562 = vmatmul.mubr.f32.gmra.mxu0 %v1495
      %v1563 = vpop.f32.mrf.mxu0
      %v1564 = vadd.f32 0.0, %v1563
      %v1565 = vpop.f32.mrf.mxu0
      %1566 = vdwg.mxu0
      %v1568 = vsel %vm754, %v1493, 0
      %1570 = vmatprep.subr.mxu0 0.0
      %1571 = vmatpush1.msra.mxu0 0.0
      %1572 = vmatprep.subr.mxu0 0.0
      %1573 = vmatpush1.msra.mxu0 0.0
      %1574 = vmatprep.subr.mxu0 0.0
      %1575 = vmatpush1.msra.mxu0 0.0
      %1576 = vmatprep.subr.mxu0 0.0
      %1577 = vmatpush1.msra.mxu0 0.0
      %1578 = vmatprep.subr.mxu0 0.0
      %1579 = vmatpush1.msra.mxu0 0.0
      %1580 = vmatprep.subr.mxu0 0.0
      %1581 = vmatpush1.msra.mxu0 0.0
      %1582 = vmatprep.subr.mxu0 0.0
      %1583 = vmatpush1.msra.mxu0 0.0
      %1584 = vmatprep.subr.mxu0 0.0
      %1585 = vmatpush1.msra.mxu0 0.0
      %1586 = vmatprep.subr.mxu0 0.0
      %1587 = vmatpush1.msra.mxu0 0.0
      %1588 = vmatprep.subr.mxu0 0.0
      %1589 = vmatpush1.msra.mxu0 0.0
      %1590 = vmatprep.subr.mxu0 0.0
      %1591 = vmatpush1.msra.mxu0 0.0
      %1592 = vmatprep.subr.mxu0 0.0
      %1593 = vmatpush1.msra.mxu0 0.0
      %1594 = vmatprep.subr.mxu0 0.0
      %1595 = vmatpush1.msra.mxu0 0.0
      %1596 = vmatprep.subr.mxu0 0.0
      %1597 = vmatpush1.msra.mxu0 0.0
      %1598 = vmatprep.subr.mxu0 0.0
      %1599 = vmatpush1.msra.mxu0 0.0
      %1600 = vmatprep.subr.mxu0 0.0
      %1601 = vmatpush1.msra.mxu0 %v1313
      %1602 = vmatprep.subr.mxu0 0.0
      %1603 = vmatpush2.msra.mxu0 0.0
      %1604 = vmatprep.subr.mxu0 0.0
      %1605 = vmatpush2.msra.mxu0 0.0
      %1606 = vmatprep.subr.mxu0 0.0
      %1607 = vmatpush2.msra.mxu0 0.0
      %1608 = vmatprep.subr.mxu0 0.0
      %1609 = vmatpush2.msra.mxu0 0.0
      %1610 = vmatprep.subr.mxu0 0.0
      %1611 = vmatpush2.msra.mxu0 0.0
      %1612 = vmatprep.subr.mxu0 0.0
      %1613 = vmatpush2.msra.mxu0 0.0
      %1614 = vmatprep.subr.mxu0 0.0
      %1615 = vmatpush2.msra.mxu0 0.0
      %1616 = vmatprep.subr.mxu0 0.0
      %1617 = vmatpush2.msra.mxu0 0.0
      %1618 = vmatprep.subr.mxu0 0.0
      %1619 = vmatpush2.msra.mxu0 0.0
      %1620 = vmatprep.subr.mxu0 0.0
      %1621 = vmatpush2.msra.mxu0 0.0
      %1622 = vmatprep.subr.mxu0 0.0
      %1623 = vmatpush2.msra.mxu0 0.0
      %1624 = vmatprep.subr.mxu0 0.0
      %1625 = vmatpush2.msra.mxu0 0.0
      %1626 = vmatprep.subr.mxu0 0.0
      %1627 = vmatpush2.msra.mxu0 0.0
      %1628 = vmatprep.subr.mxu0 0.0
      %1629 = vmatpush2.msra.mxu0 0.0
      %1630 = vmatprep.subr.mxu0 0.0
      %1631 = vmatpush2.msra.mxu0 0.0
      %1632 = vmatprep.subr.mxu0 0.0
      %1633 = vmatpush2.msra.mxu0 0.0
      %1634 = vmatprep.mubr.f32.mxu0 0.0
      %1635 = vmatmul.mubr.f32.gmra.mxu0 %v1568
      %v1636 = vpop.f32.mrf.mxu0
      %v1637 = vadd.f32 0.0, %v1636
      %v1638 = vpop.f32.mrf.mxu0
      %1639 = vdwg.mxu0
      %v1641 = vsel %vm754, %v1564, 0
      %v1644 = vsel %vm754, %v1637, 0
      %1646 = vmatprep.subr.mxu0 0.0
      %1647 = vmatpush1.msra.mxu0 0.0
      %1648 = vmatprep.subr.mxu0 0.0
      %1649 = vmatpush1.msra.mxu0 0.0
      %1650 = vmatprep.subr.mxu0 0.0
      %1651 = vmatpush1.msra.mxu0 0.0
      %1652 = vmatprep.subr.mxu0 0.0
      %1653 = vmatpush1.msra.mxu0 0.0
      %1654 = vmatprep.subr.mxu0 0.0
      %1655 = vmatpush1.msra.mxu0 0.0
      %1656 = vmatprep.subr.mxu0 0.0
      %1657 = vmatpush1.msra.mxu0 0.0
      %1658 = vmatprep.subr.mxu0 0.0
      %1659 = vmatpush1.msra.mxu0 0.0
      %1660 = vmatprep.subr.mxu0 0.0
      %1661 = vmatpush1.msra.mxu0 0.0
      %1662 = vmatprep.subr.mxu0 0.0
      %1663 = vmatpush1.msra.mxu0 0.0
      %1664 = vmatprep.subr.mxu0 0.0
      %1665 = vmatpush1.msra.mxu0 0.0
      %1666 = vmatprep.subr.mxu0 0.0
      %1667 = vmatpush1.msra.mxu0 0.0
      %1668 = vmatprep.subr.mxu0 0.0
      %1669 = vmatpush1.msra.mxu0 0.0
      %1670 = vmatprep.subr.mxu0 0.0
      %1671 = vmatpush1.msra.mxu0 0.0
      %1672 = vmatprep.subr.mxu0 0.0
      %1673 = vmatpush1.msra.mxu0 0.0
      %1674 = vmatprep.subr.mxu0 0.0
      %1675 = vmatpush1.msra.mxu0 0.0
      %1676 = vmatprep.subr.mxu0 0.0
      %1677 = vmatpush1.msra.mxu0 %v519
      %1678 = vmatprep.subr.mxu0 0.0
      %1679 = vmatpush2.msra.mxu0 0.0
      %1680 = vmatprep.subr.mxu0 0.0
      %1681 = vmatpush2.msra.mxu0 0.0
      %1682 = vmatprep.subr.mxu0 0.0
      %1683 = vmatpush2.msra.mxu0 0.0
      %1684 = vmatprep.subr.mxu0 0.0
      %1685 = vmatpush2.msra.mxu0 0.0
      %1686 = vmatprep.subr.mxu0 0.0
      %1687 = vmatpush2.msra.mxu0 0.0
      %1688 = vmatprep.subr.mxu0 0.0
      %1689 = vmatpush2.msra.mxu0 0.0
      %1690 = vmatprep.subr.mxu0 0.0
      %1691 = vmatpush2.msra.mxu0 0.0
      %1692 = vmatprep.subr.mxu0 0.0
      %1693 = vmatpush2.msra.mxu0 0.0
      %1694 = vmatprep.subr.mxu0 0.0
      %1695 = vmatpush2.msra.mxu0 0.0
      %1696 = vmatprep.subr.mxu0 0.0
      %1697 = vmatpush2.msra.mxu0 0.0
      %1698 = vmatprep.subr.mxu0 0.0
      %1699 = vmatpush2.msra.mxu0 0.0
      %1700 = vmatprep.subr.mxu0 0.0
      %1701 = vmatpush2.msra.mxu0 0.0
      %1702 = vmatprep.subr.mxu0 0.0
      %1703 = vmatpush2.msra.mxu0 0.0
      %1704 = vmatprep.subr.mxu0 0.0
      %1705 = vmatpush2.msra.mxu0 0.0
      %1706 = vmatprep.subr.mxu0 0.0
      %1707 = vmatpush2.msra.mxu0 0.0
      %1708 = vmatprep.subr.mxu0 0.0
      %1709 = vmatpush2.msra.mxu0 0.0
      %1710 = vmatprep.mubr.f32.mxu0 0.0
      %1711 = vmatmul.mubr.f32.gmra.mxu0 %v1641
      %v1712 = vpop.f32.mrf.mxu0
      %v1713 = vadd.f32 0.0, %v1712
      %v1714 = vpop.f32.mrf.mxu0
      %1715 = vmatprep.mubr.f32.mxu0 0.0
      %1716 = vmatmul.mubr.f32.gmra.mxu0 %v1644
      %v1717 = vpop.f32.mrf.mxu0
      %v1718 = vadd.f32 0.0, %v1717
      %v1719 = vpop.f32.mrf.mxu0
      %1720 = vdwg.mxu0
      %v1722 = vsel %vm754, %v1015, 0
      %v1725 = vsel %vm754, %v1088, 0
      %1727 = vmatprep.subr.mxu0 0.0
      %1728 = vmatpush1.msra.mxu0 0.0
      %1729 = vmatprep.subr.mxu0 0.0
      %1730 = vmatpush1.msra.mxu0 0.0
      %1731 = vmatprep.subr.mxu0 0.0
      %1732 = vmatpush1.msra.mxu0 0.0
      %1733 = vmatprep.subr.mxu0 0.0
      %1734 = vmatpush1.msra.mxu0 0.0
      %1735 = vmatprep.subr.mxu0 0.0
      %1736 = vmatpush1.msra.mxu0 0.0
      %1737 = vmatprep.subr.mxu0 0.0
      %1738 = vmatpush1.msra.mxu0 0.0
      %1739 = vmatprep.subr.mxu0 0.0
      %1740 = vmatpush1.msra.mxu0 0.0
      %1741 = vmatprep.subr.mxu0 0.0
      %1742 = vmatpush1.msra.mxu0 0.0
      %1743 = vmatprep.subr.mxu0 0.0
      %1744 = vmatpush1.msra.mxu0 0.0
      %1745 = vmatprep.subr.mxu0 0.0
      %1746 = vmatpush1.msra.mxu0 0.0
      %1747 = vmatprep.subr.mxu0 0.0
      %1748 = vmatpush1.msra.mxu0 0.0
      %1749 = vmatprep.subr.mxu0 0.0
      %1750 = vmatpush1.msra.mxu0 0.0
      %1751 = vmatprep.subr.mxu0 0.0
      %1752 = vmatpush1.msra.mxu0 0.0
      %1753 = vmatprep.subr.mxu0 0.0
      %1754 = vmatpush1.msra.mxu0 0.0
      %1755 = vmatprep.subr.mxu0 0.0
      %1756 = vmatpush1.msra.mxu0 0.0
      %1757 = vmatprep.subr.mxu0 0.0
      %1758 = vmatpush1.msra.mxu0 %v518
      %1759 = vmatprep.subr.mxu0 0.0
      %1760 = vmatpush2.msra.mxu0 0.0
      %1761 = vmatprep.subr.mxu0 0.0
      %1762 = vmatpush2.msra.mxu0 0.0
      %1763 = vmatprep.subr.mxu0 0.0
      %1764 = vmatpush2.msra.mxu0 0.0
      %1765 = vmatprep.subr.mxu0 0.0
      %1766 = vmatpush2.msra.mxu0 0.0
      %1767 = vmatprep.subr.mxu0 0.0
      %1768 = vmatpush2.msra.mxu0 0.0
      %1769 = vmatprep.subr.mxu0 0.0
      %1770 = vmatpush2.msra.mxu0 0.0
      %1771 = vmatprep.subr.mxu0 0.0
      %1772 = vmatpush2.msra.mxu0 0.0
      %1773 = vmatprep.subr.mxu0 0.0
      %1774 = vmatpush2.msra.mxu0 0.0
      %1775 = vmatprep.subr.mxu0 0.0
      %1776 = vmatpush2.msra.mxu0 0.0
      %1777 = vmatprep.subr.mxu0 0.0
      %1778 = vmatpush2.msra.mxu0 0.0
      %1779 = vmatprep.subr.mxu0 0.0
      %1780 = vmatpush2.msra.mxu0 0.0
      %1781 = vmatprep.subr.mxu0 0.0
      %1782 = vmatpush2.msra.mxu0 0.0
      %1783 = vmatprep.subr.mxu0 0.0
      %1784 = vmatpush2.msra.mxu0 0.0
      %1785 = vmatprep.subr.mxu0 0.0
      %1786 = vmatpush2.msra.mxu0 0.0
      %1787 = vmatprep.subr.mxu0 0.0
      %1788 = vmatpush2.msra.mxu0 0.0
      %1789 = vmatprep.subr.mxu0 0.0
      %1790 = vmatpush2.msra.mxu0 0.0
      %1791 = vmatprep.mubr.f32.mxu0 0.0
      %1792 = vmatmul.mubr.f32.gmra.mxu0 %v1722
      %v1793 = vpop.f32.mrf.mxu0
      %v1794 = vadd.f32 %v1713, %v1793
      %v1795 = vpop.f32.mrf.mxu0
      %1796 = vmatprep.mubr.f32.mxu0 0.0
      %1797 = vmatmul.mubr.f32.gmra.mxu0 %v1725
      %v1798 = vpop.f32.mrf.mxu0
      %v1799 = vadd.f32 %v1718, %v1798
      %v1800 = vpop.f32.mrf.mxu0
      %1801 = vdwg.mxu0
      %1802 = vmatprep.subr.mxu0 0.0
      %1803 = vmatpush1.msra.mxu0 0.0
      %1804 = vmatprep.subr.mxu0 0.0
      %1805 = vmatpush1.msra.mxu0 0.0
      %1806 = vmatprep.subr.mxu0 0.0
      %1807 = vmatpush1.msra.mxu0 0.0
      %1808 = vmatprep.subr.mxu0 0.0
      %1809 = vmatpush1.msra.mxu0 0.0
      %1810 = vmatprep.subr.mxu0 0.0
      %1811 = vmatpush1.msra.mxu0 0.0
      %1812 = vmatprep.subr.mxu0 0.0
      %1813 = vmatpush1.msra.mxu0 0.0
      %1814 = vmatprep.subr.mxu0 0.0
      %1815 = vmatpush1.msra.mxu0 0.0
      %1816 = vmatprep.subr.mxu0 0.0
      %1817 = vmatpush1.msra.mxu0 0.0
      %1818 = vmatprep.subr.mxu0 0.0
      %1819 = vmatpush1.msra.mxu0 0.0
      %1820 = vmatprep.subr.mxu0 0.0
      %1821 = vmatpush1.msra.mxu0 0.0
      %1822 = vmatprep.subr.mxu0 0.0
      %1823 = vmatpush1.msra.mxu0 0.0
      %1824 = vmatprep.subr.mxu0 0.0
      %1825 = vmatpush1.msra.mxu0 0.0
      %1826 = vmatprep.subr.mxu0 0.0
      %1827 = vmatpush1.msra.mxu0 %v481
      %1828 = vmatprep.subr.mxu0 0.0
      %1829 = vmatpush1.msra.mxu0 %v480
      %1830 = vmatprep.subr.mxu0 0.0
      %1831 = vmatpush1.msra.mxu0 %v479
      %1832 = vmatprep.subr.mxu0 0.0
      %1833 = vmatpush1.msra.mxu0 %v478
      %1834 = vmatprep.subr.mxu0 0.0
      %1835 = vmatpush2.msra.mxu0 0.0
      %1836 = vmatprep.subr.mxu0 0.0
      %1837 = vmatpush2.msra.mxu0 0.0
      %1838 = vmatprep.subr.mxu0 0.0
      %1839 = vmatpush2.msra.mxu0 0.0
      %1840 = vmatprep.subr.mxu0 0.0
      %1841 = vmatpush2.msra.mxu0 0.0
      %1842 = vmatprep.subr.mxu0 0.0
      %1843 = vmatpush2.msra.mxu0 0.0
      %1844 = vmatprep.subr.mxu0 0.0
      %1845 = vmatpush2.msra.mxu0 0.0
      %1846 = vmatprep.subr.mxu0 0.0
      %1847 = vmatpush2.msra.mxu0 0.0
      %1848 = vmatprep.subr.mxu0 0.0
      %1849 = vmatpush2.msra.mxu0 0.0
      %1850 = vmatprep.subr.mxu0 0.0
      %1851 = vmatpush2.msra.mxu0 0.0
      %1852 = vmatprep.subr.mxu0 0.0
      %1853 = vmatpush2.msra.mxu0 0.0
      %1854 = vmatprep.subr.mxu0 0.0
      %1855 = vmatpush2.msra.mxu0 0.0
      %1856 = vmatprep.subr.mxu0 0.0
      %1857 = vmatpush2.msra.mxu0 0.0
      %1858 = vmatprep.subr.mxu0 0.0
      %1859 = vmatpush2.msra.mxu0 0.0
      %1860 = vmatprep.subr.mxu0 0.0
      %1861 = vmatpush2.msra.mxu0 0.0
      %1862 = vmatprep.subr.mxu0 0.0
      %1863 = vmatpush2.msra.mxu0 0.0
      %1864 = vmatprep.subr.mxu0 0.0
      %1865 = vmatpush2.msra.mxu0 0.0
      %1866 = vmatprep.mubr.f32.mxu0 0.0
      %1867 = vmatmul.mubr.f32.gmra.mxu0 %v524
      %v1868 = vpop.f32.mrf.mxu0
      %v1869 = vadd.f32 0.0, %v1868
      %v1870 = vpop.f32.mrf.mxu0
      %1871 = vmatprep.mubr.f32.mxu0 0.0
      %1872 = vmatmul.mubr.f32.gmra.mxu0 %v527
      %v1873 = vpop.f32.mrf.mxu0
      %v1874 = vadd.f32 0.0, %v1873
      %v1875 = vpop.f32.mrf.mxu0
      %1876 = vdwg.mxu0
      %1877 = vmatprep.subr.mxu0 0.0
      %1878 = vmatpush1.msra.mxu0 0.0
      %1879 = vmatprep.subr.mxu0 0.0
      %1880 = vmatpush1.msra.mxu0 0.0
      %1881 = vmatprep.subr.mxu0 0.0
      %1882 = vmatpush1.msra.mxu0 0.0
      %1883 = vmatprep.subr.mxu0 0.0
      %1884 = vmatpush1.msra.mxu0 0.0
      %1885 = vmatprep.subr.mxu0 0.0
      %1886 = vmatpush1.msra.mxu0 0.0
      %1887 = vmatprep.subr.mxu0 0.0
      %1888 = vmatpush1.msra.mxu0 0.0
      %1889 = vmatprep.subr.mxu0 0.0
      %1890 = vmatpush1.msra.mxu0 0.0
      %1891 = vmatprep.subr.mxu0 0.0
      %1892 = vmatpush1.msra.mxu0 0.0
      %1893 = vmatprep.subr.mxu0 0.0
      %1894 = vmatpush1.msra.mxu0 0.0
      %1895 = vmatprep.subr.mxu0 0.0
      %1896 = vmatpush1.msra.mxu0 0.0
      %1897 = vmatprep.subr.mxu0 0.0
      %1898 = vmatpush1.msra.mxu0 0.0
      %1899 = vmatprep.subr.mxu0 0.0
      %1900 = vmatpush1.msra.mxu0 0.0
      %1901 = vmatprep.subr.mxu0 0.0
      %1902 = vmatpush1.msra.mxu0 %v497
      %1903 = vmatprep.subr.mxu0 0.0
      %1904 = vmatpush1.msra.mxu0 %v496
      %1905 = vmatprep.subr.mxu0 0.0
      %1906 = vmatpush1.msra.mxu0 %v495
      %1907 = vmatprep.subr.mxu0 0.0
      %1908 = vmatpush1.msra.mxu0 %v494
      %1909 = vmatprep.subr.mxu0 0.0
      %1910 = vmatpush2.msra.mxu0 0.0
      %1911 = vmatprep.subr.mxu0 0.0
      %1912 = vmatpush2.msra.mxu0 0.0
      %1913 = vmatprep.subr.mxu0 0.0
      %1914 = vmatpush2.msra.mxu0 0.0
      %1915 = vmatprep.subr.mxu0 0.0
      %1916 = vmatpush2.msra.mxu0 0.0
      %1917 = vmatprep.subr.mxu0 0.0
      %1918 = vmatpush2.msra.mxu0 0.0
      %1919 = vmatprep.subr.mxu0 0.0
      %1920 = vmatpush2.msra.mxu0 0.0
      %1921 = vmatprep.subr.mxu0 0.0
      %1922 = vmatpush2.msra.mxu0 0.0
      %1923 = vmatprep.subr.mxu0 0.0
      %1924 = vmatpush2.msra.mxu0 0.0
      %1925 = vmatprep.subr.mxu0 0.0
      %1926 = vmatpush2.msra.mxu0 0.0
      %1927 = vmatprep.subr.mxu0 0.0
      %1928 = vmatpush2.msra.mxu0 0.0
      %1929 = vmatprep.subr.mxu0 0.0
      %1930 = vmatpush2.msra.mxu0 0.0
      %1931 = vmatprep.subr.mxu0 0.0
      %1932 = vmatpush2.msra.mxu0 0.0
      %1933 = vmatprep.subr.mxu0 0.0
      %1934 = vmatpush2.msra.mxu0 0.0
      %1935 = vmatprep.subr.mxu0 0.0
      %1936 = vmatpush2.msra.mxu0 0.0
      %1937 = vmatprep.subr.mxu0 0.0
      %1938 = vmatpush2.msra.mxu0 0.0
      %1939 = vmatprep.subr.mxu0 0.0
      %1940 = vmatpush2.msra.mxu0 0.0
      %1941 = vmatprep.mubr.f32.mxu0 0.0
      %1942 = vmatmul.mubr.f32.gmra.mxu0 %v524
      %v1943 = vpop.f32.mrf.mxu0
      %v1944 = vadd.f32 0.0, %v1943
      %v1945 = vpop.f32.mrf.mxu0
      %1946 = vmatprep.mubr.f32.mxu0 0.0
      %1947 = vmatmul.mubr.f32.gmra.mxu0 %v527
      %v1948 = vpop.f32.mrf.mxu0
      %v1949 = vadd.f32 0.0, %v1948
      %v1950 = vpop.f32.mrf.mxu0
      %1951 = vdwg.mxu0
      %1952 = vmatprep.subr.mxu0 0.0
      %1953 = vmatpush1.msra.mxu0 0.0
      %1954 = vmatprep.subr.mxu0 0.0
      %1955 = vmatpush1.msra.mxu0 0.0
      %1956 = vmatprep.subr.mxu0 0.0
      %1957 = vmatpush1.msra.mxu0 0.0
      %1958 = vmatprep.subr.mxu0 0.0
      %1959 = vmatpush1.msra.mxu0 0.0
      %1960 = vmatprep.subr.mxu0 0.0
      %1961 = vmatpush1.msra.mxu0 0.0
      %1962 = vmatprep.subr.mxu0 0.0
      %1963 = vmatpush1.msra.mxu0 0.0
      %1964 = vmatprep.subr.mxu0 0.0
      %1965 = vmatpush1.msra.mxu0 0.0
      %1966 = vmatprep.subr.mxu0 0.0
      %1967 = vmatpush1.msra.mxu0 0.0
      %1968 = vmatprep.subr.mxu0 0.0
      %1969 = vmatpush1.msra.mxu0 0.0
      %1970 = vmatprep.subr.mxu0 0.0
      %1971 = vmatpush1.msra.mxu0 0.0
      %1972 = vmatprep.subr.mxu0 0.0
      %1973 = vmatpush1.msra.mxu0 0.0
      %1974 = vmatprep.subr.mxu0 0.0
      %1975 = vmatpush1.msra.mxu0 0.0
      %1976 = vmatprep.subr.mxu0 0.0
      %1977 = vmatpush1.msra.mxu0 %v513
      %1978 = vmatprep.subr.mxu0 0.0
      %1979 = vmatpush1.msra.mxu0 %v512
      %1980 = vmatprep.subr.mxu0 0.0
      %1981 = vmatpush1.msra.mxu0 %v511
      %1982 = vmatprep.subr.mxu0 0.0
      %1983 = vmatpush1.msra.mxu0 %v510
      %1984 = vmatprep.subr.mxu0 0.0
      %1985 = vmatpush2.msra.mxu0 0.0
      %1986 = vmatprep.subr.mxu0 0.0
      %1987 = vmatpush2.msra.mxu0 0.0
      %1988 = vmatprep.subr.mxu0 0.0
      %1989 = vmatpush2.msra.mxu0 0.0
      %1990 = vmatprep.subr.mxu0 0.0
      %1991 = vmatpush2.msra.mxu0 0.0
      %1992 = vmatprep.subr.mxu0 0.0
      %1993 = vmatpush2.msra.mxu0 0.0
      %1994 = vmatprep.subr.mxu0 0.0
      %1995 = vmatpush2.msra.mxu0 0.0
      %1996 = vmatprep.subr.mxu0 0.0
      %1997 = vmatpush2.msra.mxu0 0.0
      %1998 = vmatprep.subr.mxu0 0.0
      %1999 = vmatpush2.msra.mxu0 0.0
      %2000 = vmatprep.subr.mxu0 0.0
      %2001 = vmatpush2.msra.mxu0 0.0
      %2002 = vmatprep.subr.mxu0 0.0
      %2003 = vmatpush2.msra.mxu0 0.0
      %2004 = vmatprep.subr.mxu0 0.0
      %2005 = vmatpush2.msra.mxu0 0.0
      %2006 = vmatprep.subr.mxu0 0.0
      %2007 = vmatpush2.msra.mxu0 0.0
      %2008 = vmatprep.subr.mxu0 0.0
      %2009 = vmatpush2.msra.mxu0 0.0
      %2010 = vmatprep.subr.mxu0 0.0
      %2011 = vmatpush2.msra.mxu0 0.0
      %2012 = vmatprep.subr.mxu0 0.0
      %2013 = vmatpush2.msra.mxu0 0.0
      %2014 = vmatprep.subr.mxu0 0.0
      %2015 = vmatpush2.msra.mxu0 0.0
      %2016 = vmatprep.mubr.f32.mxu0 0.0
      %2017 = vmatmul.mubr.f32.gmra.mxu0 %v524
      %v2018 = vpop.f32.mrf.mxu0
      %v2019 = vadd.f32 0.0, %v2018
      %v2020 = vpop.f32.mrf.mxu0
      %2021 = vmatprep.mubr.f32.mxu0 0.0
      %2022 = vmatmul.mubr.f32.gmra.mxu0 %v527
      %v2023 = vpop.f32.mrf.mxu0
      %v2024 = vadd.f32 0.0, %v2023
      %v2025 = vpop.f32.mrf.mxu0
      %2026 = vdwg.mxu0
      %v2028 = vsel %vm754, %v1869, 0
      %v2031 = vsel %vm754, %v1944, 0
      %2033 = vmatprep.subr.mxu0 0.0
      %2034 = vmatpush1.xpose.msra.mxu0 0.0
      %2035 = vmatprep.subr.mxu0 0.0
      %2036 = vmatpush1.xpose.msra.mxu0 0.0
      %2037 = vmatprep.subr.mxu0 0.0
      %2038 = vmatpush1.xpose.msra.mxu0 0.0
      %2039 = vmatprep.subr.mxu0 0.0
      %2040 = vmatpush1.xpose.msra.mxu0 0.0
      %2041 = vmatprep.subr.mxu0 0.0
      %2042 = vmatpush1.xpose.msra.mxu0 0.0
      %2043 = vmatprep.subr.mxu0 0.0
      %2044 = vmatpush1.xpose.msra.mxu0 0.0
      %2045 = vmatprep.subr.mxu0 0.0
      %2046 = vmatpush1.xpose.msra.mxu0 0.0
      %2047 = vmatprep.subr.mxu0 0.0
      %2048 = vmatpush1.xpose.msra.mxu0 0.0
      %2049 = vmatprep.subr.mxu0 0.0
      %2050 = vmatpush1.xpose.msra.mxu0 0.0
      %2051 = vmatprep.subr.mxu0 0.0
      %2052 = vmatpush1.xpose.msra.mxu0 0.0
      %2053 = vmatprep.subr.mxu0 0.0
      %2054 = vmatpush1.xpose.msra.mxu0 0.0
      %2055 = vmatprep.subr.mxu0 0.0
      %2056 = vmatpush1.xpose.msra.mxu0 0.0
      %2057 = vmatprep.subr.mxu0 0.0
      %2058 = vmatpush1.xpose.msra.mxu0 0.0
      %2059 = vmatprep.subr.mxu0 0.0
      %2060 = vmatpush1.xpose.msra.mxu0 0.0
      %2061 = vmatprep.subr.mxu0 0.0
      %2062 = vmatpush1.xpose.msra.mxu0 0.0
      %2063 = vmatprep.subr.mxu0 0.0
      %2064 = vmatpush1.xpose.msra.mxu0 %v2031
      %2065 = vmatprep.subr.mxu0 0.0
      %2066 = vmatpush2.xpose.msra.mxu0 0.0
      %2067 = vmatprep.subr.mxu0 0.0
      %2068 = vmatpush2.xpose.msra.mxu0 0.0
      %2069 = vmatprep.subr.mxu0 0.0
      %2070 = vmatpush2.xpose.msra.mxu0 0.0
      %2071 = vmatprep.subr.mxu0 0.0
      %2072 = vmatpush2.xpose.msra.mxu0 0.0
      %2073 = vmatprep.subr.mxu0 0.0
      %2074 = vmatpush2.xpose.msra.mxu0 0.0
      %2075 = vmatprep.subr.mxu0 0.0
      %2076 = vmatpush2.xpose.msra.mxu0 0.0
      %2077 = vmatprep.subr.mxu0 0.0
      %2078 = vmatpush2.xpose.msra.mxu0 0.0
      %2079 = vmatprep.subr.mxu0 0.0
      %2080 = vmatpush2.xpose.msra.mxu0 0.0
      %2081 = vmatprep.subr.mxu0 0.0
      %2082 = vmatpush2.xpose.msra.mxu0 0.0
      %2083 = vmatprep.subr.mxu0 0.0
      %2084 = vmatpush2.xpose.msra.mxu0 0.0
      %2085 = vmatprep.subr.mxu0 0.0
      %2086 = vmatpush2.xpose.msra.mxu0 0.0
      %2087 = vmatprep.subr.mxu0 0.0
      %2088 = vmatpush2.xpose.msra.mxu0 0.0
      %2089 = vmatprep.subr.mxu0 0.0
      %2090 = vmatpush2.xpose.msra.mxu0 0.0
      %2091 = vmatprep.subr.mxu0 0.0
      %2092 = vmatpush2.xpose.msra.mxu0 0.0
      %2093 = vmatprep.subr.mxu0 0.0
      %2094 = vmatpush2.xpose.msra.mxu0 0.0
      %2095 = vmatprep.subr.mxu0 0.0
      %2096 = vmatpush2.xpose.msra.mxu0 0.0
      %2097 = vmatprep.mubr.f32.mxu0 0.0
      %2098 = vmatmul.mubr.f32.gmra.mxu0 %v2028
      %v2099 = vpop.f32.mrf.mxu0
      %v2100 = vadd.f32 0.0, %v2099
      %v2101 = vpop.f32.mrf.mxu0
      %2102 = vdwg.mxu0
      %v2104 = vsel %vm754, %v1874, 0
      %v2107 = vsel %vm754, %v1949, 0
      %2109 = vmatprep.subr.mxu0 0.0
      %2110 = vmatpush1.xpose.msra.mxu0 0.0
      %2111 = vmatprep.subr.mxu0 0.0
      %2112 = vmatpush1.xpose.msra.mxu0 0.0
      %2113 = vmatprep.subr.mxu0 0.0
      %2114 = vmatpush1.xpose.msra.mxu0 0.0
      %2115 = vmatprep.subr.mxu0 0.0
      %2116 = vmatpush1.xpose.msra.mxu0 0.0
      %2117 = vmatprep.subr.mxu0 0.0
      %2118 = vmatpush1.xpose.msra.mxu0 0.0
      %2119 = vmatprep.subr.mxu0 0.0
      %2120 = vmatpush1.xpose.msra.mxu0 0.0
      %2121 = vmatprep.subr.mxu0 0.0
      %2122 = vmatpush1.xpose.msra.mxu0 0.0
      %2123 = vmatprep.subr.mxu0 0.0
      %2124 = vmatpush1.xpose.msra.mxu0 0.0
      %2125 = vmatprep.subr.mxu0 0.0
      %2126 = vmatpush1.xpose.msra.mxu0 0.0
      %2127 = vmatprep.subr.mxu0 0.0
      %2128 = vmatpush1.xpose.msra.mxu0 0.0
      %2129 = vmatprep.subr.mxu0 0.0
      %2130 = vmatpush1.xpose.msra.mxu0 0.0
      %2131 = vmatprep.subr.mxu0 0.0
      %2132 = vmatpush1.xpose.msra.mxu0 0.0
      %2133 = vmatprep.subr.mxu0 0.0
      %2134 = vmatpush1.xpose.msra.mxu0 0.0
      %2135 = vmatprep.subr.mxu0 0.0
      %2136 = vmatpush1.xpose.msra.mxu0 0.0
      %2137 = vmatprep.subr.mxu0 0.0
      %2138 = vmatpush1.xpose.msra.mxu0 0.0
      %2139 = vmatprep.subr.mxu0 0.0
      %2140 = vmatpush1.xpose.msra.mxu0 %v2107
      %2141 = vmatprep.subr.mxu0 0.0
      %2142 = vmatpush2.xpose.msra.mxu0 0.0
      %2143 = vmatprep.subr.mxu0 0.0
      %2144 = vmatpush2.xpose.msra.mxu0 0.0
      %2145 = vmatprep.subr.mxu0 0.0
      %2146 = vmatpush2.xpose.msra.mxu0 0.0
      %2147 = vmatprep.subr.mxu0 0.0
      %2148 = vmatpush2.xpose.msra.mxu0 0.0
      %2149 = vmatprep.subr.mxu0 0.0
      %2150 = vmatpush2.xpose.msra.mxu0 0.0
      %2151 = vmatprep.subr.mxu0 0.0
      %2152 = vmatpush2.xpose.msra.mxu0 0.0
      %2153 = vmatprep.subr.mxu0 0.0
      %2154 = vmatpush2.xpose.msra.mxu0 0.0
      %2155 = vmatprep.subr.mxu0 0.0
      %2156 = vmatpush2.xpose.msra.mxu0 0.0
      %2157 = vmatprep.subr.mxu0 0.0
      %2158 = vmatpush2.xpose.msra.mxu0 0.0
      %2159 = vmatprep.subr.mxu0 0.0
      %2160 = vmatpush2.xpose.msra.mxu0 0.0
      %2161 = vmatprep.subr.mxu0 0.0
      %2162 = vmatpush2.xpose.msra.mxu0 0.0
      %2163 = vmatprep.subr.mxu0 0.0
      %2164 = vmatpush2.xpose.msra.mxu0 0.0
      %2165 = vmatprep.subr.mxu0 0.0
      %2166 = vmatpush2.xpose.msra.mxu0 0.0
      %2167 = vmatprep.subr.mxu0 0.0
      %2168 = vmatpush2.xpose.msra.mxu0 0.0
      %2169 = vmatprep.subr.mxu0 0.0
      %2170 = vmatpush2.xpose.msra.mxu0 0.0
      %2171 = vmatprep.subr.mxu0 0.0
      %2172 = vmatpush2.xpose.msra.mxu0 0.0
      %2173 = vmatprep.mubr.f32.mxu0 0.0
      %2174 = vmatmul.mubr.f32.gmra.mxu0 %v2104
      %v2175 = vpop.f32.mrf.mxu0
      %v2176 = vadd.f32 0.0, %v2175
      %v2177 = vpop.f32.mrf.mxu0
      %2178 = vdwg.mxu0
      %v2179 = vmul.f32 %v2100, 0.35355338
      %v2180 = vmul.f32 %v2176, 0.35355338
      %v2181 = vsel %vm919, -1e+09, %v2179
      %v2182 = vsel %vm920, -1e+09, %v2180
      %v2183 = vsel %vm754, %v2181, -inf
      %2184 = vmax.xlane.f32.xlu0 %v2183
      %v2185 = vpop.xlane.xlu0 %2184
      %v2186 = vsel %vm754, %v2182, -inf
      %2187 = vmax.xlane.f32.xlu0 %v2186
      %v2188 = vpop.xlane.xlu0 %2187
      %v2189 = vsub.f32 %v2181, %v2185
      %v2190 = vsub.f32 %v2182, %v2188
      %v2191 = vmul.f32 %v2189, 1.442695
      %v2192 = vpow.pop %v2191
      %v2193 = vmul.f32 %v2190, 1.442695
      %v2194 = vpow.pop %v2193
      %v2195 = vsel %vm754, %v2192, 0.0
      %2196 = vadd.xlane.f32.xlu0 %v2195
      %v2197 = vpop.xlane.xlu0 %2196
      %v2198 = vsel %vm754, %v2194, 0.0
      %2199 = vadd.xlane.f32.xlu0 %v2198
      %v2200 = vpop.xlane.xlu0 %2199
      %v2201 = vrcp.pop %v2197
      %v2202 = vrcp.pop %v2200
      %v2203 = vmul.f32 %v2192, %v2201
      %v2204 = vmul.f32 %v2194, %v2202
      %v2206 = vsel %vm754, %v2203, 0
      %2208 = vmatprep.subr.mxu0 0.0
      %2209 = vmatpush1.msra.mxu0 0.0
      %2210 = vmatprep.subr.mxu0 0.0
      %2211 = vmatpush1.msra.mxu0 0.0
      %2212 = vmatprep.subr.mxu0 0.0
      %2213 = vmatpush1.msra.mxu0 0.0
      %2214 = vmatprep.subr.mxu0 0.0
      %2215 = vmatpush1.msra.mxu0 0.0
      %2216 = vmatprep.subr.mxu0 0.0
      %2217 = vmatpush1.msra.mxu0 0.0
      %2218 = vmatprep.subr.mxu0 0.0
      %2219 = vmatpush1.msra.mxu0 0.0
      %2220 = vmatprep.subr.mxu0 0.0
      %2221 = vmatpush1.msra.mxu0 0.0
      %2222 = vmatprep.subr.mxu0 0.0
      %2223 = vmatpush1.msra.mxu0 0.0
      %2224 = vmatprep.subr.mxu0 0.0
      %2225 = vmatpush1.msra.mxu0 0.0
      %2226 = vmatprep.subr.mxu0 0.0
      %2227 = vmatpush1.msra.mxu0 0.0
      %2228 = vmatprep.subr.mxu0 0.0
      %2229 = vmatpush1.msra.mxu0 0.0
      %2230 = vmatprep.subr.mxu0 0.0
      %2231 = vmatpush1.msra.mxu0 0.0
      %2232 = vmatprep.subr.mxu0 0.0
      %2233 = vmatpush1.msra.mxu0 0.0
      %2234 = vmatprep.subr.mxu0 0.0
      %2235 = vmatpush1.msra.mxu0 0.0
      %2236 = vmatprep.subr.mxu0 0.0
      %2237 = vmatpush1.msra.mxu0 0.0
      %2238 = vmatprep.subr.mxu0 0.0
      %2239 = vmatpush1.msra.mxu0 %v2019
      %2240 = vmatprep.subr.mxu0 0.0
      %2241 = vmatpush2.msra.mxu0 0.0
      %2242 = vmatprep.subr.mxu0 0.0
      %2243 = vmatpush2.msra.mxu0 0.0
      %2244 = vmatprep.subr.mxu0 0.0
      %2245 = vmatpush2.msra.mxu0 0.0
      %2246 = vmatprep.subr.mxu0 0.0
      %2247 = vmatpush2.msra.mxu0 0.0
      %2248 = vmatprep.subr.mxu0 0.0
      %2249 = vmatpush2.msra.mxu0 0.0
      %2250 = vmatprep.subr.mxu0 0.0
      %2251 = vmatpush2.msra.mxu0 0.0
      %2252 = vmatprep.subr.mxu0 0.0
      %2253 = vmatpush2.msra.mxu0 0.0
      %2254 = vmatprep.subr.mxu0 0.0
      %2255 = vmatpush2.msra.mxu0 0.0
      %2256 = vmatprep.subr.mxu0 0.0
      %2257 = vmatpush2.msra.mxu0 0.0
      %2258 = vmatprep.subr.mxu0 0.0
      %2259 = vmatpush2.msra.mxu0 0.0
      %2260 = vmatprep.subr.mxu0 0.0
      %2261 = vmatpush2.msra.mxu0 0.0
      %2262 = vmatprep.subr.mxu0 0.0
      %2263 = vmatpush2.msra.mxu0 0.0
      %2264 = vmatprep.subr.mxu0 0.0
      %2265 = vmatpush2.msra.mxu0 0.0
      %2266 = vmatprep.subr.mxu0 0.0
      %2267 = vmatpush2.msra.mxu0 0.0
      %2268 = vmatprep.subr.mxu0 0.0
      %2269 = vmatpush2.msra.mxu0 0.0
      %2270 = vmatprep.subr.mxu0 0.0
      %2271 = vmatpush2.msra.mxu0 0.0
      %2272 = vmatprep.mubr.f32.mxu0 0.0
      %2273 = vmatmul.mubr.f32.gmra.mxu0 %v2206
      %v2274 = vpop.f32.mrf.mxu0
      %v2275 = vadd.f32 0.0, %v2274
      %v2276 = vpop.f32.mrf.mxu0
      %2277 = vdwg.mxu0
      %v2279 = vsel %vm754, %v2204, 0
      %2281 = vmatprep.subr.mxu0 0.0
      %2282 = vmatpush1.msra.mxu0 0.0
      %2283 = vmatprep.subr.mxu0 0.0
      %2284 = vmatpush1.msra.mxu0 0.0
      %2285 = vmatprep.subr.mxu0 0.0
      %2286 = vmatpush1.msra.mxu0 0.0
      %2287 = vmatprep.subr.mxu0 0.0
      %2288 = vmatpush1.msra.mxu0 0.0
      %2289 = vmatprep.subr.mxu0 0.0
      %2290 = vmatpush1.msra.mxu0 0.0
      %2291 = vmatprep.subr.mxu0 0.0
      %2292 = vmatpush1.msra.mxu0 0.0
      %2293 = vmatprep.subr.mxu0 0.0
      %2294 = vmatpush1.msra.mxu0 0.0
      %2295 = vmatprep.subr.mxu0 0.0
      %2296 = vmatpush1.msra.mxu0 0.0
      %2297 = vmatprep.subr.mxu0 0.0
      %2298 = vmatpush1.msra.mxu0 0.0
      %2299 = vmatprep.subr.mxu0 0.0
      %2300 = vmatpush1.msra.mxu0 0.0
      %2301 = vmatprep.subr.mxu0 0.0
      %2302 = vmatpush1.msra.mxu0 0.0
      %2303 = vmatprep.subr.mxu0 0.0
      %2304 = vmatpush1.msra.mxu0 0.0
      %2305 = vmatprep.subr.mxu0 0.0
      %2306 = vmatpush1.msra.mxu0 0.0
      %2307 = vmatprep.subr.mxu0 0.0
      %2308 = vmatpush1.msra.mxu0 0.0
      %2309 = vmatprep.subr.mxu0 0.0
      %2310 = vmatpush1.msra.mxu0 0.0
      %2311 = vmatprep.subr.mxu0 0.0
      %2312 = vmatpush1.msra.mxu0 %v2024
      %2313 = vmatprep.subr.mxu0 0.0
      %2314 = vmatpush2.msra.mxu0 0.0
      %2315 = vmatprep.subr.mxu0 0.0
      %2316 = vmatpush2.msra.mxu0 0.0
      %2317 = vmatprep.subr.mxu0 0.0
      %2318 = vmatpush2.msra.mxu0 0.0
      %2319 = vmatprep.subr.mxu0 0.0
      %2320 = vmatpush2.msra.mxu0 0.0
      %2321 = vmatprep.subr.mxu0 0.0
      %2322 = vmatpush2.msra.mxu0 0.0
      %2323 = vmatprep.subr.mxu0 0.0
      %2324 = vmatpush2.msra.mxu0 0.0
      %2325 = vmatprep.subr.mxu0 0.0
      %2326 = vmatpush2.msra.mxu0 0.0
      %2327 = vmatprep.subr.mxu0 0.0
      %2328 = vmatpush2.msra.mxu0 0.0
      %2329 = vmatprep.subr.mxu0 0.0
      %2330 = vmatpush2.msra.mxu0 0.0
      %2331 = vmatprep.subr.mxu0 0.0
      %2332 = vmatpush2.msra.mxu0 0.0
      %2333 = vmatprep.subr.mxu0 0.0
      %2334 = vmatpush2.msra.mxu0 0.0
      %2335 = vmatprep.subr.mxu0 0.0
      %2336 = vmatpush2.msra.mxu0 0.0
      %2337 = vmatprep.subr.mxu0 0.0
      %2338 = vmatpush2.msra.mxu0 0.0
      %2339 = vmatprep.subr.mxu0 0.0
      %2340 = vmatpush2.msra.mxu0 0.0
      %2341 = vmatprep.subr.mxu0 0.0
      %2342 = vmatpush2.msra.mxu0 0.0
      %2343 = vmatprep.subr.mxu0 0.0
      %2344 = vmatpush2.msra.mxu0 0.0
      %2345 = vmatprep.mubr.f32.mxu0 0.0
      %2346 = vmatmul.mubr.f32.gmra.mxu0 %v2279
      %v2347 = vpop.f32.mrf.mxu0
      %v2348 = vadd.f32 0.0, %v2347
      %v2349 = vpop.f32.mrf.mxu0
      %2350 = vdwg.mxu0
      %v2352 = vsel %vm754, %v2275, 0
      %v2355 = vsel %vm754, %v2348, 0
      %2357 = vmatprep.subr.mxu0 0.0
      %2358 = vmatpush1.msra.mxu0 0.0
      %2359 = vmatprep.subr.mxu0 0.0
      %2360 = vmatpush1.msra.mxu0 0.0
      %2361 = vmatprep.subr.mxu0 0.0
      %2362 = vmatpush1.msra.mxu0 0.0
      %2363 = vmatprep.subr.mxu0 0.0
      %2364 = vmatpush1.msra.mxu0 0.0
      %2365 = vmatprep.subr.mxu0 0.0
      %2366 = vmatpush1.msra.mxu0 0.0
      %2367 = vmatprep.subr.mxu0 0.0
      %2368 = vmatpush1.msra.mxu0 0.0
      %2369 = vmatprep.subr.mxu0 0.0
      %2370 = vmatpush1.msra.mxu0 0.0
      %2371 = vmatprep.subr.mxu0 0.0
      %2372 = vmatpush1.msra.mxu0 0.0
      %2373 = vmatprep.subr.mxu0 0.0
      %2374 = vmatpush1.msra.mxu0 0.0
      %2375 = vmatprep.subr.mxu0 0.0
      %2376 = vmatpush1.msra.mxu0 0.0
      %2377 = vmatprep.subr.mxu0 0.0
      %2378 = vmatpush1.msra.mxu0 0.0
      %2379 = vmatprep.subr.mxu0 0.0
      %2380 = vmatpush1.msra.mxu0 0.0
      %2381 = vmatprep.subr.mxu0 0.0
      %2382 = vmatpush1.msra.mxu0 0.0
      %2383 = vmatprep.subr.mxu0 0.0
      %2384 = vmatpush1.msra.mxu0 0.0
      %2385 = vmatprep.subr.mxu0 0.0
      %2386 = vmatpush1.msra.mxu0 0.0
      %2387 = vmatprep.subr.mxu0 0.0
      %2388 = vmatpush1.msra.mxu0 %v520
      %2389 = vmatprep.subr.mxu0 0.0
      %2390 = vmatpush2.msra.mxu0 0.0
      %2391 = vmatprep.subr.mxu0 0.0
      %2392 = vmatpush2.msra.mxu0 0.0
      %2393 = vmatprep.subr.mxu0 0.0
      %2394 = vmatpush2.msra.mxu0 0.0
      %2395 = vmatprep.subr.mxu0 0.0
      %2396 = vmatpush2.msra.mxu0 0.0
      %2397 = vmatprep.subr.mxu0 0.0
      %2398 = vmatpush2.msra.mxu0 0.0
      %2399 = vmatprep.subr.mxu0 0.0
      %2400 = vmatpush2.msra.mxu0 0.0
      %2401 = vmatprep.subr.mxu0 0.0
      %2402 = vmatpush2.msra.mxu0 0.0
      %2403 = vmatprep.subr.mxu0 0.0
      %2404 = vmatpush2.msra.mxu0 0.0
      %2405 = vmatprep.subr.mxu0 0.0
      %2406 = vmatpush2.msra.mxu0 0.0
      %2407 = vmatprep.subr.mxu0 0.0
      %2408 = vmatpush2.msra.mxu0 0.0
      %2409 = vmatprep.subr.mxu0 0.0
      %2410 = vmatpush2.msra.mxu0 0.0
      %2411 = vmatprep.subr.mxu0 0.0
      %2412 = vmatpush2.msra.mxu0 0.0
      %2413 = vmatprep.subr.mxu0 0.0
      %2414 = vmatpush2.msra.mxu0 0.0
      %2415 = vmatprep.subr.mxu0 0.0
      %2416 = vmatpush2.msra.mxu0 0.0
      %2417 = vmatprep.subr.mxu0 0.0
      %2418 = vmatpush2.msra.mxu0 0.0
      %2419 = vmatprep.subr.mxu0 0.0
      %2420 = vmatpush2.msra.mxu0 0.0
      %2421 = vmatprep.mubr.f32.mxu0 0.0
      %2422 = vmatmul.mubr.f32.gmra.mxu0 %v2352
      %v2423 = vpop.f32.mrf.mxu0
      %v2424 = vadd.f32 0.0, %v2423
      %v2425 = vpop.f32.mrf.mxu0
      %2426 = vmatprep.mubr.f32.mxu0 0.0
      %2427 = vmatmul.mubr.f32.gmra.mxu0 %v2355
      %v2428 = vpop.f32.mrf.mxu0
      %v2429 = vadd.f32 0.0, %v2428
      %v2430 = vpop.f32.mrf.mxu0
      %2431 = vdwg.mxu0
      %v2432 = vadd.f32 %v1794, %v2424
      %v2433 = vadd.f32 %v1799, %v2429
      %2434 = vmatprep.subr.mxu0 0.0
      %2435 = vmatpush1.msra.mxu0 0.0
      %2436 = vmatprep.subr.mxu0 0.0
      %2437 = vmatpush1.msra.mxu0 0.0
      %2438 = vmatprep.subr.mxu0 0.0
      %2439 = vmatpush1.msra.mxu0 0.0
      %2440 = vmatprep.subr.mxu0 0.0
      %2441 = vmatpush1.msra.mxu0 0.0
      %2442 = vmatprep.subr.mxu0 0.0
      %2443 = vmatpush1.msra.mxu0 0.0
      %2444 = vmatprep.subr.mxu0 0.0
      %2445 = vmatpush1.msra.mxu0 0.0
      %2446 = vmatprep.subr.mxu0 0.0
      %2447 = vmatpush1.msra.mxu0 0.0
      %2448 = vmatprep.subr.mxu0 0.0
      %2449 = vmatpush1.msra.mxu0 0.0
      %2450 = vmatprep.subr.mxu0 0.0
      %2451 = vmatpush1.msra.mxu0 0.0
      %2452 = vmatprep.subr.mxu0 0.0
      %2453 = vmatpush1.msra.mxu0 0.0
      %2454 = vmatprep.subr.mxu0 0.0
      %2455 = vmatpush1.msra.mxu0 0.0
      %2456 = vmatprep.subr.mxu0 0.0
      %2457 = vmatpush1.msra.mxu0 0.0
      %2458 = vmatprep.subr.mxu0 0.0
      %2459 = vmatpush1.msra.mxu0 %v485
      %2460 = vmatprep.subr.mxu0 0.0
      %2461 = vmatpush1.msra.mxu0 %v484
      %2462 = vmatprep.subr.mxu0 0.0
      %2463 = vmatpush1.msra.mxu0 %v483
      %2464 = vmatprep.subr.mxu0 0.0
      %2465 = vmatpush1.msra.mxu0 %v482
      %2466 = vmatprep.subr.mxu0 0.0
      %2467 = vmatpush2.msra.mxu0 0.0
      %2468 = vmatprep.subr.mxu0 0.0
      %2469 = vmatpush2.msra.mxu0 0.0
      %2470 = vmatprep.subr.mxu0 0.0
      %2471 = vmatpush2.msra.mxu0 0.0
      %2472 = vmatprep.subr.mxu0 0.0
      %2473 = vmatpush2.msra.mxu0 0.0
      %2474 = vmatprep.subr.mxu0 0.0
      %2475 = vmatpush2.msra.mxu0 0.0
      %2476 = vmatprep.subr.mxu0 0.0
      %2477 = vmatpush2.msra.mxu0 0.0
      %2478 = vmatprep.subr.mxu0 0.0
      %2479 = vmatpush2.msra.mxu0 0.0
      %2480 = vmatprep.subr.mxu0 0.0
      %2481 = vmatpush2.msra.mxu0 0.0
      %2482 = vmatprep.subr.mxu0 0.0
      %2483 = vmatpush2.msra.mxu0 0.0
      %2484 = vmatprep.subr.mxu0 0.0
      %2485 = vmatpush2.msra.mxu0 0.0
      %2486 = vmatprep.subr.mxu0 0.0
      %2487 = vmatpush2.msra.mxu0 0.0
      %2488 = vmatprep.subr.mxu0 0.0
      %2489 = vmatpush2.msra.mxu0 0.0
      %2490 = vmatprep.subr.mxu0 0.0
      %2491 = vmatpush2.msra.mxu0 0.0
      %2492 = vmatprep.subr.mxu0 0.0
      %2493 = vmatpush2.msra.mxu0 0.0
      %2494 = vmatprep.subr.mxu0 0.0
      %2495 = vmatpush2.msra.mxu0 0.0
      %2496 = vmatprep.subr.mxu0 0.0
      %2497 = vmatpush2.msra.mxu0 0.0
      %2498 = vmatprep.mubr.f32.mxu0 0.0
      %2499 = vmatmul.mubr.f32.gmra.mxu0 %v524
      %v2500 = vpop.f32.mrf.mxu0
      %v2501 = vadd.f32 0.0, %v2500
      %v2502 = vpop.f32.mrf.mxu0
      %2503 = vmatprep.mubr.f32.mxu0 0.0
      %2504 = vmatmul.mubr.f32.gmra.mxu0 %v527
      %v2505 = vpop.f32.mrf.mxu0
      %v2506 = vadd.f32 0.0, %v2505
      %v2507 = vpop.f32.mrf.mxu0
      %2508 = vdwg.mxu0
      %2509 = vmatprep.subr.mxu0 0.0
      %2510 = vmatpush1.msra.mxu0 0.0
      %2511 = vmatprep.subr.mxu0 0.0
      %2512 = vmatpush1.msra.mxu0 0.0
      %2513 = vmatprep.subr.mxu0 0.0
      %2514 = vmatpush1.msra.mxu0 0.0
      %2515 = vmatprep.subr.mxu0 0.0
      %2516 = vmatpush1.msra.mxu0 0.0
      %2517 = vmatprep.subr.mxu0 0.0
      %2518 = vmatpush1.msra.mxu0 0.0
      %2519 = vmatprep.subr.mxu0 0.0
      %2520 = vmatpush1.msra.mxu0 0.0
      %2521 = vmatprep.subr.mxu0 0.0
      %2522 = vmatpush1.msra.mxu0 0.0
      %2523 = vmatprep.subr.mxu0 0.0
      %2524 = vmatpush1.msra.mxu0 0.0
      %2525 = vmatprep.subr.mxu0 0.0
      %2526 = vmatpush1.msra.mxu0 0.0
      %2527 = vmatprep.subr.mxu0 0.0
      %2528 = vmatpush1.msra.mxu0 0.0
      %2529 = vmatprep.subr.mxu0 0.0
      %2530 = vmatpush1.msra.mxu0 0.0
      %2531 = vmatprep.subr.mxu0 0.0
      %2532 = vmatpush1.msra.mxu0 0.0
      %2533 = vmatprep.subr.mxu0 0.0
      %2534 = vmatpush1.msra.mxu0 %v501
      %2535 = vmatprep.subr.mxu0 0.0
      %2536 = vmatpush1.msra.mxu0 %v500
      %2537 = vmatprep.subr.mxu0 0.0
      %2538 = vmatpush1.msra.mxu0 %v499
      %2539 = vmatprep.subr.mxu0 0.0
      %2540 = vmatpush1.msra.mxu0 %v498
      %2541 = vmatprep.subr.mxu0 0.0
      %2542 = vmatpush2.msra.mxu0 0.0
      %2543 = vmatprep.subr.mxu0 0.0
      %2544 = vmatpush2.msra.mxu0 0.0
      %2545 = vmatprep.subr.mxu0 0.0
      %2546 = vmatpush2.msra.mxu0 0.0
      %2547 = vmatprep.subr.mxu0 0.0
      %2548 = vmatpush2.msra.mxu0 0.0
      %2549 = vmatprep.subr.mxu0 0.0
      %2550 = vmatpush2.msra.mxu0 0.0
      %2551 = vmatprep.subr.mxu0 0.0
      %2552 = vmatpush2.msra.mxu0 0.0
      %2553 = vmatprep.subr.mxu0 0.0
      %2554 = vmatpush2.msra.mxu0 0.0
      %2555 = vmatprep.subr.mxu0 0.0
      %2556 = vmatpush2.msra.mxu0 0.0
      %2557 = vmatprep.subr.mxu0 0.0
      %2558 = vmatpush2.msra.mxu0 0.0
      %2559 = vmatprep.subr.mxu0 0.0
      %2560 = vmatpush2.msra.mxu0 0.0
      %2561 = vmatprep.subr.mxu0 0.0
      %2562 = vmatpush2.msra.mxu0 0.0
      %2563 = vmatprep.subr.mxu0 0.0
      %2564 = vmatpush2.msra.mxu0 0.0
      %2565 = vmatprep.subr.mxu0 0.0
      %2566 = vmatpush2.msra.mxu0 0.0
      %2567 = vmatprep.subr.mxu0 0.0
      %2568 = vmatpush2.msra.mxu0 0.0
      %2569 = vmatprep.subr.mxu0 0.0
      %2570 = vmatpush2.msra.mxu0 0.0
      %2571 = vmatprep.subr.mxu0 0.0
      %2572 = vmatpush2.msra.mxu0 0.0
      %2573 = vmatprep.mubr.f32.mxu0 0.0
      %2574 = vmatmul.mubr.f32.gmra.mxu0 %v524
      %v2575 = vpop.f32.mrf.mxu0
      %v2576 = vadd.f32 0.0, %v2575
      %v2577 = vpop.f32.mrf.mxu0
      %2578 = vmatprep.mubr.f32.mxu0 0.0
      %2579 = vmatmul.mubr.f32.gmra.mxu0 %v527
      %v2580 = vpop.f32.mrf.mxu0
      %v2581 = vadd.f32 0.0, %v2580
      %v2582 = vpop.f32.mrf.mxu0
      %2583 = vdwg.mxu0
      %2584 = vmatprep.subr.mxu0 0.0
      %2585 = vmatpush1.msra.mxu0 0.0
      %2586 = vmatprep.subr.mxu0 0.0
      %2587 = vmatpush1.msra.mxu0 0.0
      %2588 = vmatprep.subr.mxu0 0.0
      %2589 = vmatpush1.msra.mxu0 0.0
      %2590 = vmatprep.subr.mxu0 0.0
      %2591 = vmatpush1.msra.mxu0 0.0
      %2592 = vmatprep.subr.mxu0 0.0
      %2593 = vmatpush1.msra.mxu0 0.0
      %2594 = vmatprep.subr.mxu0 0.0
      %2595 = vmatpush1.msra.mxu0 0.0
      %2596 = vmatprep.subr.mxu0 0.0
      %2597 = vmatpush1.msra.mxu0 0.0
      %2598 = vmatprep.subr.mxu0 0.0
      %2599 = vmatpush1.msra.mxu0 0.0
      %2600 = vmatprep.subr.mxu0 0.0
      %2601 = vmatpush1.msra.mxu0 0.0
      %2602 = vmatprep.subr.mxu0 0.0
      %2603 = vmatpush1.msra.mxu0 0.0
      %2604 = vmatprep.subr.mxu0 0.0
      %2605 = vmatpush1.msra.mxu0 0.0
      %2606 = vmatprep.subr.mxu0 0.0
      %2607 = vmatpush1.msra.mxu0 0.0
      %2608 = vmatprep.subr.mxu0 0.0
      %2609 = vmatpush1.msra.mxu0 %v517
      %2610 = vmatprep.subr.mxu0 0.0
      %2611 = vmatpush1.msra.mxu0 %v516
      %2612 = vmatprep.subr.mxu0 0.0
      %2613 = vmatpush1.msra.mxu0 %v515
      %2614 = vmatprep.subr.mxu0 0.0
      %2615 = vmatpush1.msra.mxu0 %v514
      %2616 = vmatprep.subr.mxu0 0.0
      %2617 = vmatpush2.msra.mxu0 0.0
      %2618 = vmatprep.subr.mxu0 0.0
      %2619 = vmatpush2.msra.mxu0 0.0
      %2620 = vmatprep.subr.mxu0 0.0
      %2621 = vmatpush2.msra.mxu0 0.0
      %2622 = vmatprep.subr.mxu0 0.0
      %2623 = vmatpush2.msra.mxu0 0.0
      %2624 = vmatprep.subr.mxu0 0.0
      %2625 = vmatpush2.msra.mxu0 0.0
      %2626 = vmatprep.subr.mxu0 0.0
      %2627 = vmatpush2.msra.mxu0 0.0
      %2628 = vmatprep.subr.mxu0 0.0
      %2629 = vmatpush2.msra.mxu0 0.0
      %2630 = vmatprep.subr.mxu0 0.0
      %2631 = vmatpush2.msra.mxu0 0.0
      %2632 = vmatprep.subr.mxu0 0.0
      %2633 = vmatpush2.msra.mxu0 0.0
      %2634 = vmatprep.subr.mxu0 0.0
      %2635 = vmatpush2.msra.mxu0 0.0
      %2636 = vmatprep.subr.mxu0 0.0
      %2637 = vmatpush2.msra.mxu0 0.0
      %2638 = vmatprep.subr.mxu0 0.0
      %2639 = vmatpush2.msra.mxu0 0.0
      %2640 = vmatprep.subr.mxu0 0.0
      %2641 = vmatpush2.msra.mxu0 0.0
      %2642 = vmatprep.subr.mxu0 0.0
      %2643 = vmatpush2.msra.mxu0 0.0
      %2644 = vmatprep.subr.mxu0 0.0
      %2645 = vmatpush2.msra.mxu0 0.0
      %2646 = vmatprep.subr.mxu0 0.0
      %2647 = vmatpush2.msra.mxu0 0.0
      %2648 = vmatprep.mubr.f32.mxu0 0.0
      %2649 = vmatmul.mubr.f32.gmra.mxu0 %v524
      %v2650 = vpop.f32.mrf.mxu0
      %v2651 = vadd.f32 0.0, %v2650
      %v2652 = vpop.f32.mrf.mxu0
      %2653 = vmatprep.mubr.f32.mxu0 0.0
      %2654 = vmatmul.mubr.f32.gmra.mxu0 %v527
      %v2655 = vpop.f32.mrf.mxu0
      %v2656 = vadd.f32 0.0, %v2655
      %v2657 = vpop.f32.mrf.mxu0
      %2658 = vdwg.mxu0
      %v2660 = vsel %vm754, %v2501, 0
      %v2663 = vsel %vm754, %v2576, 0
      %2665 = vmatprep.subr.mxu0 0.0
      %2666 = vmatpush1.xpose.msra.mxu0 0.0
      %2667 = vmatprep.subr.mxu0 0.0
      %2668 = vmatpush1.xpose.msra.mxu0 0.0
      %2669 = vmatprep.subr.mxu0 0.0
      %2670 = vmatpush1.xpose.msra.mxu0 0.0
      %2671 = vmatprep.subr.mxu0 0.0
      %2672 = vmatpush1.xpose.msra.mxu0 0.0
      %2673 = vmatprep.subr.mxu0 0.0
      %2674 = vmatpush1.xpose.msra.mxu0 0.0
      %2675 = vmatprep.subr.mxu0 0.0
      %2676 = vmatpush1.xpose.msra.mxu0 0.0
      %2677 = vmatprep.subr.mxu0 0.0
      %2678 = vmatpush1.xpose.msra.mxu0 0.0
      %2679 = vmatprep.subr.mxu0 0.0
      %2680 = vmatpush1.xpose.msra.mxu0 0.0
      %2681 = vmatprep.subr.mxu0 0.0
      %2682 = vmatpush1.xpose.msra.mxu0 0.0
      %2683 = vmatprep.subr.mxu0 0.0
      %2684 = vmatpush1.xpose.msra.mxu0 0.0
      %2685 = vmatprep.subr.mxu0 0.0
      %2686 = vmatpush1.xpose.msra.mxu0 0.0
      %2687 = vmatprep.subr.mxu0 0.0
      %2688 = vmatpush1.xpose.msra.mxu0 0.0
      %2689 = vmatprep.subr.mxu0 0.0
      %2690 = vmatpush1.xpose.msra.mxu0 0.0
      %2691 = vmatprep.subr.mxu0 0.0
      %2692 = vmatpush1.xpose.msra.mxu0 0.0
      %2693 = vmatprep.subr.mxu0 0.0
      %2694 = vmatpush1.xpose.msra.mxu0 0.0
      %2695 = vmatprep.subr.mxu0 0.0
      %2696 = vmatpush1.xpose.msra.mxu0 %v2663
      %2697 = vmatprep.subr.mxu0 0.0
      %2698 = vmatpush2.xpose.msra.mxu0 0.0
      %2699 = vmatprep.subr.mxu0 0.0
      %2700 = vmatpush2.xpose.msra.mxu0 0.0
      %2701 = vmatprep.subr.mxu0 0.0
      %2702 = vmatpush2.xpose.msra.mxu0 0.0
      %2703 = vmatprep.subr.mxu0 0.0
      %2704 = vmatpush2.xpose.msra.mxu0 0.0
      %2705 = vmatprep.subr.mxu0 0.0
      %2706 = vmatpush2.xpose.msra.mxu0 0.0
      %2707 = vmatprep.subr.mxu0 0.0
      %2708 = vmatpush2.xpose.msra.mxu0 0.0
      %2709 = vmatprep.subr.mxu0 0.0
      %2710 = vmatpush2.xpose.msra.mxu0 0.0
      %2711 = vmatprep.subr.mxu0 0.0
      %2712 = vmatpush2.xpose.msra.mxu0 0.0
      %2713 = vmatprep.subr.mxu0 0.0
      %2714 = vmatpush2.xpose.msra.mxu0 0.0
      %2715 = vmatprep.subr.mxu0 0.0
      %2716 = vmatpush2.xpose.msra.mxu0 0.0
      %2717 = vmatprep.subr.mxu0 0.0
      %2718 = vmatpush2.xpose.msra.mxu0 0.0
      %2719 = vmatprep.subr.mxu0 0.0
      %2720 = vmatpush2.xpose.msra.mxu0 0.0
      %2721 = vmatprep.subr.mxu0 0.0
      %2722 = vmatpush2.xpose.msra.mxu0 0.0
      %2723 = vmatprep.subr.mxu0 0.0
      %2724 = vmatpush2.xpose.msra.mxu0 0.0
      %2725 = vmatprep.subr.mxu0 0.0
      %2726 = vmatpush2.xpose.msra.mxu0 0.0
      %2727 = vmatprep.subr.mxu0 0.0
      %2728 = vmatpush2.xpose.msra.mxu0 0.0
      %2729 = vmatprep.mubr.f32.mxu0 0.0
      %2730 = vmatmul.mubr.f32.gmra.mxu0 %v2660
      %v2731 = vpop.f32.mrf.mxu0
      %v2732 = vadd.f32 0.0, %v2731
      %v2733 = vpop.f32.mrf.mxu0
      %2734 = vdwg.mxu0
      %v2736 = vsel %vm754, %v2506, 0
      %v2739 = vsel %vm754, %v2581, 0
      %2741 = vmatprep.subr.mxu0 0.0
      %2742 = vmatpush1.xpose.msra.mxu0 0.0
      %2743 = vmatprep.subr.mxu0 0.0
      %2744 = vmatpush1.xpose.msra.mxu0 0.0
      %2745 = vmatprep.subr.mxu0 0.0
      %2746 = vmatpush1.xpose.msra.mxu0 0.0
      %2747 = vmatprep.subr.mxu0 0.0
      %2748 = vmatpush1.xpose.msra.mxu0 0.0
      %2749 = vmatprep.subr.mxu0 0.0
      %2750 = vmatpush1.xpose.msra.mxu0 0.0
      %2751 = vmatprep.subr.mxu0 0.0
      %2752 = vmatpush1.xpose.msra.mxu0 0.0
      %2753 = vmatprep.subr.mxu0 0.0
      %2754 = vmatpush1.xpose.msra.mxu0 0.0
      %2755 = vmatprep.subr.mxu0 0.0
      %2756 = vmatpush1.xpose.msra.mxu0 0.0
      %2757 = vmatprep.subr.mxu0 0.0
      %2758 = vmatpush1.xpose.msra.mxu0 0.0
      %2759 = vmatprep.subr.mxu0 0.0
      %2760 = vmatpush1.xpose.msra.mxu0 0.0
      %2761 = vmatprep.subr.mxu0 0.0
      %2762 = vmatpush1.xpose.msra.mxu0 0.0
      %2763 = vmatprep.subr.mxu0 0.0
      %2764 = vmatpush1.xpose.msra.mxu0 0.0
      %2765 = vmatprep.subr.mxu0 0.0
      %2766 = vmatpush1.xpose.msra.mxu0 0.0
      %2767 = vmatprep.subr.mxu0 0.0
      %2768 = vmatpush1.xpose.msra.mxu0 0.0
      %2769 = vmatprep.subr.mxu0 0.0
      %2770 = vmatpush1.xpose.msra.mxu0 0.0
      %2771 = vmatprep.subr.mxu0 0.0
      %2772 = vmatpush1.xpose.msra.mxu0 %v2739
      %2773 = vmatprep.subr.mxu0 0.0
      %2774 = vmatpush2.xpose.msra.mxu0 0.0
      %2775 = vmatprep.subr.mxu0 0.0
      %2776 = vmatpush2.xpose.msra.mxu0 0.0
      %2777 = vmatprep.subr.mxu0 0.0
      %2778 = vmatpush2.xpose.msra.mxu0 0.0
      %2779 = vmatprep.subr.mxu0 0.0
      %2780 = vmatpush2.xpose.msra.mxu0 0.0
      %2781 = vmatprep.subr.mxu0 0.0
      %2782 = vmatpush2.xpose.msra.mxu0 0.0
      %2783 = vmatprep.subr.mxu0 0.0
      %2784 = vmatpush2.xpose.msra.mxu0 0.0
      %2785 = vmatprep.subr.mxu0 0.0
      %2786 = vmatpush2.xpose.msra.mxu0 0.0
      %2787 = vmatprep.subr.mxu0 0.0
      %2788 = vmatpush2.xpose.msra.mxu0 0.0
      %2789 = vmatprep.subr.mxu0 0.0
      %2790 = vmatpush2.xpose.msra.mxu0 0.0
      %2791 = vmatprep.subr.mxu0 0.0
      %2792 = vmatpush2.xpose.msra.mxu0 0.0
      %2793 = vmatprep.subr.mxu0 0.0
      %2794 = vmatpush2.xpose.msra.mxu0 0.0
      %2795 = vmatprep.subr.mxu0 0.0
      %2796 = vmatpush2.xpose.msra.mxu0 0.0
      %2797 = vmatprep.subr.mxu0 0.0
      %2798 = vmatpush2.xpose.msra.mxu0 0.0
      %2799 = vmatprep.subr.mxu0 0.0
      %2800 = vmatpush2.xpose.msra.mxu0 0.0
      %2801 = vmatprep.subr.mxu0 0.0
      %2802 = vmatpush2.xpose.msra.mxu0 0.0
      %2803 = vmatprep.subr.mxu0 0.0
      %2804 = vmatpush2.xpose.msra.mxu0 0.0
      %2805 = vmatprep.mubr.f32.mxu0 0.0
      %2806 = vmatmul.mubr.f32.gmra.mxu0 %v2736
      %v2807 = vpop.f32.mrf.mxu0
      %v2808 = vadd.f32 0.0, %v2807
      %v2809 = vpop.f32.mrf.mxu0
      %2810 = vdwg.mxu0
      %v2811 = vmul.f32 %v2732, 0.35355338
      %v2812 = vmul.f32 %v2808, 0.35355338
      %v2813 = vsel %vm919, -1e+09, %v2811
      %v2814 = vsel %vm920, -1e+09, %v2812
      %v2815 = vsel %vm754, %v2813, -inf
      %2816 = vmax.xlane.f32.xlu0 %v2815
      %v2817 = vpop.xlane.xlu0 %2816
      %v2818 = vsel %vm754, %v2814, -inf
      %2819 = vmax.xlane.f32.xlu0 %v2818
      %v2820 = vpop.xlane.xlu0 %2819
      %v2821 = vsub.f32 %v2813, %v2817
      %v2822 = vsub.f32 %v2814, %v2820
      %v2823 = vmul.f32 %v2821, 1.442695
      %v2824 = vpow.pop %v2823
      %v2825 = vmul.f32 %v2822, 1.442695
      %v2826 = vpow.pop %v2825
      %v2827 = vsel %vm754, %v2824, 0.0
      %2828 = vadd.xlane.f32.xlu0 %v2827
      %v2829 = vpop.xlane.xlu0 %2828
      %v2830 = vsel %vm754, %v2826, 0.0
      %2831 = vadd.xlane.f32.xlu0 %v2830
      %v2832 = vpop.xlane.xlu0 %2831
      %v2833 = vrcp.pop %v2829
      %v2834 = vrcp.pop %v2832
      %v2835 = vmul.f32 %v2824, %v2833
      %v2836 = vmul.f32 %v2826, %v2834
      %v2838 = vsel %vm754, %v2835, 0
      %2840 = vmatprep.subr.mxu0 0.0
      %2841 = vmatpush1.msra.mxu0 0.0
      %2842 = vmatprep.subr.mxu0 0.0
      %2843 = vmatpush1.msra.mxu0 0.0
      %2844 = vmatprep.subr.mxu0 0.0
      %2845 = vmatpush1.msra.mxu0 0.0
      %2846 = vmatprep.subr.mxu0 0.0
      %2847 = vmatpush1.msra.mxu0 0.0
      %2848 = vmatprep.subr.mxu0 0.0
      %2849 = vmatpush1.msra.mxu0 0.0
      %2850 = vmatprep.subr.mxu0 0.0
      %2851 = vmatpush1.msra.mxu0 0.0
      %2852 = vmatprep.subr.mxu0 0.0
      %2853 = vmatpush1.msra.mxu0 0.0
      %2854 = vmatprep.subr.mxu0 0.0
      %2855 = vmatpush1.msra.mxu0 0.0
      %2856 = vmatprep.subr.mxu0 0.0
      %2857 = vmatpush1.msra.mxu0 0.0
      %2858 = vmatprep.subr.mxu0 0.0
      %2859 = vmatpush1.msra.mxu0 0.0
      %2860 = vmatprep.subr.mxu0 0.0
      %2861 = vmatpush1.msra.mxu0 0.0
      %2862 = vmatprep.subr.mxu0 0.0
      %2863 = vmatpush1.msra.mxu0 0.0
      %2864 = vmatprep.subr.mxu0 0.0
      %2865 = vmatpush1.msra.mxu0 0.0
      %2866 = vmatprep.subr.mxu0 0.0
      %2867 = vmatpush1.msra.mxu0 0.0
      %2868 = vmatprep.subr.mxu0 0.0
      %2869 = vmatpush1.msra.mxu0 0.0
      %2870 = vmatprep.subr.mxu0 0.0
      %2871 = vmatpush1.msra.mxu0 %v2651
      %2872 = vmatprep.subr.mxu0 0.0
      %2873 = vmatpush2.msra.mxu0 0.0
      %2874 = vmatprep.subr.mxu0 0.0
      %2875 = vmatpush2.msra.mxu0 0.0
      %2876 = vmatprep.subr.mxu0 0.0
      %2877 = vmatpush2.msra.mxu0 0.0
      %2878 = vmatprep.subr.mxu0 0.0
      %2879 = vmatpush2.msra.mxu0 0.0
      %2880 = vmatprep.subr.mxu0 0.0
      %2881 = vmatpush2.msra.mxu0 0.0
      %2882 = vmatprep.subr.mxu0 0.0
      %2883 = vmatpush2.msra.mxu0 0.0
      %2884 = vmatprep.subr.mxu0 0.0
      %2885 = vmatpush2.msra.mxu0 0.0
      %2886 = vmatprep.subr.mxu0 0.0
      %2887 = vmatpush2.msra.mxu0 0.0
      %2888 = vmatprep.subr.mxu0 0.0
      %2889 = vmatpush2.msra.mxu0 0.0
      %2890 = vmatprep.subr.mxu0 0.0
      %2891 = vmatpush2.msra.mxu0 0.0
      %2892 = vmatprep.subr.mxu0 0.0
      %2893 = vmatpush2.msra.mxu0 0.0
      %2894 = vmatprep.subr.mxu0 0.0
      %2895 = vmatpush2.msra.mxu0 0.0
      %2896 = vmatprep.subr.mxu0 0.0
      %2897 = vmatpush2.msra.mxu0 0.0
      %2898 = vmatprep.subr.mxu0 0.0
      %2899 = vmatpush2.msra.mxu0 0.0
      %2900 = vmatprep.subr.mxu0 0.0
      %2901 = vmatpush2.msra.mxu0 0.0
      %2902 = vmatprep.subr.mxu0 0.0
      %2903 = vmatpush2.msra.mxu0 0.0
      %2904 = vmatprep.mubr.f32.mxu0 0.0
      %2905 = vmatmul.mubr.f32.gmra.mxu0 %v2838
      %v2906 = vpop.f32.mrf.mxu0
      %v2907 = vadd.f32 0.0, %v2906
      %v2908 = vpop.f32.mrf.mxu0
      %2909 = vdwg.mxu0
      %v2911 = vsel %vm754, %v2836, 0
      %2913 = vmatprep.subr.mxu0 0.0
      %2914 = vmatpush1.msra.mxu0 0.0
      %2915 = vmatprep.subr.mxu0 0.0
      %2916 = vmatpush1.msra.mxu0 0.0
      %2917 = vmatprep.subr.mxu0 0.0
      %2918 = vmatpush1.msra.mxu0 0.0
      %2919 = vmatprep.subr.mxu0 0.0
      %2920 = vmatpush1.msra.mxu0 0.0
      %2921 = vmatprep.subr.mxu0 0.0
      %2922 = vmatpush1.msra.mxu0 0.0
      %2923 = vmatprep.subr.mxu0 0.0
      %2924 = vmatpush1.msra.mxu0 0.0
      %2925 = vmatprep.subr.mxu0 0.0
      %2926 = vmatpush1.msra.mxu0 0.0
      %2927 = vmatprep.subr.mxu0 0.0
      %2928 = vmatpush1.msra.mxu0 0.0
      %2929 = vmatprep.subr.mxu0 0.0
      %2930 = vmatpush1.msra.mxu0 0.0
      %2931 = vmatprep.subr.mxu0 0.0
      %2932 = vmatpush1.msra.mxu0 0.0
      %2933 = vmatprep.subr.mxu0 0.0
      %2934 = vmatpush1.msra.mxu0 0.0
      %2935 = vmatprep.subr.mxu0 0.0
      %2936 = vmatpush1.msra.mxu0 0.0
      %2937 = vmatprep.subr.mxu0 0.0
      %2938 = vmatpush1.msra.mxu0 0.0
      %2939 = vmatprep.subr.mxu0 0.0
      %2940 = vmatpush1.msra.mxu0 0.0
      %2941 = vmatprep.subr.mxu0 0.0
      %2942 = vmatpush1.msra.mxu0 0.0
      %2943 = vmatprep.subr.mxu0 0.0
      %2944 = vmatpush1.msra.mxu0 %v2656
      %2945 = vmatprep.subr.mxu0 0.0
      %2946 = vmatpush2.msra.mxu0 0.0
      %2947 = vmatprep.subr.mxu0 0.0
      %2948 = vmatpush2.msra.mxu0 0.0
      %2949 = vmatprep.subr.mxu0 0.0
      %2950 = vmatpush2.msra.mxu0 0.0
      %2951 = vmatprep.subr.mxu0 0.0
      %2952 = vmatpush2.msra.mxu0 0.0
      %2953 = vmatprep.subr.mxu0 0.0
      %2954 = vmatpush2.msra.mxu0 0.0
      %2955 = vmatprep.subr.mxu0 0.0
      %2956 = vmatpush2.msra.mxu0 0.0
      %2957 = vmatprep.subr.mxu0 0.0
      %2958 = vmatpush2.msra.mxu0 0.0
      %2959 = vmatprep.subr.mxu0 0.0
      %2960 = vmatpush2.msra.mxu0 0.0
      %2961 = vmatprep.subr.mxu0 0.0
      %2962 = vmatpush2.msra.mxu0 0.0
      %2963 = vmatprep.subr.mxu0 0.0
      %2964 = vmatpush2.msra.mxu0 0.0
      %2965 = vmatprep.subr.mxu0 0.0
      %2966 = vmatpush2.msra.mxu0 0.0
      %2967 = vmatprep.subr.mxu0 0.0
      %2968 = vmatpush2.msra.mxu0 0.0
      %2969 = vmatprep.subr.mxu0 0.0
      %2970 = vmatpush2.msra.mxu0 0.0
      %2971 = vmatprep.subr.mxu0 0.0
      %2972 = vmatpush2.msra.mxu0 0.0
      %2973 = vmatprep.subr.mxu0 0.0
      %2974 = vmatpush2.msra.mxu0 0.0
      %2975 = vmatprep.subr.mxu0 0.0
      %2976 = vmatpush2.msra.mxu0 0.0
      %2977 = vmatprep.mubr.f32.mxu0 0.0
      %2978 = vmatmul.mubr.f32.gmra.mxu0 %v2911
      %v2979 = vpop.f32.mrf.mxu0
      %v2980 = vadd.f32 0.0, %v2979
      %v2981 = vpop.f32.mrf.mxu0
      %2982 = vdwg.mxu0
      %v2984 = vsel %vm754, %v2907, 0
      %v2987 = vsel %vm754, %v2980, 0
      %2989 = vmatprep.subr.mxu0 0.0
      %2990 = vmatpush1.msra.mxu0 0.0
      %2991 = vmatprep.subr.mxu0 0.0
      %2992 = vmatpush1.msra.mxu0 0.0
      %2993 = vmatprep.subr.mxu0 0.0
      %2994 = vmatpush1.msra.mxu0 0.0
      %2995 = vmatprep.subr.mxu0 0.0
      %2996 = vmatpush1.msra.mxu0 0.0
      %2997 = vmatprep.subr.mxu0 0.0
      %2998 = vmatpush1.msra.mxu0 0.0
      %2999 = vmatprep.subr.mxu0 0.0
      %3000 = vmatpush1.msra.mxu0 0.0
      %3001 = vmatprep.subr.mxu0 0.0
      %3002 = vmatpush1.msra.mxu0 0.0
      %3003 = vmatprep.subr.mxu0 0.0
      %3004 = vmatpush1.msra.mxu0 0.0
      %3005 = vmatprep.subr.mxu0 0.0
      %3006 = vmatpush1.msra.mxu0 0.0
      %3007 = vmatprep.subr.mxu0 0.0
      %3008 = vmatpush1.msra.mxu0 0.0
      %3009 = vmatprep.subr.mxu0 0.0
      %3010 = vmatpush1.msra.mxu0 0.0
      %3011 = vmatprep.subr.mxu0 0.0
      %3012 = vmatpush1.msra.mxu0 0.0
      %3013 = vmatprep.subr.mxu0 0.0
      %3014 = vmatpush1.msra.mxu0 0.0
      %3015 = vmatprep.subr.mxu0 0.0
      %3016 = vmatpush1.msra.mxu0 0.0
      %3017 = vmatprep.subr.mxu0 0.0
      %3018 = vmatpush1.msra.mxu0 0.0
      %3019 = vmatprep.subr.mxu0 0.0
      %3020 = vmatpush1.msra.mxu0 %v521
      %3021 = vmatprep.subr.mxu0 0.0
      %3022 = vmatpush2.msra.mxu0 0.0
      %3023 = vmatprep.subr.mxu0 0.0
      %3024 = vmatpush2.msra.mxu0 0.0
      %3025 = vmatprep.subr.mxu0 0.0
      %3026 = vmatpush2.msra.mxu0 0.0
      %3027 = vmatprep.subr.mxu0 0.0
      %3028 = vmatpush2.msra.mxu0 0.0
      %3029 = vmatprep.subr.mxu0 0.0
      %3030 = vmatpush2.msra.mxu0 0.0
      %3031 = vmatprep.subr.mxu0 0.0
      %3032 = vmatpush2.msra.mxu0 0.0
      %3033 = vmatprep.subr.mxu0 0.0
      %3034 = vmatpush2.msra.mxu0 0.0
      %3035 = vmatprep.subr.mxu0 0.0
      %3036 = vmatpush2.msra.mxu0 0.0
      %3037 = vmatprep.subr.mxu0 0.0
      %3038 = vmatpush2.msra.mxu0 0.0
      %3039 = vmatprep.subr.mxu0 0.0
      %3040 = vmatpush2.msra.mxu0 0.0
      %3041 = vmatprep.subr.mxu0 0.0
      %3042 = vmatpush2.msra.mxu0 0.0
      %3043 = vmatprep.subr.mxu0 0.0
      %3044 = vmatpush2.msra.mxu0 0.0
      %3045 = vmatprep.subr.mxu0 0.0
      %3046 = vmatpush2.msra.mxu0 0.0
      %3047 = vmatprep.subr.mxu0 0.0
      %3048 = vmatpush2.msra.mxu0 0.0
      %3049 = vmatprep.subr.mxu0 0.0
      %3050 = vmatpush2.msra.mxu0 0.0
      %3051 = vmatprep.subr.mxu0 0.0
      %3052 = vmatpush2.msra.mxu0 0.0
      %3053 = vmatprep.mubr.f32.mxu0 0.0
      %3054 = vmatmul.mubr.f32.gmra.mxu0 %v2984
      %v3055 = vpop.f32.mrf.mxu0
      %v3056 = vadd.f32 0.0, %v3055
      %v3057 = vpop.f32.mrf.mxu0
      %3058 = vmatprep.mubr.f32.mxu0 0.0
      %3059 = vmatmul.mubr.f32.gmra.mxu0 %v2987
      %v3060 = vpop.f32.mrf.mxu0
      %v3061 = vadd.f32 0.0, %v3060
      %v3062 = vpop.f32.mrf.mxu0
      %3063 = vdwg.mxu0
      %v3064 = vadd.f32 %v2432, %v3056
      %v3065 = vadd.f32 %v2433, %v3061
      %v3066 = vadd.f32 %v3064, %v440
      %v3067 = vadd.f32 %v3065, %v441
      %v3068 = vsel %vm522, %v3066, 0.0
      %3069 = vadd.xlane.f32.xlu0 %v3068
      %v3070 = vpop.xlane.xlu0 %3069
      %v3071 = vsel %vm522, %v3067, 0.0
      %3072 = vadd.xlane.f32.xlu0 %v3071
      %v3073 = vpop.xlane.xlu0 %3072
      %v3074 = vrcp.pop 32.0
      %v3075 = vmul.f32 %v3070, %v3074
      %v3076 = vmul.f32 %v3073, %v3074
      %v3077 = vsub.f32 %v3066, %v3075
      %v3078 = vsub.f32 %v3067, %v3076
      %v3079 = vmul.f32 %v3077, %v3077
      %v3080 = vmul.f32 %v3078, %v3078
      %v3081 = vsel %vm522, %v3079, 0.0
      %3082 = vadd.xlane.f32.xlu0 %v3081
      %v3083 = vpop.xlane.xlu0 %3082
      %v3084 = vsel %vm522, %v3080, 0.0
      %3085 = vadd.xlane.f32.xlu0 %v3084
      %v3086 = vpop.xlane.xlu0 %3085
      %v3087 = vmul.f32 %v3083, %v3074
      %v3088 = vmul.f32 %v3086, %v3074
      %v3089 = vadd.f32 %v3087, 1e-05
      %v3090 = vadd.f32 %v3088, 1e-05
      %v3091 = vrsqrt.pop %v3089
      %v3092 = vrsqrt.pop %v3090
      %v3093 = vmul.f32 %v3077, %v3091
      %v3094 = vmul.f32 %v3078, %v3092
      %3095 = vst.msk [vmem:[%s430] sm:$0xff] %vm754, %v943
      %3096 = vst.msk [vmem:[%s430 + $0x8] sm:$0xff] %vm754, %v1492
      %3097 = vst.msk [vmem:[%s430 + $0x10] sm:$0xff] %vm754, %v2203
      %3098 = vst.msk [vmem:[%s430 + $0x18] sm:$0xff] %vm754, %v2835
      %3099 = vst.msk [vmem:[%s430 + $0x20] sm:$0xff] %vm754, %v944
      %3100 = vst.msk [vmem:[%s430 + $0x28] sm:$0xff] %vm754, %v1493
      %3101 = vst.msk [vmem:[%s430 + $0x30] sm:$0xff] %vm754, %v2204
      %3102 = vst.msk [vmem:[%s430 + $0x38] sm:$0xff] %vm754, %v2836
      %v3103 = vld [vmem:[%s420] sm:$0xff]
      %v3104 = vld [vmem:[%s420 + $0x8] sm:$0xff]
      %v3105 = vld [vmem:[%s420 + $0x10] sm:$0xff]
      %v3106 = vld [vmem:[%s420 + $0x18] sm:$0xff]
      %v3108 = vsel %vm522, %v3093, 0
      %v3111 = vsel %vm522, %v3094, 0
      %3113 = vmatprep.subr.mxu0 0.0
      %3114 = vmatpush1.msra.mxu0 0.0
      %3115 = vmatprep.subr.mxu0 0.0
      %3116 = vmatpush1.msra.mxu0 0.0
      %3117 = vmatprep.subr.mxu0 0.0
      %3118 = vmatpush1.msra.mxu0 0.0
      %3119 = vmatprep.subr.mxu0 0.0
      %3120 = vmatpush1.msra.mxu0 0.0
      %3121 = vmatprep.subr.mxu0 0.0
      %3122 = vmatpush1.msra.mxu0 0.0
      %3123 = vmatprep.subr.mxu0 0.0
      %3124 = vmatpush1.msra.mxu0 0.0
      %3125 = vmatprep.subr.mxu0 0.0
      %3126 = vmatpush1.msra.mxu0 0.0
      %3127 = vmatprep.subr.mxu0 0.0
      %3128 = vmatpush1.msra.mxu0 0.0
      %3129 = vmatprep.subr.mxu0 0.0
      %3130 = vmatpush1.msra.mxu0 0.0
      %3131 = vmatprep.subr.mxu0 0.0
      %3132 = vmatpush1.msra.mxu0 0.0
      %3133 = vmatprep.subr.mxu0 0.0
      %3134 = vmatpush1.msra.mxu0 0.0
      %3135 = vmatprep.subr.mxu0 0.0
      %3136 = vmatpush1.msra.mxu0 0.0
      %3137 = vmatprep.subr.mxu0 0.0
      %3138 = vmatpush1.msra.mxu0 %v3106
      %3139 = vmatprep.subr.mxu0 0.0
      %3140 = vmatpush1.msra.mxu0 %v3105
      %3141 = vmatprep.subr.mxu0 0.0
      %3142 = vmatpush1.msra.mxu0 %v3104
      %3143 = vmatprep.subr.mxu0 0.0
      %3144 = vmatpush1.msra.mxu0 %v3103
      %3145 = vmatprep.subr.mxu0 0.0
      %3146 = vmatpush2.msra.mxu0 0.0
      %3147 = vmatprep.subr.mxu0 0.0
      %3148 = vmatpush2.msra.mxu0 0.0
      %3149 = vmatprep.subr.mxu0 0.0
      %3150 = vmatpush2.msra.mxu0 0.0
      %3151 = vmatprep.subr.mxu0 0.0
      %3152 = vmatpush2.msra.mxu0 0.0
      %3153 = vmatprep.subr.mxu0 0.0
      %3154 = vmatpush2.msra.mxu0 0.0
      %3155 = vmatprep.subr.mxu0 0.0
      %3156 = vmatpush2.msra.mxu0 0.0
      %3157 = vmatprep.subr.mxu0 0.0
      %3158 = vmatpush2.msra.mxu0 0.0
      %3159 = vmatprep.subr.mxu0 0.0
      %3160 = vmatpush2.msra.mxu0 0.0
      %3161 = vmatprep.subr.mxu0 0.0
      %3162 = vmatpush2.msra.mxu0 0.0
      %3163 = vmatprep.subr.mxu0 0.0
      %3164 = vmatpush2.msra.mxu0 0.0
      %3165 = vmatprep.subr.mxu0 0.0
      %3166 = vmatpush2.msra.mxu0 0.0
      %3167 = vmatprep.subr.mxu0 0.0
      %3168 = vmatpush2.msra.mxu0 0.0
      %3169 = vmatprep.subr.mxu0 0.0
      %3170 = vmatpush2.msra.mxu0 0.0
      %3171 = vmatprep.subr.mxu0 0.0
      %3172 = vmatpush2.msra.mxu0 0.0
      %3173 = vmatprep.subr.mxu0 0.0
      %3174 = vmatpush2.msra.mxu0 0.0
      %3175 = vmatprep.subr.mxu0 0.0
      %3176 = vmatpush2.msra.mxu0 0.0
      %3177 = vmatprep.mubr.f32.mxu0 0.0
      %3178 = vmatmul.mubr.f32.gmra.mxu0 %v3108
      %v3179 = vpop.f32.mrf.mxu0
      %v3180 = vadd.f32 0.0, %v3179
      %v3181 = vpop.f32.mrf.mxu0
      %3182 = vmatprep.mubr.f32.mxu0 0.0
      %3183 = vmatmul.mubr.f32.gmra.mxu0 %v3111
      %v3184 = vpop.f32.mrf.mxu0
      %v3185 = vadd.f32 0.0, %v3184
      %v3186 = vpop.f32.mrf.mxu0
      %3187 = vdwg.mxu0
      %v3188 = vmax.f32 %v3180, 0.0
      %v3189 = vmax.f32 %v3185, 0.0
      %v3190 = vld [vmem:[%s425] sm:$0xff]
      %v3191 = vld [vmem:[%s425 + $0x8] sm:$0xff]
      %v3192 = vld [vmem:[%s425 + $0x10] sm:$0xff]
      %v3193 = vld [vmem:[%s425 + $0x18] sm:$0xff]
      %v3194 = vld [vmem:[%s425 + $0x20] sm:$0xff]
      %v3195 = vld [vmem:[%s425 + $0x28] sm:$0xff]
      %v3196 = vld [vmem:[%s425 + $0x30] sm:$0xff]
      %v3197 = vld [vmem:[%s425 + $0x38] sm:$0xff]
      %vm3198 = vcmask 523264
      %v3200 = vsel %vm3198, %v3188, 0
      %v3203 = vsel %vm3198, %v3189, 0
      %3205 = vmatprep.subr.mxu0 0.0
      %3206 = vmatpush1.msra.mxu0 0.0
      %3207 = vmatprep.subr.mxu0 0.0
      %3208 = vmatpush1.msra.mxu0 0.0
      %3209 = vmatprep.subr.mxu0 0.0
      %3210 = vmatpush1.msra.mxu0 0.0
      %3211 = vmatprep.subr.mxu0 0.0
      %3212 = vmatpush1.msra.mxu0 0.0
      %3213 = vmatprep.subr.mxu0 0.0
      %3214 = vmatpush1.msra.mxu0 0.0
      %3215 = vmatprep.subr.mxu0 0.0
      %3216 = vmatpush1.msra.mxu0 0.0
      %3217 = vmatprep.subr.mxu0 0.0
      %3218 = vmatpush1.msra.mxu0 0.0
      %3219 = vmatprep.subr.mxu0 0.0
      %3220 = vmatpush1.msra.mxu0 0.0
      %3221 = vmatprep.subr.mxu0 0.0
      %3222 = vmatpush1.msra.mxu0 %v3197
      %3223 = vmatprep.subr.mxu0 0.0
      %3224 = vmatpush1.msra.mxu0 %v3196
      %3225 = vmatprep.subr.mxu0 0.0
      %3226 = vmatpush1.msra.mxu0 %v3195
      %3227 = vmatprep.subr.mxu0 0.0
      %3228 = vmatpush1.msra.mxu0 %v3194
      %3229 = vmatprep.subr.mxu0 0.0
      %3230 = vmatpush1.msra.mxu0 %v3193
      %3231 = vmatprep.subr.mxu0 0.0
      %3232 = vmatpush1.msra.mxu0 %v3192
      %3233 = vmatprep.subr.mxu0 0.0
      %3234 = vmatpush1.msra.mxu0 %v3191
      %3235 = vmatprep.subr.mxu0 0.0
      %3236 = vmatpush1.msra.mxu0 %v3190
      %3237 = vmatprep.subr.mxu0 0.0
      %3238 = vmatpush2.msra.mxu0 0.0
      %3239 = vmatprep.subr.mxu0 0.0
      %3240 = vmatpush2.msra.mxu0 0.0
      %3241 = vmatprep.subr.mxu0 0.0
      %3242 = vmatpush2.msra.mxu0 0.0
      %3243 = vmatprep.subr.mxu0 0.0
      %3244 = vmatpush2.msra.mxu0 0.0
      %3245 = vmatprep.subr.mxu0 0.0
      %3246 = vmatpush2.msra.mxu0 0.0
      %3247 = vmatprep.subr.mxu0 0.0
      %3248 = vmatpush2.msra.mxu0 0.0
      %3249 = vmatprep.subr.mxu0 0.0
      %3250 = vmatpush2.msra.mxu0 0.0
      %3251 = vmatprep.subr.mxu0 0.0
      %3252 = vmatpush2.msra.mxu0 0.0
      %3253 = vmatprep.subr.mxu0 0.0
      %3254 = vmatpush2.msra.mxu0 0.0
      %3255 = vmatprep.subr.mxu0 0.0
      %3256 = vmatpush2.msra.mxu0 0.0
      %3257 = vmatprep.subr.mxu0 0.0
      %3258 = vmatpush2.msra.mxu0 0.0
      %3259 = vmatprep.subr.mxu0 0.0
      %3260 = vmatpush2.msra.mxu0 0.0
      %3261 = vmatprep.subr.mxu0 0.0
      %3262 = vmatpush2.msra.mxu0 0.0
      %3263 = vmatprep.subr.mxu0 0.0
      %3264 = vmatpush2.msra.mxu0 0.0
      %3265 = vmatprep.subr.mxu0 0.0
      %3266 = vmatpush2.msra.mxu0 0.0
      %3267 = vmatprep.subr.mxu0 0.0
      %3268 = vmatpush2.msra.mxu0 0.0
      %3269 = vmatprep.mubr.f32.mxu0 0.0
      %3270 = vmatmul.mubr.f32.gmra.mxu0 %v3200
      %v3271 = vpop.f32.mrf.mxu0
      %v3272 = vadd.f32 %v3093, %v3271
      %v3273 = vpop.f32.mrf.mxu0
      %3274 = vmatprep.mubr.f32.mxu0 0.0
      %3275 = vmatmul.mubr.f32.gmra.mxu0 %v3203
      %v3276 = vpop.f32.mrf.mxu0
      %v3277 = vadd.f32 %v3094, %v3276
      %v3278 = vpop.f32.mrf.mxu0
      %3279 = vdwg.mxu0
      %v3280 = vsel %vm522, %v3272, 0.0
      %3281 = vadd.xlane.f32.xlu0 %v3280
      %v3282 = vpop.xlane.xlu0 %3281
      %v3283 = vsel %vm522, %v3277, 0.0
      %3284 = vadd.xlane.f32.xlu0 %v3283
      %v3285 = vpop.xlane.xlu0 %3284
      %v3286 = vmul.f32 %v3282, %v3074
      %v3287 = vmul.f32 %v3285, %v3074
      %v3288 = vsub.f32 %v3272, %v3286
      %v3289 = vsub.f32 %v3277, %v3287
      %v3290 = vmul.f32 %v3288, %v3288
      %v3291 = vmul.f32 %v3289, %v3289
      %v3292 = vsel %vm522, %v3290, 0.0
      %3293 = vadd.xlane.f32.xlu0 %v3292
      %v3294 = vpop.xlane.xlu0 %3293
      %v3295 = vsel %vm522, %v3291, 0.0
      %3296 = vadd.xlane.f32.xlu0 %v3295
      %v3297 = vpop.xlane.xlu0 %3296
      %v3298 = vmul.f32 %v3294, %v3074
      %v3299 = vmul.f32 %v3297, %v3074
      %v3300 = vadd.f32 %v3298, 1e-05
      %v3301 = vadd.f32 %v3299, 1e-05
      %v3302 = vrsqrt.pop %v3300
      %v3303 = vrsqrt.pop %v3301
      %v3304 = vmul.f32 %v3288, %v3302
      %v3305 = vmul.f32 %v3289, %v3303
      %3306 = vst.msk [vmem:[%s8] sm:$0xff] %vm522, %v3304
      %3307 = vst.msk [vmem:[%s8 + $0x8] sm:$0xff] %vm522, %v3305
      %p3308 = scmp.lt.s32.totalorder %s21, 1
      %s3309 = scalar_select %p3308, %s21, 1
      %s3310 = smul.addr %s3309, 8
      %s3311 = smul.addr %s3310, 8
      %s3312 = scalar_lea.vmem %s9, %s3311
      // Predicated region
      $region57: #{transformer_forward.2} parent=51 // pred_check
        %p3313 = pneg %p232
      $region58: #{transformer_forward.2} parent=51 // pred_check_branch
        %3315 = sbr.rel (%p3313) target = $region60
      $region59: #{transformer_forward.2} parent=51 // pred_region
        _
      $region60: #{transformer_forward.2} parent=51 // pred_fallthru
        _
      // Predicated region
      $region61: #{transformer_forward.2} parent=51 // pred_check
        %p3316 = pneg %p258
      $region62: #{transformer_forward.2} parent=51 // pred_check_branch
        %3318 = sbr.rel (%p3316) target = $region64
      $region63: #{transformer_forward.2} parent=51 // pred_region
        _
      $region64: #{transformer_forward.2} parent=51 // pred_fallthru
        _
      // Predicated region
      $region65: #{transformer_forward.2} parent=51 // pred_check
        %p3319 = pneg %p232
      $region66: #{transformer_forward.2} parent=51 // pred_check_branch
        %3321 = sbr.rel (%p3319) target = $region68
      $region67: #{transformer_forward.2} parent=51 // pred_region
        _
      $region68: #{transformer_forward.2} parent=51 // pred_fallthru
        _
    $region52: #{transformer_forward.2} parent=5 // pred_fallthru
      _
    %p3322 = scmp.le.s32.totalorder 2, %s16
    // Predicated region
    $region69: #{transformer_forward.2} parent=5 // pred_check
      %p3323 = pneg %p3322
    $region70: #{transformer_forward.2} parent=5 // pred_check_branch
      %3325 = sbr.rel (%p3323) target = $region72
    $region71: #{transformer_forward.2} parent=5 // pred_region
      %s3326 = ssub.s32 %s16, 2
      // Predicated region
      $region73: #{transformer_forward.2} parent=71 // pred_check
        %p3327 = pneg %p264
      $region74: #{transformer_forward.2} parent=71 // pred_check_branch
        %3329 = sbr.rel (%p3327) target = $region76
      $region75: #{transformer_forward.2} parent=71 // pred_region
        %p3330 = scmp.lt.s32.totalorder %s22, 1
        %s3331 = scalar_select %p3330, %s22, 1
        %s3332 = smul.addr %s3331, 8
        %s3333 = smul.addr %s3332, 8
        %s3334 = scalar_lea.vmem %s9, %s3333
      $region76: #{transformer_forward.2} parent=71 // pred_fallthru
        _
    $region72: #{transformer_forward.2} parent=5 // pred_fallthru
      _
  $region6: #{transformer_forward.2} parent=0 // loop_footer
    %s20 = sadd.s32 1, %s16
  $region7: #{transformer_forward.2} parent=0 // loop_footer_branch
    %15 = sbr.rel target = $region3
  $region8: #{transformer_forward.2} parent=0 // loop_exit
    _

// kernel: transformer_forward.3
$region0: #{transformer_forward.3}
  #allocation0 [shape = 'u32[]', space=smem, size = 0x4, offset = 0x4, fixed_abs, tag = 'smem constant byte address 0x4 - core index']
  #allocation1 [shape = 'u32[144,128]{1,0:T(1,128)}', space=vmem, size = 0x12000, scoped, tag = 'internal scratch']
  #allocation2 [shape = 'f32[16,32]{1,0:T(8,128)}', space=vmem, size = 0x2000, scoped, tag = 'scratch operand']
  %s0 = inlined_call_operand.vmem [shape: f32[16,32], index: 0, kind: input, shape index: {}]
  %s1 = inlined_call_operand.vmem [shape: f32[16,32], index: 1, kind: input, shape index: {}]
  %s2 = inlined_call_operand.vmem [shape: f32[2,8], index: 2, kind: input, shape index: {}]
  %s3 = inlined_call_operand.vmem [shape: f32[2,8], index: 3, kind: input, shape index: {}]
  %s4 = inlined_call_operand.vmem [shape: f32[2,4,32,8], index: 4, kind: input, shape index: {}]
  %s5 = inlined_call_operand.vmem [shape: f32[2,4,32,8], index: 5, kind: input, shape index: {}]
  %s6 = inlined_call_operand.vmem [shape: f32[2,4,32,8], index: 6, kind: input, shape index: {}]
  %s7 = inlined_call_operand.vmem [shape: f32[2,4,8,32], index: 7, kind: input, shape index: {}]
  %s8 = inlined_call_operand.vmem [shape: f32[2,4,32,8], index: 8, kind: input, shape index: {}]
  %s9 = inlined_call_operand.vmem [shape: f32[2,4,32,8], index: 9, kind: input, shape index: {}]
  %s10 = inlined_call_operand.vmem [shape: f32[2,4,32,8], index: 10, kind: input, shape index: {}]
  %s11 = inlined_call_operand.vmem [shape: f32[2,4,8,32], index: 11, kind: input, shape index: {}]
  %s12 = inlined_call_operand.vmem [shape: f32[2,32,64], index: 12, kind: input, shape index: {}]
  %s13 = inlined_call_operand.vmem [shape: f32[2,64,32], index: 13, kind: input, shape index: {}]
  %s14 = inlined_call_operand.vmem [shape: f32[32,16], index: 14, kind: input, shape index: {}]
  %s15 = inlined_call_operand.hbm [shape: f32[16,16], index: 15, kind: output, shape index: {0}]
  %s16 = inlined_call_operand.vmem [shape: f32[2,2,4,8,8], index: 16, kind: output, shape index: {1}]
  %s17 = inlined_call_operand.vmem [shape: f32[2,2,4,8,8], index: 17, kind: output, shape index: {2}]
  %18 = xla_tuple %s15, %s16, %s17
  %s19 = sld [smem:[#allocation0]]
  $region117: #{transformer_forward.3} parent=0
    _
  %s21 = ssub.s32 1, %s19
  %s22 = scalar_select 0, %s21, %s19
  $region1: #{transformer_forward.3} parent=0
    #allocation3 [shape = 'u8[8192]{0}', space=vmem, size = 0x2000, scoped, tag = 'output window, operand 0, single buffered']
    #allocation4 [shape = 's32[2]{0}', space=sflag, size = 0x8, scoped, tag = 'scoped memory for transformer_forward.3']
    %23 = vsyncpa [#allocation4], 0
    loop: start=0, step=1, limit=4
    $region2: #{transformer_forward.3} parent=1 // loop_pre_header
      _
    $region3: #{transformer_forward.3} parent=1 // loop_header
      %s25 = sphi 0, %s29
      %p26 = scmp.ge.s32.totalorder %s25, 4
      %s33 = sphi 0, %s33
      %s35 = sphi 0, %s33
      %s36 = sphi 0, %s35
      %s50 = sphi 0, %s36
      %s54 = sphi 0, %s54
      %s56 = sphi 0, %s54
      %s57 = sphi 0, %s56
      %s71 = sphi 0, %s57
      %s75 = sphi 0, %s75
      %s77 = sphi 0, %s75
      %s78 = sphi 0, %s77
      %s92 = sphi 0, %s78
      %s96 = sphi 0, %s96
      %s98 = sphi 0, %s96
      %s99 = sphi 0, %s98
      %s113 = sphi 0, %s99
      %s119 = sphi 0, %s121
      %s122 = sphi 0, %s119
      %s123 = sphi 0, %s122
      %s139 = sphi 0, %s123
      %s145 = sphi 0, %s147
      %s148 = sphi 0, %s145
      %s149 = sphi 0, %s148
      %s165 = sphi 0, %s149
      %s171 = sphi 0, %s173
      %s174 = sphi 0, %s171
      %s175 = sphi 0, %s174
      %s191 = sphi 0, %s175
      %s197 = sphi 0, %s199
      %s200 = sphi 0, %s197
      %s201 = sphi 0, %s200
      %s217 = sphi 0, %s201
      %s223 = sphi 0, %s225
      %s226 = sphi 0, %s223
      %s227 = sphi 0, %s226
      %s243 = sphi 0, %s227
      %s249 = sphi 0, %s251
      %s252 = sphi 0, %s249
      %s253 = sphi 0, %s252
      %s269 = sphi 0, %s253
      %s275 = sphi 0, %s277
      %s278 = sphi 0, %s275
      %s279 = sphi 0, %s278
      %s295 = sphi 0, %s279
      %s301 = sphi 0, %s303
      %s304 = sphi 0, %s301
      %s305 = sphi 0, %s304
      %s321 = sphi 0, %s305
      %s327 = sphi 0, %s329
      %s330 = sphi 0, %s327
      %s331 = sphi 0, %s330
      %s347 = sphi 0, %s331
      %s353 = sphi 0, %s355
      %s356 = sphi 0, %s353
      %s357 = sphi 0, %s356
      %s373 = sphi 0, %s357
      %s377 = sphi 0, %s377
      %s379 = sphi 0, %s377
      %s380 = sphi 0, %s379
      %s394 = sphi 0, %s380
      %s398 = sphi 0, %s398
      %s400 = sphi 0, %s398
      %s401 = sphi 0, %s400
      %s415 = sphi 0, %s401
      %s421 = sphi 0, %s423
      %s424 = sphi 0, %s421
      %s425 = sphi 0, %s424
      %s441 = sphi 0, %s425
      %s447 = sphi 0, %s449
      %s450 = sphi 0, %s447
      %s451 = sphi 0, %s450
      %s467 = sphi 0, %s451
    $region4: #{transformer_forward.3} parent=1 // loop_header_branch
      %28 = sbr.rel (%p26) target = $region8
    $region5: #{transformer_forward.3} parent=1 // loop_body
      %s30 = ssub.s32 %s25, 1
      %s31 = ssub.s32 %s25, 2
      %s32 = sadd.s32 %s25, 1
      %s34 = sadd.s32 %s33, 1
      %p37 = scmp.eq.s32.totalorder %s25, 1
      %p38 = scmp.ne.s32.totalorder %s33, %s35
      %p39 = scmp.eq.s32.totalorder %s25, 0
      %p40 = por %p38, %p39
      %p41 = scmp.ne.s32.totalorder %s33, %s35
      %p42 = scmp.eq.s32.totalorder %s30, 1
      %p43 = por %p41, %p42
      %p44 = scmp.ne.s32.totalorder %s35, %s36
      %p45 = scmp.eq.s32.totalorder %s30, 0
      %p46 = por %p44, %p45
      %p47 = scmp.ne.s32.totalorder %s35, %s36
      %p48 = scmp.eq.s32.totalorder %s31, 1
      %p49 = por %p47, %p48
      %p51 = scmp.ne.s32.totalorder %s36, %s50
      %p52 = scmp.eq.s32.totalorder %s31, 0
      %p53 = por %p51, %p52
      %s55 = sadd.s32 %s54, 1
      %p58 = scmp.eq.s32.totalorder %s25, 1
      %p59 = scmp.ne.s32.totalorder %s54, %s56
      %p60 = scmp.eq.s32.totalorder %s25, 0
      %p61 = por %p59, %p60
      %p62 = scmp.ne.s32.totalorder %s54, %s56
      %p63 = scmp.eq.s32.totalorder %s30, 1
      %p64 = por %p62, %p63
      %p65 = scmp.ne.s32.totalorder %s56, %s57
      %p66 = scmp.eq.s32.totalorder %s30, 0
      %p67 = por %p65, %p66
      %p68 = scmp.ne.s32.totalorder %s56, %s57
      %p69 = scmp.eq.s32.totalorder %s31, 1
      %p70 = por %p68, %p69
      %p72 = scmp.ne.s32.totalorder %s57, %s71
      %p73 = scmp.eq.s32.totalorder %s31, 0
      %p74 = por %p72, %p73
      %s76 = sadd.s32 %s75, 1
      %p79 = scmp.eq.s32.totalorder %s25, 1
      %p80 = scmp.ne.s32.totalorder %s75, %s77
      %p81 = scmp.eq.s32.totalorder %s25, 0
      %p82 = por %p80, %p81
      %p83 = scmp.ne.s32.totalorder %s75, %s77
      %p84 = scmp.eq.s32.totalorder %s30, 1
      %p85 = por %p83, %p84
      %p86 = scmp.ne.s32.totalorder %s77, %s78
      %p87 = scmp.eq.s32.totalorder %s30, 0
      %p88 = por %p86, %p87
      %p89 = scmp.ne.s32.totalorder %s77, %s78
      %p90 = scmp.eq.s32.totalorder %s31, 1
      %p91 = por %p89, %p90
      %p93 = scmp.ne.s32.totalorder %s78, %s92
      %p94 = scmp.eq.s32.totalorder %s31, 0
      %p95 = por %p93, %p94
      %s97 = sadd.s32 %s96, 1
      %p100 = scmp.eq.s32.totalorder %s25, 1
      %p101 = scmp.ne.s32.totalorder %s96, %s98
      %p102 = scmp.eq.s32.totalorder %s25, 0
      %p103 = por %p101, %p102
      %p104 = scmp.ne.s32.totalorder %s96, %s98
      %p105 = scmp.eq.s32.totalorder %s30, 1
      %p106 = por %p104, %p105
      %p107 = scmp.ne.s32.totalorder %s98, %s99
      %p108 = scmp.eq.s32.totalorder %s30, 0
      %p109 = por %p107, %p108
      %p110 = scmp.ne.s32.totalorder %s98, %s99
      %p111 = scmp.eq.s32.totalorder %s31, 1
      %p112 = por %p110, %p111
      %p114 = scmp.ne.s32.totalorder %s99, %s113
      %p115 = scmp.eq.s32.totalorder %s31, 0
      %p116 = por %p114, %p115
      %s117 = ssub.s32 %s25, %s32
      %p118 = scmp.eq.s32.totalorder %s117, 0
      %s120 = sadd.s32 %s119, 1
      %s121 = scalar_select %p118, %s119, %s120
      %p124 = pneg %p118
      %p125 = scmp.eq.s32.totalorder %s25, 1
      %p126 = por %p124, %p125
      %p127 = scmp.ne.s32.totalorder %s119, %s122
      %p128 = scmp.eq.s32.totalorder %s25, 0
      %p129 = por %p127, %p128
      %p130 = scmp.ne.s32.totalorder %s119, %s122
      %p131 = scmp.eq.s32.totalorder %s30, 1
      %p132 = por %p130, %p131
      %p133 = scmp.ne.s32.totalorder %s122, %s123
      %p134 = scmp.eq.s32.totalorder %s30, 0
      %p135 = por %p133, %p134
      %p136 = scmp.ne.s32.totalorder %s122, %s123
      %p137 = scmp.eq.s32.totalorder %s31, 1
      %p138 = por %p136, %p137
      %p140 = scmp.ne.s32.totalorder %s123, %s139
      %p141 = scmp.eq.s32.totalorder %s31, 0
      %p142 = por %p140, %p141
      %s143 = ssub.s32 %s25, %s32
      %p144 = scmp.eq.s32.totalorder %s143, 0
      %s146 = sadd.s32 %s145, 1
      %s147 = scalar_select %p144, %s145, %s146
      %p150 = pneg %p144
      %p151 = scmp.eq.s32.totalorder %s25, 1
      %p152 = por %p150, %p151
      %p153 = scmp.ne.s32.totalorder %s145, %s148
      %p154 = scmp.eq.s32.totalorder %s25, 0
      %p155 = por %p153, %p154
      %p156 = scmp.ne.s32.totalorder %s145, %s148
      %p157 = scmp.eq.s32.totalorder %s30, 1
      %p158 = por %p156, %p157
      %p159 = scmp.ne.s32.totalorder %s148, %s149
      %p160 = scmp.eq.s32.totalorder %s30, 0
      %p161 = por %p159, %p160
      %p162 = scmp.ne.s32.totalorder %s148, %s149
      %p163 = scmp.eq.s32.totalorder %s31, 1
      %p164 = por %p162, %p163
      %p166 = scmp.ne.s32.totalorder %s149, %s165
      %p167 = scmp.eq.s32.totalorder %s31, 0
      %p168 = por %p166, %p167
      %s169 = ssub.s32 %s25, %s32
      %p170 = scmp.eq.s32.totalorder %s169, 0
      %s172 = sadd.s32 %s171, 1
      %s173 = scalar_select %p170, %s171, %s172
      %p176 = pneg %p170
      %p177 = scmp.eq.s32.totalorder %s25, 1
      %p178 = por %p176, %p177
      %p179 = scmp.ne.s32.totalorder %s171, %s174
      %p180 = scmp.eq.s32.totalorder %s25, 0
      %p181 = por %p179, %p180
      %p182 = scmp.ne.s32.totalorder %s171, %s174
      %p183 = scmp.eq.s32.totalorder %s30, 1
      %p184 = por %p182, %p183
      %p185 = scmp.ne.s32.totalorder %s174, %s175
      %p186 = scmp.eq.s32.totalorder %s30, 0
      %p187 = por %p185, %p186
      %p188 = scmp.ne.s32.totalorder %s174, %s175
      %p189 = scmp.eq.s32.totalorder %s31, 1
      %p190 = por %p188, %p189
      %p192 = scmp.ne.s32.totalorder %s175, %s191
      %p193 = scmp.eq.s32.totalorder %s31, 0
      %p194 = por %p192, %p193
      %s195 = ssub.s32 %s25, %s32
      %p196 = scmp.eq.s32.totalorder %s195, 0
      %s198 = sadd.s32 %s197, 1
      %s199 = scalar_select %p196, %s197, %s198
      %p202 = pneg %p196
      %p203 = scmp.eq.s32.totalorder %s25, 1
      %p204 = por %p202, %p203
      %p205 = scmp.ne.s32.totalorder %s197, %s200
      %p206 = scmp.eq.s32.totalorder %s25, 0
      %p207 = por %p205, %p206
      %p208 = scmp.ne.s32.totalorder %s197, %s200
      %p209 = scmp.eq.s32.totalorder %s30, 1
      %p210 = por %p208, %p209
      %p211 = scmp.ne.s32.totalorder %s200, %s201
      %p212 = scmp.eq.s32.totalorder %s30, 0
      %p213 = por %p211, %p212
      %p214 = scmp.ne.s32.totalorder %s200, %s201
      %p215 = scmp.eq.s32.totalorder %s31, 1
      %p216 = por %p214, %p215
      %p218 = scmp.ne.s32.totalorder %s201, %s217
      %p219 = scmp.eq.s32.totalorder %s31, 0
      %p220 = por %p218, %p219
      %s221 = ssub.s32 %s25, %s32
      %p222 = scmp.eq.s32.totalorder %s221, 0
      %s224 = sadd.s32 %s223, 1
      %s225 = scalar_select %p222, %s223, %s224
      %p228 = pneg %p222
      %p229 = scmp.eq.s32.totalorder %s25, 1
      %p230 = por %p228, %p229
      %p231 = scmp.ne.s32.totalorder %s223, %s226
      %p232 = scmp.eq.s32.totalorder %s25, 0
      %p233 = por %p231, %p232
      %p234 = scmp.ne.s32.totalorder %s223, %s226
      %p235 = scmp.eq.s32.totalorder %s30, 1
      %p236 = por %p234, %p235
      %p237 = scmp.ne.s32.totalorder %s226, %s227
      %p238 = scmp.eq.s32.totalorder %s30, 0
      %p239 = por %p237, %p238
      %p240 = scmp.ne.s32.totalorder %s226, %s227
      %p241 = scmp.eq.s32.totalorder %s31, 1
      %p242 = por %p240, %p241
      %p244 = scmp.ne.s32.totalorder %s227, %s243
      %p245 = scmp.eq.s32.totalorder %s31, 0
      %p246 = por %p244, %p245
      %s247 = ssub.s32 %s25, %s32
      %p248 = scmp.eq.s32.totalorder %s247, 0
      %s250 = sadd.s32 %s249, 1
      %s251 = scalar_select %p248, %s249, %s250
      %p254 = pneg %p248
      %p255 = scmp.eq.s32.totalorder %s25, 1
      %p256 = por %p254, %p255
      %p257 = scmp.ne.s32.totalorder %s249, %s252
      %p258 = scmp.eq.s32.totalorder %s25, 0
      %p259 = por %p257, %p258
      %p260 = scmp.ne.s32.totalorder %s249, %s252
      %p261 = scmp.eq.s32.totalorder %s30, 1
      %p262 = por %p260, %p261
      %p263 = scmp.ne.s32.totalorder %s252, %s253
      %p264 = scmp.eq.s32.totalorder %s30, 0
      %p265 = por %p263, %p264
      %p266 = scmp.ne.s32.totalorder %s252, %s253
      %p267 = scmp.eq.s32.totalorder %s31, 1
      %p268 = por %p266, %p267
      %p270 = scmp.ne.s32.totalorder %s253, %s269
      %p271 = scmp.eq.s32.totalorder %s31, 0
      %p272 = por %p270, %p271
      %s273 = ssub.s32 %s25, %s32
      %p274 = scmp.eq.s32.totalorder %s273, 0
      %s276 = sadd.s32 %s275, 1
      %s277 = scalar_select %p274, %s275, %s276
      %p280 = pneg %p274
      %p281 = scmp.eq.s32.totalorder %s25, 1
      %p282 = por %p280, %p281
      %p283 = scmp.ne.s32.totalorder %s275, %s278
      %p284 = scmp.eq.s32.totalorder %s25, 0
      %p285 = por %p283, %p284
      %p286 = scmp.ne.s32.totalorder %s275, %s278
      %p287 = scmp.eq.s32.totalorder %s30, 1
      %p288 = por %p286, %p287
      %p289 = scmp.ne.s32.totalorder %s278, %s279
      %p290 = scmp.eq.s32.totalorder %s30, 0
      %p291 = por %p289, %p290
      %p292 = scmp.ne.s32.totalorder %s278, %s279
      %p293 = scmp.eq.s32.totalorder %s31, 1
      %p294 = por %p292, %p293
      %p296 = scmp.ne.s32.totalorder %s279, %s295
      %p297 = scmp.eq.s32.totalorder %s31, 0
      %p298 = por %p296, %p297
      %s299 = ssub.s32 %s25, %s32
      %p300 = scmp.eq.s32.totalorder %s299, 0
      %s302 = sadd.s32 %s301, 1
      %s303 = scalar_select %p300, %s301, %s302
      %p306 = pneg %p300
      %p307 = scmp.eq.s32.totalorder %s25, 1
      %p308 = por %p306, %p307
      %p309 = scmp.ne.s32.totalorder %s301, %s304
      %p310 = scmp.eq.s32.totalorder %s25, 0
      %p311 = por %p309, %p310
      %p312 = scmp.ne.s32.totalorder %s301, %s304
      %p313 = scmp.eq.s32.totalorder %s30, 1
      %p314 = por %p312, %p313
      %p315 = scmp.ne.s32.totalorder %s304, %s305
      %p316 = scmp.eq.s32.totalorder %s30, 0
      %p317 = por %p315, %p316
      %p318 = scmp.ne.s32.totalorder %s304, %s305
      %p319 = scmp.eq.s32.totalorder %s31, 1
      %p320 = por %p318, %p319
      %p322 = scmp.ne.s32.totalorder %s305, %s321
      %p323 = scmp.eq.s32.totalorder %s31, 0
      %p324 = por %p322, %p323
      %s325 = ssub.s32 %s25, %s32
      %p326 = scmp.eq.s32.totalorder %s325, 0
      %s328 = sadd.s32 %s327, 1
      %s329 = scalar_select %p326, %s327, %s328
      %p332 = pneg %p326
      %p333 = scmp.eq.s32.totalorder %s25, 1
      %p334 = por %p332, %p333
      %p335 = scmp.ne.s32.totalorder %s327, %s330
      %p336 = scmp.eq.s32.totalorder %s25, 0
      %p337 = por %p335, %p336
      %p338 = scmp.ne.s32.totalorder %s327, %s330
      %p339 = scmp.eq.s32.totalorder %s30, 1
      %p340 = por %p338, %p339
      %p341 = scmp.ne.s32.totalorder %s330, %s331
      %p342 = scmp.eq.s32.totalorder %s30, 0
      %p343 = por %p341, %p342
      %p344 = scmp.ne.s32.totalorder %s330, %s331
      %p345 = scmp.eq.s32.totalorder %s31, 1
      %p346 = por %p344, %p345
      %p348 = scmp.ne.s32.totalorder %s331, %s347
      %p349 = scmp.eq.s32.totalorder %s31, 0
      %p350 = por %p348, %p349
      %s351 = ssub.s32 %s25, %s32
      %p352 = scmp.eq.s32.totalorder %s351, 0
      %s354 = sadd.s32 %s353, 1
      %s355 = scalar_select %p352, %s353, %s354
      %p358 = pneg %p352
      %p359 = scmp.eq.s32.totalorder %s25, 1
      %p360 = por %p358, %p359
      %p361 = scmp.ne.s32.totalorder %s353, %s356
      %p362 = scmp.eq.s32.totalorder %s25, 0
      %p363 = por %p361, %p362
      %p364 = scmp.ne.s32.totalorder %s353, %s356
      %p365 = scmp.eq.s32.totalorder %s30, 1
      %p366 = por %p364, %p365
      %p367 = scmp.ne.s32.totalorder %s356, %s357
      %p368 = scmp.eq.s32.totalorder %s30, 0
      %p369 = por %p367, %p368
      %p370 = scmp.ne.s32.totalorder %s356, %s357
      %p371 = scmp.eq.s32.totalorder %s31, 1
      %p372 = por %p370, %p371
      %p374 = scmp.ne.s32.totalorder %s357, %s373
      %p375 = scmp.eq.s32.totalorder %s31, 0
      %p376 = por %p374, %p375
      %s378 = sadd.s32 %s377, 1
      %p381 = scmp.eq.s32.totalorder %s25, 1
      %p382 = scmp.ne.s32.totalorder %s377, %s379
      %p383 = scmp.eq.s32.totalorder %s25, 0
      %p384 = por %p382, %p383
      %p385 = scmp.ne.s32.totalorder %s377, %s379
      %p386 = scmp.eq.s32.totalorder %s30, 1
      %p387 = por %p385, %p386
      %p388 = scmp.ne.s32.totalorder %s379, %s380
      %p389 = scmp.eq.s32.totalorder %s30, 0
      %p390 = por %p388, %p389
      %p391 = scmp.ne.s32.totalorder %s379, %s380
      %p392 = scmp.eq.s32.totalorder %s31, 1
      %p393 = por %p391, %p392
      %p395 = scmp.ne.s32.totalorder %s380, %s394
      %p396 = scmp.eq.s32.totalorder %s31, 0
      %p397 = por %p395, %p396
      %s399 = sadd.s32 %s398, 1
      %p402 = scmp.eq.s32.totalorder %s25, 1
      %p403 = scmp.ne.s32.totalorder %s398, %s400
      %p404 = scmp.eq.s32.totalorder %s25, 0
      %p405 = por %p403, %p404
      %p406 = scmp.ne.s32.totalorder %s398, %s400
      %p407 = scmp.eq.s32.totalorder %s30, 1
      %p408 = por %p406, %p407
      %p409 = scmp.ne.s32.totalorder %s400, %s401
      %p410 = scmp.eq.s32.totalorder %s30, 0
      %p411 = por %p409, %p410
      %p412 = scmp.ne.s32.totalorder %s400, %s401
      %p413 = scmp.eq.s32.totalorder %s31, 1
      %p414 = por %p412, %p413
      %p416 = scmp.ne.s32.totalorder %s401, %s415
      %p417 = scmp.eq.s32.totalorder %s31, 0
      %p418 = por %p416, %p417
      %s419 = ssub.s32 %s25, %s32
      %p420 = scmp.eq.s32.totalorder %s419, 0
      %s422 = sadd.s32 %s421, 1
      %s423 = scalar_select %p420, %s421, %s422
      %p426 = pneg %p420
      %p427 = scmp.eq.s32.totalorder %s25, 1
      %p428 = por %p426, %p427
      %p429 = scmp.ne.s32.totalorder %s421, %s424
      %p430 = scmp.eq.s32.totalorder %s25, 0
      %p431 = por %p429, %p430
      %p432 = scmp.ne.s32.totalorder %s421, %s424
      %p433 = scmp.eq.s32.totalorder %s30, 1
      %p434 = por %p432, %p433
      %p435 = scmp.ne.s32.totalorder %s424, %s425
      %p436 = scmp.eq.s32.totalorder %s30, 0
      %p437 = por %p435, %p436
      %p438 = scmp.ne.s32.totalorder %s424, %s425
      %p439 = scmp.eq.s32.totalorder %s31, 1
      %p440 = por %p438, %p439
      %p442 = scmp.ne.s32.totalorder %s425, %s441
      %p443 = scmp.eq.s32.totalorder %s31, 0
      %p444 = por %p442, %p443
      %s445 = ssub.s32 %s25, %s32
      %p446 = scmp.eq.s32.totalorder %s445, 0
      %s448 = sadd.s32 %s447, 1
      %s449 = scalar_select %p446, %s447, %s448
      %p452 = pneg %p446
      %p453 = scmp.eq.s32.totalorder %s25, 1
      %p454 = por %p452, %p453
      %p455 = scmp.ne.s32.totalorder %s447, %s450
      %p456 = scmp.eq.s32.totalorder %s25, 0
      %p457 = por %p455, %p456
      %p458 = scmp.ne.s32.totalorder %s447, %s450
      %p459 = scmp.eq.s32.totalorder %s30, 1
      %p460 = por %p458, %p459
      %p461 = scmp.ne.s32.totalorder %s450, %s451
      %p462 = scmp.eq.s32.totalorder %s30, 0
      %p463 = por %p461, %p462
      %p464 = scmp.ne.s32.totalorder %s450, %s451
      %p465 = scmp.eq.s32.totalorder %s31, 1
      %p466 = por %p464, %p465
      %p468 = scmp.ne.s32.totalorder %s451, %s467
      %p469 = scmp.eq.s32.totalorder %s31, 0
      %p470 = por %p468, %p469
      %p471 = scmp.le.s32.totalorder 1, %s25
      %p472 = scmp.lt.s32.totalorder %s25, 3
      %p473 = pnand %p471, %p472
      %p474 = pneg %p473
      // Predicated region
      $region9: #{transformer_forward.3} parent=5 // pred_check
        _
      $region10: #{transformer_forward.3} parent=5 // pred_check_branch
        %476 = sbr.rel (%p473) target = $region12
      $region11: #{transformer_forward.3} parent=5 // pred_region
        %s477 = ssub.s32 %s25, 1
        // Predicated region
        $region13: #{transformer_forward.3} parent=11 // pred_check
          %p478 = pneg %p46
        $region14: #{transformer_forward.3} parent=11 // pred_check_branch
          %480 = sbr.rel (%p478) target = $region16
        $region15: #{transformer_forward.3} parent=11 // pred_region
          _
        $region16: #{transformer_forward.3} parent=11 // pred_fallthru
          _
        // Predicated region
        $region17: #{transformer_forward.3} parent=11 // pred_check
          %p481 = pneg %p67
        $region18: #{transformer_forward.3} parent=11 // pred_check_branch
          %483 = sbr.rel (%p481) target = $region20
        $region19: #{transformer_forward.3} parent=11 // pred_region
          _
        $region20: #{transformer_forward.3} parent=11 // pred_fallthru
          _
        // Predicated region
        $region21: #{transformer_forward.3} parent=11 // pred_check
          %p484 = pneg %p88
        $region22: #{transformer_forward.3} parent=11 // pred_check_branch
          %486 = sbr.rel (%p484) target = $region24
        $region23: #{transformer_forward.3} parent=11 // pred_region
          _
        $region24: #{transformer_forward.3} parent=11 // pred_fallthru
          _
        // Predicated region
        $region25: #{transformer_forward.3} parent=11 // pred_check
          %p487 = pneg %p109
        $region26: #{transformer_forward.3} parent=11 // pred_check_branch
          %489 = sbr.rel (%p487) target = $region28
        $region27: #{transformer_forward.3} parent=11 // pred_region
          _
        $region28: #{transformer_forward.3} parent=11 // pred_fallthru
          _
        // Predicated region
        $region29: #{transformer_forward.3} parent=11 // pred_check
          %p490 = pneg %p390
        $region30: #{transformer_forward.3} parent=11 // pred_check_branch
          %492 = sbr.rel (%p490) target = $region32
        $region31: #{transformer_forward.3} parent=11 // pred_region
          _
        $region32: #{transformer_forward.3} parent=11 // pred_fallthru
          _
      $region12: #{transformer_forward.3} parent=5 // pred_fallthru
        _
      %p493 = scmp.lt.s32.totalorder %s25, 2
      // Predicated region
      $region33: #{transformer_forward.3} parent=5 // pred_check
        %p494 = pneg %p493
      $region34: #{transformer_forward.3} parent=5 // pred_check_branch
        %496 = sbr.rel (%p494) target = $region36
      $region35: #{transformer_forward.3} parent=5 // pred_region
        // Predicated region
        $region37: #{transformer_forward.3} parent=35 // pred_check
          %p497 = pneg %p129
        $region38: #{transformer_forward.3} parent=35 // pred_check_branch
          %499 = sbr.rel (%p497) target = $region40
        $region39: #{transformer_forward.3} parent=35 // pred_region
          %p500 = scmp.lt.s32.totalorder %s25, 1
          %s501 = scalar_select %p500, %s25, 1
          %s502 = smul.addr %s501, 16
          %s503 = smul.addr %s502, 8
          %s504 = scalar_lea.vmem %s4, %s503
        $region40: #{transformer_forward.3} parent=35 // pred_fallthru
          _
        // Predicated region
        $region41: #{transformer_forward.3} parent=35 // pred_check
          %p505 = pneg %p155
        $region42: #{transformer_forward.3} parent=35 // pred_check_branch
          %507 = sbr.rel (%p505) target = $region44
        $region43: #{transformer_forward.3} parent=35 // pred_region
          %p508 = scmp.lt.s32.totalorder %s25, 1
          %s509 = scalar_select %p508, %s25, 1
          %s510 = smul.addr %s509, 16
          %s511 = smul.addr %s510, 8
          %s512 = scalar_lea.vmem %s5, %s511
        $region44: #{transformer_forward.3} parent=35 // pred_fallthru
          _
        // Predicated region
        $region45: #{transformer_forward.3} parent=35 // pred_check
          %p513 = pneg %p181
        $region46: #{transformer_forward.3} parent=35 // pred_check_branch
          %515 = sbr.rel (%p513) target = $region48
        $region47: #{transformer_forward.3} parent=35 // pred_region
          %p516 = scmp.lt.s32.totalorder %s25, 1
          %s517 = scalar_select %p516, %s25, 1
          %s518 = smul.addr %s517, 16
          %s519 = smul.addr %s518, 8
          %s520 = scalar_lea.vmem %s6, %s519
        $region48: #{transformer_forward.3} parent=35 // pred_fallthru
          _
        // Predicated region
        $region49: #{transformer_forward.3} parent=35 // pred_check
          %p521 = pneg %p207
        $region50: #{transformer_forward.3} parent=35 // pred_check_branch
          %523 = sbr.rel (%p521) target = $region52
        $region51: #{transformer_forward.3} parent=35 // pred_region
          %p524 = scmp.lt.s32.totalorder %s25, 1
          %s525 = scalar_select %p524, %s25, 1
          %s526 = smul.addr %s525, 4
          %s527 = smul.addr %s526, 8
          %s528 = scalar_lea.vmem %s7, %s527
        $region52: #{transformer_forward.3} parent=35 // pred_fallthru
          _
        // Predicated region
        $region53: #{transformer_forward.3} parent=35 // pred_check
          %p529 = pneg %p233
        $region54: #{transformer_forward.3} parent=35 // pred_check_branch
          %531 = sbr.rel (%p529) target = $region56
        $region55: #{transformer_forward.3} parent=35 // pred_region
          %p532 = scmp.lt.s32.totalorder %s25, 1
          %s533 = scalar_select %p532, %s25, 1
          %s534 = smul.addr %s533, 16
          %s535 = smul.addr %s534, 8
          %s536 = scalar_lea.vmem %s8, %s535
        $region56: #{transformer_forward.3} parent=35 // pred_fallthru
          _
        // Predicated region
        $region57: #{transformer_forward.3} parent=35 // pred_check
          %p537 = pneg %p259
        $region58: #{transformer_forward.3} parent=35 // pred_check_branch
          %539 = sbr.rel (%p537) target = $region60
        $region59: #{transformer_forward.3} parent=35 // pred_region
          %p540 = scmp.lt.s32.totalorder %s25, 1
          %s541 = scalar_select %p540, %s25, 1
          %s542 = smul.addr %s541, 16
          %s543 = smul.addr %s542, 8
          %s544 = scalar_lea.vmem %s9, %s543
        $region60: #{transformer_forward.3} parent=35 // pred_fallthru
          _
        // Predicated region
        $region61: #{transformer_forward.3} parent=35 // pred_check
          %p545 = pneg %p285
        $region62: #{transformer_forward.3} parent=35 // pred_check_branch
          %547 = sbr.rel (%p545) target = $region64
        $region63: #{transformer_forward.3} parent=35 // pred_region
          %p548 = scmp.lt.s32.totalorder %s25, 1
          %s549 = scalar_select %p548, %s25, 1
          %s550 = smul.addr %s549, 16
          %s551 = smul.addr %s550, 8
          %s552 = scalar_lea.vmem %s10, %s551
        $region64: #{transformer_forward.3} parent=35 // pred_fallthru
          _
        // Predicated region
        $region65: #{transformer_forward.3} parent=35 // pred_check
          %p553 = pneg %p311
        $region66: #{transformer_forward.3} parent=35 // pred_check_branch
          %555 = sbr.rel (%p553) target = $region68
        $region67: #{transformer_forward.3} parent=35 // pred_region
          %p556 = scmp.lt.s32.totalorder %s25, 1
          %s557 = scalar_select %p556, %s25, 1
          %s558 = smul.addr %s557, 4
          %s559 = smul.addr %s558, 8
          %s560 = scalar_lea.vmem %s11, %s559
        $region68: #{transformer_forward.3} parent=35 // pred_fallthru
          _
        // Predicated region
        $region69: #{transformer_forward.3} parent=35 // pred_check
          %p561 = pneg %p337
        $region70: #{transformer_forward.3} parent=35 // pred_check_branch
          %563 = sbr.rel (%p561) target = $region72
        $region71: #{transformer_forward.3} parent=35 // pred_region
          %p564 = scmp.lt.s32.totalorder %s25, 1
          %s565 = scalar_select %p564, %s25, 1
          %s566 = smul.addr %s565, 4
          %s567 = smul.addr %s566, 8
          %s568 = scalar_lea.vmem %s12, %s567
        $region72: #{transformer_forward.3} parent=35 // pred_fallthru
          _
        // Predicated region
        $region73: #{transformer_forward.3} parent=35 // pred_check
          %p569 = pneg %p363
        $region74: #{transformer_forward.3} parent=35 // pred_check_branch
          %571 = sbr.rel (%p569) target = $region76
        $region75: #{transformer_forward.3} parent=35 // pred_region
          %p572 = scmp.lt.s32.totalorder %s25, 1
          %s573 = scalar_select %p572, %s25, 1
          %s574 = smul.addr %s573, 8
          %s575 = smul.addr %s574, 8
          %s576 = scalar_lea.vmem %s13, %s575
        $region76: #{transformer_forward.3} parent=35 // pred_fallthru
          _
      $region36: #{transformer_forward.3} parent=5 // pred_fallthru
        _
      %p577 = scmp.le.s32.totalorder 1, %s25
      %p578 = scmp.lt.s32.totalorder %s25, 3
      %p579 = pnand %p577, %p578
      %p580 = pneg %p579
      // Predicated region
      $region77: #{transformer_forward.3} parent=5 // pred_check
        _
      $region78: #{transformer_forward.3} parent=5 // pred_check_branch
        %582 = sbr.rel (%p579) target = $region80
      $region79: #{transformer_forward.3} parent=5 // pred_region
        %s583 = ssub.s32 %s25, 1
        %p584 = pneg %p46
        %p585 = pneg %p43
        %p586 = pneg %p67
        %p587 = pneg %p64
        %p588 = pneg %p88
        %p589 = pneg %p85
        %p590 = pneg %p109
        %p591 = pneg %p106
        %p592 = scmp.lt.s32.totalorder %s30, 1
        %s593 = scalar_select %p592, %s30, 1
        %s594 = smul.addr %s593, 16
        %s595 = smul.addr %s594, 8
        %s596 = scalar_lea.vmem %s4, %s595
        %p597 = pneg %p135
        %p598 = pneg %p132
        %p599 = scmp.lt.s32.totalorder %s30, 1
        %s600 = scalar_select %p599, %s30, 1
        %s601 = smul.addr %s600, 16
        %s602 = smul.addr %s601, 8
        %s603 = scalar_lea.vmem %s5, %s602
        %p604 = pneg %p161
        %p605 = pneg %p158
        %p606 = scmp.lt.s32.totalorder %s30, 1
        %s607 = scalar_select %p606, %s30, 1
        %s608 = smul.addr %s607, 16
        %s609 = smul.addr %s608, 8
        %s610 = scalar_lea.vmem %s6, %s609
        %p611 = pneg %p187
        %p612 = pneg %p184
        %p613 = scmp.lt.s32.totalorder %s30, 1
        %s614 = scalar_select %p613, %s30, 1
        %s615 = smul.addr %s614, 4
        %s616 = smul.addr %s615, 8
        %s617 = scalar_lea.vmem %s7, %s616
        %p618 = pneg %p213
        %p619 = pneg %p210
        %p620 = scmp.lt.s32.totalorder %s30, 1
        %s621 = scalar_select %p620, %s30, 1
        %s622 = smul.addr %s621, 16
        %s623 = smul.addr %s622, 8
        %s624 = scalar_lea.vmem %s8, %s623
        %p625 = pneg %p239
        %p626 = pneg %p236
        %p627 = scmp.lt.s32.totalorder %s30, 1
        %s628 = scalar_select %p627, %s30, 1
        %s629 = smul.addr %s628, 16
        %s630 = smul.addr %s629, 8
        %s631 = scalar_lea.vmem %s9, %s630
        %p632 = pneg %p265
        %p633 = pneg %p262
        %p634 = scmp.lt.s32.totalorder %s30, 1
        %s635 = scalar_select %p634, %s30, 1
        %s636 = smul.addr %s635, 16
        %s637 = smul.addr %s636, 8
        %s638 = scalar_lea.vmem %s10, %s637
        %p639 = pneg %p291
        %p640 = pneg %p288
        %p641 = scmp.lt.s32.totalorder %s30, 1
        %s642 = scalar_select %p641, %s30, 1
        %s643 = smul.addr %s642, 4
        %s644 = smul.addr %s643, 8
        %s645 = scalar_lea.vmem %s11, %s644
        %p646 = pneg %p317
        %p647 = pneg %p314
        %p648 = scmp.lt.s32.totalorder %s30, 1
        %s649 = scalar_select %p648, %s30, 1
        %s650 = smul.addr %s649, 4
        %s651 = smul.addr %s650, 8
        %s652 = scalar_lea.vmem %s12, %s651
        %p653 = pneg %p343
        %p654 = pneg %p340
        %p655 = scmp.lt.s32.totalorder %s30, 1
        %s656 = scalar_select %p655, %s30, 1
        %s657 = smul.addr %s656, 8
        %s658 = smul.addr %s657, 8
        %s659 = scalar_lea.vmem %s13, %s658
        %p660 = pneg %p369
        %p661 = pneg %p366
        %p662 = pneg %p390
        %p663 = pneg %p387
        %p664 = pneg %p411
        %p665 = pneg %p408
        %p666 = pneg %p437
        %p667 = pneg %p434
        %p668 = scmp.lt.s32.totalorder %s30, 1
        %s669 = scalar_select %p668, %s30, 1
        %s670 = smul.addr %s669, 8
        %s671 = smul.addr %s670, 8
        %s672 = scalar_lea.vmem %s16, %s671
        %p673 = pneg %p463
        %p674 = pneg %p460
        %p675 = scmp.lt.s32.totalorder %s30, 1
        %s676 = scalar_select %p675, %s30, 1
        %s677 = smul.addr %s676, 8
        %s678 = smul.addr %s677, 8
        %s679 = scalar_lea.vmem %s17, %s678
        %p680 = scmp.lt.s32.totalorder %s30, 1
        %s681 = scalar_select %p680, %s30, 1
        %s682 = smul.addr %s681, 16
        %s683 = smul.addr %s682, 8
        %s684 = scalar_lea.vmem %s4, %s683
        %p685 = scmp.lt.s32.totalorder %s30, 1
        %s686 = scalar_select %p685, %s30, 1
        %s687 = smul.addr %s686, 16
        %s688 = smul.addr %s687, 8
        %s689 = scalar_lea.vmem %s5, %s688
        %p690 = scmp.lt.s32.totalorder %s30, 1
        %s691 = scalar_select %p690, %s30, 1
        %s692 = smul.addr %s691, 16
        %s693 = smul.addr %s692, 8
        %s694 = scalar_lea.vmem %s6, %s693
        %p695 = scmp.lt.s32.totalorder %s30, 1
        %s696 = scalar_select %p695, %s30, 1
        %s697 = smul.addr %s696, 4
        %s698 = smul.addr %s697, 8
        %s699 = scalar_lea.vmem %s7, %s698
        %p700 = scmp.lt.s32.totalorder %s30, 1
        %s701 = scalar_select %p700, %s30, 1
        %s702 = smul.addr %s701, 16
        %s703 = smul.addr %s702, 8
        %s704 = scalar_lea.vmem %s8, %s703
        %p705 = scmp.lt.s32.totalorder %s30, 1
        %s706 = scalar_select %p705, %s30, 1
        %s707 = smul.addr %s706, 16
        %s708 = smul.addr %s707, 8
        %s709 = scalar_lea.vmem %s9, %s708
        %p710 = scmp.lt.s32.totalorder %s30, 1
        %s711 = scalar_select %p710, %s30, 1
        %s712 = smul.addr %s711, 16
        %s713 = smul.addr %s712, 8
        %s714 = scalar_lea.vmem %s10, %s713
        %p715 = scmp.lt.s32.totalorder %s30, 1
        %s716 = scalar_select %p715, %s30, 1
        %s717 = smul.addr %s716, 4
        %s718 = smul.addr %s717, 8
        %s719 = scalar_lea.vmem %s11, %s718
        %p720 = scmp.lt.s32.totalorder %s30, 1
        %s721 = scalar_select %p720, %s30, 1
        %s722 = smul.addr %s721, 4
        %s723 = smul.addr %s722, 8
        %s724 = scalar_lea.vmem %s12, %s723
        %p725 = scmp.lt.s32.totalorder %s30, 1
        %s726 = scalar_select %p725, %s30, 1
        %s727 = smul.addr %s726, 8
        %s728 = smul.addr %s727, 8
        %s729 = scalar_lea.vmem %s13, %s728
        %p730 = scmp.lt.s32.totalorder %s30, 1
        %s731 = scalar_select %p730, %s30, 1
        %s732 = smul.addr %s731, 8
        %s733 = smul.addr %s732, 8
        %s734 = scalar_lea.vmem %s16, %s733
        %p735 = scmp.lt.s32.totalorder %s30, 1
        %s736 = scalar_select %p735, %s30, 1
        %s737 = smul.addr %s736, 8
        %s738 = smul.addr %s737, 8
        %s739 = scalar_lea.vmem %s17, %s738
        %p740 = scmp.eq.s32.totalorder %s30, 0
        // Predicated region
        $region81: #{transformer_forward.3} parent=79 // pred_check
          %p741 = pneg %p740
        $region82: #{transformer_forward.3} parent=79 // pred_check_branch
          %743 = sbr.rel (%p741) target = $region84
        $region83: #{transformer_forward.3} parent=79 // pred_region
          %v744 = vld [vmem:[%s0] sm:$0xff]
          %v745 = vld [vmem:[%s0 + $0x8] sm:$0xff]
          %vm746 = vcmask 261120
          %747 = vst.msk [vmem:[#allocation2] sm:$0xff] %vm746, %v744
          %748 = vst.msk [vmem:[#allocation2 + $0x8] sm:$0xff] %vm746, %v745
        $region84: #{transformer_forward.3} parent=79 // pred_fallthru
          _
        %v749 = vld [vmem:[#allocation2] sm:$0xff]
        %v750 = vld [vmem:[#allocation2 + $0x8] sm:$0xff]
        %v751 = vld [vmem:[%s1] sm:$0xff]
        %v752 = vld [vmem:[%s1 + $0x8] sm:$0xff]
        %v753 = vlaneseq
        %v754 = vshrl.u32 %v753, 7
        %v755 = vlaneseq
        %v756 = vand.u32 %v755, 127
        %v757 = vld [vmem:[%s2] sm:$0x3]
        %v760 = vunpack.c.l.s4 1966171168
        %v761 = vunpack.c.0.s8 %v760
        %v762 = vlaneseq
        %v763 = vshrl.u32 %v762, 7
        %v764 = vsub.s32 %v761, %v763
        %v765 = vrot.slane %v757, %v764
        %v766 = vcombine.high %v765, %v765
        %v768 = vunpack.c.l.s4 1966171168
        %v769 = vunpack.c.0.s8 %v768
        %v770 = vlaneseq
        %v771 = vshrl.u32 %v770, 7
        %v772 = vsub.s32 %v769, %v771
        %v773 = vrot.slane %v765, %v772
        %v775 = vunpack.c.l.s4 1966171168
        %v776 = vunpack.c.0.s8 %v775
        %v777 = vlaneseq
        %v778 = vshrl.u32 %v777, 7
        %v779 = vsub.s32 %v776, %v778
        %v780 = vrot.slane %v766, %v779
        %vm783 = vcmp.gt.f32.partialorder %v773, 0.5
        %vm784 = vcmp.gt.f32.partialorder %v780, 0.5
        %vm785 = vcmp.gt.s32.totalorder %v756, %v754
        %v786 = vsel %vm783, 1, 0
        %v787 = vsel %vm784, 1, 0
        %v788 = vlaneseq
        %v789 = vshrl.u32 %v788, 7
        %v790 = vsub.s32 0, %v789
        %v791 = vrot.slane %v786, %v790
        %v792 = vlaneseq
        %v793 = vshrl.u32 %v792, 7
        %v794 = vsub.s32 0, %v793
        %v795 = vrot.slane %v787, %v794
        %vm796 = vcmp.eq.s32.totalorder %v791, 1
        %vm797 = vcmp.eq.s32.totalorder %v795, 1
        %v798 = vsel %vm785, 1, 0
        %vm799 = vcmp.eq.s32.totalorder %v798, 1
        %vm800 = vmor %vm796, %vm799
        %vm801 = vmor %vm797, %vm799
        %v802 = vld [vmem:[%s3] sm:$0x3]
        %v805 = vunpack.c.l.s4 1966171168
        %v806 = vunpack.c.0.s8 %v805
        %v807 = vlaneseq
        %v808 = vshrl.u32 %v807, 7
        %v809 = vsub.s32 %v806, %v808
        %v810 = vrot.slane %v802, %v809
        %v811 = vcombine.high %v810, %v810
        %v813 = vunpack.c.l.s4 1966171168
        %v814 = vunpack.c.0.s8 %v813
        %v815 = vlaneseq
        %v816 = vshrl.u32 %v815, 7
        %v817 = vsub.s32 %v814, %v816
        %v818 = vrot.slane %v810, %v817
        %v820 = vunpack.c.l.s4 1966171168
        %v821 = vunpack.c.0.s8 %v820
        %v822 = vlaneseq
        %v823 = vshrl.u32 %v822, 7
        %v824 = vsub.s32 %v821, %v823
        %v825 = vrot.slane %v811, %v824
        %vm828 = vcmp.gt.f32.partialorder %v818, 0.5
        %vm829 = vcmp.gt.f32.partialorder %v825, 0.5
        %v830 = vld [vmem:[%s684] sm:$0xff]
        %v831 = vld [vmem:[%s684 + $0x8] sm:$0xff]
        %v832 = vld [vmem:[%s684 + $0x10] sm:$0xff]
        %v833 = vld [vmem:[%s684 + $0x18] sm:$0xff]
        %v834 = vld [vmem:[%s684 + $0x20] sm:$0xff]
        %v835 = vld [vmem:[%s684 + $0x28] sm:$0xff]
        %v836 = vld [vmem:[%s684 + $0x30] sm:$0xff]
        %v837 = vld [vmem:[%s684 + $0x38] sm:$0xff]
        %v838 = vld [vmem:[%s684 + $0x40] sm:$0xff]
        %v839 = vld [vmem:[%s684 + $0x48] sm:$0xff]
        %v840 = vld [vmem:[%s684 + $0x50] sm:$0xff]
        %v841 = vld [vmem:[%s684 + $0x58] sm:$0xff]
        %v842 = vld [vmem:[%s684 + $0x60] sm:$0xff]
        %v843 = vld [vmem:[%s684 + $0x68] sm:$0xff]
        %v844 = vld [vmem:[%s684 + $0x70] sm:$0xff]
        %v845 = vld [vmem:[%s684 + $0x78] sm:$0xff]
        %v846 = vld [vmem:[%s689] sm:$0xff]
        %v847 = vld [vmem:[%s689 + $0x8] sm:$0xff]
        %v848 = vld [vmem:[%s689 + $0x10] sm:$0xff]
        %v849 = vld [vmem:[%s689 + $0x18] sm:$0xff]
        %v850 = vld [vmem:[%s689 + $0x20] sm:$0xff]
        %v851 = vld [vmem:[%s689 + $0x28] sm:$0xff]
        %v852 = vld [vmem:[%s689 + $0x30] sm:$0xff]
        %v853 = vld [vmem:[%s689 + $0x38] sm:$0xff]
        %v854 = vld [vmem:[%s689 + $0x40] sm:$0xff]
        %v855 = vld [vmem:[%s689 + $0x48] sm:$0xff]
        %v856 = vld [vmem:[%s689 + $0x50] sm:$0xff]
        %v857 = vld [vmem:[%s689 + $0x58] sm:$0xff]
        %v858 = vld [vmem:[%s689 + $0x60] sm:$0xff]
        %v859 = vld [vmem:[%s689 + $0x68] sm:$0xff]
        %v860 = vld [vmem:[%s689 + $0x70] sm:$0xff]
        %v861 = vld [vmem:[%s689 + $0x78] sm:$0xff]
        %v862 = vld [vmem:[%s694] sm:$0xff]
        %v863 = vld [vmem:[%s694 + $0x8] sm:$0xff]
        %v864 = vld [vmem:[%s694 + $0x10] sm:$0xff]
        %v865 = vld [vmem:[%s694 + $0x18] sm:$0xff]
        %v866 = vld [vmem:[%s694 + $0x20] sm:$0xff]
        %v867 = vld [vmem:[%s694 + $0x28] sm:$0xff]
        %v868 = vld [vmem:[%s694 + $0x30] sm:$0xff]
        %v869 = vld [vmem:[%s694 + $0x38] sm:$0xff]
        %v870 = vld [vmem:[%s694 + $0x40] sm:$0xff]
        %v871 = vld [vmem:[%s694 + $0x48] sm:$0xff]
        %v872 = vld [vmem:[%s694 + $0x50] sm:$0xff]
        %v873 = vld [vmem:[%s694 + $0x58] sm:$0xff]
        %v874 = vld [vmem:[%s694 + $0x60] sm:$0xff]
        %v875 = vld [vmem:[%s694 + $0x68] sm:$0xff]
        %v876 = vld [vmem:[%s694 + $0x70] sm:$0xff]
        %v877 = vld [vmem:[%s694 + $0x78] sm:$0xff]
        %v878 = vld [vmem:[%s699] sm:$0xff]
        %v879 = vld [vmem:[%s699 + $0x8] sm:$0xff]
        %v880 = vld [vmem:[%s699 + $0x10] sm:$0xff]
        %v881 = vld [vmem:[%s699 + $0x18] sm:$0xff]
        %vm882 = vcmask 261120
        %v884 = vsel %vm882, %v749, 0
        %v887 = vsel %vm882, %v750, 0
        %889 = vmatprep.subr.mxu0 0.0
        %890 = vmatpush1.msra.mxu0 0.0
        %891 = vmatprep.subr.mxu0 0.0
        %892 = vmatpush1.msra.mxu0 0.0
        %893 = vmatprep.subr.mxu0 0.0
        %894 = vmatpush1.msra.mxu0 0.0
        %895 = vmatprep.subr.mxu0 0.0
        %896 = vmatpush1.msra.mxu0 0.0
        %897 = vmatprep.subr.mxu0 0.0
        %898 = vmatpush1.msra.mxu0 0.0
        %899 = vmatprep.subr.mxu0 0.0
        %900 = vmatpush1.msra.mxu0 0.0
        %901 = vmatprep.subr.mxu0 0.0
        %902 = vmatpush1.msra.mxu0 0.0
        %903 = vmatprep.subr.mxu0 0.0
        %904 = vmatpush1.msra.mxu0 0.0
        %905 = vmatprep.subr.mxu0 0.0
        %906 = vmatpush1.msra.mxu0 0.0
        %907 = vmatprep.subr.mxu0 0.0
        %908 = vmatpush1.msra.mxu0 0.0
        %909 = vmatprep.subr.mxu0 0.0
        %910 = vmatpush1.msra.mxu0 0.0
        %911 = vmatprep.subr.mxu0 0.0
        %912 = vmatpush1.msra.mxu0 0.0
        %913 = vmatprep.subr.mxu0 0.0
        %914 = vmatpush1.msra.mxu0 %v833
        %915 = vmatprep.subr.mxu0 0.0
        %916 = vmatpush1.msra.mxu0 %v832
        %917 = vmatprep.subr.mxu0 0.0
        %918 = vmatpush1.msra.mxu0 %v831
        %919 = vmatprep.subr.mxu0 0.0
        %920 = vmatpush1.msra.mxu0 %v830
        %921 = vmatprep.subr.mxu0 0.0
        %922 = vmatpush2.msra.mxu0 0.0
        %923 = vmatprep.subr.mxu0 0.0
        %924 = vmatpush2.msra.mxu0 0.0
        %925 = vmatprep.subr.mxu0 0.0
        %926 = vmatpush2.msra.mxu0 0.0
        %927 = vmatprep.subr.mxu0 0.0
        %928 = vmatpush2.msra.mxu0 0.0
        %929 = vmatprep.subr.mxu0 0.0
        %930 = vmatpush2.msra.mxu0 0.0
        %931 = vmatprep.subr.mxu0 0.0
        %932 = vmatpush2.msra.mxu0 0.0
        %933 = vmatprep.subr.mxu0 0.0
        %934 = vmatpush2.msra.mxu0 0.0
        %935 = vmatprep.subr.mxu0 0.0
        %936 = vmatpush2.msra.mxu0 0.0
        %937 = vmatprep.subr.mxu0 0.0
        %938 = vmatpush2.msra.mxu0 0.0
        %939 = vmatprep.subr.mxu0 0.0
        %940 = vmatpush2.msra.mxu0 0.0
        %941 = vmatprep.subr.mxu0 0.0
        %942 = vmatpush2.msra.mxu0 0.0
        %943 = vmatprep.subr.mxu0 0.0
        %944 = vmatpush2.msra.mxu0 0.0
        %945 = vmatprep.subr.mxu0 0.0
        %946 = vmatpush2.msra.mxu0 0.0
        %947 = vmatprep.subr.mxu0 0.0
        %948 = vmatpush2.msra.mxu0 0.0
        %949 = vmatprep.subr.mxu0 0.0
        %950 = vmatpush2.msra.mxu0 0.0
        %951 = vmatprep.subr.mxu0 0.0
        %952 = vmatpush2.msra.mxu0 0.0
        %953 = vmatprep.mubr.f32.mxu0 0.0
        %954 = vmatmul.mubr.f32.gmra.mxu0 %v884
        %v955 = vpop.f32.mrf.mxu0
        %v956 = vadd.f32 0.0, %v955
        %v957 = vpop.f32.mrf.mxu0
        %958 = vmatprep.mubr.f32.mxu0 0.0
        %959 = vmatmul.mubr.f32.gmra.mxu0 %v887
        %v960 = vpop.f32.mrf.mxu0
        %v961 = vadd.f32 0.0, %v960
        %v962 = vpop.f32.mrf.mxu0
        %963 = vdwg.mxu0
        %964 = vmatprep.subr.mxu0 0.0
        %965 = vmatpush1.msra.mxu0 0.0
        %966 = vmatprep.subr.mxu0 0.0
        %967 = vmatpush1.msra.mxu0 0.0
        %968 = vmatprep.subr.mxu0 0.0
        %969 = vmatpush1.msra.mxu0 0.0
        %970 = vmatprep.subr.mxu0 0.0
        %971 = vmatpush1.msra.mxu0 0.0
        %972 = vmatprep.subr.mxu0 0.0
        %973 = vmatpush1.msra.mxu0 0.0
        %974 = vmatprep.subr.mxu0 0.0
        %975 = vmatpush1.msra.mxu0 0.0
        %976 = vmatprep.subr.mxu0 0.0
        %977 = vmatpush1.msra.mxu0 0.0
        %978 = vmatprep.subr.mxu0 0.0
        %979 = vmatpush1.msra.mxu0 0.0
        %980 = vmatprep.subr.mxu0 0.0
        %981 = vmatpush1.msra.mxu0 0.0
        %982 = vmatprep.subr.mxu0 0.0
        %983 = vmatpush1.msra.mxu0 0.0
        %984 = vmatprep.subr.mxu0 0.0
        %985 = vmatpush1.msra.mxu0 0.0
        %986 = vmatprep.subr.mxu0 0.0
        %987 = vmatpush1.msra.mxu0 0.0
        %988 = vmatprep.subr.mxu0 0.0
        %989 = vmatpush1.msra.mxu0 %v849
        %990 = vmatprep.subr.mxu0 0.0
        %991 = vmatpush1.msra.mxu0 %v848
        %992 = vmatprep.subr.mxu0 0.0
        %993 = vmatpush1.msra.mxu0 %v847
        %994 = vmatprep.subr.mxu0 0.0
        %995 = vmatpush1.msra.mxu0 %v846
        %996 = vmatprep.subr.mxu0 0.0
        %997 = vmatpush2.msra.mxu0 0.0
        %998 = vmatprep.subr.mxu0 0.0
        %999 = vmatpush2.msra.mxu0 0.0
        %1000 = vmatprep.subr.mxu0 0.0
        %1001 = vmatpush2.msra.mxu0 0.0
        %1002 = vmatprep.subr.mxu0 0.0
        %1003 = vmatpush2.msra.mxu0 0.0
        %1004 = vmatprep.subr.mxu0 0.0
        %1005 = vmatpush2.msra.mxu0 0.0
        %1006 = vmatprep.subr.mxu0 0.0
        %1007 = vmatpush2.msra.mxu0 0.0
        %1008 = vmatprep.subr.mxu0 0.0
        %1009 = vmatpush2.msra.mxu0 0.0
        %1010 = vmatprep.subr.mxu0 0.0
        %1011 = vmatpush2.msra.mxu0 0.0
        %1012 = vmatprep.subr.mxu0 0.0
        %1013 = vmatpush2.msra.mxu0 0.0
        %1014 = vmatprep.subr.mxu0 0.0
        %1015 = vmatpush2.msra.mxu0 0.0
        %1016 = vmatprep.subr.mxu0 0.0
        %1017 = vmatpush2.msra.mxu0 0.0
        %1018 = vmatprep.subr.mxu0 0.0
        %1019 = vmatpush2.msra.mxu0 0.0
        %1020 = vmatprep.subr.mxu0 0.0
        %1021 = vmatpush2.msra.mxu0 0.0
        %1022 = vmatprep.subr.mxu0 0.0
        %1023 = vmatpush2.msra.mxu0 0.0
        %1024 = vmatprep.subr.mxu0 0.0
        %1025 = vmatpush2.msra.mxu0 0.0
        %1026 = vmatprep.subr.mxu0 0.0
        %1027 = vmatpush2.msra.mxu0 0.0
        %1028 = vmatprep.mubr.f32.mxu0 0.0
        %1029 = vmatmul.mubr.f32.gmra.mxu0 %v884
        %v1030 = vpop.f32.mrf.mxu0
        %v1031 = vadd.f32 0.0, %v1030
        %v1032 = vpop.f32.mrf.mxu0
        %1033 = vmatprep.mubr.f32.mxu0 0.0
        %1034 = vmatmul.mubr.f32.gmra.mxu0 %v887
        %v1035 = vpop.f32.mrf.mxu0
        %v1036 = vadd.f32 0.0, %v1035
        %v1037 = vpop.f32.mrf.mxu0
        %1038 = vdwg.mxu0
        %1039 = vmatprep.subr.mxu0 0.0
        %1040 = vmatpush1.msra.mxu0 0.0
        %1041 = vmatprep.subr.mxu0 0.0
        %1042 = vmatpush1.msra.mxu0 0.0
        %1043 = vmatprep.subr.mxu0 0.0
        %1044 = vmatpush1.msra.mxu0 0.0
        %1045 = vmatprep.subr.mxu0 0.0
        %1046 = vmatpush1.msra.mxu0 0.0
        %1047 = vmatprep.subr.mxu0 0.0
        %1048 = vmatpush1.msra.mxu0 0.0
        %1049 = vmatprep.subr.mxu0 0.0
        %1050 = vmatpush1.msra.mxu0 0.0
        %1051 = vmatprep.subr.mxu0 0.0
        %1052 = vmatpush1.msra.mxu0 0.0
        %1053 = vmatprep.subr.mxu0 0.0
        %1054 = vmatpush1.msra.mxu0 0.0
        %1055 = vmatprep.subr.mxu0 0.0
        %1056 = vmatpush1.msra.mxu0 0.0
        %1057 = vmatprep.subr.mxu0 0.0
        %1058 = vmatpush1.msra.mxu0 0.0
        %1059 = vmatprep.subr.mxu0 0.0
        %1060 = vmatpush1.msra.mxu0 0.0
        %1061 = vmatprep.subr.mxu0 0.0
        %1062 = vmatpush1.msra.mxu0 0.0
        %1063 = vmatprep.subr.mxu0 0.0
        %1064 = vmatpush1.msra.mxu0 %v865
        %1065 = vmatprep.subr.mxu0 0.0
        %1066 = vmatpush1.msra.mxu0 %v864
        %1067 = vmatprep.subr.mxu0 0.0
        %1068 = vmatpush1.msra.mxu0 %v863
        %1069 = vmatprep.subr.mxu0 0.0
        %1070 = vmatpush1.msra.mxu0 %v862
        %1071 = vmatprep.subr.mxu0 0.0
        %1072 = vmatpush2.msra.mxu0 0.0
        %1073 = vmatprep.subr.mxu0 0.0
        %1074 = vmatpush2.msra.mxu0 0.0
        %1075 = vmatprep.subr.mxu0 0.0
        %1076 = vmatpush2.msra.mxu0 0.0
        %1077 = vmatprep.subr.mxu0 0.0
        %1078 = vmatpush2.msra.mxu0 0.0
        %1079 = vmatprep.subr.mxu0 0.0
        %1080 = vmatpush2.msra.mxu0 0.0
        %1081 = vmatprep.subr.mxu0 0.0
        %1082 = vmatpush2.msra.mxu0 0.0
        %1083 = vmatprep.subr.mxu0 0.0
        %1084 = vmatpush2.msra.mxu0 0.0
        %1085 = vmatprep.subr.mxu0 0.0
        %1086 = vmatpush2.msra.mxu0 0.0
        %1087 = vmatprep.subr.mxu0 0.0
        %1088 = vmatpush2.msra.mxu0 0.0
        %1089 = vmatprep.subr.mxu0 0.0
        %1090 = vmatpush2.msra.mxu0 0.0
        %1091 = vmatprep.subr.mxu0 0.0
        %1092 = vmatpush2.msra.mxu0 0.0
        %1093 = vmatprep.subr.mxu0 0.0
        %1094 = vmatpush2.msra.mxu0 0.0
        %1095 = vmatprep.subr.mxu0 0.0
        %1096 = vmatpush2.msra.mxu0 0.0
        %1097 = vmatprep.subr.mxu0 0.0
        %1098 = vmatpush2.msra.mxu0 0.0
        %1099 = vmatprep.subr.mxu0 0.0
        %1100 = vmatpush2.msra.mxu0 0.0
        %1101 = vmatprep.subr.mxu0 0.0
        %1102 = vmatpush2.msra.mxu0 0.0
        %1103 = vmatprep.mubr.f32.mxu0 0.0
        %1104 = vmatmul.mubr.f32.gmra.mxu0 %v884
        %v1105 = vpop.f32.mrf.mxu0
        %v1106 = vadd.f32 0.0, %v1105
        %v1107 = vpop.f32.mrf.mxu0
        %1108 = vmatprep.mubr.f32.mxu0 0.0
        %1109 = vmatmul.mubr.f32.gmra.mxu0 %v887
        %v1110 = vpop.f32.mrf.mxu0
        %v1111 = vadd.f32 0.0, %v1110
        %v1112 = vpop.f32.mrf.mxu0
        %1113 = vdwg.mxu0
        %vm1114 = vcmask 64512
        %v1116 = vsel %vm1114, %v956, 0
        %v1119 = vsel %vm1114, %v1031, 0
        %1121 = vmatprep.subr.mxu0 0.0
        %1122 = vmatpush1.xpose.msra.mxu0 0.0
        %1123 = vmatprep.subr.mxu0 0.0
        %1124 = vmatpush1.xpose.msra.mxu0 0.0
        %1125 = vmatprep.subr.mxu0 0.0
        %1126 = vmatpush1.xpose.msra.mxu0 0.0
        %1127 = vmatprep.subr.mxu0 0.0
        %1128 = vmatpush1.xpose.msra.mxu0 0.0
        %1129 = vmatprep.subr.mxu0 0.0
        %1130 = vmatpush1.xpose.msra.mxu0 0.0
        %1131 = vmatprep.subr.mxu0 0.0
        %1132 = vmatpush1.xpose.msra.mxu0 0.0
        %1133 = vmatprep.subr.mxu0 0.0
        %1134 = vmatpush1.xpose.msra.mxu0 0.0
        %1135 = vmatprep.subr.mxu0 0.0
        %1136 = vmatpush1.xpose.msra.mxu0 0.0
        %1137 = vmatprep.subr.mxu0 0.0
        %1138 = vmatpush1.xpose.msra.mxu0 0.0
        %1139 = vmatprep.subr.mxu0 0.0
        %1140 = vmatpush1.xpose.msra.mxu0 0.0
        %1141 = vmatprep.subr.mxu0 0.0
        %1142 = vmatpush1.xpose.msra.mxu0 0.0
        %1143 = vmatprep.subr.mxu0 0.0
        %1144 = vmatpush1.xpose.msra.mxu0 0.0
        %1145 = vmatprep.subr.mxu0 0.0
        %1146 = vmatpush1.xpose.msra.mxu0 0.0
        %1147 = vmatprep.subr.mxu0 0.0
        %1148 = vmatpush1.xpose.msra.mxu0 0.0
        %1149 = vmatprep.subr.mxu0 0.0
        %1150 = vmatpush1.xpose.msra.mxu0 0.0
        %1151 = vmatprep.subr.mxu0 0.0
        %1152 = vmatpush1.xpose.msra.mxu0 %v1119
        %1153 = vmatprep.subr.mxu0 0.0
        %1154 = vmatpush2.xpose.msra.mxu0 0.0
        %1155 = vmatprep.subr.mxu0 0.0
        %1156 = vmatpush2.xpose.msra.mxu0 0.0
        %1157 = vmatprep.subr.mxu0 0.0
        %1158 = vmatpush2.xpose.msra.mxu0 0.0
        %1159 = vmatprep.subr.mxu0 0.0
        %1160 = vmatpush2.xpose.msra.mxu0 0.0
        %1161 = vmatprep.subr.mxu0 0.0
        %1162 = vmatpush2.xpose.msra.mxu0 0.0
        %1163 = vmatprep.subr.mxu0 0.0
        %1164 = vmatpush2.xpose.msra.mxu0 0.0
        %1165 = vmatprep.subr.mxu0 0.0
        %1166 = vmatpush2.xpose.msra.mxu0 0.0
        %1167 = vmatprep.subr.mxu0 0.0
        %1168 = vmatpush2.xpose.msra.mxu0 0.0
        %1169 = vmatprep.subr.mxu0 0.0
        %1170 = vmatpush2.xpose.msra.mxu0 0.0
        %1171 = vmatprep.subr.mxu0 0.0
        %1172 = vmatpush2.xpose.msra.mxu0 0.0
        %1173 = vmatprep.subr.mxu0 0.0
        %1174 = vmatpush2.xpose.msra.mxu0 0.0
        %1175 = vmatprep.subr.mxu0 0.0
        %1176 = vmatpush2.xpose.msra.mxu0 0.0
        %1177 = vmatprep.subr.mxu0 0.0
        %1178 = vmatpush2.xpose.msra.mxu0 0.0
        %1179 = vmatprep.subr.mxu0 0.0
        %1180 = vmatpush2.xpose.msra.mxu0 0.0
        %1181 = vmatprep.subr.mxu0 0.0
        %1182 = vmatpush2.xpose.msra.mxu0 0.0
        %1183 = vmatprep.subr.mxu0 0.0
        %1184 = vmatpush2.xpose.msra.mxu0 0.0
        %1185 = vmatprep.mubr.f32.mxu0 0.0
        %1186 = vmatmul.mubr.f32.gmra.mxu0 %v1116
        %v1187 = vpop.f32.mrf.mxu0
        %v1188 = vadd.f32 0.0, %v1187
        %v1189 = vpop.f32.mrf.mxu0
        %1190 = vdwg.mxu0
        %v1192 = vsel %vm1114, %v961, 0
        %v1195 = vsel %vm1114, %v1036, 0
        %1197 = vmatprep.subr.mxu0 0.0
        %1198 = vmatpush1.xpose.msra.mxu0 0.0
        %1199 = vmatprep.subr.mxu0 0.0
        %1200 = vmatpush1.xpose.msra.mxu0 0.0
        %1201 = vmatprep.subr.mxu0 0.0
        %1202 = vmatpush1.xpose.msra.mxu0 0.0
        %1203 = vmatprep.subr.mxu0 0.0
        %1204 = vmatpush1.xpose.msra.mxu0 0.0
        %1205 = vmatprep.subr.mxu0 0.0
        %1206 = vmatpush1.xpose.msra.mxu0 0.0
        %1207 = vmatprep.subr.mxu0 0.0
        %1208 = vmatpush1.xpose.msra.mxu0 0.0
        %1209 = vmatprep.subr.mxu0 0.0
        %1210 = vmatpush1.xpose.msra.mxu0 0.0
        %1211 = vmatprep.subr.mxu0 0.0
        %1212 = vmatpush1.xpose.msra.mxu0 0.0
        %1213 = vmatprep.subr.mxu0 0.0
        %1214 = vmatpush1.xpose.msra.mxu0 0.0
        %1215 = vmatprep.subr.mxu0 0.0
        %1216 = vmatpush1.xpose.msra.mxu0 0.0
        %1217 = vmatprep.subr.mxu0 0.0
        %1218 = vmatpush1.xpose.msra.mxu0 0.0
        %1219 = vmatprep.subr.mxu0 0.0
        %1220 = vmatpush1.xpose.msra.mxu0 0.0
        %1221 = vmatprep.subr.mxu0 0.0
        %1222 = vmatpush1.xpose.msra.mxu0 0.0
        %1223 = vmatprep.subr.mxu0 0.0
        %1224 = vmatpush1.xpose.msra.mxu0 0.0
        %1225 = vmatprep.subr.mxu0 0.0
        %1226 = vmatpush1.xpose.msra.mxu0 0.0
        %1227 = vmatprep.subr.mxu0 0.0
        %1228 = vmatpush1.xpose.msra.mxu0 %v1195
        %1229 = vmatprep.subr.mxu0 0.0
        %1230 = vmatpush2.xpose.msra.mxu0 0.0
        %1231 = vmatprep.subr.mxu0 0.0
        %1232 = vmatpush2.xpose.msra.mxu0 0.0
        %1233 = vmatprep.subr.mxu0 0.0
        %1234 = vmatpush2.xpose.msra.mxu0 0.0
        %1235 = vmatprep.subr.mxu0 0.0
        %1236 = vmatpush2.xpose.msra.mxu0 0.0
        %1237 = vmatprep.subr.mxu0 0.0
        %1238 = vmatpush2.xpose.msra.mxu0 0.0
        %1239 = vmatprep.subr.mxu0 0.0
        %1240 = vmatpush2.xpose.msra.mxu0 0.0
        %1241 = vmatprep.subr.mxu0 0.0
        %1242 = vmatpush2.xpose.msra.mxu0 0.0
        %1243 = vmatprep.subr.mxu0 0.0
        %1244 = vmatpush2.xpose.msra.mxu0 0.0
        %1245 = vmatprep.subr.mxu0 0.0
        %1246 = vmatpush2.xpose.msra.mxu0 0.0
        %1247 = vmatprep.subr.mxu0 0.0
        %1248 = vmatpush2.xpose.msra.mxu0 0.0
        %1249 = vmatprep.subr.mxu0 0.0
        %1250 = vmatpush2.xpose.msra.mxu0 0.0
        %1251 = vmatprep.subr.mxu0 0.0
        %1252 = vmatpush2.xpose.msra.mxu0 0.0
        %1253 = vmatprep.subr.mxu0 0.0
        %1254 = vmatpush2.xpose.msra.mxu0 0.0
        %1255 = vmatprep.subr.mxu0 0.0
        %1256 = vmatpush2.xpose.msra.mxu0 0.0
        %1257 = vmatprep.subr.mxu0 0.0
        %1258 = vmatpush2.xpose.msra.mxu0 0.0
        %1259 = vmatprep.subr.mxu0 0.0
        %1260 = vmatpush2.xpose.msra.mxu0 0.0
        %1261 = vmatprep.mubr.f32.mxu0 0.0
        %1262 = vmatmul.mubr.f32.gmra.mxu0 %v1192
        %v1263 = vpop.f32.mrf.mxu0
        %v1264 = vadd.f32 0.0, %v1263
        %v1265 = vpop.f32.mrf.mxu0
        %1266 = vdwg.mxu0
        %v1267 = vmul.f32 %v1188, 0.35355338
        %v1268 = vmul.f32 %v1264, 0.35355338
        %v1269 = vsel %vm800, -1e+09, %v1267
        %v1270 = vsel %vm801, -1e+09, %v1268
        %v1271 = vsel %vm1114, %v1269, -inf
        %1272 = vmax.xlane.f32.xlu0 %v1271
        %v1273 = vpop.xlane.xlu0 %1272
        %v1274 = vsel %vm1114, %v1270, -inf
        %1275 = vmax.xlane.f32.xlu0 %v1274
        %v1276 = vpop.xlane.xlu0 %1275
        %v1277 = vsub.f32 %v1269, %v1273
        %v1278 = vsub.f32 %v1270, %v1276
        %v1279 = vmul.f32 %v1277, 1.442695
        %v1280 = vpow.pop %v1279
        %v1281 = vmul.f32 %v1278, 1.442695
        %v1282 = vpow.pop %v1281
        %v1283 = vsel %vm1114, %v1280, 0.0
        %1284 = vadd.xlane.f32.xlu0 %v1283
        %v1285 = vpop.xlane.xlu0 %1284
        %v1286 = vsel %vm1114, %v1282, 0.0
        %1287 = vadd.xlane.f32.xlu0 %v1286
        %v1288 = vpop.xlane.xlu0 %1287
        %v1289 = vrcp.pop %v1285
        %v1290 = vrcp.pop %v1288
        %v1291 = vmul.f32 %v1280, %v1289
        %v1292 = vmul.f32 %v1282, %v1290
        %v1294 = vsel %vm1114, %v1291, 0
        %1296 = vmatprep.subr.mxu0 0.0
        %1297 = vmatpush1.msra.mxu0 0.0
        %1298 = vmatprep.subr.mxu0 0.0
        %1299 = vmatpush1.msra.mxu0 0.0
        %1300 = vmatprep.subr.mxu0 0.0
        %1301 = vmatpush1.msra.mxu0 0.0
        %1302 = vmatprep.subr.mxu0 0.0
        %1303 = vmatpush1.msra.mxu0 0.0
        %1304 = vmatprep.subr.mxu0 0.0
        %1305 = vmatpush1.msra.mxu0 0.0
        %1306 = vmatprep.subr.mxu0 0.0
        %1307 = vmatpush1.msra.mxu0 0.0
        %1308 = vmatprep.subr.mxu0 0.0
        %1309 = vmatpush1.msra.mxu0 0.0
        %1310 = vmatprep.subr.mxu0 0.0
        %1311 = vmatpush1.msra.mxu0 0.0
        %1312 = vmatprep.subr.mxu0 0.0
        %1313 = vmatpush1.msra.mxu0 0.0
        %1314 = vmatprep.subr.mxu0 0.0
        %1315 = vmatpush1.msra.mxu0 0.0
        %1316 = vmatprep.subr.mxu0 0.0
        %1317 = vmatpush1.msra.mxu0 0.0
        %1318 = vmatprep.subr.mxu0 0.0
        %1319 = vmatpush1.msra.mxu0 0.0
        %1320 = vmatprep.subr.mxu0 0.0
        %1321 = vmatpush1.msra.mxu0 0.0
        %1322 = vmatprep.subr.mxu0 0.0
        %1323 = vmatpush1.msra.mxu0 0.0
        %1324 = vmatprep.subr.mxu0 0.0
        %1325 = vmatpush1.msra.mxu0 0.0
        %1326 = vmatprep.subr.mxu0 0.0
        %1327 = vmatpush1.msra.mxu0 %v1106
        %1328 = vmatprep.subr.mxu0 0.0
        %1329 = vmatpush2.msra.mxu0 0.0
        %1330 = vmatprep.subr.mxu0 0.0
        %1331 = vmatpush2.msra.mxu0 0.0
        %1332 = vmatprep.subr.mxu0 0.0
        %1333 = vmatpush2.msra.mxu0 0.0
        %1334 = vmatprep.subr.mxu0 0.0
        %1335 = vmatpush2.msra.mxu0 0.0
        %1336 = vmatprep.subr.mxu0 0.0
        %1337 = vmatpush2.msra.mxu0 0.0
        %1338 = vmatprep.subr.mxu0 0.0
        %1339 = vmatpush2.msra.mxu0 0.0
        %1340 = vmatprep.subr.mxu0 0.0
        %1341 = vmatpush2.msra.mxu0 0.0
        %1342 = vmatprep.subr.mxu0 0.0
        %1343 = vmatpush2.msra.mxu0 0.0
        %1344 = vmatprep.subr.mxu0 0.0
        %1345 = vmatpush2.msra.mxu0 0.0
        %1346 = vmatprep.subr.mxu0 0.0
        %1347 = vmatpush2.msra.mxu0 0.0
        %1348 = vmatprep.subr.mxu0 0.0
        %1349 = vmatpush2.msra.mxu0 0.0
        %1350 = vmatprep.subr.mxu0 0.0
        %1351 = vmatpush2.msra.mxu0 0.0
        %1352 = vmatprep.subr.mxu0 0.0
        %1353 = vmatpush2.msra.mxu0 0.0
        %1354 = vmatprep.subr.mxu0 0.0
        %1355 = vmatpush2.msra.mxu0 0.0
        %1356 = vmatprep.subr.mxu0 0.0
        %1357 = vmatpush2.msra.mxu0 0.0
        %1358 = vmatprep.subr.mxu0 0.0
        %1359 = vmatpush2.msra.mxu0 0.0
        %1360 = vmatprep.mubr.f32.mxu0 0.0
        %1361 = vmatmul.mubr.f32.gmra.mxu0 %v1294
        %v1362 = vpop.f32.mrf.mxu0
        %v1363 = vadd.f32 0.0, %v1362
        %v1364 = vpop.f32.mrf.mxu0
        %1365 = vdwg.mxu0
        %v1367 = vsel %vm1114, %v1292, 0
        %1369 = vmatprep.subr.mxu0 0.0
        %1370 = vmatpush1.msra.mxu0 0.0
        %1371 = vmatprep.subr.mxu0 0.0
        %1372 = vmatpush1.msra.mxu0 0.0
        %1373 = vmatprep.subr.mxu0 0.0
        %1374 = vmatpush1.msra.mxu0 0.0
        %1375 = vmatprep.subr.mxu0 0.0
        %1376 = vmatpush1.msra.mxu0 0.0
        %1377 = vmatprep.subr.mxu0 0.0
        %1378 = vmatpush1.msra.mxu0 0.0
        %1379 = vmatprep.subr.mxu0 0.0
        %1380 = vmatpush1.msra.mxu0 0.0
        %1381 = vmatprep.subr.mxu0 0.0
        %1382 = vmatpush1.msra.mxu0 0.0
        %1383 = vmatprep.subr.mxu0 0.0
        %1384 = vmatpush1.msra.mxu0 0.0
        %1385 = vmatprep.subr.mxu0 0.0
        %1386 = vmatpush1.msra.mxu0 0.0
        %1387 = vmatprep.subr.mxu0 0.0
        %1388 = vmatpush1.msra.mxu0 0.0
        %1389 = vmatprep.subr.mxu0 0.0
        %1390 = vmatpush1.msra.mxu0 0.0
        %1391 = vmatprep.subr.mxu0 0.0
        %1392 = vmatpush1.msra.mxu0 0.0
        %1393 = vmatprep.subr.mxu0 0.0
        %1394 = vmatpush1.msra.mxu0 0.0
        %1395 = vmatprep.subr.mxu0 0.0
        %1396 = vmatpush1.msra.mxu0 0.0
        %1397 = vmatprep.subr.mxu0 0.0
        %1398 = vmatpush1.msra.mxu0 0.0
        %1399 = vmatprep.subr.mxu0 0.0
        %1400 = vmatpush1.msra.mxu0 %v1111
        %1401 = vmatprep.subr.mxu0 0.0
        %1402 = vmatpush2.msra.mxu0 0.0
        %1403 = vmatprep.subr.mxu0 0.0
        %1404 = vmatpush2.msra.mxu0 0.0
        %1405 = vmatprep.subr.mxu0 0.0
        %1406 = vmatpush2.msra.mxu0 0.0
        %1407 = vmatprep.subr.mxu0 0.0
        %1408 = vmatpush2.msra.mxu0 0.0
        %1409 = vmatprep.subr.mxu0 0.0
        %1410 = vmatpush2.msra.mxu0 0.0
        %1411 = vmatprep.subr.mxu0 0.0
        %1412 = vmatpush2.msra.mxu0 0.0
        %1413 = vmatprep.subr.mxu0 0.0
        %1414 = vmatpush2.msra.mxu0 0.0
        %1415 = vmatprep.subr.mxu0 0.0
        %1416 = vmatpush2.msra.mxu0 0.0
        %1417 = vmatprep.subr.mxu0 0.0
        %1418 = vmatpush2.msra.mxu0 0.0
        %1419 = vmatprep.subr.mxu0 0.0
        %1420 = vmatpush2.msra.mxu0 0.0
        %1421 = vmatprep.subr.mxu0 0.0
        %1422 = vmatpush2.msra.mxu0 0.0
        %1423 = vmatprep.subr.mxu0 0.0
        %1424 = vmatpush2.msra.mxu0 0.0
        %1425 = vmatprep.subr.mxu0 0.0
        %1426 = vmatpush2.msra.mxu0 0.0
        %1427 = vmatprep.subr.mxu0 0.0
        %1428 = vmatpush2.msra.mxu0 0.0
        %1429 = vmatprep.subr.mxu0 0.0
        %1430 = vmatpush2.msra.mxu0 0.0
        %1431 = vmatprep.subr.mxu0 0.0
        %1432 = vmatpush2.msra.mxu0 0.0
        %1433 = vmatprep.mubr.f32.mxu0 0.0
        %1434 = vmatmul.mubr.f32.gmra.mxu0 %v1367
        %v1435 = vpop.f32.mrf.mxu0
        %v1436 = vadd.f32 0.0, %v1435
        %v1437 = vpop.f32.mrf.mxu0
        %1438 = vdwg.mxu0
        %1439 = vmatprep.subr.mxu0 0.0
        %1440 = vmatpush1.msra.mxu0 0.0
        %1441 = vmatprep.subr.mxu0 0.0
        %1442 = vmatpush1.msra.mxu0 0.0
        %1443 = vmatprep.subr.mxu0 0.0
        %1444 = vmatpush1.msra.mxu0 0.0
        %1445 = vmatprep.subr.mxu0 0.0
        %1446 = vmatpush1.msra.mxu0 0.0
        %1447 = vmatprep.subr.mxu0 0.0
        %1448 = vmatpush1.msra.mxu0 0.0
        %1449 = vmatprep.subr.mxu0 0.0
        %1450 = vmatpush1.msra.mxu0 0.0
        %1451 = vmatprep.subr.mxu0 0.0
        %1452 = vmatpush1.msra.mxu0 0.0
        %1453 = vmatprep.subr.mxu0 0.0
        %1454 = vmatpush1.msra.mxu0 0.0
        %1455 = vmatprep.subr.mxu0 0.0
        %1456 = vmatpush1.msra.mxu0 0.0
        %1457 = vmatprep.subr.mxu0 0.0
        %1458 = vmatpush1.msra.mxu0 0.0
        %1459 = vmatprep.subr.mxu0 0.0
        %1460 = vmatpush1.msra.mxu0 0.0
        %1461 = vmatprep.subr.mxu0 0.0
        %1462 = vmatpush1.msra.mxu0 0.0
        %1463 = vmatprep.subr.mxu0 0.0
        %1464 = vmatpush1.msra.mxu0 %v837
        %1465 = vmatprep.subr.mxu0 0.0
        %1466 = vmatpush1.msra.mxu0 %v836
        %1467 = vmatprep.subr.mxu0 0.0
        %1468 = vmatpush1.msra.mxu0 %v835
        %1469 = vmatprep.subr.mxu0 0.0
        %1470 = vmatpush1.msra.mxu0 %v834
        %1471 = vmatprep.subr.mxu0 0.0
        %1472 = vmatpush2.msra.mxu0 0.0
        %1473 = vmatprep.subr.mxu0 0.0
        %1474 = vmatpush2.msra.mxu0 0.0
        %1475 = vmatprep.subr.mxu0 0.0
        %1476 = vmatpush2.msra.mxu0 0.0
        %1477 = vmatprep.subr.mxu0 0.0
        %1478 = vmatpush2.msra.mxu0 0.0
        %1479 = vmatprep.subr.mxu0 0.0
        %1480 = vmatpush2.msra.mxu0 0.0
        %1481 = vmatprep.subr.mxu0 0.0
        %1482 = vmatpush2.msra.mxu0 0.0
        %1483 = vmatprep.subr.mxu0 0.0
        %1484 = vmatpush2.msra.mxu0 0.0
        %1485 = vmatprep.subr.mxu0 0.0
        %1486 = vmatpush2.msra.mxu0 0.0
        %1487 = vmatprep.subr.mxu0 0.0
        %1488 = vmatpush2.msra.mxu0 0.0
        %1489 = vmatprep.subr.mxu0 0.0
        %1490 = vmatpush2.msra.mxu0 0.0
        %1491 = vmatprep.subr.mxu0 0.0
        %1492 = vmatpush2.msra.mxu0 0.0
        %1493 = vmatprep.subr.mxu0 0.0
        %1494 = vmatpush2.msra.mxu0 0.0
        %1495 = vmatprep.subr.mxu0 0.0
        %1496 = vmatpush2.msra.mxu0 0.0
        %1497 = vmatprep.subr.mxu0 0.0
        %1498 = vmatpush2.msra.mxu0 0.0
        %1499 = vmatprep.subr.mxu0 0.0
        %1500 = vmatpush2.msra.mxu0 0.0
        %1501 = vmatprep.subr.mxu0 0.0
        %1502 = vmatpush2.msra.mxu0 0.0
        %1503 = vmatprep.mubr.f32.mxu0 0.0
        %1504 = vmatmul.mubr.f32.gmra.mxu0 %v884
        %v1505 = vpop.f32.mrf.mxu0
        %v1506 = vadd.f32 0.0, %v1505
        %v1507 = vpop.f32.mrf.mxu0
        %1508 = vmatprep.mubr.f32.mxu0 0.0
        %1509 = vmatmul.mubr.f32.gmra.mxu0 %v887
        %v1510 = vpop.f32.mrf.mxu0
        %v1511 = vadd.f32 0.0, %v1510
        %v1512 = vpop.f32.mrf.mxu0
        %1513 = vdwg.mxu0
        %1514 = vmatprep.subr.mxu0 0.0
        %1515 = vmatpush1.msra.mxu0 0.0
        %1516 = vmatprep.subr.mxu0 0.0
        %1517 = vmatpush1.msra.mxu0 0.0
        %1518 = vmatprep.subr.mxu0 0.0
        %1519 = vmatpush1.msra.mxu0 0.0
        %1520 = vmatprep.subr.mxu0 0.0
        %1521 = vmatpush1.msra.mxu0 0.0
        %1522 = vmatprep.subr.mxu0 0.0
        %1523 = vmatpush1.msra.mxu0 0.0
        %1524 = vmatprep.subr.mxu0 0.0
        %1525 = vmatpush1.msra.mxu0 0.0
        %1526 = vmatprep.subr.mxu0 0.0
        %1527 = vmatpush1.msra.mxu0 0.0
        %1528 = vmatprep.subr.mxu0 0.0
        %1529 = vmatpush1.msra.mxu0 0.0
        %1530 = vmatprep.subr.mxu0 0.0
        %1531 = vmatpush1.msra.mxu0 0.0
        %1532 = vmatprep.subr.mxu0 0.0
        %1533 = vmatpush1.msra.mxu0 0.0
        %1534 = vmatprep.subr.mxu0 0.0
        %1535 = vmatpush1.msra.mxu0 0.0
        %1536 = vmatprep.subr.mxu0 0.0
        %1537 = vmatpush1.msra.mxu0 0.0
        %1538 = vmatprep.subr.mxu0 0.0
        %1539 = vmatpush1.msra.mxu0 %v853
        %1540 = vmatprep.subr.mxu0 0.0
        %1541 = vmatpush1.msra.mxu0 %v852
        %1542 = vmatprep.subr.mxu0 0.0
        %1543 = vmatpush1.msra.mxu0 %v851
        %1544 = vmatprep.subr.mxu0 0.0
        %1545 = vmatpush1.msra.mxu0 %v850
        %1546 = vmatprep.subr.mxu0 0.0
        %1547 = vmatpush2.msra.mxu0 0.0
        %1548 = vmatprep.subr.mxu0 0.0
        %1549 = vmatpush2.msra.mxu0 0.0
        %1550 = vmatprep.subr.mxu0 0.0
        %1551 = vmatpush2.msra.mxu0 0.0
        %1552 = vmatprep.subr.mxu0 0.0
        %1553 = vmatpush2.msra.mxu0 0.0
        %1554 = vmatprep.subr.mxu0 0.0
        %1555 = vmatpush2.msra.mxu0 0.0
        %1556 = vmatprep.subr.mxu0 0.0
        %1557 = vmatpush2.msra.mxu0 0.0
        %1558 = vmatprep.subr.mxu0 0.0
        %1559 = vmatpush2.msra.mxu0 0.0
        %1560 = vmatprep.subr.mxu0 0.0
        %1561 = vmatpush2.msra.mxu0 0.0
        %1562 = vmatprep.subr.mxu0 0.0
        %1563 = vmatpush2.msra.mxu0 0.0
        %1564 = vmatprep.subr.mxu0 0.0
        %1565 = vmatpush2.msra.mxu0 0.0
        %1566 = vmatprep.subr.mxu0 0.0
        %1567 = vmatpush2.msra.mxu0 0.0
        %1568 = vmatprep.subr.mxu0 0.0
        %1569 = vmatpush2.msra.mxu0 0.0
        %1570 = vmatprep.subr.mxu0 0.0
        %1571 = vmatpush2.msra.mxu0 0.0
        %1572 = vmatprep.subr.mxu0 0.0
        %1573 = vmatpush2.msra.mxu0 0.0
        %1574 = vmatprep.subr.mxu0 0.0
        %1575 = vmatpush2.msra.mxu0 0.0
        %1576 = vmatprep.subr.mxu0 0.0
        %1577 = vmatpush2.msra.mxu0 0.0
        %1578 = vmatprep.mubr.f32.mxu0 0.0
        %1579 = vmatmul.mubr.f32.gmra.mxu0 %v884
        %v1580 = vpop.f32.mrf.mxu0
        %v1581 = vadd.f32 0.0, %v1580
        %v1582 = vpop.f32.mrf.mxu0
        %1583 = vmatprep.mubr.f32.mxu0 0.0
        %1584 = vmatmul.mubr.f32.gmra.mxu0 %v887
        %v1585 = vpop.f32.mrf.mxu0
        %v1586 = vadd.f32 0.0, %v1585
        %v1587 = vpop.f32.mrf.mxu0
        %1588 = vdwg.mxu0
        %1589 = vmatprep.subr.mxu0 0.0
        %1590 = vmatpush1.msra.mxu0 0.0
        %1591 = vmatprep.subr.mxu0 0.0
        %1592 = vmatpush1.msra.mxu0 0.0
        %1593 = vmatprep.subr.mxu0 0.0
        %1594 = vmatpush1.msra.mxu0 0.0
        %1595 = vmatprep.subr.mxu0 0.0
        %1596 = vmatpush1.msra.mxu0 0.0
        %1597 = vmatprep.subr.mxu0 0.0
        %1598 = vmatpush1.msra.mxu0 0.0
        %1599 = vmatprep.subr.mxu0 0.0
        %1600 = vmatpush1.msra.mxu0 0.0
        %1601 = vmatprep.subr.mxu0 0.0
        %1602 = vmatpush1.msra.mxu0 0.0
        %1603 = vmatprep.subr.mxu0 0.0
        %1604 = vmatpush1.msra.mxu0 0.0
        %1605 = vmatprep.subr.mxu0 0.0
        %1606 = vmatpush1.msra.mxu0 0.0
        %1607 = vmatprep.subr.mxu0 0.0
        %1608 = vmatpush1.msra.mxu0 0.0
        %1609 = vmatprep.subr.mxu0 0.0
        %1610 = vmatpush1.msra.mxu0 0.0
        %1611 = vmatprep.subr.mxu0 0.0
        %1612 = vmatpush1.msra.mxu0 0.0
        %1613 = vmatprep.subr.mxu0 0.0
        %1614 = vmatpush1.msra.mxu0 %v869
        %1615 = vmatprep.subr.mxu0 0.0
        %1616 = vmatpush1.msra.mxu0 %v868
        %1617 = vmatprep.subr.mxu0 0.0
        %1618 = vmatpush1.msra.mxu0 %v867
        %1619 = vmatprep.subr.mxu0 0.0
        %1620 = vmatpush1.msra.mxu0 %v866
        %1621 = vmatprep.subr.mxu0 0.0
        %1622 = vmatpush2.msra.mxu0 0.0
        %1623 = vmatprep.subr.mxu0 0.0
        %1624 = vmatpush2.msra.mxu0 0.0
        %1625 = vmatprep.subr.mxu0 0.0
        %1626 = vmatpush2.msra.mxu0 0.0
        %1627 = vmatprep.subr.mxu0 0.0
        %1628 = vmatpush2.msra.mxu0 0.0
        %1629 = vmatprep.subr.mxu0 0.0
        %1630 = vmatpush2.msra.mxu0 0.0
        %1631 = vmatprep.subr.mxu0 0.0
        %1632 = vmatpush2.msra.mxu0 0.0
        %1633 = vmatprep.subr.mxu0 0.0
        %1634 = vmatpush2.msra.mxu0 0.0
        %1635 = vmatprep.subr.mxu0 0.0
        %1636 = vmatpush2.msra.mxu0 0.0
        %1637 = vmatprep.subr.mxu0 0.0
        %1638 = vmatpush2.msra.mxu0 0.0
        %1639 = vmatprep.subr.mxu0 0.0
        %1640 = vmatpush2.msra.mxu0 0.0
        %1641 = vmatprep.subr.mxu0 0.0
        %1642 = vmatpush2.msra.mxu0 0.0
        %1643 = vmatprep.subr.mxu0 0.0
        %1644 = vmatpush2.msra.mxu0 0.0
        %1645 = vmatprep.subr.mxu0 0.0
        %1646 = vmatpush2.msra.mxu0 0.0
        %1647 = vmatprep.subr.mxu0 0.0
        %1648 = vmatpush2.msra.mxu0 0.0
        %1649 = vmatprep.subr.mxu0 0.0
        %1650 = vmatpush2.msra.mxu0 0.0
        %1651 = vmatprep.subr.mxu0 0.0
        %1652 = vmatpush2.msra.mxu0 0.0
        %1653 = vmatprep.mubr.f32.mxu0 0.0
        %1654 = vmatmul.mubr.f32.gmra.mxu0 %v884
        %v1655 = vpop.f32.mrf.mxu0
        %v1656 = vadd.f32 0.0, %v1655
        %v1657 = vpop.f32.mrf.mxu0
        %1658 = vmatprep.mubr.f32.mxu0 0.0
        %1659 = vmatmul.mubr.f32.gmra.mxu0 %v887
        %v1660 = vpop.f32.mrf.mxu0
        %v1661 = vadd.f32 0.0, %v1660
        %v1662 = vpop.f32.mrf.mxu0
        %1663 = vdwg.mxu0
        %v1665 = vsel %vm1114, %v1506, 0
        %v1668 = vsel %vm1114, %v1581, 0
        %1670 = vmatprep.subr.mxu0 0.0
        %1671 = vmatpush1.xpose.msra.mxu0 0.0
        %1672 = vmatprep.subr.mxu0 0.0
        %1673 = vmatpush1.xpose.msra.mxu0 0.0
        %1674 = vmatprep.subr.mxu0 0.0
        %1675 = vmatpush1.xpose.msra.mxu0 0.0
        %1676 = vmatprep.subr.mxu0 0.0
        %1677 = vmatpush1.xpose.msra.mxu0 0.0
        %1678 = vmatprep.subr.mxu0 0.0
        %1679 = vmatpush1.xpose.msra.mxu0 0.0
        %1680 = vmatprep.subr.mxu0 0.0
        %1681 = vmatpush1.xpose.msra.mxu0 0.0
        %1682 = vmatprep.subr.mxu0 0.0
        %1683 = vmatpush1.xpose.msra.mxu0 0.0
        %1684 = vmatprep.subr.mxu0 0.0
        %1685 = vmatpush1.xpose.msra.mxu0 0.0
        %1686 = vmatprep.subr.mxu0 0.0
        %1687 = vmatpush1.xpose.msra.mxu0 0.0
        %1688 = vmatprep.subr.mxu0 0.0
        %1689 = vmatpush1.xpose.msra.mxu0 0.0
        %1690 = vmatprep.subr.mxu0 0.0
        %1691 = vmatpush1.xpose.msra.mxu0 0.0
        %1692 = vmatprep.subr.mxu0 0.0
        %1693 = vmatpush1.xpose.msra.mxu0 0.0
        %1694 = vmatprep.subr.mxu0 0.0
        %1695 = vmatpush1.xpose.msra.mxu0 0.0
        %1696 = vmatprep.subr.mxu0 0.0
        %1697 = vmatpush1.xpose.msra.mxu0 0.0
        %1698 = vmatprep.subr.mxu0 0.0
        %1699 = vmatpush1.xpose.msra.mxu0 0.0
        %1700 = vmatprep.subr.mxu0 0.0
        %1701 = vmatpush1.xpose.msra.mxu0 %v1668
        %1702 = vmatprep.subr.mxu0 0.0
        %1703 = vmatpush2.xpose.msra.mxu0 0.0
        %1704 = vmatprep.subr.mxu0 0.0
        %1705 = vmatpush2.xpose.msra.mxu0 0.0
        %1706 = vmatprep.subr.mxu0 0.0
        %1707 = vmatpush2.xpose.msra.mxu0 0.0
        %1708 = vmatprep.subr.mxu0 0.0
        %1709 = vmatpush2.xpose.msra.mxu0 0.0
        %1710 = vmatprep.subr.mxu0 0.0
        %1711 = vmatpush2.xpose.msra.mxu0 0.0
        %1712 = vmatprep.subr.mxu0 0.0
        %1713 = vmatpush2.xpose.msra.mxu0 0.0
        %1714 = vmatprep.subr.mxu0 0.0
        %1715 = vmatpush2.xpose.msra.mxu0 0.0
        %1716 = vmatprep.subr.mxu0 0.0
        %1717 = vmatpush2.xpose.msra.mxu0 0.0
        %1718 = vmatprep.subr.mxu0 0.0
        %1719 = vmatpush2.xpose.msra.mxu0 0.0
        %1720 = vmatprep.subr.mxu0 0.0
        %1721 = vmatpush2.xpose.msra.mxu0 0.0
        %1722 = vmatprep.subr.mxu0 0.0
        %1723 = vmatpush2.xpose.msra.mxu0 0.0
        %1724 = vmatprep.subr.mxu0 0.0
        %1725 = vmatpush2.xpose.msra.mxu0 0.0
        %1726 = vmatprep.subr.mxu0 0.0
        %1727 = vmatpush2.xpose.msra.mxu0 0.0
        %1728 = vmatprep.subr.mxu0 0.0
        %1729 = vmatpush2.xpose.msra.mxu0 0.0
        %1730 = vmatprep.subr.mxu0 0.0
        %1731 = vmatpush2.xpose.msra.mxu0 0.0
        %1732 = vmatprep.subr.mxu0 0.0
        %1733 = vmatpush2.xpose.msra.mxu0 0.0
        %1734 = vmatprep.mubr.f32.mxu0 0.0
        %1735 = vmatmul.mubr.f32.gmra.mxu0 %v1665
        %v1736 = vpop.f32.mrf.mxu0
        %v1737 = vadd.f32 0.0, %v1736
        %v1738 = vpop.f32.mrf.mxu0
        %1739 = vdwg.mxu0
        %v1741 = vsel %vm1114, %v1511, 0
        %v1744 = vsel %vm1114, %v1586, 0
        %1746 = vmatprep.subr.mxu0 0.0
        %1747 = vmatpush1.xpose.msra.mxu0 0.0
        %1748 = vmatprep.subr.mxu0 0.0
        %1749 = vmatpush1.xpose.msra.mxu0 0.0
        %1750 = vmatprep.subr.mxu0 0.0
        %1751 = vmatpush1.xpose.msra.mxu0 0.0
        %1752 = vmatprep.subr.mxu0 0.0
        %1753 = vmatpush1.xpose.msra.mxu0 0.0
        %1754 = vmatprep.subr.mxu0 0.0
        %1755 = vmatpush1.xpose.msra.mxu0 0.0
        %1756 = vmatprep.subr.mxu0 0.0
        %1757 = vmatpush1.xpose.msra.mxu0 0.0
        %1758 = vmatprep.subr.mxu0 0.0
        %1759 = vmatpush1.xpose.msra.mxu0 0.0
        %1760 = vmatprep.subr.mxu0 0.0
        %1761 = vmatpush1.xpose.msra.mxu0 0.0
        %1762 = vmatprep.subr.mxu0 0.0
        %1763 = vmatpush1.xpose.msra.mxu0 0.0
        %1764 = vmatprep.subr.mxu0 0.0
        %1765 = vmatpush1.xpose.msra.mxu0 0.0
        %1766 = vmatprep.subr.mxu0 0.0
        %1767 = vmatpush1.xpose.msra.mxu0 0.0
        %1768 = vmatprep.subr.mxu0 0.0
        %1769 = vmatpush1.xpose.msra.mxu0 0.0
        %1770 = vmatprep.subr.mxu0 0.0
        %1771 = vmatpush1.xpose.msra.mxu0 0.0
        %1772 = vmatprep.subr.mxu0 0.0
        %1773 = vmatpush1.xpose.msra.mxu0 0.0
        %1774 = vmatprep.subr.mxu0 0.0
        %1775 = vmatpush1.xpose.msra.mxu0 0.0
        %1776 = vmatprep.subr.mxu0 0.0
        %1777 = vmatpush1.xpose.msra.mxu0 %v1744
        %1778 = vmatprep.subr.mxu0 0.0
        %1779 = vmatpush2.xpose.msra.mxu0 0.0
        %1780 = vmatprep.subr.mxu0 0.0
        %1781 = vmatpush2.xpose.msra.mxu0 0.0
        %1782 = vmatprep.subr.mxu0 0.0
        %1783 = vmatpush2.xpose.msra.mxu0 0.0
        %1784 = vmatprep.subr.mxu0 0.0
        %1785 = vmatpush2.xpose.msra.mxu0 0.0
        %1786 = vmatprep.subr.mxu0 0.0
        %1787 = vmatpush2.xpose.msra.mxu0 0.0
        %1788 = vmatprep.subr.mxu0 0.0
        %1789 = vmatpush2.xpose.msra.mxu0 0.0
        %1790 = vmatprep.subr.mxu0 0.0
        %1791 = vmatpush2.xpose.msra.mxu0 0.0
        %1792 = vmatprep.subr.mxu0 0.0
        %1793 = vmatpush2.xpose.msra.mxu0 0.0
        %1794 = vmatprep.subr.mxu0 0.0
        %1795 = vmatpush2.xpose.msra.mxu0 0.0
        %1796 = vmatprep.subr.mxu0 0.0
        %1797 = vmatpush2.xpose.msra.mxu0 0.0
        %1798 = vmatprep.subr.mxu0 0.0
        %1799 = vmatpush2.xpose.msra.mxu0 0.0
        %1800 = vmatprep.subr.mxu0 0.0
        %1801 = vmatpush2.xpose.msra.mxu0 0.0
        %1802 = vmatprep.subr.mxu0 0.0
        %1803 = vmatpush2.xpose.msra.mxu0 0.0
        %1804 = vmatprep.subr.mxu0 0.0
        %1805 = vmatpush2.xpose.msra.mxu0 0.0
        %1806 = vmatprep.subr.mxu0 0.0
        %1807 = vmatpush2.xpose.msra.mxu0 0.0
        %1808 = vmatprep.subr.mxu0 0.0
        %1809 = vmatpush2.xpose.msra.mxu0 0.0
        %1810 = vmatprep.mubr.f32.mxu0 0.0
        %1811 = vmatmul.mubr.f32.gmra.mxu0 %v1741
        %v1812 = vpop.f32.mrf.mxu0
        %v1813 = vadd.f32 0.0, %v1812
        %v1814 = vpop.f32.mrf.mxu0
        %1815 = vdwg.mxu0
        %v1816 = vmul.f32 %v1737, 0.35355338
        %v1817 = vmul.f32 %v1813, 0.35355338
        %v1818 = vsel %vm800, -1e+09, %v1816
        %v1819 = vsel %vm801, -1e+09, %v1817
        %v1820 = vsel %vm1114, %v1818, -inf
        %1821 = vmax.xlane.f32.xlu0 %v1820
        %v1822 = vpop.xlane.xlu0 %1821
        %v1823 = vsel %vm1114, %v1819, -inf
        %1824 = vmax.xlane.f32.xlu0 %v1823
        %v1825 = vpop.xlane.xlu0 %1824
        %v1826 = vsub.f32 %v1818, %v1822
        %v1827 = vsub.f32 %v1819, %v1825
        %v1828 = vmul.f32 %v1826, 1.442695
        %v1829 = vpow.pop %v1828
        %v1830 = vmul.f32 %v1827, 1.442695
        %v1831 = vpow.pop %v1830
        %v1832 = vsel %vm1114, %v1829, 0.0
        %1833 = vadd.xlane.f32.xlu0 %v1832
        %v1834 = vpop.xlane.xlu0 %1833
        %v1835 = vsel %vm1114, %v1831, 0.0
        %1836 = vadd.xlane.f32.xlu0 %v1835
        %v1837 = vpop.xlane.xlu0 %1836
        %v1838 = vrcp.pop %v1834
        %v1839 = vrcp.pop %v1837
        %v1840 = vmul.f32 %v1829, %v1838
        %v1841 = vmul.f32 %v1831, %v1839
        %v1843 = vsel %vm1114, %v1840, 0
        %1845 = vmatprep.subr.mxu0 0.0
        %1846 = vmatpush1.msra.mxu0 0.0
        %1847 = vmatprep.subr.mxu0 0.0
        %1848 = vmatpush1.msra.mxu0 0.0
        %1849 = vmatprep.subr.mxu0 0.0
        %1850 = vmatpush1.msra.mxu0 0.0
        %1851 = vmatprep.subr.mxu0 0.0
        %1852 = vmatpush1.msra.mxu0 0.0
        %1853 = vmatprep.subr.mxu0 0.0
        %1854 = vmatpush1.msra.mxu0 0.0
        %1855 = vmatprep.subr.mxu0 0.0
        %1856 = vmatpush1.msra.mxu0 0.0
        %1857 = vmatprep.subr.mxu0 0.0
        %1858 = vmatpush1.msra.mxu0 0.0
        %1859 = vmatprep.subr.mxu0 0.0
        %1860 = vmatpush1.msra.mxu0 0.0
        %1861 = vmatprep.subr.mxu0 0.0
        %1862 = vmatpush1.msra.mxu0 0.0
        %1863 = vmatprep.subr.mxu0 0.0
        %1864 = vmatpush1.msra.mxu0 0.0
        %1865 = vmatprep.subr.mxu0 0.0
        %1866 = vmatpush1.msra.mxu0 0.0
        %1867 = vmatprep.subr.mxu0 0.0
        %1868 = vmatpush1.msra.mxu0 0.0
        %1869 = vmatprep.subr.mxu0 0.0
        %1870 = vmatpush1.msra.mxu0 0.0
        %1871 = vmatprep.subr.mxu0 0.0
        %1872 = vmatpush1.msra.mxu0 0.0
        %1873 = vmatprep.subr.mxu0 0.0
        %1874 = vmatpush1.msra.mxu0 0.0
        %1875 = vmatprep.subr.mxu0 0.0
        %1876 = vmatpush1.msra.mxu0 %v1656
        %1877 = vmatprep.subr.mxu0 0.0
        %1878 = vmatpush2.msra.mxu0 0.0
        %1879 = vmatprep.subr.mxu0 0.0
        %1880 = vmatpush2.msra.mxu0 0.0
        %1881 = vmatprep.subr.mxu0 0.0
        %1882 = vmatpush2.msra.mxu0 0.0
        %1883 = vmatprep.subr.mxu0 0.0
        %1884 = vmatpush2.msra.mxu0 0.0
        %1885 = vmatprep.subr.mxu0 0.0
        %1886 = vmatpush2.msra.mxu0 0.0
        %1887 = vmatprep.subr.mxu0 0.0
        %1888 = vmatpush2.msra.mxu0 0.0
        %1889 = vmatprep.subr.mxu0 0.0
        %1890 = vmatpush2.msra.mxu0 0.0
        %1891 = vmatprep.subr.mxu0 0.0
        %1892 = vmatpush2.msra.mxu0 0.0
        %1893 = vmatprep.subr.mxu0 0.0
        %1894 = vmatpush2.msra.mxu0 0.0
        %1895 = vmatprep.subr.mxu0 0.0
        %1896 = vmatpush2.msra.mxu0 0.0
        %1897 = vmatprep.subr.mxu0 0.0
        %1898 = vmatpush2.msra.mxu0 0.0
        %1899 = vmatprep.subr.mxu0 0.0
        %1900 = vmatpush2.msra.mxu0 0.0
        %1901 = vmatprep.subr.mxu0 0.0
        %1902 = vmatpush2.msra.mxu0 0.0
        %1903 = vmatprep.subr.mxu0 0.0
        %1904 = vmatpush2.msra.mxu0 0.0
        %1905 = vmatprep.subr.mxu0 0.0
        %1906 = vmatpush2.msra.mxu0 0.0
        %1907 = vmatprep.subr.mxu0 0.0
        %1908 = vmatpush2.msra.mxu0 0.0
        %1909 = vmatprep.mubr.f32.mxu0 0.0
        %1910 = vmatmul.mubr.f32.gmra.mxu0 %v1843
        %v1911 = vpop.f32.mrf.mxu0
        %v1912 = vadd.f32 0.0, %v1911
        %v1913 = vpop.f32.mrf.mxu0
        %1914 = vdwg.mxu0
        %v1916 = vsel %vm1114, %v1841, 0
        %1918 = vmatprep.subr.mxu0 0.0
        %1919 = vmatpush1.msra.mxu0 0.0
        %1920 = vmatprep.subr.mxu0 0.0
        %1921 = vmatpush1.msra.mxu0 0.0
        %1922 = vmatprep.subr.mxu0 0.0
        %1923 = vmatpush1.msra.mxu0 0.0
        %1924 = vmatprep.subr.mxu0 0.0
        %1925 = vmatpush1.msra.mxu0 0.0
        %1926 = vmatprep.subr.mxu0 0.0
        %1927 = vmatpush1.msra.mxu0 0.0
        %1928 = vmatprep.subr.mxu0 0.0
        %1929 = vmatpush1.msra.mxu0 0.0
        %1930 = vmatprep.subr.mxu0 0.0
        %1931 = vmatpush1.msra.mxu0 0.0
        %1932 = vmatprep.subr.mxu0 0.0
        %1933 = vmatpush1.msra.mxu0 0.0
        %1934 = vmatprep.subr.mxu0 0.0
        %1935 = vmatpush1.msra.mxu0 0.0
        %1936 = vmatprep.subr.mxu0 0.0
        %1937 = vmatpush1.msra.mxu0 0.0
        %1938 = vmatprep.subr.mxu0 0.0
        %1939 = vmatpush1.msra.mxu0 0.0
        %1940 = vmatprep.subr.mxu0 0.0
        %1941 = vmatpush1.msra.mxu0 0.0
        %1942 = vmatprep.subr.mxu0 0.0
        %1943 = vmatpush1.msra.mxu0 0.0
        %1944 = vmatprep.subr.mxu0 0.0
        %1945 = vmatpush1.msra.mxu0 0.0
        %1946 = vmatprep.subr.mxu0 0.0
        %1947 = vmatpush1.msra.mxu0 0.0
        %1948 = vmatprep.subr.mxu0 0.0
        %1949 = vmatpush1.msra.mxu0 %v1661
        %1950 = vmatprep.subr.mxu0 0.0
        %1951 = vmatpush2.msra.mxu0 0.0
        %1952 = vmatprep.subr.mxu0 0.0
        %1953 = vmatpush2.msra.mxu0 0.0
        %1954 = vmatprep.subr.mxu0 0.0
        %1955 = vmatpush2.msra.mxu0 0.0
        %1956 = vmatprep.subr.mxu0 0.0
        %1957 = vmatpush2.msra.mxu0 0.0
        %1958 = vmatprep.subr.mxu0 0.0
        %1959 = vmatpush2.msra.mxu0 0.0
        %1960 = vmatprep.subr.mxu0 0.0
        %1961 = vmatpush2.msra.mxu0 0.0
        %1962 = vmatprep.subr.mxu0 0.0
        %1963 = vmatpush2.msra.mxu0 0.0
        %1964 = vmatprep.subr.mxu0 0.0
        %1965 = vmatpush2.msra.mxu0 0.0
        %1966 = vmatprep.subr.mxu0 0.0
        %1967 = vmatpush2.msra.mxu0 0.0
        %1968 = vmatprep.subr.mxu0 0.0
        %1969 = vmatpush2.msra.mxu0 0.0
        %1970 = vmatprep.subr.mxu0 0.0
        %1971 = vmatpush2.msra.mxu0 0.0
        %1972 = vmatprep.subr.mxu0 0.0
        %1973 = vmatpush2.msra.mxu0 0.0
        %1974 = vmatprep.subr.mxu0 0.0
        %1975 = vmatpush2.msra.mxu0 0.0
        %1976 = vmatprep.subr.mxu0 0.0
        %1977 = vmatpush2.msra.mxu0 0.0
        %1978 = vmatprep.subr.mxu0 0.0
        %1979 = vmatpush2.msra.mxu0 0.0
        %1980 = vmatprep.subr.mxu0 0.0
        %1981 = vmatpush2.msra.mxu0 0.0
        %1982 = vmatprep.mubr.f32.mxu0 0.0
        %1983 = vmatmul.mubr.f32.gmra.mxu0 %v1916
        %v1984 = vpop.f32.mrf.mxu0
        %v1985 = vadd.f32 0.0, %v1984
        %v1986 = vpop.f32.mrf.mxu0
        %1987 = vdwg.mxu0
        %v1989 = vsel %vm1114, %v1912, 0
        %v1992 = vsel %vm1114, %v1985, 0
        %1994 = vmatprep.subr.mxu0 0.0
        %1995 = vmatpush1.msra.mxu0 0.0
        %1996 = vmatprep.subr.mxu0 0.0
        %1997 = vmatpush1.msra.mxu0 0.0
        %1998 = vmatprep.subr.mxu0 0.0
        %1999 = vmatpush1.msra.mxu0 0.0
        %2000 = vmatprep.subr.mxu0 0.0
        %2001 = vmatpush1.msra.mxu0 0.0
        %2002 = vmatprep.subr.mxu0 0.0
        %2003 = vmatpush1.msra.mxu0 0.0
        %2004 = vmatprep.subr.mxu0 0.0
        %2005 = vmatpush1.msra.mxu0 0.0
        %2006 = vmatprep.subr.mxu0 0.0
        %2007 = vmatpush1.msra.mxu0 0.0
        %2008 = vmatprep.subr.mxu0 0.0
        %2009 = vmatpush1.msra.mxu0 0.0
        %2010 = vmatprep.subr.mxu0 0.0
        %2011 = vmatpush1.msra.mxu0 0.0
        %2012 = vmatprep.subr.mxu0 0.0
        %2013 = vmatpush1.msra.mxu0 0.0
        %2014 = vmatprep.subr.mxu0 0.0
        %2015 = vmatpush1.msra.mxu0 0.0
        %2016 = vmatprep.subr.mxu0 0.0
        %2017 = vmatpush1.msra.mxu0 0.0
        %2018 = vmatprep.subr.mxu0 0.0
        %2019 = vmatpush1.msra.mxu0 0.0
        %2020 = vmatprep.subr.mxu0 0.0
        %2021 = vmatpush1.msra.mxu0 0.0
        %2022 = vmatprep.subr.mxu0 0.0
        %2023 = vmatpush1.msra.mxu0 0.0
        %2024 = vmatprep.subr.mxu0 0.0
        %2025 = vmatpush1.msra.mxu0 %v879
        %2026 = vmatprep.subr.mxu0 0.0
        %2027 = vmatpush2.msra.mxu0 0.0
        %2028 = vmatprep.subr.mxu0 0.0
        %2029 = vmatpush2.msra.mxu0 0.0
        %2030 = vmatprep.subr.mxu0 0.0
        %2031 = vmatpush2.msra.mxu0 0.0
        %2032 = vmatprep.subr.mxu0 0.0
        %2033 = vmatpush2.msra.mxu0 0.0
        %2034 = vmatprep.subr.mxu0 0.0
        %2035 = vmatpush2.msra.mxu0 0.0
        %2036 = vmatprep.subr.mxu0 0.0
        %2037 = vmatpush2.msra.mxu0 0.0
        %2038 = vmatprep.subr.mxu0 0.0
        %2039 = vmatpush2.msra.mxu0 0.0
        %2040 = vmatprep.subr.mxu0 0.0
        %2041 = vmatpush2.msra.mxu0 0.0
        %2042 = vmatprep.subr.mxu0 0.0
        %2043 = vmatpush2.msra.mxu0 0.0
        %2044 = vmatprep.subr.mxu0 0.0
        %2045 = vmatpush2.msra.mxu0 0.0
        %2046 = vmatprep.subr.mxu0 0.0
        %2047 = vmatpush2.msra.mxu0 0.0
        %2048 = vmatprep.subr.mxu0 0.0
        %2049 = vmatpush2.msra.mxu0 0.0
        %2050 = vmatprep.subr.mxu0 0.0
        %2051 = vmatpush2.msra.mxu0 0.0
        %2052 = vmatprep.subr.mxu0 0.0
        %2053 = vmatpush2.msra.mxu0 0.0
        %2054 = vmatprep.subr.mxu0 0.0
        %2055 = vmatpush2.msra.mxu0 0.0
        %2056 = vmatprep.subr.mxu0 0.0
        %2057 = vmatpush2.msra.mxu0 0.0
        %2058 = vmatprep.mubr.f32.mxu0 0.0
        %2059 = vmatmul.mubr.f32.gmra.mxu0 %v1989
        %v2060 = vpop.f32.mrf.mxu0
        %v2061 = vadd.f32 0.0, %v2060
        %v2062 = vpop.f32.mrf.mxu0
        %2063 = vmatprep.mubr.f32.mxu0 0.0
        %2064 = vmatmul.mubr.f32.gmra.mxu0 %v1992
        %v2065 = vpop.f32.mrf.mxu0
        %v2066 = vadd.f32 0.0, %v2065
        %v2067 = vpop.f32.mrf.mxu0
        %2068 = vdwg.mxu0
        %v2070 = vsel %vm1114, %v1363, 0
        %v2073 = vsel %vm1114, %v1436, 0
        %2075 = vmatprep.subr.mxu0 0.0
        %2076 = vmatpush1.msra.mxu0 0.0
        %2077 = vmatprep.subr.mxu0 0.0
        %2078 = vmatpush1.msra.mxu0 0.0
        %2079 = vmatprep.subr.mxu0 0.0
        %2080 = vmatpush1.msra.mxu0 0.0
        %2081 = vmatprep.subr.mxu0 0.0
        %2082 = vmatpush1.msra.mxu0 0.0
        %2083 = vmatprep.subr.mxu0 0.0
        %2084 = vmatpush1.msra.mxu0 0.0
        %2085 = vmatprep.subr.mxu0 0.0
        %2086 = vmatpush1.msra.mxu0 0.0
        %2087 = vmatprep.subr.mxu0 0.0
        %2088 = vmatpush1.msra.mxu0 0.0
        %2089 = vmatprep.subr.mxu0 0.0
        %2090 = vmatpush1.msra.mxu0 0.0
        %2091 = vmatprep.subr.mxu0 0.0
        %2092 = vmatpush1.msra.mxu0 0.0
        %2093 = vmatprep.subr.mxu0 0.0
        %2094 = vmatpush1.msra.mxu0 0.0
        %2095 = vmatprep.subr.mxu0 0.0
        %2096 = vmatpush1.msra.mxu0 0.0
        %2097 = vmatprep.subr.mxu0 0.0
        %2098 = vmatpush1.msra.mxu0 0.0
        %2099 = vmatprep.subr.mxu0 0.0
        %2100 = vmatpush1.msra.mxu0 0.0
        %2101 = vmatprep.subr.mxu0 0.0
        %2102 = vmatpush1.msra.mxu0 0.0
        %2103 = vmatprep.subr.mxu0 0.0
        %2104 = vmatpush1.msra.mxu0 0.0
        %2105 = vmatprep.subr.mxu0 0.0
        %2106 = vmatpush1.msra.mxu0 %v878
        %2107 = vmatprep.subr.mxu0 0.0
        %2108 = vmatpush2.msra.mxu0 0.0
        %2109 = vmatprep.subr.mxu0 0.0
        %2110 = vmatpush2.msra.mxu0 0.0
        %2111 = vmatprep.subr.mxu0 0.0
        %2112 = vmatpush2.msra.mxu0 0.0
        %2113 = vmatprep.subr.mxu0 0.0
        %2114 = vmatpush2.msra.mxu0 0.0
        %2115 = vmatprep.subr.mxu0 0.0
        %2116 = vmatpush2.msra.mxu0 0.0
        %2117 = vmatprep.subr.mxu0 0.0
        %2118 = vmatpush2.msra.mxu0 0.0
        %2119 = vmatprep.subr.mxu0 0.0
        %2120 = vmatpush2.msra.mxu0 0.0
        %2121 = vmatprep.subr.mxu0 0.0
        %2122 = vmatpush2.msra.mxu0 0.0
        %2123 = vmatprep.subr.mxu0 0.0
        %2124 = vmatpush2.msra.mxu0 0.0
        %2125 = vmatprep.subr.mxu0 0.0
        %2126 = vmatpush2.msra.mxu0 0.0
        %2127 = vmatprep.subr.mxu0 0.0
        %2128 = vmatpush2.msra.mxu0 0.0
        %2129 = vmatprep.subr.mxu0 0.0
        %2130 = vmatpush2.msra.mxu0 0.0
        %2131 = vmatprep.subr.mxu0 0.0
        %2132 = vmatpush2.msra.mxu0 0.0
        %2133 = vmatprep.subr.mxu0 0.0
        %2134 = vmatpush2.msra.mxu0 0.0
        %2135 = vmatprep.subr.mxu0 0.0
        %2136 = vmatpush2.msra.mxu0 0.0
        %2137 = vmatprep.subr.mxu0 0.0
        %2138 = vmatpush2.msra.mxu0 0.0
        %2139 = vmatprep.mubr.f32.mxu0 0.0
        %2140 = vmatmul.mubr.f32.gmra.mxu0 %v2070
        %v2141 = vpop.f32.mrf.mxu0
        %v2142 = vadd.f32 %v2061, %v2141
        %v2143 = vpop.f32.mrf.mxu0
        %2144 = vmatprep.mubr.f32.mxu0 0.0
        %2145 = vmatmul.mubr.f32.gmra.mxu0 %v2073
        %v2146 = vpop.f32.mrf.mxu0
        %v2147 = vadd.f32 %v2066, %v2146
        %v2148 = vpop.f32.mrf.mxu0
        %2149 = vdwg.mxu0
        %2150 = vmatprep.subr.mxu0 0.0
        %2151 = vmatpush1.msra.mxu0 0.0
        %2152 = vmatprep.subr.mxu0 0.0
        %2153 = vmatpush1.msra.mxu0 0.0
        %2154 = vmatprep.subr.mxu0 0.0
        %2155 = vmatpush1.msra.mxu0 0.0
        %2156 = vmatprep.subr.mxu0 0.0
        %2157 = vmatpush1.msra.mxu0 0.0
        %2158 = vmatprep.subr.mxu0 0.0
        %2159 = vmatpush1.msra.mxu0 0.0
        %2160 = vmatprep.subr.mxu0 0.0
        %2161 = vmatpush1.msra.mxu0 0.0
        %2162 = vmatprep.subr.mxu0 0.0
        %2163 = vmatpush1.msra.mxu0 0.0
        %2164 = vmatprep.subr.mxu0 0.0
        %2165 = vmatpush1.msra.mxu0 0.0
        %2166 = vmatprep.subr.mxu0 0.0
        %2167 = vmatpush1.msra.mxu0 0.0
        %2168 = vmatprep.subr.mxu0 0.0
        %2169 = vmatpush1.msra.mxu0 0.0
        %2170 = vmatprep.subr.mxu0 0.0
        %2171 = vmatpush1.msra.mxu0 0.0
        %2172 = vmatprep.subr.mxu0 0.0
        %2173 = vmatpush1.msra.mxu0 0.0
        %2174 = vmatprep.subr.mxu0 0.0
        %2175 = vmatpush1.msra.mxu0 %v841
        %2176 = vmatprep.subr.mxu0 0.0
        %2177 = vmatpush1.msra.mxu0 %v840
        %2178 = vmatprep.subr.mxu0 0.0
        %2179 = vmatpush1.msra.mxu0 %v839
        %2180 = vmatprep.subr.mxu0 0.0
        %2181 = vmatpush1.msra.mxu0 %v838
        %2182 = vmatprep.subr.mxu0 0.0
        %2183 = vmatpush2.msra.mxu0 0.0
        %2184 = vmatprep.subr.mxu0 0.0
        %2185 = vmatpush2.msra.mxu0 0.0
        %2186 = vmatprep.subr.mxu0 0.0
        %2187 = vmatpush2.msra.mxu0 0.0
        %2188 = vmatprep.subr.mxu0 0.0
        %2189 = vmatpush2.msra.mxu0 0.0
        %2190 = vmatprep.subr.mxu0 0.0
        %2191 = vmatpush2.msra.mxu0 0.0
        %2192 = vmatprep.subr.mxu0 0.0
        %2193 = vmatpush2.msra.mxu0 0.0
        %2194 = vmatprep.subr.mxu0 0.0
        %2195 = vmatpush2.msra.mxu0 0.0
        %2196 = vmatprep.subr.mxu0 0.0
        %2197 = vmatpush2.msra.mxu0 0.0
        %2198 = vmatprep.subr.mxu0 0.0
        %2199 = vmatpush2.msra.mxu0 0.0
        %2200 = vmatprep.subr.mxu0 0.0
        %2201 = vmatpush2.msra.mxu0 0.0
        %2202 = vmatprep.subr.mxu0 0.0
        %2203 = vmatpush2.msra.mxu0 0.0
        %2204 = vmatprep.subr.mxu0 0.0
        %2205 = vmatpush2.msra.mxu0 0.0
        %2206 = vmatprep.subr.mxu0 0.0
        %2207 = vmatpush2.msra.mxu0 0.0
        %2208 = vmatprep.subr.mxu0 0.0
        %2209 = vmatpush2.msra.mxu0 0.0
        %2210 = vmatprep.subr.mxu0 0.0
        %2211 = vmatpush2.msra.mxu0 0.0
        %2212 = vmatprep.subr.mxu0 0.0
        %2213 = vmatpush2.msra.mxu0 0.0
        %2214 = vmatprep.mubr.f32.mxu0 0.0
        %2215 = vmatmul.mubr.f32.gmra.mxu0 %v884
        %v2216 = vpop.f32.mrf.mxu0
        %v2217 = vadd.f32 0.0, %v2216
        %v2218 = vpop.f32.mrf.mxu0
        %2219 = vmatprep.mubr.f32.mxu0 0.0
        %2220 = vmatmul.mubr.f32.gmra.mxu0 %v887
        %v2221 = vpop.f32.mrf.mxu0
        %v2222 = vadd.f32 0.0, %v2221
        %v2223 = vpop.f32.mrf.mxu0
        %2224 = vdwg.mxu0
        %2225 = vmatprep.subr.mxu0 0.0
        %2226 = vmatpush1.msra.mxu0 0.0
        %2227 = vmatprep.subr.mxu0 0.0
        %2228 = vmatpush1.msra.mxu0 0.0
        %2229 = vmatprep.subr.mxu0 0.0
        %2230 = vmatpush1.msra.mxu0 0.0
        %2231 = vmatprep.subr.mxu0 0.0
        %2232 = vmatpush1.msra.mxu0 0.0
        %2233 = vmatprep.subr.mxu0 0.0
        %2234 = vmatpush1.msra.mxu0 0.0
        %2235 = vmatprep.subr.mxu0 0.0
        %2236 = vmatpush1.msra.mxu0 0.0
        %2237 = vmatprep.subr.mxu0 0.0
        %2238 = vmatpush1.msra.mxu0 0.0
        %2239 = vmatprep.subr.mxu0 0.0
        %2240 = vmatpush1.msra.mxu0 0.0
        %2241 = vmatprep.subr.mxu0 0.0
        %2242 = vmatpush1.msra.mxu0 0.0
        %2243 = vmatprep.subr.mxu0 0.0
        %2244 = vmatpush1.msra.mxu0 0.0
        %2245 = vmatprep.subr.mxu0 0.0
        %2246 = vmatpush1.msra.mxu0 0.0
        %2247 = vmatprep.subr.mxu0 0.0
        %2248 = vmatpush1.msra.mxu0 0.0
        %2249 = vmatprep.subr.mxu0 0.0
        %2250 = vmatpush1.msra.mxu0 %v857
        %2251 = vmatprep.subr.mxu0 0.0
        %2252 = vmatpush1.msra.mxu0 %v856
        %2253 = vmatprep.subr.mxu0 0.0
        %2254 = vmatpush1.msra.mxu0 %v855
        %2255 = vmatprep.subr.mxu0 0.0
        %2256 = vmatpush1.msra.mxu0 %v854
        %2257 = vmatprep.subr.mxu0 0.0
        %2258 = vmatpush2.msra.mxu0 0.0
        %2259 = vmatprep.subr.mxu0 0.0
        %2260 = vmatpush2.msra.mxu0 0.0
        %2261 = vmatprep.subr.mxu0 0.0
        %2262 = vmatpush2.msra.mxu0 0.0
        %2263 = vmatprep.subr.mxu0 0.0
        %2264 = vmatpush2.msra.mxu0 0.0
        %2265 = vmatprep.subr.mxu0 0.0
        %2266 = vmatpush2.msra.mxu0 0.0
        %2267 = vmatprep.subr.mxu0 0.0
        %2268 = vmatpush2.msra.mxu0 0.0
        %2269 = vmatprep.subr.mxu0 0.0
        %2270 = vmatpush2.msra.mxu0 0.0
        %2271 = vmatprep.subr.mxu0 0.0
        %2272 = vmatpush2.msra.mxu0 0.0
        %2273 = vmatprep.subr.mxu0 0.0
        %2274 = vmatpush2.msra.mxu0 0.0
        %2275 = vmatprep.subr.mxu0 0.0
        %2276 = vmatpush2.msra.mxu0 0.0
        %2277 = vmatprep.subr.mxu0 0.0
        %2278 = vmatpush2.msra.mxu0 0.0
        %2279 = vmatprep.subr.mxu0 0.0
        %2280 = vmatpush2.msra.mxu0 0.0
        %2281 = vmatprep.subr.mxu0 0.0
        %2282 = vmatpush2.msra.mxu0 0.0
        %2283 = vmatprep.subr.mxu0 0.0
        %2284 = vmatpush2.msra.mxu0 0.0
        %2285 = vmatprep.subr.mxu0 0.0
        %2286 = vmatpush2.msra.mxu0 0.0
        %2287 = vmatprep.subr.mxu0 0.0
        %2288 = vmatpush2.msra.mxu0 0.0
        %2289 = vmatprep.mubr.f32.mxu0 0.0
        %2290 = vmatmul.mubr.f32.gmra.mxu0 %v884
        %v2291 = vpop.f32.mrf.mxu0
        %v2292 = vadd.f32 0.0, %v2291
        %v2293 = vpop.f32.mrf.mxu0
        %2294 = vmatprep.mubr.f32.mxu0 0.0
        %2295 = vmatmul.mubr.f32.gmra.mxu0 %v887
        %v2296 = vpop.f32.mrf.mxu0
        %v2297 = vadd.f32 0.0, %v2296
        %v2298 = vpop.f32.mrf.mxu0
        %2299 = vdwg.mxu0
        %2300 = vmatprep.subr.mxu0 0.0
        %2301 = vmatpush1.msra.mxu0 0.0
        %2302 = vmatprep.subr.mxu0 0.0
        %2303 = vmatpush1.msra.mxu0 0.0
        %2304 = vmatprep.subr.mxu0 0.0
        %2305 = vmatpush1.msra.mxu0 0.0
        %2306 = vmatprep.subr.mxu0 0.0
        %2307 = vmatpush1.msra.mxu0 0.0
        %2308 = vmatprep.subr.mxu0 0.0
        %2309 = vmatpush1.msra.mxu0 0.0
        %2310 = vmatprep.subr.mxu0 0.0
        %2311 = vmatpush1.msra.mxu0 0.0
        %2312 = vmatprep.subr.mxu0 0.0
        %2313 = vmatpush1.msra.mxu0 0.0
        %2314 = vmatprep.subr.mxu0 0.0
        %2315 = vmatpush1.msra.mxu0 0.0
        %2316 = vmatprep.subr.mxu0 0.0
        %2317 = vmatpush1.msra.mxu0 0.0
        %2318 = vmatprep.subr.mxu0 0.0
        %2319 = vmatpush1.msra.mxu0 0.0
        %2320 = vmatprep.subr.mxu0 0.0
        %2321 = vmatpush1.msra.mxu0 0.0
        %2322 = vmatprep.subr.mxu0 0.0
        %2323 = vmatpush1.msra.mxu0 0.0
        %2324 = vmatprep.subr.mxu0 0.0
        %2325 = vmatpush1.msra.mxu0 %v873
        %2326 = vmatprep.subr.mxu0 0.0
        %2327 = vmatpush1.msra.mxu0 %v872
        %2328 = vmatprep.subr.mxu0 0.0
        %2329 = vmatpush1.msra.mxu0 %v871
        %2330 = vmatprep.subr.mxu0 0.0
        %2331 = vmatpush1.msra.mxu0 %v870
        %2332 = vmatprep.subr.mxu0 0.0
        %2333 = vmatpush2.msra.mxu0 0.0
        %2334 = vmatprep.subr.mxu0 0.0
        %2335 = vmatpush2.msra.mxu0 0.0
        %2336 = vmatprep.subr.mxu0 0.0
        %2337 = vmatpush2.msra.mxu0 0.0
        %2338 = vmatprep.subr.mxu0 0.0
        %2339 = vmatpush2.msra.mxu0 0.0
        %2340 = vmatprep.subr.mxu0 0.0
        %2341 = vmatpush2.msra.mxu0 0.0
        %2342 = vmatprep.subr.mxu0 0.0
        %2343 = vmatpush2.msra.mxu0 0.0
        %2344 = vmatprep.subr.mxu0 0.0
        %2345 = vmatpush2.msra.mxu0 0.0
        %2346 = vmatprep.subr.mxu0 0.0
        %2347 = vmatpush2.msra.mxu0 0.0
        %2348 = vmatprep.subr.mxu0 0.0
        %2349 = vmatpush2.msra.mxu0 0.0
        %2350 = vmatprep.subr.mxu0 0.0
        %2351 = vmatpush2.msra.mxu0 0.0
        %2352 = vmatprep.subr.mxu0 0.0
        %2353 = vmatpush2.msra.mxu0 0.0
        %2354 = vmatprep.subr.mxu0 0.0
        %2355 = vmatpush2.msra.mxu0 0.0
        %2356 = vmatprep.subr.mxu0 0.0
        %2357 = vmatpush2.msra.mxu0 0.0
        %2358 = vmatprep.subr.mxu0 0.0
        %2359 = vmatpush2.msra.mxu0 0.0
        %2360 = vmatprep.subr.mxu0 0.0
        %2361 = vmatpush2.msra.mxu0 0.0
        %2362 = vmatprep.subr.mxu0 0.0
        %2363 = vmatpush2.msra.mxu0 0.0
        %2364 = vmatprep.mubr.f32.mxu0 0.0
        %2365 = vmatmul.mubr.f32.gmra.mxu0 %v884
        %v2366 = vpop.f32.mrf.mxu0
        %v2367 = vadd.f32 0.0, %v2366
        %v2368 = vpop.f32.mrf.mxu0
        %2369 = vmatprep.mubr.f32.mxu0 0.0
        %2370 = vmatmul.mubr.f32.gmra.mxu0 %v887
        %v2371 = vpop.f32.mrf.mxu0
        %v2372 = vadd.f32 0.0, %v2371
        %v2373 = vpop.f32.mrf.mxu0
        %2374 = vdwg.mxu0
        %v2376 = vsel %vm1114, %v2217, 0
        %v2379 = vsel %vm1114, %v2292, 0
        %2381 = vmatprep.subr.mxu0 0.0
        %2382 = vmatpush1.xpose.msra.mxu0 0.0
        %2383 = vmatprep.subr.mxu0 0.0
        %2384 = vmatpush1.xpose.msra.mxu0 0.0
        %2385 = vmatprep.subr.mxu0 0.0
        %2386 = vmatpush1.xpose.msra.mxu0 0.0
        %2387 = vmatprep.subr.mxu0 0.0
        %2388 = vmatpush1.xpose.msra.mxu0 0.0
        %2389 = vmatprep.subr.mxu0 0.0
        %2390 = vmatpush1.xpose.msra.mxu0 0.0
        %2391 = vmatprep.subr.mxu0 0.0
        %2392 = vmatpush1.xpose.msra.mxu0 0.0
        %2393 = vmatprep.subr.mxu0 0.0
        %2394 = vmatpush1.xpose.msra.mxu0 0.0
        %2395 = vmatprep.subr.mxu0 0.0
        %2396 = vmatpush1.xpose.msra.mxu0 0.0
        %2397 = vmatprep.subr.mxu0 0.0
        %2398 = vmatpush1.xpose.msra.mxu0 0.0
        %2399 = vmatprep.subr.mxu0 0.0
        %2400 = vmatpush1.xpose.msra.mxu0 0.0
        %2401 = vmatprep.subr.mxu0 0.0
        %2402 = vmatpush1.xpose.msra.mxu0 0.0
        %2403 = vmatprep.subr.mxu0 0.0
        %2404 = vmatpush1.xpose.msra.mxu0 0.0
        %2405 = vmatprep.subr.mxu0 0.0
        %2406 = vmatpush1.xpose.msra.mxu0 0.0
        %2407 = vmatprep.subr.mxu0 0.0
        %2408 = vmatpush1.xpose.msra.mxu0 0.0
        %2409 = vmatprep.subr.mxu0 0.0
        %2410 = vmatpush1.xpose.msra.mxu0 0.0
        %2411 = vmatprep.subr.mxu0 0.0
        %2412 = vmatpush1.xpose.msra.mxu0 %v2379
        %2413 = vmatprep.subr.mxu0 0.0
        %2414 = vmatpush2.xpose.msra.mxu0 0.0
        %2415 = vmatprep.subr.mxu0 0.0
        %2416 = vmatpush2.xpose.msra.mxu0 0.0
        %2417 = vmatprep.subr.mxu0 0.0
        %2418 = vmatpush2.xpose.msra.mxu0 0.0
        %2419 = vmatprep.subr.mxu0 0.0
        %2420 = vmatpush2.xpose.msra.mxu0 0.0
        %2421 = vmatprep.subr.mxu0 0.0
        %2422 = vmatpush2.xpose.msra.mxu0 0.0
        %2423 = vmatprep.subr.mxu0 0.0
        %2424 = vmatpush2.xpose.msra.mxu0 0.0
        %2425 = vmatprep.subr.mxu0 0.0
        %2426 = vmatpush2.xpose.msra.mxu0 0.0
        %2427 = vmatprep.subr.mxu0 0.0
        %2428 = vmatpush2.xpose.msra.mxu0 0.0
        %2429 = vmatprep.subr.mxu0 0.0
        %2430 = vmatpush2.xpose.msra.mxu0 0.0
        %2431 = vmatprep.subr.mxu0 0.0
        %2432 = vmatpush2.xpose.msra.mxu0 0.0
        %2433 = vmatprep.subr.mxu0 0.0
        %2434 = vmatpush2.xpose.msra.mxu0 0.0
        %2435 = vmatprep.subr.mxu0 0.0
        %2436 = vmatpush2.xpose.msra.mxu0 0.0
        %2437 = vmatprep.subr.mxu0 0.0
        %2438 = vmatpush2.xpose.msra.mxu0 0.0
        %2439 = vmatprep.subr.mxu0 0.0
        %2440 = vmatpush2.xpose.msra.mxu0 0.0
        %2441 = vmatprep.subr.mxu0 0.0
        %2442 = vmatpush2.xpose.msra.mxu0 0.0
        %2443 = vmatprep.subr.mxu0 0.0
        %2444 = vmatpush2.xpose.msra.mxu0 0.0
        %2445 = vmatprep.mubr.f32.mxu0 0.0
        %2446 = vmatmul.mubr.f32.gmra.mxu0 %v2376
        %v2447 = vpop.f32.mrf.mxu0
        %v2448 = vadd.f32 0.0, %v2447
        %v2449 = vpop.f32.mrf.mxu0
        %2450 = vdwg.mxu0
        %v2452 = vsel %vm1114, %v2222, 0
        %v2455 = vsel %vm1114, %v2297, 0
        %2457 = vmatprep.subr.mxu0 0.0
        %2458 = vmatpush1.xpose.msra.mxu0 0.0
        %2459 = vmatprep.subr.mxu0 0.0
        %2460 = vmatpush1.xpose.msra.mxu0 0.0
        %2461 = vmatprep.subr.mxu0 0.0
        %2462 = vmatpush1.xpose.msra.mxu0 0.0
        %2463 = vmatprep.subr.mxu0 0.0
        %2464 = vmatpush1.xpose.msra.mxu0 0.0
        %2465 = vmatprep.subr.mxu0 0.0
        %2466 = vmatpush1.xpose.msra.mxu0 0.0
        %2467 = vmatprep.subr.mxu0 0.0
        %2468 = vmatpush1.xpose.msra.mxu0 0.0
        %2469 = vmatprep.subr.mxu0 0.0
        %2470 = vmatpush1.xpose.msra.mxu0 0.0
        %2471 = vmatprep.subr.mxu0 0.0
        %2472 = vmatpush1.xpose.msra.mxu0 0.0
        %2473 = vmatprep.subr.mxu0 0.0
        %2474 = vmatpush1.xpose.msra.mxu0 0.0
        %2475 = vmatprep.subr.mxu0 0.0
        %2476 = vmatpush1.xpose.msra.mxu0 0.0
        %2477 = vmatprep.subr.mxu0 0.0
        %2478 = vmatpush1.xpose.msra.mxu0 0.0
        %2479 = vmatprep.subr.mxu0 0.0
        %2480 = vmatpush1.xpose.msra.mxu0 0.0
        %2481 = vmatprep.subr.mxu0 0.0
        %2482 = vmatpush1.xpose.msra.mxu0 0.0
        %2483 = vmatprep.subr.mxu0 0.0
        %2484 = vmatpush1.xpose.msra.mxu0 0.0
        %2485 = vmatprep.subr.mxu0 0.0
        %2486 = vmatpush1.xpose.msra.mxu0 0.0
        %2487 = vmatprep.subr.mxu0 0.0
        %2488 = vmatpush1.xpose.msra.mxu0 %v2455
        %2489 = vmatprep.subr.mxu0 0.0
        %2490 = vmatpush2.xpose.msra.mxu0 0.0
        %2491 = vmatprep.subr.mxu0 0.0
        %2492 = vmatpush2.xpose.msra.mxu0 0.0
        %2493 = vmatprep.subr.mxu0 0.0
        %2494 = vmatpush2.xpose.msra.mxu0 0.0
        %2495 = vmatprep.subr.mxu0 0.0
        %2496 = vmatpush2.xpose.msra.mxu0 0.0
        %2497 = vmatprep.subr.mxu0 0.0
        %2498 = vmatpush2.xpose.msra.mxu0 0.0
        %2499 = vmatprep.subr.mxu0 0.0
        %2500 = vmatpush2.xpose.msra.mxu0 0.0
        %2501 = vmatprep.subr.mxu0 0.0
        %2502 = vmatpush2.xpose.msra.mxu0 0.0
        %2503 = vmatprep.subr.mxu0 0.0
        %2504 = vmatpush2.xpose.msra.mxu0 0.0
        %2505 = vmatprep.subr.mxu0 0.0
        %2506 = vmatpush2.xpose.msra.mxu0 0.0
        %2507 = vmatprep.subr.mxu0 0.0
        %2508 = vmatpush2.xpose.msra.mxu0 0.0
        %2509 = vmatprep.subr.mxu0 0.0
        %2510 = vmatpush2.xpose.msra.mxu0 0.0
        %2511 = vmatprep.subr.mxu0 0.0
        %2512 = vmatpush2.xpose.msra.mxu0 0.0
        %2513 = vmatprep.subr.mxu0 0.0
        %2514 = vmatpush2.xpose.msra.mxu0 0.0
        %2515 = vmatprep.subr.mxu0 0.0
        %2516 = vmatpush2.xpose.msra.mxu0 0.0
        %2517 = vmatprep.subr.mxu0 0.0
        %2518 = vmatpush2.xpose.msra.mxu0 0.0
        %2519 = vmatprep.subr.mxu0 0.0
        %2520 = vmatpush2.xpose.msra.mxu0 0.0
        %2521 = vmatprep.mubr.f32.mxu0 0.0
        %2522 = vmatmul.mubr.f32.gmra.mxu0 %v2452
        %v2523 = vpop.f32.mrf.mxu0
        %v2524 = vadd.f32 0.0, %v2523
        %v2525 = vpop.f32.mrf.mxu0
        %2526 = vdwg.mxu0
        %v2527 = vmul.f32 %v2448, 0.35355338
        %v2528 = vmul.f32 %v2524, 0.35355338
        %v2529 = vsel %vm800, -1e+09, %v2527
        %v2530 = vsel %vm801, -1e+09, %v2528
        %v2531 = vsel %vm1114, %v2529, -inf
        %2532 = vmax.xlane.f32.xlu0 %v2531
        %v2533 = vpop.xlane.xlu0 %2532
        %v2534 = vsel %vm1114, %v2530, -inf
        %2535 = vmax.xlane.f32.xlu0 %v2534
        %v2536 = vpop.xlane.xlu0 %2535
        %v2537 = vsub.f32 %v2529, %v2533
        %v2538 = vsub.f32 %v2530, %v2536
        %v2539 = vmul.f32 %v2537, 1.442695
        %v2540 = vpow.pop %v2539
        %v2541 = vmul.f32 %v2538, 1.442695
        %v2542 = vpow.pop %v2541
        %v2543 = vsel %vm1114, %v2540, 0.0
        %2544 = vadd.xlane.f32.xlu0 %v2543
        %v2545 = vpop.xlane.xlu0 %2544
        %v2546 = vsel %vm1114, %v2542, 0.0
        %2547 = vadd.xlane.f32.xlu0 %v2546
        %v2548 = vpop.xlane.xlu0 %2547
        %v2549 = vrcp.pop %v2545
        %v2550 = vrcp.pop %v2548
        %v2551 = vmul.f32 %v2540, %v2549
        %v2552 = vmul.f32 %v2542, %v2550
        %v2554 = vsel %vm1114, %v2551, 0
        %2556 = vmatprep.subr.mxu0 0.0
        %2557 = vmatpush1.msra.mxu0 0.0
        %2558 = vmatprep.subr.mxu0 0.0
        %2559 = vmatpush1.msra.mxu0 0.0
        %2560 = vmatprep.subr.mxu0 0.0
        %2561 = vmatpush1.msra.mxu0 0.0
        %2562 = vmatprep.subr.mxu0 0.0
        %2563 = vmatpush1.msra.mxu0 0.0
        %2564 = vmatprep.subr.mxu0 0.0
        %2565 = vmatpush1.msra.mxu0 0.0
        %2566 = vmatprep.subr.mxu0 0.0
        %2567 = vmatpush1.msra.mxu0 0.0
        %2568 = vmatprep.subr.mxu0 0.0
        %2569 = vmatpush1.msra.mxu0 0.0
        %2570 = vmatprep.subr.mxu0 0.0
        %2571 = vmatpush1.msra.mxu0 0.0
        %2572 = vmatprep.subr.mxu0 0.0
        %2573 = vmatpush1.msra.mxu0 0.0
        %2574 = vmatprep.subr.mxu0 0.0
        %2575 = vmatpush1.msra.mxu0 0.0
        %2576 = vmatprep.subr.mxu0 0.0
        %2577 = vmatpush1.msra.mxu0 0.0
        %2578 = vmatprep.subr.mxu0 0.0
        %2579 = vmatpush1.msra.mxu0 0.0
        %2580 = vmatprep.subr.mxu0 0.0
        %2581 = vmatpush1.msra.mxu0 0.0
        %2582 = vmatprep.subr.mxu0 0.0
        %2583 = vmatpush1.msra.mxu0 0.0
        %2584 = vmatprep.subr.mxu0 0.0
        %2585 = vmatpush1.msra.mxu0 0.0
        %2586 = vmatprep.subr.mxu0 0.0
        %2587 = vmatpush1.msra.mxu0 %v2367
        %2588 = vmatprep.subr.mxu0 0.0
        %2589 = vmatpush2.msra.mxu0 0.0
        %2590 = vmatprep.subr.mxu0 0.0
        %2591 = vmatpush2.msra.mxu0 0.0
        %2592 = vmatprep.subr.mxu0 0.0
        %2593 = vmatpush2.msra.mxu0 0.0
        %2594 = vmatprep.subr.mxu0 0.0
        %2595 = vmatpush2.msra.mxu0 0.0
        %2596 = vmatprep.subr.mxu0 0.0
        %2597 = vmatpush2.msra.mxu0 0.0
        %2598 = vmatprep.subr.mxu0 0.0
        %2599 = vmatpush2.msra.mxu0 0.0
        %2600 = vmatprep.subr.mxu0 0.0
        %2601 = vmatpush2.msra.mxu0 0.0
        %2602 = vmatprep.subr.mxu0 0.0
        %2603 = vmatpush2.msra.mxu0 0.0
        %2604 = vmatprep.subr.mxu0 0.0
        %2605 = vmatpush2.msra.mxu0 0.0
        %2606 = vmatprep.subr.mxu0 0.0
        %2607 = vmatpush2.msra.mxu0 0.0
        %2608 = vmatprep.subr.mxu0 0.0
        %2609 = vmatpush2.msra.mxu0 0.0
        %2610 = vmatprep.subr.mxu0 0.0
        %2611 = vmatpush2.msra.mxu0 0.0
        %2612 = vmatprep.subr.mxu0 0.0
        %2613 = vmatpush2.msra.mxu0 0.0
        %2614 = vmatprep.subr.mxu0 0.0
        %2615 = vmatpush2.msra.mxu0 0.0
        %2616 = vmatprep.subr.mxu0 0.0
        %2617 = vmatpush2.msra.mxu0 0.0
        %2618 = vmatprep.subr.mxu0 0.0
        %2619 = vmatpush2.msra.mxu0 0.0
        %2620 = vmatprep.mubr.f32.mxu0 0.0
        %2621 = vmatmul.mubr.f32.gmra.mxu0 %v2554
        %v2622 = vpop.f32.mrf.mxu0
        %v2623 = vadd.f32 0.0, %v2622
        %v2624 = vpop.f32.mrf.mxu0
        %2625 = vdwg.mxu0
        %v2627 = vsel %vm1114, %v2552, 0
        %2629 = vmatprep.subr.mxu0 0.0
        %2630 = vmatpush1.msra.mxu0 0.0
        %2631 = vmatprep.subr.mxu0 0.0
        %2632 = vmatpush1.msra.mxu0 0.0
        %2633 = vmatprep.subr.mxu0 0.0
        %2634 = vmatpush1.msra.mxu0 0.0
        %2635 = vmatprep.subr.mxu0 0.0
        %2636 = vmatpush1.msra.mxu0 0.0
        %2637 = vmatprep.subr.mxu0 0.0
        %2638 = vmatpush1.msra.mxu0 0.0
        %2639 = vmatprep.subr.mxu0 0.0
        %2640 = vmatpush1.msra.mxu0 0.0
        %2641 = vmatprep.subr.mxu0 0.0
        %2642 = vmatpush1.msra.mxu0 0.0
        %2643 = vmatprep.subr.mxu0 0.0
        %2644 = vmatpush1.msra.mxu0 0.0
        %2645 = vmatprep.subr.mxu0 0.0
        %2646 = vmatpush1.msra.mxu0 0.0
        %2647 = vmatprep.subr.mxu0 0.0
        %2648 = vmatpush1.msra.mxu0 0.0
        %2649 = vmatprep.subr.mxu0 0.0
        %2650 = vmatpush1.msra.mxu0 0.0
        %2651 = vmatprep.subr.mxu0 0.0
        %2652 = vmatpush1.msra.mxu0 0.0
        %2653 = vmatprep.subr.mxu0 0.0
        %2654 = vmatpush1.msra.mxu0 0.0
        %2655 = vmatprep.subr.mxu0 0.0
        %2656 = vmatpush1.msra.mxu0 0.0
        %2657 = vmatprep.subr.mxu0 0.0
        %2658 = vmatpush1.msra.mxu0 0.0
        %2659 = vmatprep.subr.mxu0 0.0
        %2660 = vmatpush1.msra.mxu0 %v2372
        %2661 = vmatprep.subr.mxu0 0.0
        %2662 = vmatpush2.msra.mxu0 0.0
        %2663 = vmatprep.subr.mxu0 0.0
        %2664 = vmatpush2.msra.mxu0 0.0
        %2665 = vmatprep.subr.mxu0 0.0
        %2666 = vmatpush2.msra.mxu0 0.0
        %2667 = vmatprep.subr.mxu0 0.0
        %2668 = vmatpush2.msra.mxu0 0.0
        %2669 = vmatprep.subr.mxu0 0.0
        %2670 = vmatpush2.msra.mxu0 0.0
        %2671 = vmatprep.subr.mxu0 0.0
        %2672 = vmatpush2.msra.mxu0 0.0
        %2673 = vmatprep.subr.mxu0 0.0
        %2674 = vmatpush2.msra.mxu0 0.0
        %2675 = vmatprep.subr.mxu0 0.0
        %2676 = vmatpush2.msra.mxu0 0.0
        %2677 = vmatprep.subr.mxu0 0.0
        %2678 = vmatpush2.msra.mxu0 0.0
        %2679 = vmatprep.subr.mxu0 0.0
        %2680 = vmatpush2.msra.mxu0 0.0
        %2681 = vmatprep.subr.mxu0 0.0
        %2682 = vmatpush2.msra.mxu0 0.0
        %2683 = vmatprep.subr.mxu0 0.0
        %2684 = vmatpush2.msra.mxu0 0.0
        %2685 = vmatprep.subr.mxu0 0.0
        %2686 = vmatpush2.msra.mxu0 0.0
        %2687 = vmatprep.subr.mxu0 0.0
        %2688 = vmatpush2.msra.mxu0 0.0
        %2689 = vmatprep.subr.mxu0 0.0
        %2690 = vmatpush2.msra.mxu0 0.0
        %2691 = vmatprep.subr.mxu0 0.0
        %2692 = vmatpush2.msra.mxu0 0.0
        %2693 = vmatprep.mubr.f32.mxu0 0.0
        %2694 = vmatmul.mubr.f32.gmra.mxu0 %v2627
        %v2695 = vpop.f32.mrf.mxu0
        %v2696 = vadd.f32 0.0, %v2695
        %v2697 = vpop.f32.mrf.mxu0
        %2698 = vdwg.mxu0
        %v2700 = vsel %vm1114, %v2623, 0
        %v2703 = vsel %vm1114, %v2696, 0
        %2705 = vmatprep.subr.mxu0 0.0
        %2706 = vmatpush1.msra.mxu0 0.0
        %2707 = vmatprep.subr.mxu0 0.0
        %2708 = vmatpush1.msra.mxu0 0.0
        %2709 = vmatprep.subr.mxu0 0.0
        %2710 = vmatpush1.msra.mxu0 0.0
        %2711 = vmatprep.subr.mxu0 0.0
        %2712 = vmatpush1.msra.mxu0 0.0
        %2713 = vmatprep.subr.mxu0 0.0
        %2714 = vmatpush1.msra.mxu0 0.0
        %2715 = vmatprep.subr.mxu0 0.0
        %2716 = vmatpush1.msra.mxu0 0.0
        %2717 = vmatprep.subr.mxu0 0.0
        %2718 = vmatpush1.msra.mxu0 0.0
        %2719 = vmatprep.subr.mxu0 0.0
        %2720 = vmatpush1.msra.mxu0 0.0
        %2721 = vmatprep.subr.mxu0 0.0
        %2722 = vmatpush1.msra.mxu0 0.0
        %2723 = vmatprep.subr.mxu0 0.0
        %2724 = vmatpush1.msra.mxu0 0.0
        %2725 = vmatprep.subr.mxu0 0.0
        %2726 = vmatpush1.msra.mxu0 0.0
        %2727 = vmatprep.subr.mxu0 0.0
        %2728 = vmatpush1.msra.mxu0 0.0
        %2729 = vmatprep.subr.mxu0 0.0
        %2730 = vmatpush1.msra.mxu0 0.0
        %2731 = vmatprep.subr.mxu0 0.0
        %2732 = vmatpush1.msra.mxu0 0.0
        %2733 = vmatprep.subr.mxu0 0.0
        %2734 = vmatpush1.msra.mxu0 0.0
        %2735 = vmatprep.subr.mxu0 0.0
        %2736 = vmatpush1.msra.mxu0 %v880
        %2737 = vmatprep.subr.mxu0 0.0
        %2738 = vmatpush2.msra.mxu0 0.0
        %2739 = vmatprep.subr.mxu0 0.0
        %2740 = vmatpush2.msra.mxu0 0.0
        %2741 = vmatprep.subr.mxu0 0.0
        %2742 = vmatpush2.msra.mxu0 0.0
        %2743 = vmatprep.subr.mxu0 0.0
        %2744 = vmatpush2.msra.mxu0 0.0
        %2745 = vmatprep.subr.mxu0 0.0
        %2746 = vmatpush2.msra.mxu0 0.0
        %2747 = vmatprep.subr.mxu0 0.0
        %2748 = vmatpush2.msra.mxu0 0.0
        %2749 = vmatprep.subr.mxu0 0.0
        %2750 = vmatpush2.msra.mxu0 0.0
        %2751 = vmatprep.subr.mxu0 0.0
        %2752 = vmatpush2.msra.mxu0 0.0
        %2753 = vmatprep.subr.mxu0 0.0
        %2754 = vmatpush2.msra.mxu0 0.0
        %2755 = vmatprep.subr.mxu0 0.0
        %2756 = vmatpush2.msra.mxu0 0.0
        %2757 = vmatprep.subr.mxu0 0.0
        %2758 = vmatpush2.msra.mxu0 0.0
        %2759 = vmatprep.subr.mxu0 0.0
        %2760 = vmatpush2.msra.mxu0 0.0
        %2761 = vmatprep.subr.mxu0 0.0
        %2762 = vmatpush2.msra.mxu0 0.0
        %2763 = vmatprep.subr.mxu0 0.0
        %2764 = vmatpush2.msra.mxu0 0.0
        %2765 = vmatprep.subr.mxu0 0.0
        %2766 = vmatpush2.msra.mxu0 0.0
        %2767 = vmatprep.subr.mxu0 0.0
        %2768 = vmatpush2.msra.mxu0 0.0
        %2769 = vmatprep.mubr.f32.mxu0 0.0
        %2770 = vmatmul.mubr.f32.gmra.mxu0 %v2700
        %v2771 = vpop.f32.mrf.mxu0
        %v2772 = vadd.f32 0.0, %v2771
        %v2773 = vpop.f32.mrf.mxu0
        %2774 = vmatprep.mubr.f32.mxu0 0.0
        %2775 = vmatmul.mubr.f32.gmra.mxu0 %v2703
        %v2776 = vpop.f32.mrf.mxu0
        %v2777 = vadd.f32 0.0, %v2776
        %v2778 = vpop.f32.mrf.mxu0
        %2779 = vdwg.mxu0
        %v2780 = vadd.f32 %v2142, %v2772
        %v2781 = vadd.f32 %v2147, %v2777
        %2782 = vmatprep.subr.mxu0 0.0
        %2783 = vmatpush1.msra.mxu0 0.0
        %2784 = vmatprep.subr.mxu0 0.0
        %2785 = vmatpush1.msra.mxu0 0.0
        %2786 = vmatprep.subr.mxu0 0.0
        %2787 = vmatpush1.msra.mxu0 0.0
        %2788 = vmatprep.subr.mxu0 0.0
        %2789 = vmatpush1.msra.mxu0 0.0
        %2790 = vmatprep.subr.mxu0 0.0
        %2791 = vmatpush1.msra.mxu0 0.0
        %2792 = vmatprep.subr.mxu0 0.0
        %2793 = vmatpush1.msra.mxu0 0.0
        %2794 = vmatprep.subr.mxu0 0.0
        %2795 = vmatpush1.msra.mxu0 0.0
        %2796 = vmatprep.subr.mxu0 0.0
        %2797 = vmatpush1.msra.mxu0 0.0
        %2798 = vmatprep.subr.mxu0 0.0
        %2799 = vmatpush1.msra.mxu0 0.0
        %2800 = vmatprep.subr.mxu0 0.0
        %2801 = vmatpush1.msra.mxu0 0.0
        %2802 = vmatprep.subr.mxu0 0.0
        %2803 = vmatpush1.msra.mxu0 0.0
        %2804 = vmatprep.subr.mxu0 0.0
        %2805 = vmatpush1.msra.mxu0 0.0
        %2806 = vmatprep.subr.mxu0 0.0
        %2807 = vmatpush1.msra.mxu0 %v845
        %2808 = vmatprep.subr.mxu0 0.0
        %2809 = vmatpush1.msra.mxu0 %v844
        %2810 = vmatprep.subr.mxu0 0.0
        %2811 = vmatpush1.msra.mxu0 %v843
        %2812 = vmatprep.subr.mxu0 0.0
        %2813 = vmatpush1.msra.mxu0 %v842
        %2814 = vmatprep.subr.mxu0 0.0
        %2815 = vmatpush2.msra.mxu0 0.0
        %2816 = vmatprep.subr.mxu0 0.0
        %2817 = vmatpush2.msra.mxu0 0.0
        %2818 = vmatprep.subr.mxu0 0.0
        %2819 = vmatpush2.msra.mxu0 0.0
        %2820 = vmatprep.subr.mxu0 0.0
        %2821 = vmatpush2.msra.mxu0 0.0
        %2822 = vmatprep.subr.mxu0 0.0
        %2823 = vmatpush2.msra.mxu0 0.0
        %2824 = vmatprep.subr.mxu0 0.0
        %2825 = vmatpush2.msra.mxu0 0.0
        %2826 = vmatprep.subr.mxu0 0.0
        %2827 = vmatpush2.msra.mxu0 0.0
        %2828 = vmatprep.subr.mxu0 0.0
        %2829 = vmatpush2.msra.mxu0 0.0
        %2830 = vmatprep.subr.mxu0 0.0
        %2831 = vmatpush2.msra.mxu0 0.0
        %2832 = vmatprep.subr.mxu0 0.0
        %2833 = vmatpush2.msra.mxu0 0.0
        %2834 = vmatprep.subr.mxu0 0.0
        %2835 = vmatpush2.msra.mxu0 0.0
        %2836 = vmatprep.subr.mxu0 0.0
        %2837 = vmatpush2.msra.mxu0 0.0
        %2838 = vmatprep.subr.mxu0 0.0
        %2839 = vmatpush2.msra.mxu0 0.0
        %2840 = vmatprep.subr.mxu0 0.0
        %2841 = vmatpush2.msra.mxu0 0.0
        %2842 = vmatprep.subr.mxu0 0.0
        %2843 = vmatpush2.msra.mxu0 0.0
        %2844 = vmatprep.subr.mxu0 0.0
        %2845 = vmatpush2.msra.mxu0 0.0
        %2846 = vmatprep.mubr.f32.mxu0 0.0
        %2847 = vmatmul.mubr.f32.gmra.mxu0 %v884
        %v2848 = vpop.f32.mrf.mxu0
        %v2849 = vadd.f32 0.0, %v2848
        %v2850 = vpop.f32.mrf.mxu0
        %2851 = vmatprep.mubr.f32.mxu0 0.0
        %2852 = vmatmul.mubr.f32.gmra.mxu0 %v887
        %v2853 = vpop.f32.mrf.mxu0
        %v2854 = vadd.f32 0.0, %v2853
        %v2855 = vpop.f32.mrf.mxu0
        %2856 = vdwg.mxu0
        %2857 = vmatprep.subr.mxu0 0.0
        %2858 = vmatpush1.msra.mxu0 0.0
        %2859 = vmatprep.subr.mxu0 0.0
        %2860 = vmatpush1.msra.mxu0 0.0
        %2861 = vmatprep.subr.mxu0 0.0
        %2862 = vmatpush1.msra.mxu0 0.0
        %2863 = vmatprep.subr.mxu0 0.0
        %2864 = vmatpush1.msra.mxu0 0.0
        %2865 = vmatprep.subr.mxu0 0.0
        %2866 = vmatpush1.msra.mxu0 0.0
        %2867 = vmatprep.subr.mxu0 0.0
        %2868 = vmatpush1.msra.mxu0 0.0
        %2869 = vmatprep.subr.mxu0 0.0
        %2870 = vmatpush1.msra.mxu0 0.0
        %2871 = vmatprep.subr.mxu0 0.0
        %2872 = vmatpush1.msra.mxu0 0.0
        %2873 = vmatprep.subr.mxu0 0.0
        %2874 = vmatpush1.msra.mxu0 0.0
        %2875 = vmatprep.subr.mxu0 0.0
        %2876 = vmatpush1.msra.mxu0 0.0
        %2877 = vmatprep.subr.mxu0 0.0
        %2878 = vmatpush1.msra.mxu0 0.0
        %2879 = vmatprep.subr.mxu0 0.0
        %2880 = vmatpush1.msra.mxu0 0.0
        %2881 = vmatprep.subr.mxu0 0.0
        %2882 = vmatpush1.msra.mxu0 %v861
        %2883 = vmatprep.subr.mxu0 0.0
        %2884 = vmatpush1.msra.mxu0 %v860
        %2885 = vmatprep.subr.mxu0 0.0
        %2886 = vmatpush1.msra.mxu0 %v859
        %2887 = vmatprep.subr.mxu0 0.0
        %2888 = vmatpush1.msra.mxu0 %v858
        %2889 = vmatprep.subr.mxu0 0.0
        %2890 = vmatpush2.msra.mxu0 0.0
        %2891 = vmatprep.subr.mxu0 0.0
        %2892 = vmatpush2.msra.mxu0 0.0
        %2893 = vmatprep.subr.mxu0 0.0
        %2894 = vmatpush2.msra.mxu0 0.0
        %2895 = vmatprep.subr.mxu0 0.0
        %2896 = vmatpush2.msra.mxu0 0.0
        %2897 = vmatprep.subr.mxu0 0.0
        %2898 = vmatpush2.msra.mxu0 0.0
        %2899 = vmatprep.subr.mxu0 0.0
        %2900 = vmatpush2.msra.mxu0 0.0
        %2901 = vmatprep.subr.mxu0 0.0
        %2902 = vmatpush2.msra.mxu0 0.0
        %2903 = vmatprep.subr.mxu0 0.0
        %2904 = vmatpush2.msra.mxu0 0.0
        %2905 = vmatprep.subr.mxu0 0.0
        %2906 = vmatpush2.msra.mxu0 0.0
        %2907 = vmatprep.subr.mxu0 0.0
        %2908 = vmatpush2.msra.mxu0 0.0
        %2909 = vmatprep.subr.mxu0 0.0
        %2910 = vmatpush2.msra.mxu0 0.0
        %2911 = vmatprep.subr.mxu0 0.0
        %2912 = vmatpush2.msra.mxu0 0.0
        %2913 = vmatprep.subr.mxu0 0.0
        %2914 = vmatpush2.msra.mxu0 0.0
        %2915 = vmatprep.subr.mxu0 0.0
        %2916 = vmatpush2.msra.mxu0 0.0
        %2917 = vmatprep.subr.mxu0 0.0
        %2918 = vmatpush2.msra.mxu0 0.0
        %2919 = vmatprep.subr.mxu0 0.0
        %2920 = vmatpush2.msra.mxu0 0.0
        %2921 = vmatprep.mubr.f32.mxu0 0.0
        %2922 = vmatmul.mubr.f32.gmra.mxu0 %v884
        %v2923 = vpop.f32.mrf.mxu0
        %v2924 = vadd.f32 0.0, %v2923
        %v2925 = vpop.f32.mrf.mxu0
        %2926 = vmatprep.mubr.f32.mxu0 0.0
        %2927 = vmatmul.mubr.f32.gmra.mxu0 %v887
        %v2928 = vpop.f32.mrf.mxu0
        %v2929 = vadd.f32 0.0, %v2928
        %v2930 = vpop.f32.mrf.mxu0
        %2931 = vdwg.mxu0
        %2932 = vmatprep.subr.mxu0 0.0
        %2933 = vmatpush1.msra.mxu0 0.0
        %2934 = vmatprep.subr.mxu0 0.0
        %2935 = vmatpush1.msra.mxu0 0.0
        %2936 = vmatprep.subr.mxu0 0.0
        %2937 = vmatpush1.msra.mxu0 0.0
        %2938 = vmatprep.subr.mxu0 0.0
        %2939 = vmatpush1.msra.mxu0 0.0
        %2940 = vmatprep.subr.mxu0 0.0
        %2941 = vmatpush1.msra.mxu0 0.0
        %2942 = vmatprep.subr.mxu0 0.0
        %2943 = vmatpush1.msra.mxu0 0.0
        %2944 = vmatprep.subr.mxu0 0.0
        %2945 = vmatpush1.msra.mxu0 0.0
        %2946 = vmatprep.subr.mxu0 0.0
        %2947 = vmatpush1.msra.mxu0 0.0
        %2948 = vmatprep.subr.mxu0 0.0
        %2949 = vmatpush1.msra.mxu0 0.0
        %2950 = vmatprep.subr.mxu0 0.0
        %2951 = vmatpush1.msra.mxu0 0.0
        %2952 = vmatprep.subr.mxu0 0.0
        %2953 = vmatpush1.msra.mxu0 0.0
        %2954 = vmatprep.subr.mxu0 0.0
        %2955 = vmatpush1.msra.mxu0 0.0
        %2956 = vmatprep.subr.mxu0 0.0
        %2957 = vmatpush1.msra.mxu0 %v877
        %2958 = vmatprep.subr.mxu0 0.0
        %2959 = vmatpush1.msra.mxu0 %v876
        %2960 = vmatprep.subr.mxu0 0.0
        %2961 = vmatpush1.msra.mxu0 %v875
        %2962 = vmatprep.subr.mxu0 0.0
        %2963 = vmatpush1.msra.mxu0 %v874
        %2964 = vmatprep.subr.mxu0 0.0
        %2965 = vmatpush2.msra.mxu0 0.0
        %2966 = vmatprep.subr.mxu0 0.0
        %2967 = vmatpush2.msra.mxu0 0.0
        %2968 = vmatprep.subr.mxu0 0.0
        %2969 = vmatpush2.msra.mxu0 0.0
        %2970 = vmatprep.subr.mxu0 0.0
        %2971 = vmatpush2.msra.mxu0 0.0
        %2972 = vmatprep.subr.mxu0 0.0
        %2973 = vmatpush2.msra.mxu0 0.0
        %2974 = vmatprep.subr.mxu0 0.0
        %2975 = vmatpush2.msra.mxu0 0.0
        %2976 = vmatprep.subr.mxu0 0.0
        %2977 = vmatpush2.msra.mxu0 0.0
        %2978 = vmatprep.subr.mxu0 0.0
        %2979 = vmatpush2.msra.mxu0 0.0
        %2980 = vmatprep.subr.mxu0 0.0
        %2981 = vmatpush2.msra.mxu0 0.0
        %2982 = vmatprep.subr.mxu0 0.0
        %2983 = vmatpush2.msra.mxu0 0.0
        %2984 = vmatprep.subr.mxu0 0.0
        %2985 = vmatpush2.msra.mxu0 0.0
        %2986 = vmatprep.subr.mxu0 0.0
        %2987 = vmatpush2.msra.mxu0 0.0
        %2988 = vmatprep.subr.mxu0 0.0
        %2989 = vmatpush2.msra.mxu0 0.0
        %2990 = vmatprep.subr.mxu0 0.0
        %2991 = vmatpush2.msra.mxu0 0.0
        %2992 = vmatprep.subr.mxu0 0.0
        %2993 = vmatpush2.msra.mxu0 0.0
        %2994 = vmatprep.subr.mxu0 0.0
        %2995 = vmatpush2.msra.mxu0 0.0
        %2996 = vmatprep.mubr.f32.mxu0 0.0
        %2997 = vmatmul.mubr.f32.gmra.mxu0 %v884
        %v2998 = vpop.f32.mrf.mxu0
        %v2999 = vadd.f32 0.0, %v2998
        %v3000 = vpop.f32.mrf.mxu0
        %3001 = vmatprep.mubr.f32.mxu0 0.0
        %3002 = vmatmul.mubr.f32.gmra.mxu0 %v887
        %v3003 = vpop.f32.mrf.mxu0
        %v3004 = vadd.f32 0.0, %v3003
        %v3005 = vpop.f32.mrf.mxu0
        %3006 = vdwg.mxu0
        %v3008 = vsel %vm1114, %v2849, 0
        %v3011 = vsel %vm1114, %v2924, 0
        %3013 = vmatprep.subr.mxu0 0.0
        %3014 = vmatpush1.xpose.msra.mxu0 0.0
        %3015 = vmatprep.subr.mxu0 0.0
        %3016 = vmatpush1.xpose.msra.mxu0 0.0
        %3017 = vmatprep.subr.mxu0 0.0
        %3018 = vmatpush1.xpose.msra.mxu0 0.0
        %3019 = vmatprep.subr.mxu0 0.0
        %3020 = vmatpush1.xpose.msra.mxu0 0.0
        %3021 = vmatprep.subr.mxu0 0.0
        %3022 = vmatpush1.xpose.msra.mxu0 0.0
        %3023 = vmatprep.subr.mxu0 0.0
        %3024 = vmatpush1.xpose.msra.mxu0 0.0
        %3025 = vmatprep.subr.mxu0 0.0
        %3026 = vmatpush1.xpose.msra.mxu0 0.0
        %3027 = vmatprep.subr.mxu0 0.0
        %3028 = vmatpush1.xpose.msra.mxu0 0.0
        %3029 = vmatprep.subr.mxu0 0.0
        %3030 = vmatpush1.xpose.msra.mxu0 0.0
        %3031 = vmatprep.subr.mxu0 0.0
        %3032 = vmatpush1.xpose.msra.mxu0 0.0
        %3033 = vmatprep.subr.mxu0 0.0
        %3034 = vmatpush1.xpose.msra.mxu0 0.0
        %3035 = vmatprep.subr.mxu0 0.0
        %3036 = vmatpush1.xpose.msra.mxu0 0.0
        %3037 = vmatprep.subr.mxu0 0.0
        %3038 = vmatpush1.xpose.msra.mxu0 0.0
        %3039 = vmatprep.subr.mxu0 0.0
        %3040 = vmatpush1.xpose.msra.mxu0 0.0
        %3041 = vmatprep.subr.mxu0 0.0
        %3042 = vmatpush1.xpose.msra.mxu0 0.0
        %3043 = vmatprep.subr.mxu0 0.0
        %3044 = vmatpush1.xpose.msra.mxu0 %v3011
        %3045 = vmatprep.subr.mxu0 0.0
        %3046 = vmatpush2.xpose.msra.mxu0 0.0
        %3047 = vmatprep.subr.mxu0 0.0
        %3048 = vmatpush2.xpose.msra.mxu0 0.0
        %3049 = vmatprep.subr.mxu0 0.0
        %3050 = vmatpush2.xpose.msra.mxu0 0.0
        %3051 = vmatprep.subr.mxu0 0.0
        %3052 = vmatpush2.xpose.msra.mxu0 0.0
        %3053 = vmatprep.subr.mxu0 0.0
        %3054 = vmatpush2.xpose.msra.mxu0 0.0
        %3055 = vmatprep.subr.mxu0 0.0
        %3056 = vmatpush2.xpose.msra.mxu0 0.0
        %3057 = vmatprep.subr.mxu0 0.0
        %3058 = vmatpush2.xpose.msra.mxu0 0.0
        %3059 = vmatprep.subr.mxu0 0.0
        %3060 = vmatpush2.xpose.msra.mxu0 0.0
        %3061 = vmatprep.subr.mxu0 0.0
        %3062 = vmatpush2.xpose.msra.mxu0 0.0
        %3063 = vmatprep.subr.mxu0 0.0
        %3064 = vmatpush2.xpose.msra.mxu0 0.0
        %3065 = vmatprep.subr.mxu0 0.0
        %3066 = vmatpush2.xpose.msra.mxu0 0.0
        %3067 = vmatprep.subr.mxu0 0.0
        %3068 = vmatpush2.xpose.msra.mxu0 0.0
        %3069 = vmatprep.subr.mxu0 0.0
        %3070 = vmatpush2.xpose.msra.mxu0 0.0
        %3071 = vmatprep.subr.mxu0 0.0
        %3072 = vmatpush2.xpose.msra.mxu0 0.0
        %3073 = vmatprep.subr.mxu0 0.0
        %3074 = vmatpush2.xpose.msra.mxu0 0.0
        %3075 = vmatprep.subr.mxu0 0.0
        %3076 = vmatpush2.xpose.msra.mxu0 0.0
        %3077 = vmatprep.mubr.f32.mxu0 0.0
        %3078 = vmatmul.mubr.f32.gmra.mxu0 %v3008
        %v3079 = vpop.f32.mrf.mxu0
        %v3080 = vadd.f32 0.0, %v3079
        %v3081 = vpop.f32.mrf.mxu0
        %3082 = vdwg.mxu0
        %v3084 = vsel %vm1114, %v2854, 0
        %v3087 = vsel %vm1114, %v2929, 0
        %3089 = vmatprep.subr.mxu0 0.0
        %3090 = vmatpush1.xpose.msra.mxu0 0.0
        %3091 = vmatprep.subr.mxu0 0.0
        %3092 = vmatpush1.xpose.msra.mxu0 0.0
        %3093 = vmatprep.subr.mxu0 0.0
        %3094 = vmatpush1.xpose.msra.mxu0 0.0
        %3095 = vmatprep.subr.mxu0 0.0
        %3096 = vmatpush1.xpose.msra.mxu0 0.0
        %3097 = vmatprep.subr.mxu0 0.0
        %3098 = vmatpush1.xpose.msra.mxu0 0.0
        %3099 = vmatprep.subr.mxu0 0.0
        %3100 = vmatpush1.xpose.msra.mxu0 0.0
        %3101 = vmatprep.subr.mxu0 0.0
        %3102 = vmatpush1.xpose.msra.mxu0 0.0
        %3103 = vmatprep.subr.mxu0 0.0
        %3104 = vmatpush1.xpose.msra.mxu0 0.0
        %3105 = vmatprep.subr.mxu0 0.0
        %3106 = vmatpush1.xpose.msra.mxu0 0.0
        %3107 = vmatprep.subr.mxu0 0.0
        %3108 = vmatpush1.xpose.msra.mxu0 0.0
        %3109 = vmatprep.subr.mxu0 0.0
        %3110 = vmatpush1.xpose.msra.mxu0 0.0
        %3111 = vmatprep.subr.mxu0 0.0
        %3112 = vmatpush1.xpose.msra.mxu0 0.0
        %3113 = vmatprep.subr.mxu0 0.0
        %3114 = vmatpush1.xpose.msra.mxu0 0.0
        %3115 = vmatprep.subr.mxu0 0.0
        %3116 = vmatpush1.xpose.msra.mxu0 0.0
        %3117 = vmatprep.subr.mxu0 0.0
        %3118 = vmatpush1.xpose.msra.mxu0 0.0
        %3119 = vmatprep.subr.mxu0 0.0
        %3120 = vmatpush1.xpose.msra.mxu0 %v3087
        %3121 = vmatprep.subr.mxu0 0.0
        %3122 = vmatpush2.xpose.msra.mxu0 0.0
        %3123 = vmatprep.subr.mxu0 0.0
        %3124 = vmatpush2.xpose.msra.mxu0 0.0
        %3125 = vmatprep.subr.mxu0 0.0
        %3126 = vmatpush2.xpose.msra.mxu0 0.0
        %3127 = vmatprep.subr.mxu0 0.0
        %3128 = vmatpush2.xpose.msra.mxu0 0.0
        %3129 = vmatprep.subr.mxu0 0.0
        %3130 = vmatpush2.xpose.msra.mxu0 0.0
        %3131 = vmatprep.subr.mxu0 0.0
        %3132 = vmatpush2.xpose.msra.mxu0 0.0
        %3133 = vmatprep.subr.mxu0 0.0
        %3134 = vmatpush2.xpose.msra.mxu0 0.0
        %3135 = vmatprep.subr.mxu0 0.0
        %3136 = vmatpush2.xpose.msra.mxu0 0.0
        %3137 = vmatprep.subr.mxu0 0.0
        %3138 = vmatpush2.xpose.msra.mxu0 0.0
        %3139 = vmatprep.subr.mxu0 0.0
        %3140 = vmatpush2.xpose.msra.mxu0 0.0
        %3141 = vmatprep.subr.mxu0 0.0
        %3142 = vmatpush2.xpose.msra.mxu0 0.0
        %3143 = vmatprep.subr.mxu0 0.0
        %3144 = vmatpush2.xpose.msra.mxu0 0.0
        %3145 = vmatprep.subr.mxu0 0.0
        %3146 = vmatpush2.xpose.msra.mxu0 0.0
        %3147 = vmatprep.subr.mxu0 0.0
        %3148 = vmatpush2.xpose.msra.mxu0 0.0
        %3149 = vmatprep.subr.mxu0 0.0
        %3150 = vmatpush2.xpose.msra.mxu0 0.0
        %3151 = vmatprep.subr.mxu0 0.0
        %3152 = vmatpush2.xpose.msra.mxu0 0.0
        %3153 = vmatprep.mubr.f32.mxu0 0.0
        %3154 = vmatmul.mubr.f32.gmra.mxu0 %v3084
        %v3155 = vpop.f32.mrf.mxu0
        %v3156 = vadd.f32 0.0, %v3155
        %v3157 = vpop.f32.mrf.mxu0
        %3158 = vdwg.mxu0
        %v3159 = vmul.f32 %v3080, 0.35355338
        %v3160 = vmul.f32 %v3156, 0.35355338
        %v3161 = vsel %vm800, -1e+09, %v3159
        %v3162 = vsel %vm801, -1e+09, %v3160
        %v3163 = vsel %vm1114, %v3161, -inf
        %3164 = vmax.xlane.f32.xlu0 %v3163
        %v3165 = vpop.xlane.xlu0 %3164
        %v3166 = vsel %vm1114, %v3162, -inf
        %3167 = vmax.xlane.f32.xlu0 %v3166
        %v3168 = vpop.xlane.xlu0 %3167
        %v3169 = vsub.f32 %v3161, %v3165
        %v3170 = vsub.f32 %v3162, %v3168
        %v3171 = vmul.f32 %v3169, 1.442695
        %v3172 = vpow.pop %v3171
        %v3173 = vmul.f32 %v3170, 1.442695
        %v3174 = vpow.pop %v3173
        %v3175 = vsel %vm1114, %v3172, 0.0
        %3176 = vadd.xlane.f32.xlu0 %v3175
        %v3177 = vpop.xlane.xlu0 %3176
        %v3178 = vsel %vm1114, %v3174, 0.0
        %3179 = vadd.xlane.f32.xlu0 %v3178
        %v3180 = vpop.xlane.xlu0 %3179
        %v3181 = vrcp.pop %v3177
        %v3182 = vrcp.pop %v3180
        %v3183 = vmul.f32 %v3172, %v3181
        %v3184 = vmul.f32 %v3174, %v3182
        %v3186 = vsel %vm1114, %v3183, 0
        %3188 = vmatprep.subr.mxu0 0.0
        %3189 = vmatpush1.msra.mxu0 0.0
        %3190 = vmatprep.subr.mxu0 0.0
        %3191 = vmatpush1.msra.mxu0 0.0
        %3192 = vmatprep.subr.mxu0 0.0
        %3193 = vmatpush1.msra.mxu0 0.0
        %3194 = vmatprep.subr.mxu0 0.0
        %3195 = vmatpush1.msra.mxu0 0.0
        %3196 = vmatprep.subr.mxu0 0.0
        %3197 = vmatpush1.msra.mxu0 0.0
        %3198 = vmatprep.subr.mxu0 0.0
        %3199 = vmatpush1.msra.mxu0 0.0
        %3200 = vmatprep.subr.mxu0 0.0
        %3201 = vmatpush1.msra.mxu0 0.0
        %3202 = vmatprep.subr.mxu0 0.0
        %3203 = vmatpush1.msra.mxu0 0.0
        %3204 = vmatprep.subr.mxu0 0.0
        %3205 = vmatpush1.msra.mxu0 0.0
        %3206 = vmatprep.subr.mxu0 0.0
        %3207 = vmatpush1.msra.mxu0 0.0
        %3208 = vmatprep.subr.mxu0 0.0
        %3209 = vmatpush1.msra.mxu0 0.0
        %3210 = vmatprep.subr.mxu0 0.0
        %3211 = vmatpush1.msra.mxu0 0.0
        %3212 = vmatprep.subr.mxu0 0.0
        %3213 = vmatpush1.msra.mxu0 0.0
        %3214 = vmatprep.subr.mxu0 0.0
        %3215 = vmatpush1.msra.mxu0 0.0
        %3216 = vmatprep.subr.mxu0 0.0
        %3217 = vmatpush1.msra.mxu0 0.0
        %3218 = vmatprep.subr.mxu0 0.0
        %3219 = vmatpush1.msra.mxu0 %v2999
        %3220 = vmatprep.subr.mxu0 0.0
        %3221 = vmatpush2.msra.mxu0 0.0
        %3222 = vmatprep.subr.mxu0 0.0
        %3223 = vmatpush2.msra.mxu0 0.0
        %3224 = vmatprep.subr.mxu0 0.0
        %3225 = vmatpush2.msra.mxu0 0.0
        %3226 = vmatprep.subr.mxu0 0.0
        %3227 = vmatpush2.msra.mxu0 0.0
        %3228 = vmatprep.subr.mxu0 0.0
        %3229 = vmatpush2.msra.mxu0 0.0
        %3230 = vmatprep.subr.mxu0 0.0
        %3231 = vmatpush2.msra.mxu0 0.0
        %3232 = vmatprep.subr.mxu0 0.0
        %3233 = vmatpush2.msra.mxu0 0.0
        %3234 = vmatprep.subr.mxu0 0.0
        %3235 = vmatpush2.msra.mxu0 0.0
        %3236 = vmatprep.subr.mxu0 0.0
        %3237 = vmatpush2.msra.mxu0 0.0
        %3238 = vmatprep.subr.mxu0 0.0
        %3239 = vmatpush2.msra.mxu0 0.0
        %3240 = vmatprep.subr.mxu0 0.0
        %3241 = vmatpush2.msra.mxu0 0.0
        %3242 = vmatprep.subr.mxu0 0.0
        %3243 = vmatpush2.msra.mxu0 0.0
        %3244 = vmatprep.subr.mxu0 0.0
        %3245 = vmatpush2.msra.mxu0 0.0
        %3246 = vmatprep.subr.mxu0 0.0
        %3247 = vmatpush2.msra.mxu0 0.0
        %3248 = vmatprep.subr.mxu0 0.0
        %3249 = vmatpush2.msra.mxu0 0.0
        %3250 = vmatprep.subr.mxu0 0.0
        %3251 = vmatpush2.msra.mxu0 0.0
        %3252 = vmatprep.mubr.f32.mxu0 0.0
        %3253 = vmatmul.mubr.f32.gmra.mxu0 %v3186
        %v3254 = vpop.f32.mrf.mxu0
        %v3255 = vadd.f32 0.0, %v3254
        %v3256 = vpop.f32.mrf.mxu0
        %3257 = vdwg.mxu0
        %v3259 = vsel %vm1114, %v3184, 0
        %3261 = vmatprep.subr.mxu0 0.0
        %3262 = vmatpush1.msra.mxu0 0.0
        %3263 = vmatprep.subr.mxu0 0.0
        %3264 = vmatpush1.msra.mxu0 0.0
        %3265 = vmatprep.subr.mxu0 0.0
        %3266 = vmatpush1.msra.mxu0 0.0
        %3267 = vmatprep.subr.mxu0 0.0
        %3268 = vmatpush1.msra.mxu0 0.0
        %3269 = vmatprep.subr.mxu0 0.0
        %3270 = vmatpush1.msra.mxu0 0.0
        %3271 = vmatprep.subr.mxu0 0.0
        %3272 = vmatpush1.msra.mxu0 0.0
        %3273 = vmatprep.subr.mxu0 0.0
        %3274 = vmatpush1.msra.mxu0 0.0
        %3275 = vmatprep.subr.mxu0 0.0
        %3276 = vmatpush1.msra.mxu0 0.0
        %3277 = vmatprep.subr.mxu0 0.0
        %3278 = vmatpush1.msra.mxu0 0.0
        %3279 = vmatprep.subr.mxu0 0.0
        %3280 = vmatpush1.msra.mxu0 0.0
        %3281 = vmatprep.subr.mxu0 0.0
        %3282 = vmatpush1.msra.mxu0 0.0
        %3283 = vmatprep.subr.mxu0 0.0
        %3284 = vmatpush1.msra.mxu0 0.0
        %3285 = vmatprep.subr.mxu0 0.0
        %3286 = vmatpush1.msra.mxu0 0.0
        %3287 = vmatprep.subr.mxu0 0.0
        %3288 = vmatpush1.msra.mxu0 0.0
        %3289 = vmatprep.subr.mxu0 0.0
        %3290 = vmatpush1.msra.mxu0 0.0
        %3291 = vmatprep.subr.mxu0 0.0
        %3292 = vmatpush1.msra.mxu0 %v3004
        %3293 = vmatprep.subr.mxu0 0.0
        %3294 = vmatpush2.msra.mxu0 0.0
        %3295 = vmatprep.subr.mxu0 0.0
        %3296 = vmatpush2.msra.mxu0 0.0
        %3297 = vmatprep.subr.mxu0 0.0
        %3298 = vmatpush2.msra.mxu0 0.0
        %3299 = vmatprep.subr.mxu0 0.0
        %3300 = vmatpush2.msra.mxu0 0.0
        %3301 = vmatprep.subr.mxu0 0.0
        %3302 = vmatpush2.msra.mxu0 0.0
        %3303 = vmatprep.subr.mxu0 0.0
        %3304 = vmatpush2.msra.mxu0 0.0
        %3305 = vmatprep.subr.mxu0 0.0
        %3306 = vmatpush2.msra.mxu0 0.0
        %3307 = vmatprep.subr.mxu0 0.0
        %3308 = vmatpush2.msra.mxu0 0.0
        %3309 = vmatprep.subr.mxu0 0.0
        %3310 = vmatpush2.msra.mxu0 0.0
        %3311 = vmatprep.subr.mxu0 0.0
        %3312 = vmatpush2.msra.mxu0 0.0
        %3313 = vmatprep.subr.mxu0 0.0
        %3314 = vmatpush2.msra.mxu0 0.0
        %3315 = vmatprep.subr.mxu0 0.0
        %3316 = vmatpush2.msra.mxu0 0.0
        %3317 = vmatprep.subr.mxu0 0.0
        %3318 = vmatpush2.msra.mxu0 0.0
        %3319 = vmatprep.subr.mxu0 0.0
        %3320 = vmatpush2.msra.mxu0 0.0
        %3321 = vmatprep.subr.mxu0 0.0
        %3322 = vmatpush2.msra.mxu0 0.0
        %3323 = vmatprep.subr.mxu0 0.0
        %3324 = vmatpush2.msra.mxu0 0.0
        %3325 = vmatprep.mubr.f32.mxu0 0.0
        %3326 = vmatmul.mubr.f32.gmra.mxu0 %v3259
        %v3327 = vpop.f32.mrf.mxu0
        %v3328 = vadd.f32 0.0, %v3327
        %v3329 = vpop.f32.mrf.mxu0
        %3330 = vdwg.mxu0
        %v3332 = vsel %vm1114, %v3255, 0
        %v3335 = vsel %vm1114, %v3328, 0
        %3337 = vmatprep.subr.mxu0 0.0
        %3338 = vmatpush1.msra.mxu0 0.0
        %3339 = vmatprep.subr.mxu0 0.0
        %3340 = vmatpush1.msra.mxu0 0.0
        %3341 = vmatprep.subr.mxu0 0.0
        %3342 = vmatpush1.msra.mxu0 0.0
        %3343 = vmatprep.subr.mxu0 0.0
        %3344 = vmatpush1.msra.mxu0 0.0
        %3345 = vmatprep.subr.mxu0 0.0
        %3346 = vmatpush1.msra.mxu0 0.0
        %3347 = vmatprep.subr.mxu0 0.0
        %3348 = vmatpush1.msra.mxu0 0.0
        %3349 = vmatprep.subr.mxu0 0.0
        %3350 = vmatpush1.msra.mxu0 0.0
        %3351 = vmatprep.subr.mxu0 0.0
        %3352 = vmatpush1.msra.mxu0 0.0
        %3353 = vmatprep.subr.mxu0 0.0
        %3354 = vmatpush1.msra.mxu0 0.0
        %3355 = vmatprep.subr.mxu0 0.0
        %3356 = vmatpush1.msra.mxu0 0.0
        %3357 = vmatprep.subr.mxu0 0.0
        %3358 = vmatpush1.msra.mxu0 0.0
        %3359 = vmatprep.subr.mxu0 0.0
        %3360 = vmatpush1.msra.mxu0 0.0
        %3361 = vmatprep.subr.mxu0 0.0
        %3362 = vmatpush1.msra.mxu0 0.0
        %3363 = vmatprep.subr.mxu0 0.0
        %3364 = vmatpush1.msra.mxu0 0.0
        %3365 = vmatprep.subr.mxu0 0.0
        %3366 = vmatpush1.msra.mxu0 0.0
        %3367 = vmatprep.subr.mxu0 0.0
        %3368 = vmatpush1.msra.mxu0 %v881
        %3369 = vmatprep.subr.mxu0 0.0
        %3370 = vmatpush2.msra.mxu0 0.0
        %3371 = vmatprep.subr.mxu0 0.0
        %3372 = vmatpush2.msra.mxu0 0.0
        %3373 = vmatprep.subr.mxu0 0.0
        %3374 = vmatpush2.msra.mxu0 0.0
        %3375 = vmatprep.subr.mxu0 0.0
        %3376 = vmatpush2.msra.mxu0 0.0
        %3377 = vmatprep.subr.mxu0 0.0
        %3378 = vmatpush2.msra.mxu0 0.0
        %3379 = vmatprep.subr.mxu0 0.0
        %3380 = vmatpush2.msra.mxu0 0.0
        %3381 = vmatprep.subr.mxu0 0.0
        %3382 = vmatpush2.msra.mxu0 0.0
        %3383 = vmatprep.subr.mxu0 0.0
        %3384 = vmatpush2.msra.mxu0 0.0
        %3385 = vmatprep.subr.mxu0 0.0
        %3386 = vmatpush2.msra.mxu0 0.0
        %3387 = vmatprep.subr.mxu0 0.0
        %3388 = vmatpush2.msra.mxu0 0.0
        %3389 = vmatprep.subr.mxu0 0.0
        %3390 = vmatpush2.msra.mxu0 0.0
        %3391 = vmatprep.subr.mxu0 0.0
        %3392 = vmatpush2.msra.mxu0 0.0
        %3393 = vmatprep.subr.mxu0 0.0
        %3394 = vmatpush2.msra.mxu0 0.0
        %3395 = vmatprep.subr.mxu0 0.0
        %3396 = vmatpush2.msra.mxu0 0.0
        %3397 = vmatprep.subr.mxu0 0.0
        %3398 = vmatpush2.msra.mxu0 0.0
        %3399 = vmatprep.subr.mxu0 0.0
        %3400 = vmatpush2.msra.mxu0 0.0
        %3401 = vmatprep.mubr.f32.mxu0 0.0
        %3402 = vmatmul.mubr.f32.gmra.mxu0 %v3332
        %v3403 = vpop.f32.mrf.mxu0
        %v3404 = vadd.f32 0.0, %v3403
        %v3405 = vpop.f32.mrf.mxu0
        %3406 = vmatprep.mubr.f32.mxu0 0.0
        %3407 = vmatmul.mubr.f32.gmra.mxu0 %v3335
        %v3408 = vpop.f32.mrf.mxu0
        %v3409 = vadd.f32 0.0, %v3408
        %v3410 = vpop.f32.mrf.mxu0
        %3411 = vdwg.mxu0
        %v3412 = vadd.f32 %v2780, %v3404
        %v3413 = vadd.f32 %v2781, %v3409
        %v3414 = vadd.f32 %v3412, %v749
        %v3415 = vadd.f32 %v3413, %v750
        %v3416 = vsel %vm882, %v3414, 0.0
        %3417 = vadd.xlane.f32.xlu0 %v3416
        %v3418 = vpop.xlane.xlu0 %3417
        %v3419 = vsel %vm882, %v3415, 0.0
        %3420 = vadd.xlane.f32.xlu0 %v3419
        %v3421 = vpop.xlane.xlu0 %3420
        %v3422 = vrcp.pop 32.0
        %v3423 = vmul.f32 %v3418, %v3422
        %v3424 = vmul.f32 %v3421, %v3422
        %v3425 = vsub.f32 %v3414, %v3423
        %v3426 = vsub.f32 %v3415, %v3424
        %v3427 = vmul.f32 %v3425, %v3425
        %v3428 = vmul.f32 %v3426, %v3426
        %v3429 = vsel %vm882, %v3427, 0.0
        %3430 = vadd.xlane.f32.xlu0 %v3429
        %v3431 = vpop.xlane.xlu0 %3430
        %v3432 = vsel %vm882, %v3428, 0.0
        %3433 = vadd.xlane.f32.xlu0 %v3432
        %v3434 = vpop.xlane.xlu0 %3433
        %v3435 = vmul.f32 %v3431, %v3422
        %v3436 = vmul.f32 %v3434, %v3422
        %v3437 = vadd.f32 %v3435, 1e-05
        %v3438 = vadd.f32 %v3436, 1e-05
        %v3439 = vrsqrt.pop %v3437
        %v3440 = vrsqrt.pop %v3438
        %v3441 = vmul.f32 %v3425, %v3439
        %v3442 = vmul.f32 %v3426, %v3440
        %3443 = vst.msk [vmem:[%s734] sm:$0xff] %vm1114, %v1291
        %3444 = vst.msk [vmem:[%s734 + $0x8] sm:$0xff] %vm1114, %v1840
        %3445 = vst.msk [vmem:[%s734 + $0x10] sm:$0xff] %vm1114, %v2551
        %3446 = vst.msk [vmem:[%s734 + $0x18] sm:$0xff] %vm1114, %v3183
        %3447 = vst.msk [vmem:[%s734 + $0x20] sm:$0xff] %vm1114, %v1292
        %3448 = vst.msk [vmem:[%s734 + $0x28] sm:$0xff] %vm1114, %v1841
        %3449 = vst.msk [vmem:[%s734 + $0x30] sm:$0xff] %vm1114, %v2552
        %3450 = vst.msk [vmem:[%s734 + $0x38] sm:$0xff] %vm1114, %v3184
        %v3451 = vld [vmem:[%s704] sm:$0xff]
        %v3452 = vld [vmem:[%s704 + $0x8] sm:$0xff]
        %v3453 = vld [vmem:[%s704 + $0x10] sm:$0xff]
        %v3454 = vld [vmem:[%s704 + $0x18] sm:$0xff]
        %v3455 = vld [vmem:[%s704 + $0x20] sm:$0xff]
        %v3456 = vld [vmem:[%s704 + $0x28] sm:$0xff]
        %v3457 = vld [vmem:[%s704 + $0x30] sm:$0xff]
        %v3458 = vld [vmem:[%s704 + $0x38] sm:$0xff]
        %v3459 = vld [vmem:[%s704 + $0x40] sm:$0xff]
        %v3460 = vld [vmem:[%s704 + $0x48] sm:$0xff]
        %v3461 = vld [vmem:[%s704 + $0x50] sm:$0xff]
        %v3462 = vld [vmem:[%s704 + $0x58] sm:$0xff]
        %v3463 = vld [vmem:[%s704 + $0x60] sm:$0xff]
        %v3464 = vld [vmem:[%s704 + $0x68] sm:$0xff]
        %v3465 = vld [vmem:[%s704 + $0x70] sm:$0xff]
        %v3466 = vld [vmem:[%s704 + $0x78] sm:$0xff]
        %v3467 = vld [vmem:[%s709] sm:$0xff]
        %v3468 = vld [vmem:[%s709 + $0x8] sm:$0xff]
        %v3469 = vld [vmem:[%s709 + $0x10] sm:$0xff]
        %v3470 = vld [vmem:[%s709 + $0x18] sm:$0xff]
        %v3471 = vld [vmem:[%s709 + $0x20] sm:$0xff]
        %v3472 = vld [vmem:[%s709 + $0x28] sm:$0xff]
        %v3473 = vld [vmem:[%s709 + $0x30] sm:$0xff]
        %v3474 = vld [vmem:[%s709 + $0x38] sm:$0xff]
        %v3475 = vld [vmem:[%s709 + $0x40] sm:$0xff]
        %v3476 = vld [vmem:[%s709 + $0x48] sm:$0xff]
        %v3477 = vld [vmem:[%s709 + $0x50] sm:$0xff]
        %v3478 = vld [vmem:[%s709 + $0x58] sm:$0xff]
        %v3479 = vld [vmem:[%s709 + $0x60] sm:$0xff]
        %v3480 = vld [vmem:[%s709 + $0x68] sm:$0xff]
        %v3481 = vld [vmem:[%s709 + $0x70] sm:$0xff]
        %v3482 = vld [vmem:[%s709 + $0x78] sm:$0xff]
        %v3483 = vld [vmem:[%s714] sm:$0xff]
        %v3484 = vld [vmem:[%s714 + $0x8] sm:$0xff]
        %v3485 = vld [vmem:[%s714 + $0x10] sm:$0xff]
        %v3486 = vld [vmem:[%s714 + $0x18] sm:$0xff]
        %v3487 = vld [vmem:[%s714 + $0x20] sm:$0xff]
        %v3488 = vld [vmem:[%s714 + $0x28] sm:$0xff]
        %v3489 = vld [vmem:[%s714 + $0x30] sm:$0xff]
        %v3490 = vld [vmem:[%s714 + $0x38] sm:$0xff]
        %v3491 = vld [vmem:[%s714 + $0x40] sm:$0xff]
        %v3492 = vld [vmem:[%s714 + $0x48] sm:$0xff]
        %v3493 = vld [vmem:[%s714 + $0x50] sm:$0xff]
        %v3494 = vld [vmem:[%s714 + $0x58] sm:$0xff]
        %v3495 = vld [vmem:[%s714 + $0x60] sm:$0xff]
        %v3496 = vld [vmem:[%s714 + $0x68] sm:$0xff]
        %v3497 = vld [vmem:[%s714 + $0x70] sm:$0xff]
        %v3498 = vld [vmem:[%s714 + $0x78] sm:$0xff]
        %v3499 = vld [vmem:[%s719] sm:$0xff]
        %v3500 = vld [vmem:[%s719 + $0x8] sm:$0xff]
        %v3501 = vld [vmem:[%s719 + $0x10] sm:$0xff]
        %v3502 = vld [vmem:[%s719 + $0x18] sm:$0xff]
        %v3504 = vsel %vm882, %v3441, 0
        %v3507 = vsel %vm882, %v3442, 0
        %3509 = vmatprep.subr.mxu0 0.0
        %3510 = vmatpush1.msra.mxu0 0.0
        %3511 = vmatprep.subr.mxu0 0.0
        %3512 = vmatpush1.msra.mxu0 0.0
        %3513 = vmatprep.subr.mxu0 0.0
        %3514 = vmatpush1.msra.mxu0 0.0
        %3515 = vmatprep.subr.mxu0 0.0
        %3516 = vmatpush1.msra.mxu0 0.0
        %3517 = vmatprep.subr.mxu0 0.0
        %3518 = vmatpush1.msra.mxu0 0.0
        %3519 = vmatprep.subr.mxu0 0.0
        %3520 = vmatpush1.msra.mxu0 0.0
        %3521 = vmatprep.subr.mxu0 0.0
        %3522 = vmatpush1.msra.mxu0 0.0
        %3523 = vmatprep.subr.mxu0 0.0
        %3524 = vmatpush1.msra.mxu0 0.0
        %3525 = vmatprep.subr.mxu0 0.0
        %3526 = vmatpush1.msra.mxu0 0.0
        %3527 = vmatprep.subr.mxu0 0.0
        %3528 = vmatpush1.msra.mxu0 0.0
        %3529 = vmatprep.subr.mxu0 0.0
        %3530 = vmatpush1.msra.mxu0 0.0
        %3531 = vmatprep.subr.mxu0 0.0
        %3532 = vmatpush1.msra.mxu0 0.0
        %3533 = vmatprep.subr.mxu0 0.0
        %3534 = vmatpush1.msra.mxu0 %v3454
        %3535 = vmatprep.subr.mxu0 0.0
        %3536 = vmatpush1.msra.mxu0 %v3453
        %3537 = vmatprep.subr.mxu0 0.0
        %3538 = vmatpush1.msra.mxu0 %v3452
        %3539 = vmatprep.subr.mxu0 0.0
        %3540 = vmatpush1.msra.mxu0 %v3451
        %3541 = vmatprep.subr.mxu0 0.0
        %3542 = vmatpush2.msra.mxu0 0.0
        %3543 = vmatprep.subr.mxu0 0.0
        %3544 = vmatpush2.msra.mxu0 0.0
        %3545 = vmatprep.subr.mxu0 0.0
        %3546 = vmatpush2.msra.mxu0 0.0
        %3547 = vmatprep.subr.mxu0 0.0
        %3548 = vmatpush2.msra.mxu0 0.0
        %3549 = vmatprep.subr.mxu0 0.0
        %3550 = vmatpush2.msra.mxu0 0.0
        %3551 = vmatprep.subr.mxu0 0.0
        %3552 = vmatpush2.msra.mxu0 0.0
        %3553 = vmatprep.subr.mxu0 0.0
        %3554 = vmatpush2.msra.mxu0 0.0
        %3555 = vmatprep.subr.mxu0 0.0
        %3556 = vmatpush2.msra.mxu0 0.0
        %3557 = vmatprep.subr.mxu0 0.0
        %3558 = vmatpush2.msra.mxu0 0.0
        %3559 = vmatprep.subr.mxu0 0.0
        %3560 = vmatpush2.msra.mxu0 0.0
        %3561 = vmatprep.subr.mxu0 0.0
        %3562 = vmatpush2.msra.mxu0 0.0
        %3563 = vmatprep.subr.mxu0 0.0
        %3564 = vmatpush2.msra.mxu0 0.0
        %3565 = vmatprep.subr.mxu0 0.0
        %3566 = vmatpush2.msra.mxu0 0.0
        %3567 = vmatprep.subr.mxu0 0.0
        %3568 = vmatpush2.msra.mxu0 0.0
        %3569 = vmatprep.subr.mxu0 0.0
        %3570 = vmatpush2.msra.mxu0 0.0
        %3571 = vmatprep.subr.mxu0 0.0
        %3572 = vmatpush2.msra.mxu0 0.0
        %3573 = vmatprep.mubr.f32.mxu0 0.0
        %3574 = vmatmul.mubr.f32.gmra.mxu0 %v3504
        %v3575 = vpop.f32.mrf.mxu0
        %v3576 = vadd.f32 0.0, %v3575
        %v3577 = vpop.f32.mrf.mxu0
        %3578 = vmatprep.mubr.f32.mxu0 0.0
        %3579 = vmatmul.mubr.f32.gmra.mxu0 %v3507
        %v3580 = vpop.f32.mrf.mxu0
        %v3581 = vadd.f32 0.0, %v3580
        %v3582 = vpop.f32.mrf.mxu0
        %3583 = vdwg.mxu0
        %v3585 = vsel %vm882, %v751, 0
        %v3588 = vsel %vm882, %v752, 0
        %3590 = vmatprep.subr.mxu0 0.0
        %3591 = vmatpush1.msra.mxu0 0.0
        %3592 = vmatprep.subr.mxu0 0.0
        %3593 = vmatpush1.msra.mxu0 0.0
        %3594 = vmatprep.subr.mxu0 0.0
        %3595 = vmatpush1.msra.mxu0 0.0
        %3596 = vmatprep.subr.mxu0 0.0
        %3597 = vmatpush1.msra.mxu0 0.0
        %3598 = vmatprep.subr.mxu0 0.0
        %3599 = vmatpush1.msra.mxu0 0.0
        %3600 = vmatprep.subr.mxu0 0.0
        %3601 = vmatpush1.msra.mxu0 0.0
        %3602 = vmatprep.subr.mxu0 0.0
        %3603 = vmatpush1.msra.mxu0 0.0
        %3604 = vmatprep.subr.mxu0 0.0
        %3605 = vmatpush1.msra.mxu0 0.0
        %3606 = vmatprep.subr.mxu0 0.0
        %3607 = vmatpush1.msra.mxu0 0.0
        %3608 = vmatprep.subr.mxu0 0.0
        %3609 = vmatpush1.msra.mxu0 0.0
        %3610 = vmatprep.subr.mxu0 0.0
        %3611 = vmatpush1.msra.mxu0 0.0
        %3612 = vmatprep.subr.mxu0 0.0
        %3613 = vmatpush1.msra.mxu0 0.0
        %3614 = vmatprep.subr.mxu0 0.0
        %3615 = vmatpush1.msra.mxu0 %v3470
        %3616 = vmatprep.subr.mxu0 0.0
        %3617 = vmatpush1.msra.mxu0 %v3469
        %3618 = vmatprep.subr.mxu0 0.0
        %3619 = vmatpush1.msra.mxu0 %v3468
        %3620 = vmatprep.subr.mxu0 0.0
        %3621 = vmatpush1.msra.mxu0 %v3467
        %3622 = vmatprep.subr.mxu0 0.0
        %3623 = vmatpush2.msra.mxu0 0.0
        %3624 = vmatprep.subr.mxu0 0.0
        %3625 = vmatpush2.msra.mxu0 0.0
        %3626 = vmatprep.subr.mxu0 0.0
        %3627 = vmatpush2.msra.mxu0 0.0
        %3628 = vmatprep.subr.mxu0 0.0
        %3629 = vmatpush2.msra.mxu0 0.0
        %3630 = vmatprep.subr.mxu0 0.0
        %3631 = vmatpush2.msra.mxu0 0.0
        %3632 = vmatprep.subr.mxu0 0.0
        %3633 = vmatpush2.msra.mxu0 0.0
        %3634 = vmatprep.subr.mxu0 0.0
        %3635 = vmatpush2.msra.mxu0 0.0
        %3636 = vmatprep.subr.mxu0 0.0
        %3637 = vmatpush2.msra.mxu0 0.0
        %3638 = vmatprep.subr.mxu0 0.0
        %3639 = vmatpush2.msra.mxu0 0.0
        %3640 = vmatprep.subr.mxu0 0.0
        %3641 = vmatpush2.msra.mxu0 0.0
        %3642 = vmatprep.subr.mxu0 0.0
        %3643 = vmatpush2.msra.mxu0 0.0
        %3644 = vmatprep.subr.mxu0 0.0
        %3645 = vmatpush2.msra.mxu0 0.0
        %3646 = vmatprep.subr.mxu0 0.0
        %3647 = vmatpush2.msra.mxu0 0.0
        %3648 = vmatprep.subr.mxu0 0.0
        %3649 = vmatpush2.msra.mxu0 0.0
        %3650 = vmatprep.subr.mxu0 0.0
        %3651 = vmatpush2.msra.mxu0 0.0
        %3652 = vmatprep.subr.mxu0 0.0
        %3653 = vmatpush2.msra.mxu0 0.0
        %3654 = vmatprep.mubr.f32.mxu0 0.0
        %3655 = vmatmul.mubr.f32.gmra.mxu0 %v3585
        %v3656 = vpop.f32.mrf.mxu0
        %v3657 = vadd.f32 0.0, %v3656
        %v3658 = vpop.f32.mrf.mxu0
        %3659 = vmatprep.mubr.f32.mxu0 0.0
        %3660 = vmatmul.mubr.f32.gmra.mxu0 %v3588
        %v3661 = vpop.f32.mrf.mxu0
        %v3662 = vadd.f32 0.0, %v3661
        %v3663 = vpop.f32.mrf.mxu0
        %3664 = vdwg.mxu0
        %3665 = vmatprep.subr.mxu0 0.0
        %3666 = vmatpush1.msra.mxu0 0.0
        %3667 = vmatprep.subr.mxu0 0.0
        %3668 = vmatpush1.msra.mxu0 0.0
        %3669 = vmatprep.subr.mxu0 0.0
        %3670 = vmatpush1.msra.mxu0 0.0
        %3671 = vmatprep.subr.mxu0 0.0
        %3672 = vmatpush1.msra.mxu0 0.0
        %3673 = vmatprep.subr.mxu0 0.0
        %3674 = vmatpush1.msra.mxu0 0.0
        %3675 = vmatprep.subr.mxu0 0.0
        %3676 = vmatpush1.msra.mxu0 0.0
        %3677 = vmatprep.subr.mxu0 0.0
        %3678 = vmatpush1.msra.mxu0 0.0
        %3679 = vmatprep.subr.mxu0 0.0
        %3680 = vmatpush1.msra.mxu0 0.0
        %3681 = vmatprep.subr.mxu0 0.0
        %3682 = vmatpush1.msra.mxu0 0.0
        %3683 = vmatprep.subr.mxu0 0.0
        %3684 = vmatpush1.msra.mxu0 0.0
        %3685 = vmatprep.subr.mxu0 0.0
        %3686 = vmatpush1.msra.mxu0 0.0
        %3687 = vmatprep.subr.mxu0 0.0
        %3688 = vmatpush1.msra.mxu0 0.0
        %3689 = vmatprep.subr.mxu0 0.0
        %3690 = vmatpush1.msra.mxu0 %v3486
        %3691 = vmatprep.subr.mxu0 0.0
        %3692 = vmatpush1.msra.mxu0 %v3485
        %3693 = vmatprep.subr.mxu0 0.0
        %3694 = vmatpush1.msra.mxu0 %v3484
        %3695 = vmatprep.subr.mxu0 0.0
        %3696 = vmatpush1.msra.mxu0 %v3483
        %3697 = vmatprep.subr.mxu0 0.0
        %3698 = vmatpush2.msra.mxu0 0.0
        %3699 = vmatprep.subr.mxu0 0.0
        %3700 = vmatpush2.msra.mxu0 0.0
        %3701 = vmatprep.subr.mxu0 0.0
        %3702 = vmatpush2.msra.mxu0 0.0
        %3703 = vmatprep.subr.mxu0 0.0
        %3704 = vmatpush2.msra.mxu0 0.0
        %3705 = vmatprep.subr.mxu0 0.0
        %3706 = vmatpush2.msra.mxu0 0.0
        %3707 = vmatprep.subr.mxu0 0.0
        %3708 = vmatpush2.msra.mxu0 0.0
        %3709 = vmatprep.subr.mxu0 0.0
        %3710 = vmatpush2.msra.mxu0 0.0
        %3711 = vmatprep.subr.mxu0 0.0
        %3712 = vmatpush2.msra.mxu0 0.0
        %3713 = vmatprep.subr.mxu0 0.0
        %3714 = vmatpush2.msra.mxu0 0.0
        %3715 = vmatprep.subr.mxu0 0.0
        %3716 = vmatpush2.msra.mxu0 0.0
        %3717 = vmatprep.subr.mxu0 0.0
        %3718 = vmatpush2.msra.mxu0 0.0
        %3719 = vmatprep.subr.mxu0 0.0
        %3720 = vmatpush2.msra.mxu0 0.0
        %3721 = vmatprep.subr.mxu0 0.0
        %3722 = vmatpush2.msra.mxu0 0.0
        %3723 = vmatprep.subr.mxu0 0.0
        %3724 = vmatpush2.msra.mxu0 0.0
        %3725 = vmatprep.subr.mxu0 0.0
        %3726 = vmatpush2.msra.mxu0 0.0
        %3727 = vmatprep.subr.mxu0 0.0
        %3728 = vmatpush2.msra.mxu0 0.0
        %3729 = vmatprep.mubr.f32.mxu0 0.0
        %3730 = vmatmul.mubr.f32.gmra.mxu0 %v3585
        %v3731 = vpop.f32.mrf.mxu0
        %v3732 = vadd.f32 0.0, %v3731
        %v3733 = vpop.f32.mrf.mxu0
        %3734 = vmatprep.mubr.f32.mxu0 0.0
        %3735 = vmatmul.mubr.f32.gmra.mxu0 %v3588
        %v3736 = vpop.f32.mrf.mxu0
        %v3737 = vadd.f32 0.0, %v3736
        %v3738 = vpop.f32.mrf.mxu0
        %3739 = vdwg.mxu0
        %v3741 = vsel %vm1114, %v3576, 0
        %v3744 = vsel %vm1114, %v3657, 0
        %3746 = vmatprep.subr.mxu0 0.0
        %3747 = vmatpush1.xpose.msra.mxu0 0.0
        %3748 = vmatprep.subr.mxu0 0.0
        %3749 = vmatpush1.xpose.msra.mxu0 0.0
        %3750 = vmatprep.subr.mxu0 0.0
        %3751 = vmatpush1.xpose.msra.mxu0 0.0
        %3752 = vmatprep.subr.mxu0 0.0
        %3753 = vmatpush1.xpose.msra.mxu0 0.0
        %3754 = vmatprep.subr.mxu0 0.0
        %3755 = vmatpush1.xpose.msra.mxu0 0.0
        %3756 = vmatprep.subr.mxu0 0.0
        %3757 = vmatpush1.xpose.msra.mxu0 0.0
        %3758 = vmatprep.subr.mxu0 0.0
        %3759 = vmatpush1.xpose.msra.mxu0 0.0
        %3760 = vmatprep.subr.mxu0 0.0
        %3761 = vmatpush1.xpose.msra.mxu0 0.0
        %3762 = vmatprep.subr.mxu0 0.0
        %3763 = vmatpush1.xpose.msra.mxu0 0.0
        %3764 = vmatprep.subr.mxu0 0.0
        %3765 = vmatpush1.xpose.msra.mxu0 0.0
        %3766 = vmatprep.subr.mxu0 0.0
        %3767 = vmatpush1.xpose.msra.mxu0 0.0
        %3768 = vmatprep.subr.mxu0 0.0
        %3769 = vmatpush1.xpose.msra.mxu0 0.0
        %3770 = vmatprep.subr.mxu0 0.0
        %3771 = vmatpush1.xpose.msra.mxu0 0.0
        %3772 = vmatprep.subr.mxu0 0.0
        %3773 = vmatpush1.xpose.msra.mxu0 0.0
        %3774 = vmatprep.subr.mxu0 0.0
        %3775 = vmatpush1.xpose.msra.mxu0 0.0
        %3776 = vmatprep.subr.mxu0 0.0
        %3777 = vmatpush1.xpose.msra.mxu0 %v3744
        %3778 = vmatprep.subr.mxu0 0.0
        %3779 = vmatpush2.xpose.msra.mxu0 0.0
        %3780 = vmatprep.subr.mxu0 0.0
        %3781 = vmatpush2.xpose.msra.mxu0 0.0
        %3782 = vmatprep.subr.mxu0 0.0
        %3783 = vmatpush2.xpose.msra.mxu0 0.0
        %3784 = vmatprep.subr.mxu0 0.0
        %3785 = vmatpush2.xpose.msra.mxu0 0.0
        %3786 = vmatprep.subr.mxu0 0.0
        %3787 = vmatpush2.xpose.msra.mxu0 0.0
        %3788 = vmatprep.subr.mxu0 0.0
        %3789 = vmatpush2.xpose.msra.mxu0 0.0
        %3790 = vmatprep.subr.mxu0 0.0
        %3791 = vmatpush2.xpose.msra.mxu0 0.0
        %3792 = vmatprep.subr.mxu0 0.0
        %3793 = vmatpush2.xpose.msra.mxu0 0.0
        %3794 = vmatprep.subr.mxu0 0.0
        %3795 = vmatpush2.xpose.msra.mxu0 0.0
        %3796 = vmatprep.subr.mxu0 0.0
        %3797 = vmatpush2.xpose.msra.mxu0 0.0
        %3798 = vmatprep.subr.mxu0 0.0
        %3799 = vmatpush2.xpose.msra.mxu0 0.0
        %3800 = vmatprep.subr.mxu0 0.0
        %3801 = vmatpush2.xpose.msra.mxu0 0.0
        %3802 = vmatprep.subr.mxu0 0.0
        %3803 = vmatpush2.xpose.msra.mxu0 0.0
        %3804 = vmatprep.subr.mxu0 0.0
        %3805 = vmatpush2.xpose.msra.mxu0 0.0
        %3806 = vmatprep.subr.mxu0 0.0
        %3807 = vmatpush2.xpose.msra.mxu0 0.0
        %3808 = vmatprep.subr.mxu0 0.0
        %3809 = vmatpush2.xpose.msra.mxu0 0.0
        %3810 = vmatprep.mubr.f32.mxu0 0.0
        %3811 = vmatmul.mubr.f32.gmra.mxu0 %v3741
        %v3812 = vpop.f32.mrf.mxu0
        %v3813 = vadd.f32 0.0, %v3812
        %v3814 = vpop.f32.mrf.mxu0
        %3815 = vdwg.mxu0
        %v3817 = vsel %vm1114, %v3581, 0
        %v3820 = vsel %vm1114, %v3662, 0
        %3822 = vmatprep.subr.mxu0 0.0
        %3823 = vmatpush1.xpose.msra.mxu0 0.0
        %3824 = vmatprep.subr.mxu0 0.0
        %3825 = vmatpush1.xpose.msra.mxu0 0.0
        %3826 = vmatprep.subr.mxu0 0.0
        %3827 = vmatpush1.xpose.msra.mxu0 0.0
        %3828 = vmatprep.subr.mxu0 0.0
        %3829 = vmatpush1.xpose.msra.mxu0 0.0
        %3830 = vmatprep.subr.mxu0 0.0
        %3831 = vmatpush1.xpose.msra.mxu0 0.0
        %3832 = vmatprep.subr.mxu0 0.0
        %3833 = vmatpush1.xpose.msra.mxu0 0.0
        %3834 = vmatprep.subr.mxu0 0.0
        %3835 = vmatpush1.xpose.msra.mxu0 0.0
        %3836 = vmatprep.subr.mxu0 0.0
        %3837 = vmatpush1.xpose.msra.mxu0 0.0
        %3838 = vmatprep.subr.mxu0 0.0
        %3839 = vmatpush1.xpose.msra.mxu0 0.0
        %3840 = vmatprep.subr.mxu0 0.0
        %3841 = vmatpush1.xpose.msra.mxu0 0.0
        %3842 = vmatprep.subr.mxu0 0.0
        %3843 = vmatpush1.xpose.msra.mxu0 0.0
        %3844 = vmatprep.subr.mxu0 0.0
        %3845 = vmatpush1.xpose.msra.mxu0 0.0
        %3846 = vmatprep.subr.mxu0 0.0
        %3847 = vmatpush1.xpose.msra.mxu0 0.0
        %3848 = vmatprep.subr.mxu0 0.0
        %3849 = vmatpush1.xpose.msra.mxu0 0.0
        %3850 = vmatprep.subr.mxu0 0.0
        %3851 = vmatpush1.xpose.msra.mxu0 0.0
        %3852 = vmatprep.subr.mxu0 0.0
        %3853 = vmatpush1.xpose.msra.mxu0 %v3820
        %3854 = vmatprep.subr.mxu0 0.0
        %3855 = vmatpush2.xpose.msra.mxu0 0.0
        %3856 = vmatprep.subr.mxu0 0.0
        %3857 = vmatpush2.xpose.msra.mxu0 0.0
        %3858 = vmatprep.subr.mxu0 0.0
        %3859 = vmatpush2.xpose.msra.mxu0 0.0
        %3860 = vmatprep.subr.mxu0 0.0
        %3861 = vmatpush2.xpose.msra.mxu0 0.0
        %3862 = vmatprep.subr.mxu0 0.0
        %3863 = vmatpush2.xpose.msra.mxu0 0.0
        %3864 = vmatprep.subr.mxu0 0.0
        %3865 = vmatpush2.xpose.msra.mxu0 0.0
        %3866 = vmatprep.subr.mxu0 0.0
        %3867 = vmatpush2.xpose.msra.mxu0 0.0
        %3868 = vmatprep.subr.mxu0 0.0
        %3869 = vmatpush2.xpose.msra.mxu0 0.0
        %3870 = vmatprep.subr.mxu0 0.0
        %3871 = vmatpush2.xpose.msra.mxu0 0.0
        %3872 = vmatprep.subr.mxu0 0.0
        %3873 = vmatpush2.xpose.msra.mxu0 0.0
        %3874 = vmatprep.subr.mxu0 0.0
        %3875 = vmatpush2.xpose.msra.mxu0 0.0
        %3876 = vmatprep.subr.mxu0 0.0
        %3877 = vmatpush2.xpose.msra.mxu0 0.0
        %3878 = vmatprep.subr.mxu0 0.0
        %3879 = vmatpush2.xpose.msra.mxu0 0.0
        %3880 = vmatprep.subr.mxu0 0.0
        %3881 = vmatpush2.xpose.msra.mxu0 0.0
        %3882 = vmatprep.subr.mxu0 0.0
        %3883 = vmatpush2.xpose.msra.mxu0 0.0
        %3884 = vmatprep.subr.mxu0 0.0
        %3885 = vmatpush2.xpose.msra.mxu0 0.0
        %3886 = vmatprep.mubr.f32.mxu0 0.0
        %3887 = vmatmul.mubr.f32.gmra.mxu0 %v3817
        %v3888 = vpop.f32.mrf.mxu0
        %v3889 = vadd.f32 0.0, %v3888
        %v3890 = vpop.f32.mrf.mxu0
        %3891 = vdwg.mxu0
        %v3892 = vmul.f32 %v3813, 0.35355338
        %v3893 = vmul.f32 %v3889, 0.35355338
        %v3894 = vsel %vm828, 1, 0
        %v3895 = vsel %vm829, 1, 0
        %v3896 = vlaneseq
        %v3897 = vshrl.u32 %v3896, 7
        %v3898 = vsub.s32 0, %v3897
        %v3899 = vrot.slane %v3894, %v3898
        %v3900 = vlaneseq
        %v3901 = vshrl.u32 %v3900, 7
        %v3902 = vsub.s32 0, %v3901
        %v3903 = vrot.slane %v3895, %v3902
        %vm3904 = vcmp.eq.s32.totalorder %v3899, 1
        %vm3905 = vcmp.eq.s32.totalorder %v3903, 1
        %v3906 = vsel %vm3904, -1e+09, %v3892
        %v3907 = vsel %vm3905, -1e+09, %v3893
        %v3908 = vsel %vm1114, %v3906, -inf
        %3909 = vmax.xlane.f32.xlu0 %v3908
        %v3910 = vpop.xlane.xlu0 %3909
        %v3911 = vsel %vm1114, %v3907, -inf
        %3912 = vmax.xlane.f32.xlu0 %v3911
        %v3913 = vpop.xlane.xlu0 %3912
        %v3914 = vsub.f32 %v3906, %v3910
        %v3915 = vsub.f32 %v3907, %v3913
        %v3916 = vmul.f32 %v3914, 1.442695
        %v3917 = vpow.pop %v3916
        %v3918 = vmul.f32 %v3915, 1.442695
        %v3919 = vpow.pop %v3918
        %v3920 = vsel %vm1114, %v3917, 0.0
        %3921 = vadd.xlane.f32.xlu0 %v3920
        %v3922 = vpop.xlane.xlu0 %3921
        %v3923 = vsel %vm1114, %v3919, 0.0
        %3924 = vadd.xlane.f32.xlu0 %v3923
        %v3925 = vpop.xlane.xlu0 %3924
        %v3926 = vrcp.pop %v3922
        %v3927 = vrcp.pop %v3925
        %v3928 = vmul.f32 %v3917, %v3926
        %v3929 = vmul.f32 %v3919, %v3927
        %v3931 = vsel %vm1114, %v3928, 0
        %3933 = vmatprep.subr.mxu0 0.0
        %3934 = vmatpush1.msra.mxu0 0.0
        %3935 = vmatprep.subr.mxu0 0.0
        %3936 = vmatpush1.msra.mxu0 0.0
        %3937 = vmatprep.subr.mxu0 0.0
        %3938 = vmatpush1.msra.mxu0 0.0
        %3939 = vmatprep.subr.mxu0 0.0
        %3940 = vmatpush1.msra.mxu0 0.0
        %3941 = vmatprep.subr.mxu0 0.0
        %3942 = vmatpush1.msra.mxu0 0.0
        %3943 = vmatprep.subr.mxu0 0.0
        %3944 = vmatpush1.msra.mxu0 0.0
        %3945 = vmatprep.subr.mxu0 0.0
        %3946 = vmatpush1.msra.mxu0 0.0
        %3947 = vmatprep.subr.mxu0 0.0
        %3948 = vmatpush1.msra.mxu0 0.0
        %3949 = vmatprep.subr.mxu0 0.0
        %3950 = vmatpush1.msra.mxu0 0.0
        %3951 = vmatprep.subr.mxu0 0.0
        %3952 = vmatpush1.msra.mxu0 0.0
        %3953 = vmatprep.subr.mxu0 0.0
        %3954 = vmatpush1.msra.mxu0 0.0
        %3955 = vmatprep.subr.mxu0 0.0
        %3956 = vmatpush1.msra.mxu0 0.0
        %3957 = vmatprep.subr.mxu0 0.0
        %3958 = vmatpush1.msra.mxu0 0.0
        %3959 = vmatprep.subr.mxu0 0.0
        %3960 = vmatpush1.msra.mxu0 0.0
        %3961 = vmatprep.subr.mxu0 0.0
        %3962 = vmatpush1.msra.mxu0 0.0
        %3963 = vmatprep.subr.mxu0 0.0
        %3964 = vmatpush1.msra.mxu0 %v3732
        %3965 = vmatprep.subr.mxu0 0.0
        %3966 = vmatpush2.msra.mxu0 0.0
        %3967 = vmatprep.subr.mxu0 0.0
        %3968 = vmatpush2.msra.mxu0 0.0
        %3969 = vmatprep.subr.mxu0 0.0
        %3970 = vmatpush2.msra.mxu0 0.0
        %3971 = vmatprep.subr.mxu0 0.0
        %3972 = vmatpush2.msra.mxu0 0.0
        %3973 = vmatprep.subr.mxu0 0.0
        %3974 = vmatpush2.msra.mxu0 0.0
        %3975 = vmatprep.subr.mxu0 0.0
        %3976 = vmatpush2.msra.mxu0 0.0
        %3977 = vmatprep.subr.mxu0 0.0
        %3978 = vmatpush2.msra.mxu0 0.0
        %3979 = vmatprep.subr.mxu0 0.0
        %3980 = vmatpush2.msra.mxu0 0.0
        %3981 = vmatprep.subr.mxu0 0.0
        %3982 = vmatpush2.msra.mxu0 0.0
        %3983 = vmatprep.subr.mxu0 0.0
        %3984 = vmatpush2.msra.mxu0 0.0
        %3985 = vmatprep.subr.mxu0 0.0
        %3986 = vmatpush2.msra.mxu0 0.0
        %3987 = vmatprep.subr.mxu0 0.0
        %3988 = vmatpush2.msra.mxu0 0.0
        %3989 = vmatprep.subr.mxu0 0.0
        %3990 = vmatpush2.msra.mxu0 0.0
        %3991 = vmatprep.subr.mxu0 0.0
        %3992 = vmatpush2.msra.mxu0 0.0
        %3993 = vmatprep.subr.mxu0 0.0
        %3994 = vmatpush2.msra.mxu0 0.0
        %3995 = vmatprep.subr.mxu0 0.0
        %3996 = vmatpush2.msra.mxu0 0.0
        %3997 = vmatprep.mubr.f32.mxu0 0.0
        %3998 = vmatmul.mubr.f32.gmra.mxu0 %v3931
        %v3999 = vpop.f32.mrf.mxu0
        %v4000 = vadd.f32 0.0, %v3999
        %v4001 = vpop.f32.mrf.mxu0
        %4002 = vdwg.mxu0
        %v4004 = vsel %vm1114, %v3929, 0
        %4006 = vmatprep.subr.mxu0 0.0
        %4007 = vmatpush1.msra.mxu0 0.0
        %4008 = vmatprep.subr.mxu0 0.0
        %4009 = vmatpush1.msra.mxu0 0.0
        %4010 = vmatprep.subr.mxu0 0.0
        %4011 = vmatpush1.msra.mxu0 0.0
        %4012 = vmatprep.subr.mxu0 0.0
        %4013 = vmatpush1.msra.mxu0 0.0
        %4014 = vmatprep.subr.mxu0 0.0
        %4015 = vmatpush1.msra.mxu0 0.0
        %4016 = vmatprep.subr.mxu0 0.0
        %4017 = vmatpush1.msra.mxu0 0.0
        %4018 = vmatprep.subr.mxu0 0.0
        %4019 = vmatpush1.msra.mxu0 0.0
        %4020 = vmatprep.subr.mxu0 0.0
        %4021 = vmatpush1.msra.mxu0 0.0
        %4022 = vmatprep.subr.mxu0 0.0
        %4023 = vmatpush1.msra.mxu0 0.0
        %4024 = vmatprep.subr.mxu0 0.0
        %4025 = vmatpush1.msra.mxu0 0.0
        %4026 = vmatprep.subr.mxu0 0.0
        %4027 = vmatpush1.msra.mxu0 0.0
        %4028 = vmatprep.subr.mxu0 0.0
        %4029 = vmatpush1.msra.mxu0 0.0
        %4030 = vmatprep.subr.mxu0 0.0
        %4031 = vmatpush1.msra.mxu0 0.0
        %4032 = vmatprep.subr.mxu0 0.0
        %4033 = vmatpush1.msra.mxu0 0.0
        %4034 = vmatprep.subr.mxu0 0.0
        %4035 = vmatpush1.msra.mxu0 0.0
        %4036 = vmatprep.subr.mxu0 0.0
        %4037 = vmatpush1.msra.mxu0 %v3737
        %4038 = vmatprep.subr.mxu0 0.0
        %4039 = vmatpush2.msra.mxu0 0.0
        %4040 = vmatprep.subr.mxu0 0.0
        %4041 = vmatpush2.msra.mxu0 0.0
        %4042 = vmatprep.subr.mxu0 0.0
        %4043 = vmatpush2.msra.mxu0 0.0
        %4044 = vmatprep.subr.mxu0 0.0
        %4045 = vmatpush2.msra.mxu0 0.0
        %4046 = vmatprep.subr.mxu0 0.0
        %4047 = vmatpush2.msra.mxu0 0.0
        %4048 = vmatprep.subr.mxu0 0.0
        %4049 = vmatpush2.msra.mxu0 0.0
        %4050 = vmatprep.subr.mxu0 0.0
        %4051 = vmatpush2.msra.mxu0 0.0
        %4052 = vmatprep.subr.mxu0 0.0
        %4053 = vmatpush2.msra.mxu0 0.0
        %4054 = vmatprep.subr.mxu0 0.0
        %4055 = vmatpush2.msra.mxu0 0.0
        %4056 = vmatprep.subr.mxu0 0.0
        %4057 = vmatpush2.msra.mxu0 0.0
        %4058 = vmatprep.subr.mxu0 0.0
        %4059 = vmatpush2.msra.mxu0 0.0
        %4060 = vmatprep.subr.mxu0 0.0
        %4061 = vmatpush2.msra.mxu0 0.0
        %4062 = vmatprep.subr.mxu0 0.0
        %4063 = vmatpush2.msra.mxu0 0.0
        %4064 = vmatprep.subr.mxu0 0.0
        %4065 = vmatpush2.msra.mxu0 0.0
        %4066 = vmatprep.subr.mxu0 0.0
        %4067 = vmatpush2.msra.mxu0 0.0
        %4068 = vmatprep.subr.mxu0 0.0
        %4069 = vmatpush2.msra.mxu0 0.0
        %4070 = vmatprep.mubr.f32.mxu0 0.0
        %4071 = vmatmul.mubr.f32.gmra.mxu0 %v4004
        %v4072 = vpop.f32.mrf.mxu0
        %v4073 = vadd.f32 0.0, %v4072
        %v4074 = vpop.f32.mrf.mxu0
        %4075 = vdwg.mxu0
        %4076 = vmatprep.subr.mxu0 0.0
        %4077 = vmatpush1.msra.mxu0 0.0
        %4078 = vmatprep.subr.mxu0 0.0
        %4079 = vmatpush1.msra.mxu0 0.0
        %4080 = vmatprep.subr.mxu0 0.0
        %4081 = vmatpush1.msra.mxu0 0.0
        %4082 = vmatprep.subr.mxu0 0.0
        %4083 = vmatpush1.msra.mxu0 0.0
        %4084 = vmatprep.subr.mxu0 0.0
        %4085 = vmatpush1.msra.mxu0 0.0
        %4086 = vmatprep.subr.mxu0 0.0
        %4087 = vmatpush1.msra.mxu0 0.0
        %4088 = vmatprep.subr.mxu0 0.0
        %4089 = vmatpush1.msra.mxu0 0.0
        %4090 = vmatprep.subr.mxu0 0.0
        %4091 = vmatpush1.msra.mxu0 0.0
        %4092 = vmatprep.subr.mxu0 0.0
        %4093 = vmatpush1.msra.mxu0 0.0
        %4094 = vmatprep.subr.mxu0 0.0
        %4095 = vmatpush1.msra.mxu0 0.0
        %4096 = vmatprep.subr.mxu0 0.0
        %4097 = vmatpush1.msra.mxu0 0.0
        %4098 = vmatprep.subr.mxu0 0.0
        %4099 = vmatpush1.msra.mxu0 0.0
        %4100 = vmatprep.subr.mxu0 0.0
        %4101 = vmatpush1.msra.mxu0 %v3458
        %4102 = vmatprep.subr.mxu0 0.0
        %4103 = vmatpush1.msra.mxu0 %v3457
        %4104 = vmatprep.subr.mxu0 0.0
        %4105 = vmatpush1.msra.mxu0 %v3456
        %4106 = vmatprep.subr.mxu0 0.0
        %4107 = vmatpush1.msra.mxu0 %v3455
        %4108 = vmatprep.subr.mxu0 0.0
        %4109 = vmatpush2.msra.mxu0 0.0
        %4110 = vmatprep.subr.mxu0 0.0
        %4111 = vmatpush2.msra.mxu0 0.0
        %4112 = vmatprep.subr.mxu0 0.0
        %4113 = vmatpush2.msra.mxu0 0.0
        %4114 = vmatprep.subr.mxu0 0.0
        %4115 = vmatpush2.msra.mxu0 0.0
        %4116 = vmatprep.subr.mxu0 0.0
        %4117 = vmatpush2.msra.mxu0 0.0
        %4118 = vmatprep.subr.mxu0 0.0
        %4119 = vmatpush2.msra.mxu0 0.0
        %4120 = vmatprep.subr.mxu0 0.0
        %4121 = vmatpush2.msra.mxu0 0.0
        %4122 = vmatprep.subr.mxu0 0.0
        %4123 = vmatpush2.msra.mxu0 0.0
        %4124 = vmatprep.subr.mxu0 0.0
        %4125 = vmatpush2.msra.mxu0 0.0
        %4126 = vmatprep.subr.mxu0 0.0
        %4127 = vmatpush2.msra.mxu0 0.0
        %4128 = vmatprep.subr.mxu0 0.0
        %4129 = vmatpush2.msra.mxu0 0.0
        %4130 = vmatprep.subr.mxu0 0.0
        %4131 = vmatpush2.msra.mxu0 0.0
        %4132 = vmatprep.subr.mxu0 0.0
        %4133 = vmatpush2.msra.mxu0 0.0
        %4134 = vmatprep.subr.mxu0 0.0
        %4135 = vmatpush2.msra.mxu0 0.0
        %4136 = vmatprep.subr.mxu0 0.0
        %4137 = vmatpush2.msra.mxu0 0.0
        %4138 = vmatprep.subr.mxu0 0.0
        %4139 = vmatpush2.msra.mxu0 0.0
        %4140 = vmatprep.mubr.f32.mxu0 0.0
        %4141 = vmatmul.mubr.f32.gmra.mxu0 %v3504
        %v4142 = vpop.f32.mrf.mxu0
        %v4143 = vadd.f32 0.0, %v4142
        %v4144 = vpop.f32.mrf.mxu0
        %4145 = vmatprep.mubr.f32.mxu0 0.0
        %4146 = vmatmul.mubr.f32.gmra.mxu0 %v3507
        %v4147 = vpop.f32.mrf.mxu0
        %v4148 = vadd.f32 0.0, %v4147
        %v4149 = vpop.f32.mrf.mxu0
        %4150 = vdwg.mxu0
        %4151 = vmatprep.subr.mxu0 0.0
        %4152 = vmatpush1.msra.mxu0 0.0
        %4153 = vmatprep.subr.mxu0 0.0
        %4154 = vmatpush1.msra.mxu0 0.0
        %4155 = vmatprep.subr.mxu0 0.0
        %4156 = vmatpush1.msra.mxu0 0.0
        %4157 = vmatprep.subr.mxu0 0.0
        %4158 = vmatpush1.msra.mxu0 0.0
        %4159 = vmatprep.subr.mxu0 0.0
        %4160 = vmatpush1.msra.mxu0 0.0
        %4161 = vmatprep.subr.mxu0 0.0
        %4162 = vmatpush1.msra.mxu0 0.0
        %4163 = vmatprep.subr.mxu0 0.0
        %4164 = vmatpush1.msra.mxu0 0.0
        %4165 = vmatprep.subr.mxu0 0.0
        %4166 = vmatpush1.msra.mxu0 0.0
        %4167 = vmatprep.subr.mxu0 0.0
        %4168 = vmatpush1.msra.mxu0 0.0
        %4169 = vmatprep.subr.mxu0 0.0
        %4170 = vmatpush1.msra.mxu0 0.0
        %4171 = vmatprep.subr.mxu0 0.0
        %4172 = vmatpush1.msra.mxu0 0.0
        %4173 = vmatprep.subr.mxu0 0.0
        %4174 = vmatpush1.msra.mxu0 0.0
        %4175 = vmatprep.subr.mxu0 0.0
        %4176 = vmatpush1.msra.mxu0 %v3474
        %4177 = vmatprep.subr.mxu0 0.0
        %4178 = vmatpush1.msra.mxu0 %v3473
        %4179 = vmatprep.subr.mxu0 0.0
        %4180 = vmatpush1.msra.mxu0 %v3472
        %4181 = vmatprep.subr.mxu0 0.0
        %4182 = vmatpush1.msra.mxu0 %v3471
        %4183 = vmatprep.subr.mxu0 0.0
        %4184 = vmatpush2.msra.mxu0 0.0
        %4185 = vmatprep.subr.mxu0 0.0
        %4186 = vmatpush2.msra.mxu0 0.0
        %4187 = vmatprep.subr.mxu0 0.0
        %4188 = vmatpush2.msra.mxu0 0.0
        %4189 = vmatprep.subr.mxu0 0.0
        %4190 = vmatpush2.msra.mxu0 0.0
        %4191 = vmatprep.subr.mxu0 0.0
        %4192 = vmatpush2.msra.mxu0 0.0
        %4193 = vmatprep.subr.mxu0 0.0
        %4194 = vmatpush2.msra.mxu0 0.0
        %4195 = vmatprep.subr.mxu0 0.0
        %4196 = vmatpush2.msra.mxu0 0.0
        %4197 = vmatprep.subr.mxu0 0.0
        %4198 = vmatpush2.msra.mxu0 0.0
        %4199 = vmatprep.subr.mxu0 0.0
        %4200 = vmatpush2.msra.mxu0 0.0
        %4201 = vmatprep.subr.mxu0 0.0
        %4202 = vmatpush2.msra.mxu0 0.0
        %4203 = vmatprep.subr.mxu0 0.0
        %4204 = vmatpush2.msra.mxu0 0.0
        %4205 = vmatprep.subr.mxu0 0.0
        %4206 = vmatpush2.msra.mxu0 0.0
        %4207 = vmatprep.subr.mxu0 0.0
        %4208 = vmatpush2.msra.mxu0 0.0
        %4209 = vmatprep.subr.mxu0 0.0
        %4210 = vmatpush2.msra.mxu0 0.0
        %4211 = vmatprep.subr.mxu0 0.0
        %4212 = vmatpush2.msra.mxu0 0.0
        %4213 = vmatprep.subr.mxu0 0.0
        %4214 = vmatpush2.msra.mxu0 0.0
        %4215 = vmatprep.mubr.f32.mxu0 0.0
        %4216 = vmatmul.mubr.f32.gmra.mxu0 %v3585
        %v4217 = vpop.f32.mrf.mxu0
        %v4218 = vadd.f32 0.0, %v4217
        %v4219 = vpop.f32.mrf.mxu0
        %4220 = vmatprep.mubr.f32.mxu0 0.0
        %4221 = vmatmul.mubr.f32.gmra.mxu0 %v3588
        %v4222 = vpop.f32.mrf.mxu0
        %v4223 = vadd.f32 0.0, %v4222
        %v4224 = vpop.f32.mrf.mxu0
        %4225 = vdwg.mxu0
        %4226 = vmatprep.subr.mxu0 0.0
        %4227 = vmatpush1.msra.mxu0 0.0
        %4228 = vmatprep.subr.mxu0 0.0
        %4229 = vmatpush1.msra.mxu0 0.0
        %4230 = vmatprep.subr.mxu0 0.0
        %4231 = vmatpush1.msra.mxu0 0.0
        %4232 = vmatprep.subr.mxu0 0.0
        %4233 = vmatpush1.msra.mxu0 0.0
        %4234 = vmatprep.subr.mxu0 0.0
        %4235 = vmatpush1.msra.mxu0 0.0
        %4236 = vmatprep.subr.mxu0 0.0
        %4237 = vmatpush1.msra.mxu0 0.0
        %4238 = vmatprep.subr.mxu0 0.0
        %4239 = vmatpush1.msra.mxu0 0.0
        %4240 = vmatprep.subr.mxu0 0.0
        %4241 = vmatpush1.msra.mxu0 0.0
        %4242 = vmatprep.subr.mxu0 0.0
        %4243 = vmatpush1.msra.mxu0 0.0
        %4244 = vmatprep.subr.mxu0 0.0
        %4245 = vmatpush1.msra.mxu0 0.0
        %4246 = vmatprep.subr.mxu0 0.0
        %4247 = vmatpush1.msra.mxu0 0.0
        %4248 = vmatprep.subr.mxu0 0.0
        %4249 = vmatpush1.msra.mxu0 0.0
        %4250 = vmatprep.subr.mxu0 0.0
        %4251 = vmatpush1.msra.mxu0 %v3490
        %4252 = vmatprep.subr.mxu0 0.0
        %4253 = vmatpush1.msra.mxu0 %v3489
        %4254 = vmatprep.subr.mxu0 0.0
        %4255 = vmatpush1.msra.mxu0 %v3488
        %4256 = vmatprep.subr.mxu0 0.0
        %4257 = vmatpush1.msra.mxu0 %v3487
        %4258 = vmatprep.subr.mxu0 0.0
        %4259 = vmatpush2.msra.mxu0 0.0
        %4260 = vmatprep.subr.mxu0 0.0
        %4261 = vmatpush2.msra.mxu0 0.0
        %4262 = vmatprep.subr.mxu0 0.0
        %4263 = vmatpush2.msra.mxu0 0.0
        %4264 = vmatprep.subr.mxu0 0.0
        %4265 = vmatpush2.msra.mxu0 0.0
        %4266 = vmatprep.subr.mxu0 0.0
        %4267 = vmatpush2.msra.mxu0 0.0
        %4268 = vmatprep.subr.mxu0 0.0
        %4269 = vmatpush2.msra.mxu0 0.0
        %4270 = vmatprep.subr.mxu0 0.0
        %4271 = vmatpush2.msra.mxu0 0.0
        %4272 = vmatprep.subr.mxu0 0.0
        %4273 = vmatpush2.msra.mxu0 0.0
        %4274 = vmatprep.subr.mxu0 0.0
        %4275 = vmatpush2.msra.mxu0 0.0
        %4276 = vmatprep.subr.mxu0 0.0
        %4277 = vmatpush2.msra.mxu0 0.0
        %4278 = vmatprep.subr.mxu0 0.0
        %4279 = vmatpush2.msra.mxu0 0.0
        %4280 = vmatprep.subr.mxu0 0.0
        %4281 = vmatpush2.msra.mxu0 0.0
        %4282 = vmatprep.subr.mxu0 0.0
        %4283 = vmatpush2.msra.mxu0 0.0
        %4284 = vmatprep.subr.mxu0 0.0
        %4285 = vmatpush2.msra.mxu0 0.0
        %4286 = vmatprep.subr.mxu0 0.0
        %4287 = vmatpush2.msra.mxu0 0.0
        %4288 = vmatprep.subr.mxu0 0.0
        %4289 = vmatpush2.msra.mxu0 0.0
        %4290 = vmatprep.mubr.f32.mxu0 0.0
        %4291 = vmatmul.mubr.f32.gmra.mxu0 %v3585
        %v4292 = vpop.f32.mrf.mxu0
        %v4293 = vadd.f32 0.0, %v4292
        %v4294 = vpop.f32.mrf.mxu0
        %4295 = vmatprep.mubr.f32.mxu0 0.0
        %4296 = vmatmul.mubr.f32.gmra.mxu0 %v3588
        %v4297 = vpop.f32.mrf.mxu0
        %v4298 = vadd.f32 0.0, %v4297
        %v4299 = vpop.f32.mrf.mxu0
        %4300 = vdwg.mxu0
        %v4302 = vsel %vm1114, %v4143, 0
        %v4305 = vsel %vm1114, %v4218, 0
        %4307 = vmatprep.subr.mxu0 0.0
        %4308 = vmatpush1.xpose.msra.mxu0 0.0
        %4309 = vmatprep.subr.mxu0 0.0
        %4310 = vmatpush1.xpose.msra.mxu0 0.0
        %4311 = vmatprep.subr.mxu0 0.0
        %4312 = vmatpush1.xpose.msra.mxu0 0.0
        %4313 = vmatprep.subr.mxu0 0.0
        %4314 = vmatpush1.xpose.msra.mxu0 0.0
        %4315 = vmatprep.subr.mxu0 0.0
        %4316 = vmatpush1.xpose.msra.mxu0 0.0
        %4317 = vmatprep.subr.mxu0 0.0
        %4318 = vmatpush1.xpose.msra.mxu0 0.0
        %4319 = vmatprep.subr.mxu0 0.0
        %4320 = vmatpush1.xpose.msra.mxu0 0.0
        %4321 = vmatprep.subr.mxu0 0.0
        %4322 = vmatpush1.xpose.msra.mxu0 0.0
        %4323 = vmatprep.subr.mxu0 0.0
        %4324 = vmatpush1.xpose.msra.mxu0 0.0
        %4325 = vmatprep.subr.mxu0 0.0
        %4326 = vmatpush1.xpose.msra.mxu0 0.0
        %4327 = vmatprep.subr.mxu0 0.0
        %4328 = vmatpush1.xpose.msra.mxu0 0.0
        %4329 = vmatprep.subr.mxu0 0.0
        %4330 = vmatpush1.xpose.msra.mxu0 0.0
        %4331 = vmatprep.subr.mxu0 0.0
        %4332 = vmatpush1.xpose.msra.mxu0 0.0
        %4333 = vmatprep.subr.mxu0 0.0
        %4334 = vmatpush1.xpose.msra.mxu0 0.0
        %4335 = vmatprep.subr.mxu0 0.0
        %4336 = vmatpush1.xpose.msra.mxu0 0.0
        %4337 = vmatprep.subr.mxu0 0.0
        %4338 = vmatpush1.xpose.msra.mxu0 %v4305
        %4339 = vmatprep.subr.mxu0 0.0
        %4340 = vmatpush2.xpose.msra.mxu0 0.0
        %4341 = vmatprep.subr.mxu0 0.0
        %4342 = vmatpush2.xpose.msra.mxu0 0.0
        %4343 = vmatprep.subr.mxu0 0.0
        %4344 = vmatpush2.xpose.msra.mxu0 0.0
        %4345 = vmatprep.subr.mxu0 0.0
        %4346 = vmatpush2.xpose.msra.mxu0 0.0
        %4347 = vmatprep.subr.mxu0 0.0
        %4348 = vmatpush2.xpose.msra.mxu0 0.0
        %4349 = vmatprep.subr.mxu0 0.0
        %4350 = vmatpush2.xpose.msra.mxu0 0.0
        %4351 = vmatprep.subr.mxu0 0.0
        %4352 = vmatpush2.xpose.msra.mxu0 0.0
        %4353 = vmatprep.subr.mxu0 0.0
        %4354 = vmatpush2.xpose.msra.mxu0 0.0
        %4355 = vmatprep.subr.mxu0 0.0
        %4356 = vmatpush2.xpose.msra.mxu0 0.0
        %4357 = vmatprep.subr.mxu0 0.0
        %4358 = vmatpush2.xpose.msra.mxu0 0.0
        %4359 = vmatprep.subr.mxu0 0.0
        %4360 = vmatpush2.xpose.msra.mxu0 0.0
        %4361 = vmatprep.subr.mxu0 0.0
        %4362 = vmatpush2.xpose.msra.mxu0 0.0
        %4363 = vmatprep.subr.mxu0 0.0
        %4364 = vmatpush2.xpose.msra.mxu0 0.0
        %4365 = vmatprep.subr.mxu0 0.0
        %4366 = vmatpush2.xpose.msra.mxu0 0.0
        %4367 = vmatprep.subr.mxu0 0.0
        %4368 = vmatpush2.xpose.msra.mxu0 0.0
        %4369 = vmatprep.subr.mxu0 0.0
        %4370 = vmatpush2.xpose.msra.mxu0 0.0
        %4371 = vmatprep.mubr.f32.mxu0 0.0
        %4372 = vmatmul.mubr.f32.gmra.mxu0 %v4302
        %v4373 = vpop.f32.mrf.mxu0
        %v4374 = vadd.f32 0.0, %v4373
        %v4375 = vpop.f32.mrf.mxu0
        %4376 = vdwg.mxu0
        %v4378 = vsel %vm1114, %v4148, 0
        %v4381 = vsel %vm1114, %v4223, 0
        %4383 = vmatprep.subr.mxu0 0.0
        %4384 = vmatpush1.xpose.msra.mxu0 0.0
        %4385 = vmatprep.subr.mxu0 0.0
        %4386 = vmatpush1.xpose.msra.mxu0 0.0
        %4387 = vmatprep.subr.mxu0 0.0
        %4388 = vmatpush1.xpose.msra.mxu0 0.0
        %4389 = vmatprep.subr.mxu0 0.0
        %4390 = vmatpush1.xpose.msra.mxu0 0.0
        %4391 = vmatprep.subr.mxu0 0.0
        %4392 = vmatpush1.xpose.msra.mxu0 0.0
        %4393 = vmatprep.subr.mxu0 0.0
        %4394 = vmatpush1.xpose.msra.mxu0 0.0
        %4395 = vmatprep.subr.mxu0 0.0
        %4396 = vmatpush1.xpose.msra.mxu0 0.0
        %4397 = vmatprep.subr.mxu0 0.0
        %4398 = vmatpush1.xpose.msra.mxu0 0.0
        %4399 = vmatprep.subr.mxu0 0.0
        %4400 = vmatpush1.xpose.msra.mxu0 0.0
        %4401 = vmatprep.subr.mxu0 0.0
        %4402 = vmatpush1.xpose.msra.mxu0 0.0
        %4403 = vmatprep.subr.mxu0 0.0
        %4404 = vmatpush1.xpose.msra.mxu0 0.0
        %4405 = vmatprep.subr.mxu0 0.0
        %4406 = vmatpush1.xpose.msra.mxu0 0.0
        %4407 = vmatprep.subr.mxu0 0.0
        %4408 = vmatpush1.xpose.msra.mxu0 0.0
        %4409 = vmatprep.subr.mxu0 0.0
        %4410 = vmatpush1.xpose.msra.mxu0 0.0
        %4411 = vmatprep.subr.mxu0 0.0
        %4412 = vmatpush1.xpose.msra.mxu0 0.0
        %4413 = vmatprep.subr.mxu0 0.0
        %4414 = vmatpush1.xpose.msra.mxu0 %v4381
        %4415 = vmatprep.subr.mxu0 0.0
        %4416 = vmatpush2.xpose.msra.mxu0 0.0
        %4417 = vmatprep.subr.mxu0 0.0
        %4418 = vmatpush2.xpose.msra.mxu0 0.0
        %4419 = vmatprep.subr.mxu0 0.0
        %4420 = vmatpush2.xpose.msra.mxu0 0.0
        %4421 = vmatprep.subr.mxu0 0.0
        %4422 = vmatpush2.xpose.msra.mxu0 0.0
        %4423 = vmatprep.subr.mxu0 0.0
        %4424 = vmatpush2.xpose.msra.mxu0 0.0
        %4425 = vmatprep.subr.mxu0 0.0
        %4426 = vmatpush2.xpose.msra.mxu0 0.0
        %4427 = vmatprep.subr.mxu0 0.0
        %4428 = vmatpush2.xpose.msra.mxu0 0.0
        %4429 = vmatprep.subr.mxu0 0.0
        %4430 = vmatpush2.xpose.msra.mxu0 0.0
        %4431 = vmatprep.subr.mxu0 0.0
        %4432 = vmatpush2.xpose.msra.mxu0 0.0
        %4433 = vmatprep.subr.mxu0 0.0
        %4434 = vmatpush2.xpose.msra.mxu0 0.0
        %4435 = vmatprep.subr.mxu0 0.0
        %4436 = vmatpush2.xpose.msra.mxu0 0.0
        %4437 = vmatprep.subr.mxu0 0.0
        %4438 = vmatpush2.xpose.msra.mxu0 0.0
        %4439 = vmatprep.subr.mxu0 0.0
        %4440 = vmatpush2.xpose.msra.mxu0 0.0
        %4441 = vmatprep.subr.mxu0 0.0
        %4442 = vmatpush2.xpose.msra.mxu0 0.0
        %4443 = vmatprep.subr.mxu0 0.0
        %4444 = vmatpush2.xpose.msra.mxu0 0.0
        %4445 = vmatprep.subr.mxu0 0.0
        %4446 = vmatpush2.xpose.msra.mxu0 0.0
        %4447 = vmatprep.mubr.f32.mxu0 0.0
        %4448 = vmatmul.mubr.f32.gmra.mxu0 %v4378
        %v4449 = vpop.f32.mrf.mxu0
        %v4450 = vadd.f32 0.0, %v4449
        %v4451 = vpop.f32.mrf.mxu0
        %4452 = vdwg.mxu0
        %v4453 = vmul.f32 %v4374, 0.35355338
        %v4454 = vmul.f32 %v4450, 0.35355338
        %v4455 = vsel %vm3904, -1e+09, %v4453
        %v4456 = vsel %vm3905, -1e+09, %v4454
        %v4457 = vsel %vm1114, %v4455, -inf
        %4458 = vmax.xlane.f32.xlu0 %v4457
        %v4459 = vpop.xlane.xlu0 %4458
        %v4460 = vsel %vm1114, %v4456, -inf
        %4461 = vmax.xlane.f32.xlu0 %v4460
        %v4462 = vpop.xlane.xlu0 %4461
        %v4463 = vsub.f32 %v4455, %v4459
        %v4464 = vsub.f32 %v4456, %v4462
        %v4465 = vmul.f32 %v4463, 1.442695
        %v4466 = vpow.pop %v4465
        %v4467 = vmul.f32 %v4464, 1.442695
        %v4468 = vpow.pop %v4467
        %v4469 = vsel %vm1114, %v4466, 0.0
        %4470 = vadd.xlane.f32.xlu0 %v4469
        %v4471 = vpop.xlane.xlu0 %4470
        %v4472 = vsel %vm1114, %v4468, 0.0
        %4473 = vadd.xlane.f32.xlu0 %v4472
        %v4474 = vpop.xlane.xlu0 %4473
        %v4475 = vrcp.pop %v4471
        %v4476 = vrcp.pop %v4474
        %v4477 = vmul.f32 %v4466, %v4475
        %v4478 = vmul.f32 %v4468, %v4476
        %v4480 = vsel %vm1114, %v4477, 0
        %4482 = vmatprep.subr.mxu0 0.0
        %4483 = vmatpush1.msra.mxu0 0.0
        %4484 = vmatprep.subr.mxu0 0.0
        %4485 = vmatpush1.msra.mxu0 0.0
        %4486 = vmatprep.subr.mxu0 0.0
        %4487 = vmatpush1.msra.mxu0 0.0
        %4488 = vmatprep.subr.mxu0 0.0
        %4489 = vmatpush1.msra.mxu0 0.0
        %4490 = vmatprep.subr.mxu0 0.0
        %4491 = vmatpush1.msra.mxu0 0.0
        %4492 = vmatprep.subr.mxu0 0.0
        %4493 = vmatpush1.msra.mxu0 0.0
        %4494 = vmatprep.subr.mxu0 0.0
        %4495 = vmatpush1.msra.mxu0 0.0
        %4496 = vmatprep.subr.mxu0 0.0
        %4497 = vmatpush1.msra.mxu0 0.0
        %4498 = vmatprep.subr.mxu0 0.0
        %4499 = vmatpush1.msra.mxu0 0.0
        %4500 = vmatprep.subr.mxu0 0.0
        %4501 = vmatpush1.msra.mxu0 0.0
        %4502 = vmatprep.subr.mxu0 0.0
        %4503 = vmatpush1.msra.mxu0 0.0
        %4504 = vmatprep.subr.mxu0 0.0
        %4505 = vmatpush1.msra.mxu0 0.0
        %4506 = vmatprep.subr.mxu0 0.0
        %4507 = vmatpush1.msra.mxu0 0.0
        %4508 = vmatprep.subr.mxu0 0.0
        %4509 = vmatpush1.msra.mxu0 0.0
        %4510 = vmatprep.subr.mxu0 0.0
        %4511 = vmatpush1.msra.mxu0 0.0
        %4512 = vmatprep.subr.mxu0 0.0
        %4513 = vmatpush1.msra.mxu0 %v4293
        %4514 = vmatprep.subr.mxu0 0.0
        %4515 = vmatpush2.msra.mxu0 0.0
        %4516 = vmatprep.subr.mxu0 0.0
        %4517 = vmatpush2.msra.mxu0 0.0
        %4518 = vmatprep.subr.mxu0 0.0
        %4519 = vmatpush2.msra.mxu0 0.0
        %4520 = vmatprep.subr.mxu0 0.0
        %4521 = vmatpush2.msra.mxu0 0.0
        %4522 = vmatprep.subr.mxu0 0.0
        %4523 = vmatpush2.msra.mxu0 0.0
        %4524 = vmatprep.subr.mxu0 0.0
        %4525 = vmatpush2.msra.mxu0 0.0
        %4526 = vmatprep.subr.mxu0 0.0
        %4527 = vmatpush2.msra.mxu0 0.0
        %4528 = vmatprep.subr.mxu0 0.0
        %4529 = vmatpush2.msra.mxu0 0.0
        %4530 = vmatprep.subr.mxu0 0.0
        %4531 = vmatpush2.msra.mxu0 0.0
        %4532 = vmatprep.subr.mxu0 0.0
        %4533 = vmatpush2.msra.mxu0 0.0
        %4534 = vmatprep.subr.mxu0 0.0
        %4535 = vmatpush2.msra.mxu0 0.0
        %4536 = vmatprep.subr.mxu0 0.0
        %4537 = vmatpush2.msra.mxu0 0.0
        %4538 = vmatprep.subr.mxu0 0.0
        %4539 = vmatpush2.msra.mxu0 0.0
        %4540 = vmatprep.subr.mxu0 0.0
        %4541 = vmatpush2.msra.mxu0 0.0
        %4542 = vmatprep.subr.mxu0 0.0
        %4543 = vmatpush2.msra.mxu0 0.0
        %4544 = vmatprep.subr.mxu0 0.0
        %4545 = vmatpush2.msra.mxu0 0.0
        %4546 = vmatprep.mubr.f32.mxu0 0.0
        %4547 = vmatmul.mubr.f32.gmra.mxu0 %v4480
        %v4548 = vpop.f32.mrf.mxu0
        %v4549 = vadd.f32 0.0, %v4548
        %v4550 = vpop.f32.mrf.mxu0
        %4551 = vdwg.mxu0
        %v4553 = vsel %vm1114, %v4478, 0
        %4555 = vmatprep.subr.mxu0 0.0
        %4556 = vmatpush1.msra.mxu0 0.0
        %4557 = vmatprep.subr.mxu0 0.0
        %4558 = vmatpush1.msra.mxu0 0.0
        %4559 = vmatprep.subr.mxu0 0.0
        %4560 = vmatpush1.msra.mxu0 0.0
        %4561 = vmatprep.subr.mxu0 0.0
        %4562 = vmatpush1.msra.mxu0 0.0
        %4563 = vmatprep.subr.mxu0 0.0
        %4564 = vmatpush1.msra.mxu0 0.0
        %4565 = vmatprep.subr.mxu0 0.0
        %4566 = vmatpush1.msra.mxu0 0.0
        %4567 = vmatprep.subr.mxu0 0.0
        %4568 = vmatpush1.msra.mxu0 0.0
        %4569 = vmatprep.subr.mxu0 0.0
        %4570 = vmatpush1.msra.mxu0 0.0
        %4571 = vmatprep.subr.mxu0 0.0
        %4572 = vmatpush1.msra.mxu0 0.0
        %4573 = vmatprep.subr.mxu0 0.0
        %4574 = vmatpush1.msra.mxu0 0.0
        %4575 = vmatprep.subr.mxu0 0.0
        %4576 = vmatpush1.msra.mxu0 0.0
        %4577 = vmatprep.subr.mxu0 0.0
        %4578 = vmatpush1.msra.mxu0 0.0
        %4579 = vmatprep.subr.mxu0 0.0
        %4580 = vmatpush1.msra.mxu0 0.0
        %4581 = vmatprep.subr.mxu0 0.0
        %4582 = vmatpush1.msra.mxu0 0.0
        %4583 = vmatprep.subr.mxu0 0.0
        %4584 = vmatpush1.msra.mxu0 0.0
        %4585 = vmatprep.subr.mxu0 0.0
        %4586 = vmatpush1.msra.mxu0 %v4298
        %4587 = vmatprep.subr.mxu0 0.0
        %4588 = vmatpush2.msra.mxu0 0.0
        %4589 = vmatprep.subr.mxu0 0.0
        %4590 = vmatpush2.msra.mxu0 0.0
        %4591 = vmatprep.subr.mxu0 0.0
        %4592 = vmatpush2.msra.mxu0 0.0
        %4593 = vmatprep.subr.mxu0 0.0
        %4594 = vmatpush2.msra.mxu0 0.0
        %4595 = vmatprep.subr.mxu0 0.0
        %4596 = vmatpush2.msra.mxu0 0.0
        %4597 = vmatprep.subr.mxu0 0.0
        %4598 = vmatpush2.msra.mxu0 0.0
        %4599 = vmatprep.subr.mxu0 0.0
        %4600 = vmatpush2.msra.mxu0 0.0
        %4601 = vmatprep.subr.mxu0 0.0
        %4602 = vmatpush2.msra.mxu0 0.0
        %4603 = vmatprep.subr.mxu0 0.0
        %4604 = vmatpush2.msra.mxu0 0.0
        %4605 = vmatprep.subr.mxu0 0.0
        %4606 = vmatpush2.msra.mxu0 0.0
        %4607 = vmatprep.subr.mxu0 0.0
        %4608 = vmatpush2.msra.mxu0 0.0
        %4609 = vmatprep.subr.mxu0 0.0
        %4610 = vmatpush2.msra.mxu0 0.0
        %4611 = vmatprep.subr.mxu0 0.0
        %4612 = vmatpush2.msra.mxu0 0.0
        %4613 = vmatprep.subr.mxu0 0.0
        %4614 = vmatpush2.msra.mxu0 0.0
        %4615 = vmatprep.subr.mxu0 0.0
        %4616 = vmatpush2.msra.mxu0 0.0
        %4617 = vmatprep.subr.mxu0 0.0
        %4618 = vmatpush2.msra.mxu0 0.0
        %4619 = vmatprep.mubr.f32.mxu0 0.0
        %4620 = vmatmul.mubr.f32.gmra.mxu0 %v4553
        %v4621 = vpop.f32.mrf.mxu0
        %v4622 = vadd.f32 0.0, %v4621
        %v4623 = vpop.f32.mrf.mxu0
        %4624 = vdwg.mxu0
        %v4626 = vsel %vm1114, %v4549, 0
        %v4629 = vsel %vm1114, %v4622, 0
        %4631 = vmatprep.subr.mxu0 0.0
        %4632 = vmatpush1.msra.mxu0 0.0
        %4633 = vmatprep.subr.mxu0 0.0
        %4634 = vmatpush1.msra.mxu0 0.0
        %4635 = vmatprep.subr.mxu0 0.0
        %4636 = vmatpush1.msra.mxu0 0.0
        %4637 = vmatprep.subr.mxu0 0.0
        %4638 = vmatpush1.msra.mxu0 0.0
        %4639 = vmatprep.subr.mxu0 0.0
        %4640 = vmatpush1.msra.mxu0 0.0
        %4641 = vmatprep.subr.mxu0 0.0
        %4642 = vmatpush1.msra.mxu0 0.0
        %4643 = vmatprep.subr.mxu0 0.0
        %4644 = vmatpush1.msra.mxu0 0.0
        %4645 = vmatprep.subr.mxu0 0.0
        %4646 = vmatpush1.msra.mxu0 0.0
        %4647 = vmatprep.subr.mxu0 0.0
        %4648 = vmatpush1.msra.mxu0 0.0
        %4649 = vmatprep.subr.mxu0 0.0
        %4650 = vmatpush1.msra.mxu0 0.0
        %4651 = vmatprep.subr.mxu0 0.0
        %4652 = vmatpush1.msra.mxu0 0.0
        %4653 = vmatprep.subr.mxu0 0.0
        %4654 = vmatpush1.msra.mxu0 0.0
        %4655 = vmatprep.subr.mxu0 0.0
        %4656 = vmatpush1.msra.mxu0 0.0
        %4657 = vmatprep.subr.mxu0 0.0
        %4658 = vmatpush1.msra.mxu0 0.0
        %4659 = vmatprep.subr.mxu0 0.0
        %4660 = vmatpush1.msra.mxu0 0.0
        %4661 = vmatprep.subr.mxu0 0.0
        %4662 = vmatpush1.msra.mxu0 %v3500
        %4663 = vmatprep.subr.mxu0 0.0
        %4664 = vmatpush2.msra.mxu0 0.0
        %4665 = vmatprep.subr.mxu0 0.0
        %4666 = vmatpush2.msra.mxu0 0.0
        %4667 = vmatprep.subr.mxu0 0.0
        %4668 = vmatpush2.msra.mxu0 0.0
        %4669 = vmatprep.subr.mxu0 0.0
        %4670 = vmatpush2.msra.mxu0 0.0
        %4671 = vmatprep.subr.mxu0 0.0
        %4672 = vmatpush2.msra.mxu0 0.0
        %4673 = vmatprep.subr.mxu0 0.0
        %4674 = vmatpush2.msra.mxu0 0.0
        %4675 = vmatprep.subr.mxu0 0.0
        %4676 = vmatpush2.msra.mxu0 0.0
        %4677 = vmatprep.subr.mxu0 0.0
        %4678 = vmatpush2.msra.mxu0 0.0
        %4679 = vmatprep.subr.mxu0 0.0
        %4680 = vmatpush2.msra.mxu0 0.0
        %4681 = vmatprep.subr.mxu0 0.0
        %4682 = vmatpush2.msra.mxu0 0.0
        %4683 = vmatprep.subr.mxu0 0.0
        %4684 = vmatpush2.msra.mxu0 0.0
        %4685 = vmatprep.subr.mxu0 0.0
        %4686 = vmatpush2.msra.mxu0 0.0
        %4687 = vmatprep.subr.mxu0 0.0
        %4688 = vmatpush2.msra.mxu0 0.0
        %4689 = vmatprep.subr.mxu0 0.0
        %4690 = vmatpush2.msra.mxu0 0.0
        %4691 = vmatprep.subr.mxu0 0.0
        %4692 = vmatpush2.msra.mxu0 0.0
        %4693 = vmatprep.subr.mxu0 0.0
        %4694 = vmatpush2.msra.mxu0 0.0
        %4695 = vmatprep.mubr.f32.mxu0 0.0
        %4696 = vmatmul.mubr.f32.gmra.mxu0 %v4626
        %v4697 = vpop.f32.mrf.mxu0
        %v4698 = vadd.f32 0.0, %v4697
        %v4699 = vpop.f32.mrf.mxu0
        %4700 = vmatprep.mubr.f32.mxu0 0.0
        %4701 = vmatmul.mubr.f32.gmra.mxu0 %v4629
        %v4702 = vpop.f32.mrf.mxu0
        %v4703 = vadd.f32 0.0, %v4702
        %v4704 = vpop.f32.mrf.mxu0
        %4705 = vdwg.mxu0
        %v4707 = vsel %vm1114, %v4000, 0
        %v4710 = vsel %vm1114, %v4073, 0
        %4712 = vmatprep.subr.mxu0 0.0
        %4713 = vmatpush1.msra.mxu0 0.0
        %4714 = vmatprep.subr.mxu0 0.0
        %4715 = vmatpush1.msra.mxu0 0.0
        %4716 = vmatprep.subr.mxu0 0.0
        %4717 = vmatpush1.msra.mxu0 0.0
        %4718 = vmatprep.subr.mxu0 0.0
        %4719 = vmatpush1.msra.mxu0 0.0
        %4720 = vmatprep.subr.mxu0 0.0
        %4721 = vmatpush1.msra.mxu0 0.0
        %4722 = vmatprep.subr.mxu0 0.0
        %4723 = vmatpush1.msra.mxu0 0.0
        %4724 = vmatprep.subr.mxu0 0.0
        %4725 = vmatpush1.msra.mxu0 0.0
        %4726 = vmatprep.subr.mxu0 0.0
        %4727 = vmatpush1.msra.mxu0 0.0
        %4728 = vmatprep.subr.mxu0 0.0
        %4729 = vmatpush1.msra.mxu0 0.0
        %4730 = vmatprep.subr.mxu0 0.0
        %4731 = vmatpush1.msra.mxu0 0.0
        %4732 = vmatprep.subr.mxu0 0.0
        %4733 = vmatpush1.msra.mxu0 0.0
        %4734 = vmatprep.subr.mxu0 0.0
        %4735 = vmatpush1.msra.mxu0 0.0
        %4736 = vmatprep.subr.mxu0 0.0
        %4737 = vmatpush1.msra.mxu0 0.0
        %4738 = vmatprep.subr.mxu0 0.0
        %4739 = vmatpush1.msra.mxu0 0.0
        %4740 = vmatprep.subr.mxu0 0.0
        %4741 = vmatpush1.msra.mxu0 0.0
        %4742 = vmatprep.subr.mxu0 0.0
        %4743 = vmatpush1.msra.mxu0 %v3499
        %4744 = vmatprep.subr.mxu0 0.0
        %4745 = vmatpush2.msra.mxu0 0.0
        %4746 = vmatprep.subr.mxu0 0.0
        %4747 = vmatpush2.msra.mxu0 0.0
        %4748 = vmatprep.subr.mxu0 0.0
        %4749 = vmatpush2.msra.mxu0 0.0
        %4750 = vmatprep.subr.mxu0 0.0
        %4751 = vmatpush2.msra.mxu0 0.0
        %4752 = vmatprep.subr.mxu0 0.0
        %4753 = vmatpush2.msra.mxu0 0.0
        %4754 = vmatprep.subr.mxu0 0.0
        %4755 = vmatpush2.msra.mxu0 0.0
        %4756 = vmatprep.subr.mxu0 0.0
        %4757 = vmatpush2.msra.mxu0 0.0
        %4758 = vmatprep.subr.mxu0 0.0
        %4759 = vmatpush2.msra.mxu0 0.0
        %4760 = vmatprep.subr.mxu0 0.0
        %4761 = vmatpush2.msra.mxu0 0.0
        %4762 = vmatprep.subr.mxu0 0.0
        %4763 = vmatpush2.msra.mxu0 0.0
        %4764 = vmatprep.subr.mxu0 0.0
        %4765 = vmatpush2.msra.mxu0 0.0
        %4766 = vmatprep.subr.mxu0 0.0
        %4767 = vmatpush2.msra.mxu0 0.0
        %4768 = vmatprep.subr.mxu0 0.0
        %4769 = vmatpush2.msra.mxu0 0.0
        %4770 = vmatprep.subr.mxu0 0.0
        %4771 = vmatpush2.msra.mxu0 0.0
        %4772 = vmatprep.subr.mxu0 0.0
        %4773 = vmatpush2.msra.mxu0 0.0
        %4774 = vmatprep.subr.mxu0 0.0
        %4775 = vmatpush2.msra.mxu0 0.0
        %4776 = vmatprep.mubr.f32.mxu0 0.0
        %4777 = vmatmul.mubr.f32.gmra.mxu0 %v4707
        %v4778 = vpop.f32.mrf.mxu0
        %v4779 = vadd.f32 %v4698, %v4778
        %v4780 = vpop.f32.mrf.mxu0
        %4781 = vmatprep.mubr.f32.mxu0 0.0
        %4782 = vmatmul.mubr.f32.gmra.mxu0 %v4710
        %v4783 = vpop.f32.mrf.mxu0
        %v4784 = vadd.f32 %v4703, %v4783
        %v4785 = vpop.f32.mrf.mxu0
        %4786 = vdwg.mxu0
        %4787 = vmatprep.subr.mxu0 0.0
        %4788 = vmatpush1.msra.mxu0 0.0
        %4789 = vmatprep.subr.mxu0 0.0
        %4790 = vmatpush1.msra.mxu0 0.0
        %4791 = vmatprep.subr.mxu0 0.0
        %4792 = vmatpush1.msra.mxu0 0.0
        %4793 = vmatprep.subr.mxu0 0.0
        %4794 = vmatpush1.msra.mxu0 0.0
        %4795 = vmatprep.subr.mxu0 0.0
        %4796 = vmatpush1.msra.mxu0 0.0
        %4797 = vmatprep.subr.mxu0 0.0
        %4798 = vmatpush1.msra.mxu0 0.0
        %4799 = vmatprep.subr.mxu0 0.0
        %4800 = vmatpush1.msra.mxu0 0.0
        %4801 = vmatprep.subr.mxu0 0.0
        %4802 = vmatpush1.msra.mxu0 0.0
        %4803 = vmatprep.subr.mxu0 0.0
        %4804 = vmatpush1.msra.mxu0 0.0
        %4805 = vmatprep.subr.mxu0 0.0
        %4806 = vmatpush1.msra.mxu0 0.0
        %4807 = vmatprep.subr.mxu0 0.0
        %4808 = vmatpush1.msra.mxu0 0.0
        %4809 = vmatprep.subr.mxu0 0.0
        %4810 = vmatpush1.msra.mxu0 0.0
        %4811 = vmatprep.subr.mxu0 0.0
        %4812 = vmatpush1.msra.mxu0 %v3462
        %4813 = vmatprep.subr.mxu0 0.0
        %4814 = vmatpush1.msra.mxu0 %v3461
        %4815 = vmatprep.subr.mxu0 0.0
        %4816 = vmatpush1.msra.mxu0 %v3460
        %4817 = vmatprep.subr.mxu0 0.0
        %4818 = vmatpush1.msra.mxu0 %v3459
        %4819 = vmatprep.subr.mxu0 0.0
        %4820 = vmatpush2.msra.mxu0 0.0
        %4821 = vmatprep.subr.mxu0 0.0
        %4822 = vmatpush2.msra.mxu0 0.0
        %4823 = vmatprep.subr.mxu0 0.0
        %4824 = vmatpush2.msra.mxu0 0.0
        %4825 = vmatprep.subr.mxu0 0.0
        %4826 = vmatpush2.msra.mxu0 0.0
        %4827 = vmatprep.subr.mxu0 0.0
        %4828 = vmatpush2.msra.mxu0 0.0
        %4829 = vmatprep.subr.mxu0 0.0
        %4830 = vmatpush2.msra.mxu0 0.0
        %4831 = vmatprep.subr.mxu0 0.0
        %4832 = vmatpush2.msra.mxu0 0.0
        %4833 = vmatprep.subr.mxu0 0.0
        %4834 = vmatpush2.msra.mxu0 0.0
        %4835 = vmatprep.subr.mxu0 0.0
        %4836 = vmatpush2.msra.mxu0 0.0
        %4837 = vmatprep.subr.mxu0 0.0
        %4838 = vmatpush2.msra.mxu0 0.0
        %4839 = vmatprep.subr.mxu0 0.0
        %4840 = vmatpush2.msra.mxu0 0.0
        %4841 = vmatprep.subr.mxu0 0.0
        %4842 = vmatpush2.msra.mxu0 0.0
        %4843 = vmatprep.subr.mxu0 0.0
        %4844 = vmatpush2.msra.mxu0 0.0
        %4845 = vmatprep.subr.mxu0 0.0
        %4846 = vmatpush2.msra.mxu0 0.0
        %4847 = vmatprep.subr.mxu0 0.0
        %4848 = vmatpush2.msra.mxu0 0.0
        %4849 = vmatprep.subr.mxu0 0.0
        %4850 = vmatpush2.msra.mxu0 0.0
        %4851 = vmatprep.mubr.f32.mxu0 0.0
        %4852 = vmatmul.mubr.f32.gmra.mxu0 %v3504
        %v4853 = vpop.f32.mrf.mxu0
        %v4854 = vadd.f32 0.0, %v4853
        %v4855 = vpop.f32.mrf.mxu0
        %4856 = vmatprep.mubr.f32.mxu0 0.0
        %4857 = vmatmul.mubr.f32.gmra.mxu0 %v3507
        %v4858 = vpop.f32.mrf.mxu0
        %v4859 = vadd.f32 0.0, %v4858
        %v4860 = vpop.f32.mrf.mxu0
        %4861 = vdwg.mxu0
        %4862 = vmatprep.subr.mxu0 0.0
        %4863 = vmatpush1.msra.mxu0 0.0
        %4864 = vmatprep.subr.mxu0 0.0
        %4865 = vmatpush1.msra.mxu0 0.0
        %4866 = vmatprep.subr.mxu0 0.0
        %4867 = vmatpush1.msra.mxu0 0.0
        %4868 = vmatprep.subr.mxu0 0.0
        %4869 = vmatpush1.msra.mxu0 0.0
        %4870 = vmatprep.subr.mxu0 0.0
        %4871 = vmatpush1.msra.mxu0 0.0
        %4872 = vmatprep.subr.mxu0 0.0
        %4873 = vmatpush1.msra.mxu0 0.0
        %4874 = vmatprep.subr.mxu0 0.0
        %4875 = vmatpush1.msra.mxu0 0.0
        %4876 = vmatprep.subr.mxu0 0.0
        %4877 = vmatpush1.msra.mxu0 0.0
        %4878 = vmatprep.subr.mxu0 0.0
        %4879 = vmatpush1.msra.mxu0 0.0
        %4880 = vmatprep.subr.mxu0 0.0
        %4881 = vmatpush1.msra.mxu0 0.0
        %4882 = vmatprep.subr.mxu0 0.0
        %4883 = vmatpush1.msra.mxu0 0.0
        %4884 = vmatprep.subr.mxu0 0.0
        %4885 = vmatpush1.msra.mxu0 0.0
        %4886 = vmatprep.subr.mxu0 0.0
        %4887 = vmatpush1.msra.mxu0 %v3478
        %4888 = vmatprep.subr.mxu0 0.0
        %4889 = vmatpush1.msra.mxu0 %v3477
        %4890 = vmatprep.subr.mxu0 0.0
        %4891 = vmatpush1.msra.mxu0 %v3476
        %4892 = vmatprep.subr.mxu0 0.0
        %4893 = vmatpush1.msra.mxu0 %v3475
        %4894 = vmatprep.subr.mxu0 0.0
        %4895 = vmatpush2.msra.mxu0 0.0
        %4896 = vmatprep.subr.mxu0 0.0
        %4897 = vmatpush2.msra.mxu0 0.0
        %4898 = vmatprep.subr.mxu0 0.0
        %4899 = vmatpush2.msra.mxu0 0.0
        %4900 = vmatprep.subr.mxu0 0.0
        %4901 = vmatpush2.msra.mxu0 0.0
        %4902 = vmatprep.subr.mxu0 0.0
        %4903 = vmatpush2.msra.mxu0 0.0
        %4904 = vmatprep.subr.mxu0 0.0
        %4905 = vmatpush2.msra.mxu0 0.0
        %4906 = vmatprep.subr.mxu0 0.0
        %4907 = vmatpush2.msra.mxu0 0.0
        %4908 = vmatprep.subr.mxu0 0.0
        %4909 = vmatpush2.msra.mxu0 0.0
        %4910 = vmatprep.subr.mxu0 0.0
        %4911 = vmatpush2.msra.mxu0 0.0
        %4912 = vmatprep.subr.mxu0 0.0
        %4913 = vmatpush2.msra.mxu0 0.0
        %4914 = vmatprep.subr.mxu0 0.0
        %4915 = vmatpush2.msra.mxu0 0.0
        %4916 = vmatprep.subr.mxu0 0.0
        %4917 = vmatpush2.msra.mxu0 0.0
        %4918 = vmatprep.subr.mxu0 0.0
        %4919 = vmatpush2.msra.mxu0 0.0
        %4920 = vmatprep.subr.mxu0 0.0
        %4921 = vmatpush2.msra.mxu0 0.0
        %4922 = vmatprep.subr.mxu0 0.0
        %4923 = vmatpush2.msra.mxu0 0.0
        %4924 = vmatprep.subr.mxu0 0.0
        %4925 = vmatpush2.msra.mxu0 0.0
        %4926 = vmatprep.mubr.f32.mxu0 0.0
        %4927 = vmatmul.mubr.f32.gmra.mxu0 %v3585
        %v4928 = vpop.f32.mrf.mxu0
        %v4929 = vadd.f32 0.0, %v4928
        %v4930 = vpop.f32.mrf.mxu0
        %4931 = vmatprep.mubr.f32.mxu0 0.0
        %4932 = vmatmul.mubr.f32.gmra.mxu0 %v3588
        %v4933 = vpop.f32.mrf.mxu0
        %v4934 = vadd.f32 0.0, %v4933
        %v4935 = vpop.f32.mrf.mxu0
        %4936 = vdwg.mxu0
        %4937 = vmatprep.subr.mxu0 0.0
        %4938 = vmatpush1.msra.mxu0 0.0
        %4939 = vmatprep.subr.mxu0 0.0
        %4940 = vmatpush1.msra.mxu0 0.0
        %4941 = vmatprep.subr.mxu0 0.0
        %4942 = vmatpush1.msra.mxu0 0.0
        %4943 = vmatprep.subr.mxu0 0.0
        %4944 = vmatpush1.msra.mxu0 0.0
        %4945 = vmatprep.subr.mxu0 0.0
        %4946 = vmatpush1.msra.mxu0 0.0
        %4947 = vmatprep.subr.mxu0 0.0
        %4948 = vmatpush1.msra.mxu0 0.0
        %4949 = vmatprep.subr.mxu0 0.0
        %4950 = vmatpush1.msra.mxu0 0.0
        %4951 = vmatprep.subr.mxu0 0.0
        %4952 = vmatpush1.msra.mxu0 0.0
        %4953 = vmatprep.subr.mxu0 0.0
        %4954 = vmatpush1.msra.mxu0 0.0
        %4955 = vmatprep.subr.mxu0 0.0
        %4956 = vmatpush1.msra.mxu0 0.0
        %4957 = vmatprep.subr.mxu0 0.0
        %4958 = vmatpush1.msra.mxu0 0.0
        %4959 = vmatprep.subr.mxu0 0.0
        %4960 = vmatpush1.msra.mxu0 0.0
        %4961 = vmatprep.subr.mxu0 0.0
        %4962 = vmatpush1.msra.mxu0 %v3494
        %4963 = vmatprep.subr.mxu0 0.0
        %4964 = vmatpush1.msra.mxu0 %v3493
        %4965 = vmatprep.subr.mxu0 0.0
        %4966 = vmatpush1.msra.mxu0 %v3492
        %4967 = vmatprep.subr.mxu0 0.0
        %4968 = vmatpush1.msra.mxu0 %v3491
        %4969 = vmatprep.subr.mxu0 0.0
        %4970 = vmatpush2.msra.mxu0 0.0
        %4971 = vmatprep.subr.mxu0 0.0
        %4972 = vmatpush2.msra.mxu0 0.0
        %4973 = vmatprep.subr.mxu0 0.0
        %4974 = vmatpush2.msra.mxu0 0.0
        %4975 = vmatprep.subr.mxu0 0.0
        %4976 = vmatpush2.msra.mxu0 0.0
        %4977 = vmatprep.subr.mxu0 0.0
        %4978 = vmatpush2.msra.mxu0 0.0
        %4979 = vmatprep.subr.mxu0 0.0
        %4980 = vmatpush2.msra.mxu0 0.0
        %4981 = vmatprep.subr.mxu0 0.0
        %4982 = vmatpush2.msra.mxu0 0.0
        %4983 = vmatprep.subr.mxu0 0.0
        %4984 = vmatpush2.msra.mxu0 0.0
        %4985 = vmatprep.subr.mxu0 0.0
        %4986 = vmatpush2.msra.mxu0 0.0
        %4987 = vmatprep.subr.mxu0 0.0
        %4988 = vmatpush2.msra.mxu0 0.0
        %4989 = vmatprep.subr.mxu0 0.0
        %4990 = vmatpush2.msra.mxu0 0.0
        %4991 = vmatprep.subr.mxu0 0.0
        %4992 = vmatpush2.msra.mxu0 0.0
        %4993 = vmatprep.subr.mxu0 0.0
        %4994 = vmatpush2.msra.mxu0 0.0
        %4995 = vmatprep.subr.mxu0 0.0
        %4996 = vmatpush2.msra.mxu0 0.0
        %4997 = vmatprep.subr.mxu0 0.0
        %4998 = vmatpush2.msra.mxu0 0.0
        %4999 = vmatprep.subr.mxu0 0.0
        %5000 = vmatpush2.msra.mxu0 0.0
        %5001 = vmatprep.mubr.f32.mxu0 0.0
        %5002 = vmatmul.mubr.f32.gmra.mxu0 %v3585
        %v5003 = vpop.f32.mrf.mxu0
        %v5004 = vadd.f32 0.0, %v5003
        %v5005 = vpop.f32.mrf.mxu0
        %5006 = vmatprep.mubr.f32.mxu0 0.0
        %5007 = vmatmul.mubr.f32.gmra.mxu0 %v3588
        %v5008 = vpop.f32.mrf.mxu0
        %v5009 = vadd.f32 0.0, %v5008
        %v5010 = vpop.f32.mrf.mxu0
        %5011 = vdwg.mxu0
        %v5013 = vsel %vm1114, %v4854, 0
        %v5016 = vsel %vm1114, %v4929, 0
        %5018 = vmatprep.subr.mxu0 0.0
        %5019 = vmatpush1.xpose.msra.mxu0 0.0
        %5020 = vmatprep.subr.mxu0 0.0
        %5021 = vmatpush1.xpose.msra.mxu0 0.0
        %5022 = vmatprep.subr.mxu0 0.0
        %5023 = vmatpush1.xpose.msra.mxu0 0.0
        %5024 = vmatprep.subr.mxu0 0.0
        %5025 = vmatpush1.xpose.msra.mxu0 0.0
        %5026 = vmatprep.subr.mxu0 0.0
        %5027 = vmatpush1.xpose.msra.mxu0 0.0
        %5028 = vmatprep.subr.mxu0 0.0
        %5029 = vmatpush1.xpose.msra.mxu0 0.0
        %5030 = vmatprep.subr.mxu0 0.0
        %5031 = vmatpush1.xpose.msra.mxu0 0.0
        %5032 = vmatprep.subr.mxu0 0.0
        %5033 = vmatpush1.xpose.msra.mxu0 0.0
        %5034 = vmatprep.subr.mxu0 0.0
        %5035 = vmatpush1.xpose.msra.mxu0 0.0
        %5036 = vmatprep.subr.mxu0 0.0
        %5037 = vmatpush1.xpose.msra.mxu0 0.0
        %5038 = vmatprep.subr.mxu0 0.0
        %5039 = vmatpush1.xpose.msra.mxu0 0.0
        %5040 = vmatprep.subr.mxu0 0.0
        %5041 = vmatpush1.xpose.msra.mxu0 0.0
        %5042 = vmatprep.subr.mxu0 0.0
        %5043 = vmatpush1.xpose.msra.mxu0 0.0
        %5044 = vmatprep.subr.mxu0 0.0
        %5045 = vmatpush1.xpose.msra.mxu0 0.0
        %5046 = vmatprep.subr.mxu0 0.0
        %5047 = vmatpush1.xpose.msra.mxu0 0.0
        %5048 = vmatprep.subr.mxu0 0.0
        %5049 = vmatpush1.xpose.msra.mxu0 %v5016
        %5050 = vmatprep.subr.mxu0 0.0
        %5051 = vmatpush2.xpose.msra.mxu0 0.0
        %5052 = vmatprep.subr.mxu0 0.0
        %5053 = vmatpush2.xpose.msra.mxu0 0.0
        %5054 = vmatprep.subr.mxu0 0.0
        %5055 = vmatpush2.xpose.msra.mxu0 0.0
        %5056 = vmatprep.subr.mxu0 0.0
        %5057 = vmatpush2.xpose.msra.mxu0 0.0
        %5058 = vmatprep.subr.mxu0 0.0
        %5059 = vmatpush2.xpose.msra.mxu0 0.0
        %5060 = vmatprep.subr.mxu0 0.0
        %5061 = vmatpush2.xpose.msra.mxu0 0.0
        %5062 = vmatprep.subr.mxu0 0.0
        %5063 = vmatpush2.xpose.msra.mxu0 0.0
        %5064 = vmatprep.subr.mxu0 0.0
        %5065 = vmatpush2.xpose.msra.mxu0 0.0
        %5066 = vmatprep.subr.mxu0 0.0
        %5067 = vmatpush2.xpose.msra.mxu0 0.0
        %5068 = vmatprep.subr.mxu0 0.0
        %5069 = vmatpush2.xpose.msra.mxu0 0.0
        %5070 = vmatprep.subr.mxu0 0.0
        %5071 = vmatpush2.xpose.msra.mxu0 0.0
        %5072 = vmatprep.subr.mxu0 0.0
        %5073 = vmatpush2.xpose.msra.mxu0 0.0
        %5074 = vmatprep.subr.mxu0 0.0
        %5075 = vmatpush2.xpose.msra.mxu0 0.0
        %5076 = vmatprep.subr.mxu0 0.0
        %5077 = vmatpush2.xpose.msra.mxu0 0.0
        %5078 = vmatprep.subr.mxu0 0.0
        %5079 = vmatpush2.xpose.msra.mxu0 0.0
        %5080 = vmatprep.subr.mxu0 0.0
        %5081 = vmatpush2.xpose.msra.mxu0 0.0
        %5082 = vmatprep.mubr.f32.mxu0 0.0
        %5083 = vmatmul.mubr.f32.gmra.mxu0 %v5013
        %v5084 = vpop.f32.mrf.mxu0
        %v5085 = vadd.f32 0.0, %v5084
        %v5086 = vpop.f32.mrf.mxu0
        %5087 = vdwg.mxu0
        %v5089 = vsel %vm1114, %v4859, 0
        %v5092 = vsel %vm1114, %v4934, 0
        %5094 = vmatprep.subr.mxu0 0.0
        %5095 = vmatpush1.xpose.msra.mxu0 0.0
        %5096 = vmatprep.subr.mxu0 0.0
        %5097 = vmatpush1.xpose.msra.mxu0 0.0
        %5098 = vmatprep.subr.mxu0 0.0
        %5099 = vmatpush1.xpose.msra.mxu0 0.0
        %5100 = vmatprep.subr.mxu0 0.0
        %5101 = vmatpush1.xpose.msra.mxu0 0.0
        %5102 = vmatprep.subr.mxu0 0.0
        %5103 = vmatpush1.xpose.msra.mxu0 0.0
        %5104 = vmatprep.subr.mxu0 0.0
        %5105 = vmatpush1.xpose.msra.mxu0 0.0
        %5106 = vmatprep.subr.mxu0 0.0
        %5107 = vmatpush1.xpose.msra.mxu0 0.0
        %5108 = vmatprep.subr.mxu0 0.0
        %5109 = vmatpush1.xpose.msra.mxu0 0.0
        %5110 = vmatprep.subr.mxu0 0.0
        %5111 = vmatpush1.xpose.msra.mxu0 0.0
        %5112 = vmatprep.subr.mxu0 0.0
        %5113 = vmatpush1.xpose.msra.mxu0 0.0
        %5114 = vmatprep.subr.mxu0 0.0
        %5115 = vmatpush1.xpose.msra.mxu0 0.0
        %5116 = vmatprep.subr.mxu0 0.0
        %5117 = vmatpush1.xpose.msra.mxu0 0.0
        %5118 = vmatprep.subr.mxu0 0.0
        %5119 = vmatpush1.xpose.msra.mxu0 0.0
        %5120 = vmatprep.subr.mxu0 0.0
        %5121 = vmatpush1.xpose.msra.mxu0 0.0
        %5122 = vmatprep.subr.mxu0 0.0
        %5123 = vmatpush1.xpose.msra.mxu0 0.0
        %5124 = vmatprep.subr.mxu0 0.0
        %5125 = vmatpush1.xpose.msra.mxu0 %v5092
        %5126 = vmatprep.subr.mxu0 0.0
        %5127 = vmatpush2.xpose.msra.mxu0 0.0
        %5128 = vmatprep.subr.mxu0 0.0
        %5129 = vmatpush2.xpose.msra.mxu0 0.0
        %5130 = vmatprep.subr.mxu0 0.0
        %5131 = vmatpush2.xpose.msra.mxu0 0.0
        %5132 = vmatprep.subr.mxu0 0.0
        %5133 = vmatpush2.xpose.msra.mxu0 0.0
        %5134 = vmatprep.subr.mxu0 0.0
        %5135 = vmatpush2.xpose.msra.mxu0 0.0
        %5136 = vmatprep.subr.mxu0 0.0
        %5137 = vmatpush2.xpose.msra.mxu0 0.0
        %5138 = vmatprep.subr.mxu0 0.0
        %5139 = vmatpush2.xpose.msra.mxu0 0.0
        %5140 = vmatprep.subr.mxu0 0.0
        %5141 = vmatpush2.xpose.msra.mxu0 0.0
        %5142 = vmatprep.subr.mxu0 0.0
        %5143 = vmatpush2.xpose.msra.mxu0 0.0
        %5144 = vmatprep.subr.mxu0 0.0
        %5145 = vmatpush2.xpose.msra.mxu0 0.0
        %5146 = vmatprep.subr.mxu0 0.0
        %5147 = vmatpush2.xpose.msra.mxu0 0.0
        %5148 = vmatprep.subr.mxu0 0.0
        %5149 = vmatpush2.xpose.msra.mxu0 0.0
        %5150 = vmatprep.subr.mxu0 0.0
        %5151 = vmatpush2.xpose.msra.mxu0 0.0
        %5152 = vmatprep.subr.mxu0 0.0
        %5153 = vmatpush2.xpose.msra.mxu0 0.0
        %5154 = vmatprep.subr.mxu0 0.0
        %5155 = vmatpush2.xpose.msra.mxu0 0.0
        %5156 = vmatprep.subr.mxu0 0.0
        %5157 = vmatpush2.xpose.msra.mxu0 0.0
        %5158 = vmatprep.mubr.f32.mxu0 0.0
        %5159 = vmatmul.mubr.f32.gmra.mxu0 %v5089
        %v5160 = vpop.f32.mrf.mxu0
        %v5161 = vadd.f32 0.0, %v5160
        %v5162 = vpop.f32.mrf.mxu0
        %5163 = vdwg.mxu0
        %v5164 = vmul.f32 %v5085, 0.35355338
        %v5165 = vmul.f32 %v5161, 0.35355338
        %v5166 = vsel %vm3904, -1e+09, %v5164
        %v5167 = vsel %vm3905, -1e+09, %v5165
        %v5168 = vsel %vm1114, %v5166, -inf
        %5169 = vmax.xlane.f32.xlu0 %v5168
        %v5170 = vpop.xlane.xlu0 %5169
        %v5171 = vsel %vm1114, %v5167, -inf
        %5172 = vmax.xlane.f32.xlu0 %v5171
        %v5173 = vpop.xlane.xlu0 %5172
        %v5174 = vsub.f32 %v5166, %v5170
        %v5175 = vsub.f32 %v5167, %v5173
        %v5176 = vmul.f32 %v5174, 1.442695
        %v5177 = vpow.pop %v5176
        %v5178 = vmul.f32 %v5175, 1.442695
        %v5179 = vpow.pop %v5178
        %v5180 = vsel %vm1114, %v5177, 0.0
        %5181 = vadd.xlane.f32.xlu0 %v5180
        %v5182 = vpop.xlane.xlu0 %5181
        %v5183 = vsel %vm1114, %v5179, 0.0
        %5184 = vadd.xlane.f32.xlu0 %v5183
        %v5185 = vpop.xlane.xlu0 %5184
        %v5186 = vrcp.pop %v5182
        %v5187 = vrcp.pop %v5185
        %v5188 = vmul.f32 %v5177, %v5186
        %v5189 = vmul.f32 %v5179, %v5187
        %v5191 = vsel %vm1114, %v5188, 0
        %5193 = vmatprep.subr.mxu0 0.0
        %5194 = vmatpush1.msra.mxu0 0.0
        %5195 = vmatprep.subr.mxu0 0.0
        %5196 = vmatpush1.msra.mxu0 0.0
        %5197 = vmatprep.subr.mxu0 0.0
        %5198 = vmatpush1.msra.mxu0 0.0
        %5199 = vmatprep.subr.mxu0 0.0
        %5200 = vmatpush1.msra.mxu0 0.0
        %5201 = vmatprep.subr.mxu0 0.0
        %5202 = vmatpush1.msra.mxu0 0.0
        %5203 = vmatprep.subr.mxu0 0.0
        %5204 = vmatpush1.msra.mxu0 0.0
        %5205 = vmatprep.subr.mxu0 0.0
        %5206 = vmatpush1.msra.mxu0 0.0
        %5207 = vmatprep.subr.mxu0 0.0
        %5208 = vmatpush1.msra.mxu0 0.0
        %5209 = vmatprep.subr.mxu0 0.0
        %5210 = vmatpush1.msra.mxu0 0.0
        %5211 = vmatprep.subr.mxu0 0.0
        %5212 = vmatpush1.msra.mxu0 0.0
        %5213 = vmatprep.subr.mxu0 0.0
        %5214 = vmatpush1.msra.mxu0 0.0
        %5215 = vmatprep.subr.mxu0 0.0
        %5216 = vmatpush1.msra.mxu0 0.0
        %5217 = vmatprep.subr.mxu0 0.0
        %5218 = vmatpush1.msra.mxu0 0.0
        %5219 = vmatprep.subr.mxu0 0.0
        %5220 = vmatpush1.msra.mxu0 0.0
        %5221 = vmatprep.subr.mxu0 0.0
        %5222 = vmatpush1.msra.mxu0 0.0
        %5223 = vmatprep.subr.mxu0 0.0
        %5224 = vmatpush1.msra.mxu0 %v5004
        %5225 = vmatprep.subr.mxu0 0.0
        %5226 = vmatpush2.msra.mxu0 0.0
        %5227 = vmatprep.subr.mxu0 0.0
        %5228 = vmatpush2.msra.mxu0 0.0
        %5229 = vmatprep.subr.mxu0 0.0
        %5230 = vmatpush2.msra.mxu0 0.0
        %5231 = vmatprep.subr.mxu0 0.0
        %5232 = vmatpush2.msra.mxu0 0.0
        %5233 = vmatprep.subr.mxu0 0.0
        %5234 = vmatpush2.msra.mxu0 0.0
        %5235 = vmatprep.subr.mxu0 0.0
        %5236 = vmatpush2.msra.mxu0 0.0
        %5237 = vmatprep.subr.mxu0 0.0
        %5238 = vmatpush2.msra.mxu0 0.0
        %5239 = vmatprep.subr.mxu0 0.0
        %5240 = vmatpush2.msra.mxu0 0.0
        %5241 = vmatprep.subr.mxu0 0.0
        %5242 = vmatpush2.msra.mxu0 0.0
        %5243 = vmatprep.subr.mxu0 0.0
        %5244 = vmatpush2.msra.mxu0 0.0
        %5245 = vmatprep.subr.mxu0 0.0
        %5246 = vmatpush2.msra.mxu0 0.0
        %5247 = vmatprep.subr.mxu0 0.0
        %5248 = vmatpush2.msra.mxu0 0.0
        %5249 = vmatprep.subr.mxu0 0.0
        %5250 = vmatpush2.msra.mxu0 0.0
        %5251 = vmatprep.subr.mxu0 0.0
        %5252 = vmatpush2.msra.mxu0 0.0
        %5253 = vmatprep.subr.mxu0 0.0
        %5254 = vmatpush2.msra.mxu0 0.0
        %5255 = vmatprep.subr.mxu0 0.0
        %5256 = vmatpush2.msra.mxu0 0.0
        %5257 = vmatprep.mubr.f32.mxu0 0.0
        %5258 = vmatmul.mubr.f32.gmra.mxu0 %v5191
        %v5259 = vpop.f32.mrf.mxu0
        %v5260 = vadd.f32 0.0, %v5259
        %v5261 = vpop.f32.mrf.mxu0
        %5262 = vdwg.mxu0
        %v5264 = vsel %vm1114, %v5189, 0
        %5266 = vmatprep.subr.mxu0 0.0
        %5267 = vmatpush1.msra.mxu0 0.0
        %5268 = vmatprep.subr.mxu0 0.0
        %5269 = vmatpush1.msra.mxu0 0.0
        %5270 = vmatprep.subr.mxu0 0.0
        %5271 = vmatpush1.msra.mxu0 0.0
        %5272 = vmatprep.subr.mxu0 0.0
        %5273 = vmatpush1.msra.mxu0 0.0
        %5274 = vmatprep.subr.mxu0 0.0
        %5275 = vmatpush1.msra.mxu0 0.0
        %5276 = vmatprep.subr.mxu0 0.0
        %5277 = vmatpush1.msra.mxu0 0.0
        %5278 = vmatprep.subr.mxu0 0.0
        %5279 = vmatpush1.msra.mxu0 0.0
        %5280 = vmatprep.subr.mxu0 0.0
        %5281 = vmatpush1.msra.mxu0 0.0
        %5282 = vmatprep.subr.mxu0 0.0
        %5283 = vmatpush1.msra.mxu0 0.0
        %5284 = vmatprep.subr.mxu0 0.0
        %5285 = vmatpush1.msra.mxu0 0.0
        %5286 = vmatprep.subr.mxu0 0.0
        %5287 = vmatpush1.msra.mxu0 0.0
        %5288 = vmatprep.subr.mxu0 0.0
        %5289 = vmatpush1.msra.mxu0 0.0
        %5290 = vmatprep.subr.mxu0 0.0
        %5291 = vmatpush1.msra.mxu0 0.0
        %5292 = vmatprep.subr.mxu0 0.0
        %5293 = vmatpush1.msra.mxu0 0.0
        %5294 = vmatprep.subr.mxu0 0.0
        %5295 = vmatpush1.msra.mxu0 0.0
        %5296 = vmatprep.subr.mxu0 0.0
        %5297 = vmatpush1.msra.mxu0 %v5009
        %5298 = vmatprep.subr.mxu0 0.0
        %5299 = vmatpush2.msra.mxu0 0.0
        %5300 = vmatprep.subr.mxu0 0.0
        %5301 = vmatpush2.msra.mxu0 0.0
        %5302 = vmatprep.subr.mxu0 0.0
        %5303 = vmatpush2.msra.mxu0 0.0
        %5304 = vmatprep.subr.mxu0 0.0
        %5305 = vmatpush2.msra.mxu0 0.0
        %5306 = vmatprep.subr.mxu0 0.0
        %5307 = vmatpush2.msra.mxu0 0.0
        %5308 = vmatprep.subr.mxu0 0.0
        %5309 = vmatpush2.msra.mxu0 0.0
        %5310 = vmatprep.subr.mxu0 0.0
        %5311 = vmatpush2.msra.mxu0 0.0
        %5312 = vmatprep.subr.mxu0 0.0
        %5313 = vmatpush2.msra.mxu0 0.0
        %5314 = vmatprep.subr.mxu0 0.0
        %5315 = vmatpush2.msra.mxu0 0.0
        %5316 = vmatprep.subr.mxu0 0.0
        %5317 = vmatpush2.msra.mxu0 0.0
        %5318 = vmatprep.subr.mxu0 0.0
        %5319 = vmatpush2.msra.mxu0 0.0
        %5320 = vmatprep.subr.mxu0 0.0
        %5321 = vmatpush2.msra.mxu0 0.0
        %5322 = vmatprep.subr.mxu0 0.0
        %5323 = vmatpush2.msra.mxu0 0.0
        %5324 = vmatprep.subr.mxu0 0.0
        %5325 = vmatpush2.msra.mxu0 0.0
        %5326 = vmatprep.subr.mxu0 0.0
        %5327 = vmatpush2.msra.mxu0 0.0
        %5328 = vmatprep.subr.mxu0 0.0
        %5329 = vmatpush2.msra.mxu0 0.0
        %5330 = vmatprep.mubr.f32.mxu0 0.0
        %5331 = vmatmul.mubr.f32.gmra.mxu0 %v5264
        %v5332 = vpop.f32.mrf.mxu0
        %v5333 = vadd.f32 0.0, %v5332
        %v5334 = vpop.f32.mrf.mxu0
        %5335 = vdwg.mxu0
        %v5337 = vsel %vm1114, %v5260, 0
        %v5340 = vsel %vm1114, %v5333, 0
        %5342 = vmatprep.subr.mxu0 0.0
        %5343 = vmatpush1.msra.mxu0 0.0
        %5344 = vmatprep.subr.mxu0 0.0
        %5345 = vmatpush1.msra.mxu0 0.0
        %5346 = vmatprep.subr.mxu0 0.0
        %5347 = vmatpush1.msra.mxu0 0.0
        %5348 = vmatprep.subr.mxu0 0.0
        %5349 = vmatpush1.msra.mxu0 0.0
        %5350 = vmatprep.subr.mxu0 0.0
        %5351 = vmatpush1.msra.mxu0 0.0
        %5352 = vmatprep.subr.mxu0 0.0
        %5353 = vmatpush1.msra.mxu0 0.0
        %5354 = vmatprep.subr.mxu0 0.0
        %5355 = vmatpush1.msra.mxu0 0.0
        %5356 = vmatprep.subr.mxu0 0.0
        %5357 = vmatpush1.msra.mxu0 0.0
        %5358 = vmatprep.subr.mxu0 0.0
        %5359 = vmatpush1.msra.mxu0 0.0
        %5360 = vmatprep.subr.mxu0 0.0
        %5361 = vmatpush1.msra.mxu0 0.0
        %5362 = vmatprep.subr.mxu0 0.0
        %5363 = vmatpush1.msra.mxu0 0.0
        %5364 = vmatprep.subr.mxu0 0.0
        %5365 = vmatpush1.msra.mxu0 0.0
        %5366 = vmatprep.subr.mxu0 0.0
        %5367 = vmatpush1.msra.mxu0 0.0
        %5368 = vmatprep.subr.mxu0 0.0
        %5369 = vmatpush1.msra.mxu0 0.0
        %5370 = vmatprep.subr.mxu0 0.0
        %5371 = vmatpush1.msra.mxu0 0.0
        %5372 = vmatprep.subr.mxu0 0.0
        %5373 = vmatpush1.msra.mxu0 %v3501
        %5374 = vmatprep.subr.mxu0 0.0
        %5375 = vmatpush2.msra.mxu0 0.0
        %5376 = vmatprep.subr.mxu0 0.0
        %5377 = vmatpush2.msra.mxu0 0.0
        %5378 = vmatprep.subr.mxu0 0.0
        %5379 = vmatpush2.msra.mxu0 0.0
        %5380 = vmatprep.subr.mxu0 0.0
        %5381 = vmatpush2.msra.mxu0 0.0
        %5382 = vmatprep.subr.mxu0 0.0
        %5383 = vmatpush2.msra.mxu0 0.0
        %5384 = vmatprep.subr.mxu0 0.0
        %5385 = vmatpush2.msra.mxu0 0.0
        %5386 = vmatprep.subr.mxu0 0.0
        %5387 = vmatpush2.msra.mxu0 0.0
        %5388 = vmatprep.subr.mxu0 0.0
        %5389 = vmatpush2.msra.mxu0 0.0
        %5390 = vmatprep.subr.mxu0 0.0
        %5391 = vmatpush2.msra.mxu0 0.0
        %5392 = vmatprep.subr.mxu0 0.0
        %5393 = vmatpush2.msra.mxu0 0.0
        %5394 = vmatprep.subr.mxu0 0.0
        %5395 = vmatpush2.msra.mxu0 0.0
        %5396 = vmatprep.subr.mxu0 0.0
        %5397 = vmatpush2.msra.mxu0 0.0
        %5398 = vmatprep.subr.mxu0 0.0
        %5399 = vmatpush2.msra.mxu0 0.0
        %5400 = vmatprep.subr.mxu0 0.0
        %5401 = vmatpush2.msra.mxu0 0.0
        %5402 = vmatprep.subr.mxu0 0.0
        %5403 = vmatpush2.msra.mxu0 0.0
        %5404 = vmatprep.subr.mxu0 0.0
        %5405 = vmatpush2.msra.mxu0 0.0
        %5406 = vmatprep.mubr.f32.mxu0 0.0
        %5407 = vmatmul.mubr.f32.gmra.mxu0 %v5337
        %v5408 = vpop.f32.mrf.mxu0
        %v5409 = vadd.f32 0.0, %v5408
        %v5410 = vpop.f32.mrf.mxu0
        %5411 = vmatprep.mubr.f32.mxu0 0.0
        %5412 = vmatmul.mubr.f32.gmra.mxu0 %v5340
        %v5413 = vpop.f32.mrf.mxu0
        %v5414 = vadd.f32 0.0, %v5413
        %v5415 = vpop.f32.mrf.mxu0
        %5416 = vdwg.mxu0
        %v5417 = vadd.f32 %v4779, %v5409
        %v5418 = vadd.f32 %v4784, %v5414
        %5419 = vmatprep.subr.mxu0 0.0
        %5420 = vmatpush1.msra.mxu0 0.0
        %5421 = vmatprep.subr.mxu0 0.0
        %5422 = vmatpush1.msra.mxu0 0.0
        %5423 = vmatprep.subr.mxu0 0.0
        %5424 = vmatpush1.msra.mxu0 0.0
        %5425 = vmatprep.subr.mxu0 0.0
        %5426 = vmatpush1.msra.mxu0 0.0
        %5427 = vmatprep.subr.mxu0 0.0
        %5428 = vmatpush1.msra.mxu0 0.0
        %5429 = vmatprep.subr.mxu0 0.0
        %5430 = vmatpush1.msra.mxu0 0.0
        %5431 = vmatprep.subr.mxu0 0.0
        %5432 = vmatpush1.msra.mxu0 0.0
        %5433 = vmatprep.subr.mxu0 0.0
        %5434 = vmatpush1.msra.mxu0 0.0
        %5435 = vmatprep.subr.mxu0 0.0
        %5436 = vmatpush1.msra.mxu0 0.0
        %5437 = vmatprep.subr.mxu0 0.0
        %5438 = vmatpush1.msra.mxu0 0.0
        %5439 = vmatprep.subr.mxu0 0.0
        %5440 = vmatpush1.msra.mxu0 0.0
        %5441 = vmatprep.subr.mxu0 0.0
        %5442 = vmatpush1.msra.mxu0 0.0
        %5443 = vmatprep.subr.mxu0 0.0
        %5444 = vmatpush1.msra.mxu0 %v3466
        %5445 = vmatprep.subr.mxu0 0.0
        %5446 = vmatpush1.msra.mxu0 %v3465
        %5447 = vmatprep.subr.mxu0 0.0
        %5448 = vmatpush1.msra.mxu0 %v3464
        %5449 = vmatprep.subr.mxu0 0.0
        %5450 = vmatpush1.msra.mxu0 %v3463
        %5451 = vmatprep.subr.mxu0 0.0
        %5452 = vmatpush2.msra.mxu0 0.0
        %5453 = vmatprep.subr.mxu0 0.0
        %5454 = vmatpush2.msra.mxu0 0.0
        %5455 = vmatprep.subr.mxu0 0.0
        %5456 = vmatpush2.msra.mxu0 0.0
        %5457 = vmatprep.subr.mxu0 0.0
        %5458 = vmatpush2.msra.mxu0 0.0
        %5459 = vmatprep.subr.mxu0 0.0
        %5460 = vmatpush2.msra.mxu0 0.0
        %5461 = vmatprep.subr.mxu0 0.0
        %5462 = vmatpush2.msra.mxu0 0.0
        %5463 = vmatprep.subr.mxu0 0.0
        %5464 = vmatpush2.msra.mxu0 0.0
        %5465 = vmatprep.subr.mxu0 0.0
        %5466 = vmatpush2.msra.mxu0 0.0
        %5467 = vmatprep.subr.mxu0 0.0
        %5468 = vmatpush2.msra.mxu0 0.0
        %5469 = vmatprep.subr.mxu0 0.0
        %5470 = vmatpush2.msra.mxu0 0.0
        %5471 = vmatprep.subr.mxu0 0.0
        %5472 = vmatpush2.msra.mxu0 0.0
        %5473 = vmatprep.subr.mxu0 0.0
        %5474 = vmatpush2.msra.mxu0 0.0
        %5475 = vmatprep.subr.mxu0 0.0
        %5476 = vmatpush2.msra.mxu0 0.0
        %5477 = vmatprep.subr.mxu0 0.0
        %5478 = vmatpush2.msra.mxu0 0.0
        %5479 = vmatprep.subr.mxu0 0.0
        %5480 = vmatpush2.msra.mxu0 0.0
        %5481 = vmatprep.subr.mxu0 0.0
        %5482 = vmatpush2.msra.mxu0 0.0
        %5483 = vmatprep.mubr.f32.mxu0 0.0
        %5484 = vmatmul.mubr.f32.gmra.mxu0 %v3504
        %v5485 = vpop.f32.mrf.mxu0
        %v5486 = vadd.f32 0.0, %v5485
        %v5487 = vpop.f32.mrf.mxu0
        %5488 = vmatprep.mubr.f32.mxu0 0.0
        %5489 = vmatmul.mubr.f32.gmra.mxu0 %v3507
        %v5490 = vpop.f32.mrf.mxu0
        %v5491 = vadd.f32 0.0, %v5490
        %v5492 = vpop.f32.mrf.mxu0
        %5493 = vdwg.mxu0
        %5494 = vmatprep.subr.mxu0 0.0
        %5495 = vmatpush1.msra.mxu0 0.0
        %5496 = vmatprep.subr.mxu0 0.0
        %5497 = vmatpush1.msra.mxu0 0.0
        %5498 = vmatprep.subr.mxu0 0.0
        %5499 = vmatpush1.msra.mxu0 0.0
        %5500 = vmatprep.subr.mxu0 0.0
        %5501 = vmatpush1.msra.mxu0 0.0
        %5502 = vmatprep.subr.mxu0 0.0
        %5503 = vmatpush1.msra.mxu0 0.0
        %5504 = vmatprep.subr.mxu0 0.0
        %5505 = vmatpush1.msra.mxu0 0.0
        %5506 = vmatprep.subr.mxu0 0.0
        %5507 = vmatpush1.msra.mxu0 0.0
        %5508 = vmatprep.subr.mxu0 0.0
        %5509 = vmatpush1.msra.mxu0 0.0
        %5510 = vmatprep.subr.mxu0 0.0
        %5511 = vmatpush1.msra.mxu0 0.0
        %5512 = vmatprep.subr.mxu0 0.0
        %5513 = vmatpush1.msra.mxu0 0.0
        %5514 = vmatprep.subr.mxu0 0.0
        %5515 = vmatpush1.msra.mxu0 0.0
        %5516 = vmatprep.subr.mxu0 0.0
        %5517 = vmatpush1.msra.mxu0 0.0
        %5518 = vmatprep.subr.mxu0 0.0
        %5519 = vmatpush1.msra.mxu0 %v3482
        %5520 = vmatprep.subr.mxu0 0.0
        %5521 = vmatpush1.msra.mxu0 %v3481
        %5522 = vmatprep.subr.mxu0 0.0
        %5523 = vmatpush1.msra.mxu0 %v3480
        %5524 = vmatprep.subr.mxu0 0.0
        %5525 = vmatpush1.msra.mxu0 %v3479
        %5526 = vmatprep.subr.mxu0 0.0
        %5527 = vmatpush2.msra.mxu0 0.0
        %5528 = vmatprep.subr.mxu0 0.0
        %5529 = vmatpush2.msra.mxu0 0.0
        %5530 = vmatprep.subr.mxu0 0.0
        %5531 = vmatpush2.msra.mxu0 0.0
        %5532 = vmatprep.subr.mxu0 0.0
        %5533 = vmatpush2.msra.mxu0 0.0
        %5534 = vmatprep.subr.mxu0 0.0
        %5535 = vmatpush2.msra.mxu0 0.0
        %5536 = vmatprep.subr.mxu0 0.0
        %5537 = vmatpush2.msra.mxu0 0.0
        %5538 = vmatprep.subr.mxu0 0.0
        %5539 = vmatpush2.msra.mxu0 0.0
        %5540 = vmatprep.subr.mxu0 0.0
        %5541 = vmatpush2.msra.mxu0 0.0
        %5542 = vmatprep.subr.mxu0 0.0
        %5543 = vmatpush2.msra.mxu0 0.0
        %5544 = vmatprep.subr.mxu0 0.0
        %5545 = vmatpush2.msra.mxu0 0.0
        %5546 = vmatprep.subr.mxu0 0.0
        %5547 = vmatpush2.msra.mxu0 0.0
        %5548 = vmatprep.subr.mxu0 0.0
        %5549 = vmatpush2.msra.mxu0 0.0
        %5550 = vmatprep.subr.mxu0 0.0
        %5551 = vmatpush2.msra.mxu0 0.0
        %5552 = vmatprep.subr.mxu0 0.0
        %5553 = vmatpush2.msra.mxu0 0.0
        %5554 = vmatprep.subr.mxu0 0.0
        %5555 = vmatpush2.msra.mxu0 0.0
        %5556 = vmatprep.subr.mxu0 0.0
        %5557 = vmatpush2.msra.mxu0 0.0
        %5558 = vmatprep.mubr.f32.mxu0 0.0
        %5559 = vmatmul.mubr.f32.gmra.mxu0 %v3585
        %v5560 = vpop.f32.mrf.mxu0
        %v5561 = vadd.f32 0.0, %v5560
        %v5562 = vpop.f32.mrf.mxu0
        %5563 = vmatprep.mubr.f32.mxu0 0.0
        %5564 = vmatmul.mubr.f32.gmra.mxu0 %v3588
        %v5565 = vpop.f32.mrf.mxu0
        %v5566 = vadd.f32 0.0, %v5565
        %v5567 = vpop.f32.mrf.mxu0
        %5568 = vdwg.mxu0
        %5569 = vmatprep.subr.mxu0 0.0
        %5570 = vmatpush1.msra.mxu0 0.0
        %5571 = vmatprep.subr.mxu0 0.0
        %5572 = vmatpush1.msra.mxu0 0.0
        %5573 = vmatprep.subr.mxu0 0.0
        %5574 = vmatpush1.msra.mxu0 0.0
        %5575 = vmatprep.subr.mxu0 0.0
        %5576 = vmatpush1.msra.mxu0 0.0
        %5577 = vmatprep.subr.mxu0 0.0
        %5578 = vmatpush1.msra.mxu0 0.0
        %5579 = vmatprep.subr.mxu0 0.0
        %5580 = vmatpush1.msra.mxu0 0.0
        %5581 = vmatprep.subr.mxu0 0.0
        %5582 = vmatpush1.msra.mxu0 0.0
        %5583 = vmatprep.subr.mxu0 0.0
        %5584 = vmatpush1.msra.mxu0 0.0
        %5585 = vmatprep.subr.mxu0 0.0
        %5586 = vmatpush1.msra.mxu0 0.0
        %5587 = vmatprep.subr.mxu0 0.0
        %5588 = vmatpush1.msra.mxu0 0.0
        %5589 = vmatprep.subr.mxu0 0.0
        %5590 = vmatpush1.msra.mxu0 0.0
        %5591 = vmatprep.subr.mxu0 0.0
        %5592 = vmatpush1.msra.mxu0 0.0
        %5593 = vmatprep.subr.mxu0 0.0
        %5594 = vmatpush1.msra.mxu0 %v3498
        %5595 = vmatprep.subr.mxu0 0.0
        %5596 = vmatpush1.msra.mxu0 %v3497
        %5597 = vmatprep.subr.mxu0 0.0
        %5598 = vmatpush1.msra.mxu0 %v3496
        %5599 = vmatprep.subr.mxu0 0.0
        %5600 = vmatpush1.msra.mxu0 %v3495
        %5601 = vmatprep.subr.mxu0 0.0
        %5602 = vmatpush2.msra.mxu0 0.0
        %5603 = vmatprep.subr.mxu0 0.0
        %5604 = vmatpush2.msra.mxu0 0.0
        %5605 = vmatprep.subr.mxu0 0.0
        %5606 = vmatpush2.msra.mxu0 0.0
        %5607 = vmatprep.subr.mxu0 0.0
        %5608 = vmatpush2.msra.mxu0 0.0
        %5609 = vmatprep.subr.mxu0 0.0
        %5610 = vmatpush2.msra.mxu0 0.0
        %5611 = vmatprep.subr.mxu0 0.0
        %5612 = vmatpush2.msra.mxu0 0.0
        %5613 = vmatprep.subr.mxu0 0.0
        %5614 = vmatpush2.msra.mxu0 0.0
        %5615 = vmatprep.subr.mxu0 0.0
        %5616 = vmatpush2.msra.mxu0 0.0
        %5617 = vmatprep.subr.mxu0 0.0
        %5618 = vmatpush2.msra.mxu0 0.0
        %5619 = vmatprep.subr.mxu0 0.0
        %5620 = vmatpush2.msra.mxu0 0.0
        %5621 = vmatprep.subr.mxu0 0.0
        %5622 = vmatpush2.msra.mxu0 0.0
        %5623 = vmatprep.subr.mxu0 0.0
        %5624 = vmatpush2.msra.mxu0 0.0
        %5625 = vmatprep.subr.mxu0 0.0
        %5626 = vmatpush2.msra.mxu0 0.0
        %5627 = vmatprep.subr.mxu0 0.0
        %5628 = vmatpush2.msra.mxu0 0.0
        %5629 = vmatprep.subr.mxu0 0.0
        %5630 = vmatpush2.msra.mxu0 0.0
        %5631 = vmatprep.subr.mxu0 0.0
        %5632 = vmatpush2.msra.mxu0 0.0
        %5633 = vmatprep.mubr.f32.mxu0 0.0
        %5634 = vmatmul.mubr.f32.gmra.mxu0 %v3585
        %v5635 = vpop.f32.mrf.mxu0
        %v5636 = vadd.f32 0.0, %v5635
        %v5637 = vpop.f32.mrf.mxu0
        %5638 = vmatprep.mubr.f32.mxu0 0.0
        %5639 = vmatmul.mubr.f32.gmra.mxu0 %v3588
        %v5640 = vpop.f32.mrf.mxu0
        %v5641 = vadd.f32 0.0, %v5640
        %v5642 = vpop.f32.mrf.mxu0
        %5643 = vdwg.mxu0
        %v5645 = vsel %vm1114, %v5486, 0
        %v5648 = vsel %vm1114, %v5561, 0
        %5650 = vmatprep.subr.mxu0 0.0
        %5651 = vmatpush1.xpose.msra.mxu0 0.0
        %5652 = vmatprep.subr.mxu0 0.0
        %5653 = vmatpush1.xpose.msra.mxu0 0.0
        %5654 = vmatprep.subr.mxu0 0.0
        %5655 = vmatpush1.xpose.msra.mxu0 0.0
        %5656 = vmatprep.subr.mxu0 0.0
        %5657 = vmatpush1.xpose.msra.mxu0 0.0
        %5658 = vmatprep.subr.mxu0 0.0
        %5659 = vmatpush1.xpose.msra.mxu0 0.0
        %5660 = vmatprep.subr.mxu0 0.0
        %5661 = vmatpush1.xpose.msra.mxu0 0.0
        %5662 = vmatprep.subr.mxu0 0.0
        %5663 = vmatpush1.xpose.msra.mxu0 0.0
        %5664 = vmatprep.subr.mxu0 0.0
        %5665 = vmatpush1.xpose.msra.mxu0 0.0
        %5666 = vmatprep.subr.mxu0 0.0
        %5667 = vmatpush1.xpose.msra.mxu0 0.0
        %5668 = vmatprep.subr.mxu0 0.0
        %5669 = vmatpush1.xpose.msra.mxu0 0.0
        %5670 = vmatprep.subr.mxu0 0.0
        %5671 = vmatpush1.xpose.msra.mxu0 0.0
        %5672 = vmatprep.subr.mxu0 0.0
        %5673 = vmatpush1.xpose.msra.mxu0 0.0
        %5674 = vmatprep.subr.mxu0 0.0
        %5675 = vmatpush1.xpose.msra.mxu0 0.0
        %5676 = vmatprep.subr.mxu0 0.0
        %5677 = vmatpush1.xpose.msra.mxu0 0.0
        %5678 = vmatprep.subr.mxu0 0.0
        %5679 = vmatpush1.xpose.msra.mxu0 0.0
        %5680 = vmatprep.subr.mxu0 0.0
        %5681 = vmatpush1.xpose.msra.mxu0 %v5648
        %5682 = vmatprep.subr.mxu0 0.0
        %5683 = vmatpush2.xpose.msra.mxu0 0.0
        %5684 = vmatprep.subr.mxu0 0.0
        %5685 = vmatpush2.xpose.msra.mxu0 0.0
        %5686 = vmatprep.subr.mxu0 0.0
        %5687 = vmatpush2.xpose.msra.mxu0 0.0
        %5688 = vmatprep.subr.mxu0 0.0
        %5689 = vmatpush2.xpose.msra.mxu0 0.0
        %5690 = vmatprep.subr.mxu0 0.0
        %5691 = vmatpush2.xpose.msra.mxu0 0.0
        %5692 = vmatprep.subr.mxu0 0.0
        %5693 = vmatpush2.xpose.msra.mxu0 0.0
        %5694 = vmatprep.subr.mxu0 0.0
        %5695 = vmatpush2.xpose.msra.mxu0 0.0
        %5696 = vmatprep.subr.mxu0 0.0
        %5697 = vmatpush2.xpose.msra.mxu0 0.0
        %5698 = vmatprep.subr.mxu0 0.0
        %5699 = vmatpush2.xpose.msra.mxu0 0.0
        %5700 = vmatprep.subr.mxu0 0.0
        %5701 = vmatpush2.xpose.msra.mxu0 0.0
        %5702 = vmatprep.subr.mxu0 0.0
        %5703 = vmatpush2.xpose.msra.mxu0 0.0
        %5704 = vmatprep.subr.mxu0 0.0
        %5705 = vmatpush2.xpose.msra.mxu0 0.0
        %5706 = vmatprep.subr.mxu0 0.0
        %5707 = vmatpush2.xpose.msra.mxu0 0.0
        %5708 = vmatprep.subr.mxu0 0.0
        %5709 = vmatpush2.xpose.msra.mxu0 0.0
        %5710 = vmatprep.subr.mxu0 0.0
        %5711 = vmatpush2.xpose.msra.mxu0 0.0
        %5712 = vmatprep.subr.mxu0 0.0
        %5713 = vmatpush2.xpose.msra.mxu0 0.0
        %5714 = vmatprep.mubr.f32.mxu0 0.0
        %5715 = vmatmul.mubr.f32.gmra.mxu0 %v5645
        %v5716 = vpop.f32.mrf.mxu0
        %v5717 = vadd.f32 0.0, %v5716
        %v5718 = vpop.f32.mrf.mxu0
        %5719 = vdwg.mxu0
        %v5721 = vsel %vm1114, %v5491, 0
        %v5724 = vsel %vm1114, %v5566, 0
        %5726 = vmatprep.subr.mxu0 0.0
        %5727 = vmatpush1.xpose.msra.mxu0 0.0
        %5728 = vmatprep.subr.mxu0 0.0
        %5729 = vmatpush1.xpose.msra.mxu0 0.0
        %5730 = vmatprep.subr.mxu0 0.0
        %5731 = vmatpush1.xpose.msra.mxu0 0.0
        %5732 = vmatprep.subr.mxu0 0.0
        %5733 = vmatpush1.xpose.msra.mxu0 0.0
        %5734 = vmatprep.subr.mxu0 0.0
        %5735 = vmatpush1.xpose.msra.mxu0 0.0
        %5736 = vmatprep.subr.mxu0 0.0
        %5737 = vmatpush1.xpose.msra.mxu0 0.0
        %5738 = vmatprep.subr.mxu0 0.0
        %5739 = vmatpush1.xpose.msra.mxu0 0.0
        %5740 = vmatprep.subr.mxu0 0.0
        %5741 = vmatpush1.xpose.msra.mxu0 0.0
        %5742 = vmatprep.subr.mxu0 0.0
        %5743 = vmatpush1.xpose.msra.mxu0 0.0
        %5744 = vmatprep.subr.mxu0 0.0
        %5745 = vmatpush1.xpose.msra.mxu0 0.0
        %5746 = vmatprep.subr.mxu0 0.0
        %5747 = vmatpush1.xpose.msra.mxu0 0.0
        %5748 = vmatprep.subr.mxu0 0.0
        %5749 = vmatpush1.xpose.msra.mxu0 0.0
        %5750 = vmatprep.subr.mxu0 0.0
        %5751 = vmatpush1.xpose.msra.mxu0 0.0
        %5752 = vmatprep.subr.mxu0 0.0
        %5753 = vmatpush1.xpose.msra.mxu0 0.0
        %5754 = vmatprep.subr.mxu0 0.0
        %5755 = vmatpush1.xpose.msra.mxu0 0.0
        %5756 = vmatprep.subr.mxu0 0.0
        %5757 = vmatpush1.xpose.msra.mxu0 %v5724
        %5758 = vmatprep.subr.mxu0 0.0
        %5759 = vmatpush2.xpose.msra.mxu0 0.0
        %5760 = vmatprep.subr.mxu0 0.0
        %5761 = vmatpush2.xpose.msra.mxu0 0.0
        %5762 = vmatprep.subr.mxu0 0.0
        %5763 = vmatpush2.xpose.msra.mxu0 0.0
        %5764 = vmatprep.subr.mxu0 0.0
        %5765 = vmatpush2.xpose.msra.mxu0 0.0
        %5766 = vmatprep.subr.mxu0 0.0
        %5767 = vmatpush2.xpose.msra.mxu0 0.0
        %5768 = vmatprep.subr.mxu0 0.0
        %5769 = vmatpush2.xpose.msra.mxu0 0.0
        %5770 = vmatprep.subr.mxu0 0.0
        %5771 = vmatpush2.xpose.msra.mxu0 0.0
        %5772 = vmatprep.subr.mxu0 0.0
        %5773 = vmatpush2.xpose.msra.mxu0 0.0
        %5774 = vmatprep.subr.mxu0 0.0
        %5775 = vmatpush2.xpose.msra.mxu0 0.0
        %5776 = vmatprep.subr.mxu0 0.0
        %5777 = vmatpush2.xpose.msra.mxu0 0.0
        %5778 = vmatprep.subr.mxu0 0.0
        %5779 = vmatpush2.xpose.msra.mxu0 0.0
        %5780 = vmatprep.subr.mxu0 0.0
        %5781 = vmatpush2.xpose.msra.mxu0 0.0
        %5782 = vmatprep.subr.mxu0 0.0
        %5783 = vmatpush2.xpose.msra.mxu0 0.0
        %5784 = vmatprep.subr.mxu0 0.0
        %5785 = vmatpush2.xpose.msra.mxu0 0.0
        %5786 = vmatprep.subr.mxu0 0.0
        %5787 = vmatpush2.xpose.msra.mxu0 0.0
        %5788 = vmatprep.subr.mxu0 0.0
        %5789 = vmatpush2.xpose.msra.mxu0 0.0
        %5790 = vmatprep.mubr.f32.mxu0 0.0
        %5791 = vmatmul.mubr.f32.gmra.mxu0 %v5721
        %v5792 = vpop.f32.mrf.mxu0
        %v5793 = vadd.f32 0.0, %v5792
        %v5794 = vpop.f32.mrf.mxu0
        %5795 = vdwg.mxu0
        %v5796 = vmul.f32 %v5717, 0.35355338
        %v5797 = vmul.f32 %v5793, 0.35355338
        %v5798 = vsel %vm3904, -1e+09, %v5796
        %v5799 = vsel %vm3905, -1e+09, %v5797
        %v5800 = vsel %vm1114, %v5798, -inf
        %5801 = vmax.xlane.f32.xlu0 %v5800
        %v5802 = vpop.xlane.xlu0 %5801
        %v5803 = vsel %vm1114, %v5799, -inf
        %5804 = vmax.xlane.f32.xlu0 %v5803
        %v5805 = vpop.xlane.xlu0 %5804
        %v5806 = vsub.f32 %v5798, %v5802
        %v5807 = vsub.f32 %v5799, %v5805
        %v5808 = vmul.f32 %v5806, 1.442695
        %v5809 = vpow.pop %v5808
        %v5810 = vmul.f32 %v5807, 1.442695
        %v5811 = vpow.pop %v5810
        %v5812 = vsel %vm1114, %v5809, 0.0
        %5813 = vadd.xlane.f32.xlu0 %v5812
        %v5814 = vpop.xlane.xlu0 %5813
        %v5815 = vsel %vm1114, %v5811, 0.0
        %5816 = vadd.xlane.f32.xlu0 %v5815
        %v5817 = vpop.xlane.xlu0 %5816
        %v5818 = vrcp.pop %v5814
        %v5819 = vrcp.pop %v5817
        %v5820 = vmul.f32 %v5809, %v5818
        %v5821 = vmul.f32 %v5811, %v5819
        %v5823 = vsel %vm1114, %v5820, 0
        %5825 = vmatprep.subr.mxu0 0.0
        %5826 = vmatpush1.msra.mxu0 0.0
        %5827 = vmatprep.subr.mxu0 0.0
        %5828 = vmatpush1.msra.mxu0 0.0
        %5829 = vmatprep.subr.mxu0 0.0
        %5830 = vmatpush1.msra.mxu0 0.0
        %5831 = vmatprep.subr.mxu0 0.0
        %5832 = vmatpush1.msra.mxu0 0.0
        %5833 = vmatprep.subr.mxu0 0.0
        %5834 = vmatpush1.msra.mxu0 0.0
        %5835 = vmatprep.subr.mxu0 0.0
        %5836 = vmatpush1.msra.mxu0 0.0
        %5837 = vmatprep.subr.mxu0 0.0
        %5838 = vmatpush1.msra.mxu0 0.0
        %5839 = vmatprep.subr.mxu0 0.0
        %5840 = vmatpush1.msra.mxu0 0.0
        %5841 = vmatprep.subr.mxu0 0.0
        %5842 = vmatpush1.msra.mxu0 0.0
        %5843 = vmatprep.subr.mxu0 0.0
        %5844 = vmatpush1.msra.mxu0 0.0
        %5845 = vmatprep.subr.mxu0 0.0
        %5846 = vmatpush1.msra.mxu0 0.0
        %5847 = vmatprep.subr.mxu0 0.0
        %5848 = vmatpush1.msra.mxu0 0.0
        %5849 = vmatprep.subr.mxu0 0.0
        %5850 = vmatpush1.msra.mxu0 0.0
        %5851 = vmatprep.subr.mxu0 0.0
        %5852 = vmatpush1.msra.mxu0 0.0
        %5853 = vmatprep.subr.mxu0 0.0
        %5854 = vmatpush1.msra.mxu0 0.0
        %5855 = vmatprep.subr.mxu0 0.0
        %5856 = vmatpush1.msra.mxu0 %v5636
        %5857 = vmatprep.subr.mxu0 0.0
        %5858 = vmatpush2.msra.mxu0 0.0
        %5859 = vmatprep.subr.mxu0 0.0
        %5860 = vmatpush2.msra.mxu0 0.0
        %5861 = vmatprep.subr.mxu0 0.0
        %5862 = vmatpush2.msra.mxu0 0.0
        %5863 = vmatprep.subr.mxu0 0.0
        %5864 = vmatpush2.msra.mxu0 0.0
        %5865 = vmatprep.subr.mxu0 0.0
        %5866 = vmatpush2.msra.mxu0 0.0
        %5867 = vmatprep.subr.mxu0 0.0
        %5868 = vmatpush2.msra.mxu0 0.0
        %5869 = vmatprep.subr.mxu0 0.0
        %5870 = vmatpush2.msra.mxu0 0.0
        %5871 = vmatprep.subr.mxu0 0.0
        %5872 = vmatpush2.msra.mxu0 0.0
        %5873 = vmatprep.subr.mxu0 0.0
        %5874 = vmatpush2.msra.mxu0 0.0
        %5875 = vmatprep.subr.mxu0 0.0
        %5876 = vmatpush2.msra.mxu0 0.0
        %5877 = vmatprep.subr.mxu0 0.0
        %5878 = vmatpush2.msra.mxu0 0.0
        %5879 = vmatprep.subr.mxu0 0.0
        %5880 = vmatpush2.msra.mxu0 0.0
        %5881 = vmatprep.subr.mxu0 0.0
        %5882 = vmatpush2.msra.mxu0 0.0
        %5883 = vmatprep.subr.mxu0 0.0
        %5884 = vmatpush2.msra.mxu0 0.0
        %5885 = vmatprep.subr.mxu0 0.0
        %5886 = vmatpush2.msra.mxu0 0.0
        %5887 = vmatprep.subr.mxu0 0.0
        %5888 = vmatpush2.msra.mxu0 0.0
        %5889 = vmatprep.mubr.f32.mxu0 0.0
        %5890 = vmatmul.mubr.f32.gmra.mxu0 %v5823
        %v5891 = vpop.f32.mrf.mxu0
        %v5892 = vadd.f32 0.0, %v5891
        %v5893 = vpop.f32.mrf.mxu0
        %5894 = vdwg.mxu0
        %v5896 = vsel %vm1114, %v5821, 0
        %5898 = vmatprep.subr.mxu0 0.0
        %5899 = vmatpush1.msra.mxu0 0.0
        %5900 = vmatprep.subr.mxu0 0.0
        %5901 = vmatpush1.msra.mxu0 0.0
        %5902 = vmatprep.subr.mxu0 0.0
        %5903 = vmatpush1.msra.mxu0 0.0
        %5904 = vmatprep.subr.mxu0 0.0
        %5905 = vmatpush1.msra.mxu0 0.0
        %5906 = vmatprep.subr.mxu0 0.0
        %5907 = vmatpush1.msra.mxu0 0.0
        %5908 = vmatprep.subr.mxu0 0.0
        %5909 = vmatpush1.msra.mxu0 0.0
        %5910 = vmatprep.subr.mxu0 0.0
        %5911 = vmatpush1.msra.mxu0 0.0
        %5912 = vmatprep.subr.mxu0 0.0
        %5913 = vmatpush1.msra.mxu0 0.0
        %5914 = vmatprep.subr.mxu0 0.0
        %5915 = vmatpush1.msra.mxu0 0.0
        %5916 = vmatprep.subr.mxu0 0.0
        %5917 = vmatpush1.msra.mxu0 0.0
        %5918 = vmatprep.subr.mxu0 0.0
        %5919 = vmatpush1.msra.mxu0 0.0
        %5920 = vmatprep.subr.mxu0 0.0
        %5921 = vmatpush1.msra.mxu0 0.0
        %5922 = vmatprep.subr.mxu0 0.0
        %5923 = vmatpush1.msra.mxu0 0.0
        %5924 = vmatprep.subr.mxu0 0.0
        %5925 = vmatpush1.msra.mxu0 0.0
        %5926 = vmatprep.subr.mxu0 0.0
        %5927 = vmatpush1.msra.mxu0 0.0
        %5928 = vmatprep.subr.mxu0 0.0
        %5929 = vmatpush1.msra.mxu0 %v5641
        %5930 = vmatprep.subr.mxu0 0.0
        %5931 = vmatpush2.msra.mxu0 0.0
        %5932 = vmatprep.subr.mxu0 0.0
        %5933 = vmatpush2.msra.mxu0 0.0
        %5934 = vmatprep.subr.mxu0 0.0
        %5935 = vmatpush2.msra.mxu0 0.0
        %5936 = vmatprep.subr.mxu0 0.0
        %5937 = vmatpush2.msra.mxu0 0.0
        %5938 = vmatprep.subr.mxu0 0.0
        %5939 = vmatpush2.msra.mxu0 0.0
        %5940 = vmatprep.subr.mxu0 0.0
        %5941 = vmatpush2.msra.mxu0 0.0
        %5942 = vmatprep.subr.mxu0 0.0
        %5943 = vmatpush2.msra.mxu0 0.0
        %5944 = vmatprep.subr.mxu0 0.0
        %5945 = vmatpush2.msra.mxu0 0.0
        %5946 = vmatprep.subr.mxu0 0.0
        %5947 = vmatpush2.msra.mxu0 0.0
        %5948 = vmatprep.subr.mxu0 0.0
        %5949 = vmatpush2.msra.mxu0 0.0
        %5950 = vmatprep.subr.mxu0 0.0
        %5951 = vmatpush2.msra.mxu0 0.0
        %5952 = vmatprep.subr.mxu0 0.0
        %5953 = vmatpush2.msra.mxu0 0.0
        %5954 = vmatprep.subr.mxu0 0.0
        %5955 = vmatpush2.msra.mxu0 0.0
        %5956 = vmatprep.subr.mxu0 0.0
        %5957 = vmatpush2.msra.mxu0 0.0
        %5958 = vmatprep.subr.mxu0 0.0
        %5959 = vmatpush2.msra.mxu0 0.0
        %5960 = vmatprep.subr.mxu0 0.0
        %5961 = vmatpush2.msra.mxu0 0.0
        %5962 = vmatprep.mubr.f32.mxu0 0.0
        %5963 = vmatmul.mubr.f32.gmra.mxu0 %v5896
        %v5964 = vpop.f32.mrf.mxu0
        %v5965 = vadd.f32 0.0, %v5964
        %v5966 = vpop.f32.mrf.mxu0
        %5967 = vdwg.mxu0
        %v5969 = vsel %vm1114, %v5892, 0
        %v5972 = vsel %vm1114, %v5965, 0
        %5974 = vmatprep.subr.mxu0 0.0
        %5975 = vmatpush1.msra.mxu0 0.0
        %5976 = vmatprep.subr.mxu0 0.0
        %5977 = vmatpush1.msra.mxu0 0.0
        %5978 = vmatprep.subr.mxu0 0.0
        %5979 = vmatpush1.msra.mxu0 0.0
        %5980 = vmatprep.subr.mxu0 0.0
        %5981 = vmatpush1.msra.mxu0 0.0
        %5982 = vmatprep.subr.mxu0 0.0
        %5983 = vmatpush1.msra.mxu0 0.0
        %5984 = vmatprep.subr.mxu0 0.0
        %5985 = vmatpush1.msra.mxu0 0.0
        %5986 = vmatprep.subr.mxu0 0.0
        %5987 = vmatpush1.msra.mxu0 0.0
        %5988 = vmatprep.subr.mxu0 0.0
        %5989 = vmatpush1.msra.mxu0 0.0
        %5990 = vmatprep.subr.mxu0 0.0
        %5991 = vmatpush1.msra.mxu0 0.0
        %5992 = vmatprep.subr.mxu0 0.0
        %5993 = vmatpush1.msra.mxu0 0.0
        %5994 = vmatprep.subr.mxu0 0.0
        %5995 = vmatpush1.msra.mxu0 0.0
        %5996 = vmatprep.subr.mxu0 0.0
        %5997 = vmatpush1.msra.mxu0 0.0
        %5998 = vmatprep.subr.mxu0 0.0
        %5999 = vmatpush1.msra.mxu0 0.0
        %6000 = vmatprep.subr.mxu0 0.0
        %6001 = vmatpush1.msra.mxu0 0.0
        %6002 = vmatprep.subr.mxu0 0.0
        %6003 = vmatpush1.msra.mxu0 0.0
        %6004 = vmatprep.subr.mxu0 0.0
        %6005 = vmatpush1.msra.mxu0 %v3502
        %6006 = vmatprep.subr.mxu0 0.0
        %6007 = vmatpush2.msra.mxu0 0.0
        %6008 = vmatprep.subr.mxu0 0.0
        %6009 = vmatpush2.msra.mxu0 0.0
        %6010 = vmatprep.subr.mxu0 0.0
        %6011 = vmatpush2.msra.mxu0 0.0
        %6012 = vmatprep.subr.mxu0 0.0
        %6013 = vmatpush2.msra.mxu0 0.0
        %6014 = vmatprep.subr.mxu0 0.0
        %6015 = vmatpush2.msra.mxu0 0.0
        %6016 = vmatprep.subr.mxu0 0.0
        %6017 = vmatpush2.msra.mxu0 0.0
        %6018 = vmatprep.subr.mxu0 0.0
        %6019 = vmatpush2.msra.mxu0 0.0
        %6020 = vmatprep.subr.mxu0 0.0
        %6021 = vmatpush2.msra.mxu0 0.0
        %6022 = vmatprep.subr.mxu0 0.0
        %6023 = vmatpush2.msra.mxu0 0.0
        %6024 = vmatprep.subr.mxu0 0.0
        %6025 = vmatpush2.msra.mxu0 0.0
        %6026 = vmatprep.subr.mxu0 0.0
        %6027 = vmatpush2.msra.mxu0 0.0
        %6028 = vmatprep.subr.mxu0 0.0
        %6029 = vmatpush2.msra.mxu0 0.0
        %6030 = vmatprep.subr.mxu0 0.0
        %6031 = vmatpush2.msra.mxu0 0.0
        %6032 = vmatprep.subr.mxu0 0.0
        %6033 = vmatpush2.msra.mxu0 0.0
        %6034 = vmatprep.subr.mxu0 0.0
        %6035 = vmatpush2.msra.mxu0 0.0
        %6036 = vmatprep.subr.mxu0 0.0
        %6037 = vmatpush2.msra.mxu0 0.0
        %6038 = vmatprep.mubr.f32.mxu0 0.0
        %6039 = vmatmul.mubr.f32.gmra.mxu0 %v5969
        %v6040 = vpop.f32.mrf.mxu0
        %v6041 = vadd.f32 0.0, %v6040
        %v6042 = vpop.f32.mrf.mxu0
        %6043 = vmatprep.mubr.f32.mxu0 0.0
        %6044 = vmatmul.mubr.f32.gmra.mxu0 %v5972
        %v6045 = vpop.f32.mrf.mxu0
        %v6046 = vadd.f32 0.0, %v6045
        %v6047 = vpop.f32.mrf.mxu0
        %6048 = vdwg.mxu0
        %v6049 = vadd.f32 %v5417, %v6041
        %v6050 = vadd.f32 %v5418, %v6046
        %v6051 = vadd.f32 %v6049, %v3441
        %v6052 = vadd.f32 %v6050, %v3442
        %v6053 = vsel %vm882, %v6051, 0.0
        %6054 = vadd.xlane.f32.xlu0 %v6053
        %v6055 = vpop.xlane.xlu0 %6054
        %v6056 = vsel %vm882, %v6052, 0.0
        %6057 = vadd.xlane.f32.xlu0 %v6056
        %v6058 = vpop.xlane.xlu0 %6057
        %v6059 = vmul.f32 %v6055, %v3422
        %v6060 = vmul.f32 %v6058, %v3422
        %v6061 = vsub.f32 %v6051, %v6059
        %v6062 = vsub.f32 %v6052, %v6060
        %v6063 = vmul.f32 %v6061, %v6061
        %v6064 = vmul.f32 %v6062, %v6062
        %v6065 = vsel %vm882, %v6063, 0.0
        %6066 = vadd.xlane.f32.xlu0 %v6065
        %v6067 = vpop.xlane.xlu0 %6066
        %v6068 = vsel %vm882, %v6064, 0.0
        %6069 = vadd.xlane.f32.xlu0 %v6068
        %v6070 = vpop.xlane.xlu0 %6069
        %v6071 = vmul.f32 %v6067, %v3422
        %v6072 = vmul.f32 %v6070, %v3422
        %v6073 = vadd.f32 %v6071, 1e-05
        %v6074 = vadd.f32 %v6072, 1e-05
        %v6075 = vrsqrt.pop %v6073
        %v6076 = vrsqrt.pop %v6074
        %v6077 = vmul.f32 %v6061, %v6075
        %v6078 = vmul.f32 %v6062, %v6076
        %6079 = vst.msk [vmem:[%s739] sm:$0xff] %vm1114, %v3928
        %6080 = vst.msk [vmem:[%s739 + $0x8] sm:$0xff] %vm1114, %v4477
        %6081 = vst.msk [vmem:[%s739 + $0x10] sm:$0xff] %vm1114, %v5188
        %6082 = vst.msk [vmem:[%s739 + $0x18] sm:$0xff] %vm1114, %v5820
        %6083 = vst.msk [vmem:[%s739 + $0x20] sm:$0xff] %vm1114, %v3929
        %6084 = vst.msk [vmem:[%s739 + $0x28] sm:$0xff] %vm1114, %v4478
        %6085 = vst.msk [vmem:[%s739 + $0x30] sm:$0xff] %vm1114, %v5189
        %6086 = vst.msk [vmem:[%s739 + $0x38] sm:$0xff] %vm1114, %v5821
        %v6087 = vld [vmem:[%s724] sm:$0xff]
        %v6088 = vld [vmem:[%s724 + $0x8] sm:$0xff]
        %v6089 = vld [vmem:[%s724 + $0x10] sm:$0xff]
        %v6090 = vld [vmem:[%s724 + $0x18] sm:$0xff]
        %v6092 = vsel %vm882, %v6077, 0
        %v6095 = vsel %vm882, %v6078, 0
        %6097 = vmatprep.subr.mxu0 0.0
        %6098 = vmatpush1.msra.mxu0 0.0
        %6099 = vmatprep.subr.mxu0 0.0
        %6100 = vmatpush1.msra.mxu0 0.0
        %6101 = vmatprep.subr.mxu0 0.0
        %6102 = vmatpush1.msra.mxu0 0.0
        %6103 = vmatprep.subr.mxu0 0.0
        %6104 = vmatpush1.msra.mxu0 0.0
        %6105 = vmatprep.subr.mxu0 0.0
        %6106 = vmatpush1.msra.mxu0 0.0
        %6107 = vmatprep.subr.mxu0 0.0
        %6108 = vmatpush1.msra.mxu0 0.0
        %6109 = vmatprep.subr.mxu0 0.0
        %6110 = vmatpush1.msra.mxu0 0.0
        %6111 = vmatprep.subr.mxu0 0.0
        %6112 = vmatpush1.msra.mxu0 0.0
        %6113 = vmatprep.subr.mxu0 0.0
        %6114 = vmatpush1.msra.mxu0 0.0
        %6115 = vmatprep.subr.mxu0 0.0
        %6116 = vmatpush1.msra.mxu0 0.0
        %6117 = vmatprep.subr.mxu0 0.0
        %6118 = vmatpush1.msra.mxu0 0.0
        %6119 = vmatprep.subr.mxu0 0.0
        %6120 = vmatpush1.msra.mxu0 0.0
        %6121 = vmatprep.subr.mxu0 0.0
        %6122 = vmatpush1.msra.mxu0 %v6090
        %6123 = vmatprep.subr.mxu0 0.0
        %6124 = vmatpush1.msra.mxu0 %v6089
        %6125 = vmatprep.subr.mxu0 0.0
        %6126 = vmatpush1.msra.mxu0 %v6088
        %6127 = vmatprep.subr.mxu0 0.0
        %6128 = vmatpush1.msra.mxu0 %v6087
        %6129 = vmatprep.subr.mxu0 0.0
        %6130 = vmatpush2.msra.mxu0 0.0
        %6131 = vmatprep.subr.mxu0 0.0
        %6132 = vmatpush2.msra.mxu0 0.0
        %6133 = vmatprep.subr.mxu0 0.0
        %6134 = vmatpush2.msra.mxu0 0.0
        %6135 = vmatprep.subr.mxu0 0.0
        %6136 = vmatpush2.msra.mxu0 0.0
        %6137 = vmatprep.subr.mxu0 0.0
        %6138 = vmatpush2.msra.mxu0 0.0
        %6139 = vmatprep.subr.mxu0 0.0
        %6140 = vmatpush2.msra.mxu0 0.0
        %6141 = vmatprep.subr.mxu0 0.0
        %6142 = vmatpush2.msra.mxu0 0.0
        %6143 = vmatprep.subr.mxu0 0.0
        %6144 = vmatpush2.msra.mxu0 0.0
        %6145 = vmatprep.subr.mxu0 0.0
        %6146 = vmatpush2.msra.mxu0 0.0
        %6147 = vmatprep.subr.mxu0 0.0
        %6148 = vmatpush2.msra.mxu0 0.0
        %6149 = vmatprep.subr.mxu0 0.0
        %6150 = vmatpush2.msra.mxu0 0.0
        %6151 = vmatprep.subr.mxu0 0.0
        %6152 = vmatpush2.msra.mxu0 0.0
        %6153 = vmatprep.subr.mxu0 0.0
        %6154 = vmatpush2.msra.mxu0 0.0
        %6155 = vmatprep.subr.mxu0 0.0
        %6156 = vmatpush2.msra.mxu0 0.0
        %6157 = vmatprep.subr.mxu0 0.0
        %6158 = vmatpush2.msra.mxu0 0.0
        %6159 = vmatprep.subr.mxu0 0.0
        %6160 = vmatpush2.msra.mxu0 0.0
        %6161 = vmatprep.mubr.f32.mxu0 0.0
        %6162 = vmatmul.mubr.f32.gmra.mxu0 %v6092
        %v6163 = vpop.f32.mrf.mxu0
        %v6164 = vadd.f32 0.0, %v6163
        %v6165 = vpop.f32.mrf.mxu0
        %6166 = vmatprep.mubr.f32.mxu0 0.0
        %6167 = vmatmul.mubr.f32.gmra.mxu0 %v6095
        %v6168 = vpop.f32.mrf.mxu0
        %v6169 = vadd.f32 0.0, %v6168
        %v6170 = vpop.f32.mrf.mxu0
        %6171 = vdwg.mxu0
        %v6172 = vmax.f32 %v6164, 0.0
        %v6173 = vmax.f32 %v6169, 0.0
        %v6174 = vld [vmem:[%s729] sm:$0xff]
        %v6175 = vld [vmem:[%s729 + $0x8] sm:$0xff]
        %v6176 = vld [vmem:[%s729 + $0x10] sm:$0xff]
        %v6177 = vld [vmem:[%s729 + $0x18] sm:$0xff]
        %v6178 = vld [vmem:[%s729 + $0x20] sm:$0xff]
        %v6179 = vld [vmem:[%s729 + $0x28] sm:$0xff]
        %v6180 = vld [vmem:[%s729 + $0x30] sm:$0xff]
        %v6181 = vld [vmem:[%s729 + $0x38] sm:$0xff]
        %vm6182 = vcmask 523264
        %v6184 = vsel %vm6182, %v6172, 0
        %v6187 = vsel %vm6182, %v6173, 0
        %6189 = vmatprep.subr.mxu0 0.0
        %6190 = vmatpush1.msra.mxu0 0.0
        %6191 = vmatprep.subr.mxu0 0.0
        %6192 = vmatpush1.msra.mxu0 0.0
        %6193 = vmatprep.subr.mxu0 0.0
        %6194 = vmatpush1.msra.mxu0 0.0
        %6195 = vmatprep.subr.mxu0 0.0
        %6196 = vmatpush1.msra.mxu0 0.0
        %6197 = vmatprep.subr.mxu0 0.0
        %6198 = vmatpush1.msra.mxu0 0.0
        %6199 = vmatprep.subr.mxu0 0.0
        %6200 = vmatpush1.msra.mxu0 0.0
        %6201 = vmatprep.subr.mxu0 0.0
        %6202 = vmatpush1.msra.mxu0 0.0
        %6203 = vmatprep.subr.mxu0 0.0
        %6204 = vmatpush1.msra.mxu0 0.0
        %6205 = vmatprep.subr.mxu0 0.0
        %6206 = vmatpush1.msra.mxu0 %v6181
        %6207 = vmatprep.subr.mxu0 0.0
        %6208 = vmatpush1.msra.mxu0 %v6180
        %6209 = vmatprep.subr.mxu0 0.0
        %6210 = vmatpush1.msra.mxu0 %v6179
        %6211 = vmatprep.subr.mxu0 0.0
        %6212 = vmatpush1.msra.mxu0 %v6178
        %6213 = vmatprep.subr.mxu0 0.0
        %6214 = vmatpush1.msra.mxu0 %v6177
        %6215 = vmatprep.subr.mxu0 0.0
        %6216 = vmatpush1.msra.mxu0 %v6176
        %6217 = vmatprep.subr.mxu0 0.0
        %6218 = vmatpush1.msra.mxu0 %v6175
        %6219 = vmatprep.subr.mxu0 0.0
        %6220 = vmatpush1.msra.mxu0 %v6174
        %6221 = vmatprep.subr.mxu0 0.0
        %6222 = vmatpush2.msra.mxu0 0.0
        %6223 = vmatprep.subr.mxu0 0.0
        %6224 = vmatpush2.msra.mxu0 0.0
        %6225 = vmatprep.subr.mxu0 0.0
        %6226 = vmatpush2.msra.mxu0 0.0
        %6227 = vmatprep.subr.mxu0 0.0
        %6228 = vmatpush2.msra.mxu0 0.0
        %6229 = vmatprep.subr.mxu0 0.0
        %6230 = vmatpush2.msra.mxu0 0.0
        %6231 = vmatprep.subr.mxu0 0.0
        %6232 = vmatpush2.msra.mxu0 0.0
        %6233 = vmatprep.subr.mxu0 0.0
        %6234 = vmatpush2.msra.mxu0 0.0
        %6235 = vmatprep.subr.mxu0 0.0
        %6236 = vmatpush2.msra.mxu0 0.0
        %6237 = vmatprep.subr.mxu0 0.0
        %6238 = vmatpush2.msra.mxu0 0.0
        %6239 = vmatprep.subr.mxu0 0.0
        %6240 = vmatpush2.msra.mxu0 0.0
        %6241 = vmatprep.subr.mxu0 0.0
        %6242 = vmatpush2.msra.mxu0 0.0
        %6243 = vmatprep.subr.mxu0 0.0
        %6244 = vmatpush2.msra.mxu0 0.0
        %6245 = vmatprep.subr.mxu0 0.0
        %6246 = vmatpush2.msra.mxu0 0.0
        %6247 = vmatprep.subr.mxu0 0.0
        %6248 = vmatpush2.msra.mxu0 0.0
        %6249 = vmatprep.subr.mxu0 0.0
        %6250 = vmatpush2.msra.mxu0 0.0
        %6251 = vmatprep.subr.mxu0 0.0
        %6252 = vmatpush2.msra.mxu0 0.0
        %6253 = vmatprep.mubr.f32.mxu0 0.0
        %6254 = vmatmul.mubr.f32.gmra.mxu0 %v6184
        %v6255 = vpop.f32.mrf.mxu0
        %v6256 = vadd.f32 %v6077, %v6255
        %v6257 = vpop.f32.mrf.mxu0
        %6258 = vmatprep.mubr.f32.mxu0 0.0
        %6259 = vmatmul.mubr.f32.gmra.mxu0 %v6187
        %v6260 = vpop.f32.mrf.mxu0
        %v6261 = vadd.f32 %v6078, %v6260
        %v6262 = vpop.f32.mrf.mxu0
        %6263 = vdwg.mxu0
        %v6264 = vsel %vm882, %v6256, 0.0
        %6265 = vadd.xlane.f32.xlu0 %v6264
        %v6266 = vpop.xlane.xlu0 %6265
        %v6267 = vsel %vm882, %v6261, 0.0
        %6268 = vadd.xlane.f32.xlu0 %v6267
        %v6269 = vpop.xlane.xlu0 %6268
        %v6270 = vmul.f32 %v6266, %v3422
        %v6271 = vmul.f32 %v6269, %v3422
        %v6272 = vsub.f32 %v6256, %v6270
        %v6273 = vsub.f32 %v6261, %v6271
        %v6274 = vmul.f32 %v6272, %v6272
        %v6275 = vmul.f32 %v6273, %v6273
        %v6276 = vsel %vm882, %v6274, 0.0
        %6277 = vadd.xlane.f32.xlu0 %v6276
        %v6278 = vpop.xlane.xlu0 %6277
        %v6279 = vsel %vm882, %v6275, 0.0
        %6280 = vadd.xlane.f32.xlu0 %v6279
        %v6281 = vpop.xlane.xlu0 %6280
        %v6282 = vmul.f32 %v6278, %v3422
        %v6283 = vmul.f32 %v6281, %v3422
        %v6284 = vadd.f32 %v6282, 1e-05
        %v6285 = vadd.f32 %v6283, 1e-05
        %v6286 = vrsqrt.pop %v6284
        %v6287 = vrsqrt.pop %v6285
        %v6288 = vmul.f32 %v6272, %v6286
        %v6289 = vmul.f32 %v6273, %v6287
        %6290 = vst.msk [vmem:[#allocation2] sm:$0xff] %vm882, %v6288
        %6291 = vst.msk [vmem:[#allocation2 + $0x8] sm:$0xff] %vm882, %v6289
        %p6292 = scmp.eq.s32.totalorder %s30, 1
        // Predicated region
        $region85: #{transformer_forward.3} parent=79 // pred_check
          %p6293 = pneg %p6292
        $region86: #{transformer_forward.3} parent=79 // pred_check_branch
          %6295 = sbr.rel (%p6293) target = $region88
        $region87: #{transformer_forward.3} parent=79 // pred_region
          %v6296 = vld [vmem:[%s14] sm:$0xff]
          %v6297 = vld [vmem:[%s14 + $0x8] sm:$0xff]
          %v6298 = vld [vmem:[%s14 + $0x10] sm:$0xff]
          %v6299 = vld [vmem:[%s14 + $0x18] sm:$0xff]
          %v6301 = vsel %vm882, %v6288, 0
          %v6304 = vsel %vm882, %v6289, 0
          %6306 = vmatprep.subr.mxu0 0.0
          %6307 = vmatpush1.msra.mxu0 0.0
          %6308 = vmatprep.subr.mxu0 0.0
          %6309 = vmatpush1.msra.mxu0 0.0
          %6310 = vmatprep.subr.mxu0 0.0
          %6311 = vmatpush1.msra.mxu0 0.0
          %6312 = vmatprep.subr.mxu0 0.0
          %6313 = vmatpush1.msra.mxu0 0.0
          %6314 = vmatprep.subr.mxu0 0.0
          %6315 = vmatpush1.msra.mxu0 0.0
          %6316 = vmatprep.subr.mxu0 0.0
          %6317 = vmatpush1.msra.mxu0 0.0
          %6318 = vmatprep.subr.mxu0 0.0
          %6319 = vmatpush1.msra.mxu0 0.0
          %6320 = vmatprep.subr.mxu0 0.0
          %6321 = vmatpush1.msra.mxu0 0.0
          %6322 = vmatprep.subr.mxu0 0.0
          %6323 = vmatpush1.msra.mxu0 0.0
          %6324 = vmatprep.subr.mxu0 0.0
          %6325 = vmatpush1.msra.mxu0 0.0
          %6326 = vmatprep.subr.mxu0 0.0
          %6327 = vmatpush1.msra.mxu0 0.0
          %6328 = vmatprep.subr.mxu0 0.0
          %6329 = vmatpush1.msra.mxu0 0.0
          %6330 = vmatprep.subr.mxu0 0.0
          %6331 = vmatpush1.msra.mxu0 %v6299
          %6332 = vmatprep.subr.mxu0 0.0
          %6333 = vmatpush1.msra.mxu0 %v6298
          %6334 = vmatprep.subr.mxu0 0.0
          %6335 = vmatpush1.msra.mxu0 %v6297
          %6336 = vmatprep.subr.mxu0 0.0
          %6337 = vmatpush1.msra.mxu0 %v6296
          %6338 = vmatprep.subr.mxu0 0.0
          %6339 = vmatpush2.msra.mxu0 0.0
          %6340 = vmatprep.subr.mxu0 0.0
          %6341 = vmatpush2.msra.mxu0 0.0
          %6342 = vmatprep.subr.mxu0 0.0
          %6343 = vmatpush2.msra.mxu0 0.0
          %6344 = vmatprep.subr.mxu0 0.0
          %6345 = vmatpush2.msra.mxu0 0.0
          %6346 = vmatprep.subr.mxu0 0.0
          %6347 = vmatpush2.msra.mxu0 0.0
          %6348 = vmatprep.subr.mxu0 0.0
          %6349 = vmatpush2.msra.mxu0 0.0
          %6350 = vmatprep.subr.mxu0 0.0
          %6351 = vmatpush2.msra.mxu0 0.0
          %6352 = vmatprep.subr.mxu0 0.0
          %6353 = vmatpush2.msra.mxu0 0.0
          %6354 = vmatprep.subr.mxu0 0.0
          %6355 = vmatpush2.msra.mxu0 0.0
          %6356 = vmatprep.subr.mxu0 0.0
          %6357 = vmatpush2.msra.mxu0 0.0
          %6358 = vmatprep.subr.mxu0 0.0
          %6359 = vmatpush2.msra.mxu0 0.0
          %6360 = vmatprep.subr.mxu0 0.0
          %6361 = vmatpush2.msra.mxu0 0.0
          %6362 = vmatprep.subr.mxu0 0.0
          %6363 = vmatpush2.msra.mxu0 0.0
          %6364 = vmatprep.subr.mxu0 0.0
          %6365 = vmatpush2.msra.mxu0 0.0
          %6366 = vmatprep.subr.mxu0 0.0
          %6367 = vmatpush2.msra.mxu0 0.0
          %6368 = vmatprep.subr.mxu0 0.0
          %6369 = vmatpush2.msra.mxu0 0.0
          %6370 = vmatprep.mubr.f32.mxu0 0.0
          %6371 = vmatmul.mubr.f32.gmra.mxu0 %v6301
          %v6372 = vpop.f32.mrf.mxu0
          %v6373 = vadd.f32 0.0, %v6372
          %v6374 = vpop.f32.mrf.mxu0
          %6375 = vmatprep.mubr.f32.mxu0 0.0
          %6376 = vmatmul.mubr.f32.gmra.mxu0 %v6304
          %v6377 = vpop.f32.mrf.mxu0
          %v6378 = vadd.f32 0.0, %v6377
          %v6379 = vpop.f32.mrf.mxu0
          %6380 = vdwg.mxu0
          %vm6381 = vcmask 130048
          %6382 = vst.msk [vmem:[#allocation3] sm:$0xff] %vm6381, %v6373
          %6383 = vst.msk [vmem:[#allocation3 + $0x8] sm:$0xff] %vm6381, %v6378
        $region88: #{transformer_forward.3} parent=79 // pred_fallthru
          _
        %p6384 = scmp.lt.s32.totalorder %s30, 1
        %s6385 = scalar_select %p6384, %s30, 1
        %s6386 = smul.addr %s6385, 8
        %s6387 = smul.addr %s6386, 8
        %s6388 = scalar_lea.vmem %s16, %s6387
        %p6389 = scmp.lt.s32.totalorder %s30, 1
        %s6390 = scalar_select %p6389, %s30, 1
        %s6391 = smul.addr %s6390, 8
        %s6392 = smul.addr %s6391, 8
        %s6393 = scalar_lea.vmem %s17, %s6392
        // Predicated region
        $region89: #{transformer_forward.3} parent=79 // pred_check
          %p6394 = pneg %p408
        $region90: #{transformer_forward.3} parent=79 // pred_check_branch
          %6396 = sbr.rel (%p6394) target = $region92
        $region91: #{transformer_forward.3} parent=79 // pred_region
          %s6398 = ssub.s32 256, 256
          %6399 = vsyncadd [#allocation4], %s6398
          %s6400 = sshll.u32 [#allocation3], 4
          %s6401 = int_to_ptr.vmem [resolvable:$true] %s6400
          %6406 = dma.vmem_to_hbm [thread:$0]  %s6401, 256, %s15, [#allocation4], 128, 128, 8
        $region92: #{transformer_forward.3} parent=79 // pred_fallthru
          _
        // Predicated region
        $region93: #{transformer_forward.3} parent=79 // pred_check
          %p6407 = pneg %p434
        $region94: #{transformer_forward.3} parent=79 // pred_check_branch
          %6409 = sbr.rel (%p6407) target = $region96
        $region95: #{transformer_forward.3} parent=79 // pred_region
          _
        $region96: #{transformer_forward.3} parent=79 // pred_fallthru
          _
        // Predicated region
        $region97: #{transformer_forward.3} parent=79 // pred_check
          %p6410 = pneg %p460
        $region98: #{transformer_forward.3} parent=79 // pred_check_branch
          %6412 = sbr.rel (%p6410) target = $region100
        $region99: #{transformer_forward.3} parent=79 // pred_region
          _
        $region100: #{transformer_forward.3} parent=79 // pred_fallthru
          _
        // Predicated region
        $region101: #{transformer_forward.3} parent=79 // pred_check
          %p6413 = pneg %p408
        $region102: #{transformer_forward.3} parent=79 // pred_check_branch
          %6415 = sbr.rel (%p6413) target = $region104
        $region103: #{transformer_forward.3} parent=79 // pred_region
          %6416 = dma.done [#allocation4], 256
        $region104: #{transformer_forward.3} parent=79 // pred_fallthru
          _
      $region80: #{transformer_forward.3} parent=5 // pred_fallthru
        _
      %p6417 = scmp.le.s32.totalorder 2, %s25
      // Predicated region
      $region105: #{transformer_forward.3} parent=5 // pred_check
        %p6418 = pneg %p6417
      $region106: #{transformer_forward.3} parent=5 // pred_check_branch
        %6420 = sbr.rel (%p6418) target = $region108
      $region107: #{transformer_forward.3} parent=5 // pred_region
        %s6421 = ssub.s32 %s25, 2
        // Predicated region
        $region109: #{transformer_forward.3} parent=107 // pred_check
          %p6422 = pneg %p440
        $region110: #{transformer_forward.3} parent=107 // pred_check_branch
          %6424 = sbr.rel (%p6422) target = $region112
        $region111: #{transformer_forward.3} parent=107 // pred_region
          %p6425 = scmp.lt.s32.totalorder %s31, 1
          %s6426 = scalar_select %p6425, %s31, 1
          %s6427 = smul.addr %s6426, 8
          %s6428 = smul.addr %s6427, 8
          %s6429 = scalar_lea.vmem %s16, %s6428
        $region112: #{transformer_forward.3} parent=107 // pred_fallthru
          _
        // Predicated region
        $region113: #{transformer_forward.3} parent=107 // pred_check
          %p6430 = pneg %p466
        $region114: #{transformer_forward.3} parent=107 // pred_check_branch
          %6432 = sbr.rel (%p6430) target = $region116
        $region115: #{transformer_forward.3} parent=107 // pred_region
          %p6433 = scmp.lt.s32.totalorder %s31, 1
          %s6434 = scalar_select %p6433, %s31, 1
          %s6435 = smul.addr %s6434, 8
          %s6436 = smul.addr %s6435, 8
          %s6437 = scalar_lea.vmem %s17, %s6436
        $region116: #{transformer_forward.3} parent=107 // pred_fallthru
          _
      $region108: #{transformer_forward.3} parent=5 // pred_fallthru
        _
    $region6: #{transformer_forward.3} parent=1 // loop_footer
      %s29 = sadd.s32 1, %s25
    $region7: #{transformer_forward.3} parent=1 // loop_footer_branch
      %24 = sbr.rel target = $region3
    $region8: #{transformer_forward.3} parent=1 // loop_exit
      _
    %6438 = vsyncpa [#allocation4], 1
    %s6439 = scalar_lea.sflag [#allocation4], 1
    %6440 = vsyncpa %s6439, 1

</llo_original>
